<compile_context>
chip_gen: v6e
topology: v6e:2x2x1
jax: 0.10.0
libtpu: 0.0.40
codegen_flags: <defaults>
</compile_context>

<pallas_src>
import jax
import jax.numpy as jnp
from jax.experimental import pallas as pl
from jax.experimental.pallas import tpu as pltpu


# ----------------------------- Pallas kernels ------------------------------ #

def _conv_relu_pool_t_kernel(q_ref, w_ref, b_ref, o_ref):
    """Transposed conv (+ optional 2x2 max-pool), one image per grid step.

    q_ref: (1, NQ, K, M) bf16   im2col patches (NQ = 4 pool quadrants, or 1)
    w_ref: (Cout, K)     bf16
    b_ref: (Cout, 1)     f32
    o_ref: (1, Cout, M)  bf16   = relu(max_q(W @ P_q) + b)
    """
    w = w_ref[...]
    nq = q_ref.shape[1]
    acc = jnp.dot(w, q_ref[0, 0], preferred_element_type=jnp.float32)
    for q in range(1, nq):
        acc = jnp.maximum(
            acc, jnp.dot(w, q_ref[0, q], preferred_element_type=jnp.float32))
    acc = acc + b_ref[...]
    o_ref[0] = jnp.maximum(acc, 0.0).astype(o_ref.dtype)


def _conv3_fc_fused_kernel(q_ref, w3_ref, b3_ref, w1_ref, b1_ref,
                           w2_ref, b2_ref, o_ref):
    """conv3 + ReLU + MaxPool(2,2) + flatten + Linear + Linear, fused.

    q_ref : (N, 4, S, K3) bf16   row-major quadrant im2col, S = Hp*Wp (= 20)
    w3_ref: (K3, 64)      bf16
    b3_ref: (1, 64)       f32
    w1_ref: (S, 64, 640)  bf16   fc1 weight as [s, c, o]  (torch col = c*S + s)
    b1_ref: (1, 640)      f32
    w2_ref: (640, 245)    bf16
    b2_ref: (1, 245)      f32
    o_ref : (N, 245)      f32
    """
    n, nq, s_len, _ = q_ref.shape
    w3 = w3_ref[...]
    b3 = b3_ref[...]

    # conv3 + bias + ReLU + max-pool (max over quadrants), per image.
    acts = []
    for i in range(n):
        acc = jnp.dot(q_ref[i, 0], w3, preferred_element_type=jnp.float32)
        for q in range(1, nq):
            acc = jnp.maximum(
                acc, jnp.dot(q_ref[i, q], w3,
                             preferred_element_type=jnp.float32))
        acts.append(jnp.maximum(acc + b3, 0.0).astype(jnp.bfloat16))  # (S, 64)

    # fc1 over the torch NCHW flatten: h[n, o] = sum_{s,c} act_n[s, c] w1[s, c, o]
    # expressed as S accumulating (N,64)@(64,640) matmuls (no in-kernel reshape).
    h = jnp.zeros((n, w1_ref.shape[2]), jnp.float32)
    for s in range(s_len):
        a_s = jnp.concatenate([acts[i][s:s + 1, :] for i in range(n)], axis=0)
        h = h + jnp.dot(a_s, w1_ref[s], preferred_element_type=jnp.float32)
    h = h + b1_ref[...]

    # fc2 (the reference has no activation between the two Linear layers).
    y = jnp.dot(h.astype(jnp.bfloat16), w2_ref[...],
                preferred_element_type=jnp.float32) + b2_ref[...]
    o_ref[...] = y.astype(o_ref.dtype)


# ----------------------------- kernel wrappers ------------------------------ #

def conv_relu_pool_t(quads, w, b):
    """relu(max_q(W @ P_q) + b), per image.  Output (N, Cout, M), lane-dense."""
    n, nq, k, m = quads.shape
    cout = w.shape[0]
    return pl.pallas_call(
        _conv_relu_pool_t_kernel,
        out_shape=jax.ShapeDtypeStruct((n, cout, m), jnp.bfloat16),
        grid_spec=pltpu.PrefetchScalarGridSpec(
            num_scalar_prefetch=0,
            grid=(n,),
            in_specs=[
                pl.BlockSpec((1, nq, k, m), lambda i: (i, 0, 0, 0)),
                pl.BlockSpec((cout, k), lambda i: (0, 0)),     # weight: resident
                pl.BlockSpec((cout, 1), lambda i: (0, 0)),     # bias:   resident
            ],
            out_specs=pl.BlockSpec((1, cout, m), lambda i: (i, 0, 0)),
        ),
        compiler_params=pltpu.CompilerParams(
            dimension_semantics=("parallel",)),
    )(quads, w, b)


def conv3_fc_fused(quads, w3, b3, w1, b1, w2, b2):
    """Fused conv3(+pool)+flatten+fc1+fc2; everything fits VMEM at batch 2."""
    n, nq, s_len, k3 = quads.shape
    cout = w3.shape[1]
    n1 = w1.shape[2]
    n2 = w2.shape[1]
    return pl.pallas_call(
        _conv3_fc_fused_kernel,
        out_shape=jax.ShapeDtypeStruct((n, n2), jnp.float32),
        grid_spec=pltpu.PrefetchScalarGridSpec(
            num_scalar_prefetch=0,
            grid=(1,),
            in_specs=[
                pl.BlockSpec((n, nq, s_len, k3), lambda i: (0, 0, 0, 0)),
                pl.BlockSpec((k3, cout), lambda i: (0, 0)),
                pl.BlockSpec((1, cout), lambda i: (0, 0)),
                pl.BlockSpec((s_len, cout, n1), lambda i: (0, 0, 0)),
                pl.BlockSpec((1, n1), lambda i: (0, 0)),
                pl.BlockSpec((n1, n2), lambda i: (0, 0)),
                pl.BlockSpec((1, n2), lambda i: (0, 0)),
            ],
            out_specs=pl.BlockSpec((n, n2), lambda i: (0, 0)),
        ),
        compiler_params=pltpu.CompilerParams(
            dimension_semantics=("arbitrary",),
            vmem_limit_bytes=32 * 1024 * 1024),
    )(quads, w3, b3, w1, b1, w2, b2)


# --------------------------- host-side im2col (NCHW) ------------------------ #

def _im2col_t(x, kh, kw, stride):
    """x: (N,C,H,W) -> (N, C*kh*kw, Ho*Wo); K rows ordered (c, i, j)."""
    n, c, h, w = x.shape
    ho = (h - kh) // stride + 1
    wo = (w - kw) // stride + 1
    rows = []
    for i in range(kh):
        for j in range(kw):
            rows.append(x[:, :, i:i + stride * (ho - 1) + 1:stride,
                          j:j + stride * (wo - 1) + 1:stride])
    p = jnp.stack(rows, axis=2)                    # (N, C, kh*kw, Ho, Wo)
    return p.reshape(n, c * kh * kw, ho * wo), ho, wo


def _im2col_t_pool_quads(x, kh, kw, stride):
    """K-major quadrant im2col from NCHW: (N, 4, C*kh*kw, Hp*Wp).

    Quadrant (a, b) holds patches of conv positions (2*hp + a, 2*wp + b); all
    quadrants share the pooled (hp, wp) column ordering, so an elementwise max
    over them equals MaxPool2d(2, 2) of the conv output.
    """
    n, c, h, w = x.shape
    ho = (h - kh) // stride + 1
    wo = (w - kw) // stride + 1
    hp, wp = ho // 2, wo // 2
    s2 = 2 * stride
    quads = []
    for a in range(2):
        for b in range(2):
            rows = []
            for i in range(kh):
                for j in range(kw):
                    r0 = a * stride + i
                    c0 = b * stride + j
                    rows.append(x[:, :, r0:r0 + s2 * (hp - 1) + 1:s2,
                                  c0:c0 + s2 * (wp - 1) + 1:s2])
            p = jnp.stack(rows, axis=2)            # (N, C, kh*kw, Hp, Wp)
            quads.append(p.reshape(n, c * kh * kw, hp * wp))
    return jnp.stack(quads, axis=1), hp, wp


def _im2col_rows_pool_quads(x, kh, kw, stride):
    """Row-major quadrant im2col: (N, 4, Hp*Wp, C*kh*kw); cols ordered (c,i,j)."""
    n, c, h, w = x.shape
    ho = (h - kh) // stride + 1
    wo = (w - kw) // stride + 1
    hp, wp = ho // 2, wo // 2
    s2 = 2 * stride
    quads = []
    for a in range(2):
        for b in range(2):
            cols = []
            for i in range(kh):
                for j in range(kw):
                    r0 = a * stride + i
                    c0 = b * stride + j
                    cols.append(x[:, :, r0:r0 + s2 * (hp - 1) + 1:s2,
                                  c0:c0 + s2 * (wp - 1) + 1:s2])
            p = jnp.stack(cols, axis=2)            # (N, C, kh*kw, Hp, Wp)
            p = p.transpose(0, 3, 4, 1, 2)         # (N, Hp, Wp, C, kh*kw)
            quads.append(p.reshape(n, hp * wp, c * kh * kw))
    return jnp.stack(quads, axis=1), hp, wp


# ------------------------------ params & forward ---------------------------- #

def init_params(key):
    """Parameters in PyTorch-native layouts."""
    ks = jax.random.split(key, 10)

    def norm(k, shape, scale=0.05):
        return (scale * jax.random.normal(k, shape)).astype(jnp.float32)

    return {
        "conv1_w": norm(ks[0], (16, 3, 5, 5)),    # (Cout, Cin, kh, kw)
        "conv1_b": norm(ks[1], (16,)),
        "conv2_w": norm(ks[2], (32, 16, 5, 5)),
        "conv2_b": norm(ks[3], (32,)),
        "conv3_w": norm(ks[4], (64, 32, 3, 3)),
        "conv3_b": norm(ks[5], (64,)),
        "fc1_w": norm(ks[6], (640, 1280)),        # torch (out, in), in = (C64,H4,W5)
        "fc1_b": norm(ks[7], (640,)),
        "fc2_w": norm(ks[8], (245, 640)),
        "fc2_b": norm(ks[9], (245,)),
    }


def prepare_params(p):
    """One-time conversion of torch-layout params to kernel-friendly layouts."""
    bf16 = jnp.bfloat16

    def conv_w(w):   # (Cout,Cin,kh,kw) -> (Cout, Cin*kh*kw); K order (c, i, j)
        return w.reshape(w.shape[0], -1).astype(bf16)

    # conv3 weight consumed as (K3, 64) for the row-major fused kernel.
    w3 = p["conv3_w"].reshape(64, -1).T.astype(bf16)                  # (288, 64)
    # fc1: torch column index = c*20 + (h*5 + w); re-layout to [s, c, o].
    w1 = p["fc1_w"].reshape(640, 64, 4, 5).transpose(2, 3, 1, 0)      # (4,5,64,640)
    w1 = w1.reshape(20, 64, 640).astype(bf16)
    return {
        "conv1_w": conv_w(p["conv1_w"]), "conv1_b": p["conv1_b"].reshape(16, 1),
        "conv2_w": conv_w(p["conv2_w"]), "conv2_b": p["conv2_b"].reshape(32, 1),
        "conv3_w": w3,                   "conv3_b": p["conv3_b"].reshape(1, 64),
        "fc1_w": w1,                     "fc1_b": p["fc1_b"].reshape(1, 640),
        "fc2_w": p["fc2_w"].T.astype(bf16), "fc2_b": p["fc2_b"].reshape(1, 245),
    }


def cnn_first_forward(kp, x_nchw):
    n = x_nchw.shape[0]
    x = x_nchw.astype(jnp.bfloat16)                 # NCHW throughout, bf16 bytes

    # conv1: Conv2d(3,16,k=5,s=3) + ReLU + MaxPool(2,2), fused
    q1, hp, wp = _im2col_t_pool_quads(x, 5, 5, 3)   # (N, 4, 75, 1216)
    y = conv_relu_pool_t(q1, kp["conv1_w"], kp["conv1_b"])   # (N, 16, 1216)
    x = y.reshape(n, 16, hp, wp)

    # conv2: Conv2d(16,32,k=5,s=3) + ReLU
    p2, ho, wo = _im2col_t(x, 5, 5, 3)              # (N, 400, 120)
    y = conv_relu_pool_t(p2[:, None], kp["conv2_w"], kp["conv2_b"])  # (N, 32, 120)
    x = y.reshape(n, 32, ho, wo)

    # conv3: Conv2d(32,64,k=3,s=1) + ReLU + MaxPool(2,2) + flatten + fc1 + fc2,
    # all fused in one pallas_call.
    q3, _, _ = _im2col_rows_pool_quads(x, 3, 3, 1)  # (N, 4, 20, 288)
    return conv3_fc_fused(q3, kp["conv3_w"], kp["conv3_b"],
                          kp["fc1_w"], kp["fc1_b"],
                          kp["fc2_w"], kp["fc2_b"])


if __name__ == "__main__":
    # Spatial size is fixed by Linear(1280, ...):
    # (3,194,230) -> conv1 (64,76)->pool(32,38) -> conv2 (10,12)
    # -> conv3 (8,10)->pool(4,5); 64*4*5 = 1280.
    key = jax.random.PRNGKey(0)
    k_params, k_x = jax.random.split(key)
    params = prepare_params(init_params(k_params))
    x = jax.random.normal(k_x, (2, 3, 194, 230), dtype=jnp.float32)

    fwd = jax.jit(cnn_first_forward)
    out = jax.block_until_ready(fwd(params, x))
    assert out.shape == (2, 245), out.shape
    print("KERNEL_OK")
</pallas_src>

<mosaic_0001>
module attributes {stable_mosaic.version = 11 : i64} {
  func.func @_conv_relu_pool_t_kernel(%arg0: i32, %arg1: memref<1x4x75x1216xbf16, #tpu.memory_space<vmem>>, %arg2: memref<16x75xbf16, #tpu.memory_space<vmem>>, %arg3: memref<16x1xf32, #tpu.memory_space<vmem>>, %arg4: memref<1x16x1216xbf16, #tpu.memory_space<vmem>>) attributes {dimension_semantics = [#tpu.dimension_semantics<parallel>], iteration_bounds = array<i64: 2>, scalar_prefetch = 0 : i64, scratch_operands = 0 : i64, tpu.core_type = #tpu.core_type<tc>, window_params = [{transform_indices = @transform_0, window_bounds = array<i64: 1, 4, 75, 1216>}, {pipeline_mode = #tpu.pipeline_mode<synchronous>, transform_indices = @transform_1, window_bounds = array<i64: 16, 75>}, {pipeline_mode = #tpu.pipeline_mode<synchronous>, transform_indices = @transform_2, window_bounds = array<i64: 16, 1>}, {transform_indices = @transform_3, window_bounds = array<i64: 1, 16, 1216>}]} {
    %c0 = arith.constant 0 : index
    %c0_0 = arith.constant 0 : index
    %0 = vector.load %arg2[%c0, %c0_0] : memref<16x75xbf16, #tpu.memory_space<vmem>>, vector<16x75xbf16>
    %c0_1 = arith.constant 0 : index
    %c0_2 = arith.constant 0 : index
    %c0_3 = arith.constant 0 : index
    %c0_4 = arith.constant 0 : index
    %1 = vector.load %arg1[%c0_1, %c0_2, %c0_3, %c0_4] : memref<1x4x75x1216xbf16, #tpu.memory_space<vmem>>, vector<1x1x75x1216xbf16>
    %2 = vector.shape_cast %1 : vector<1x1x75x1216xbf16> to vector<75x1216xbf16>
    %cst = arith.constant dense<0.000000e+00> : vector<16x1216xf32>
    %3 = tpu.matmul %0, %2, %cst {dimension_numbers = #tpu.dot_dimension_numbers<[1], [0], [0], [1], [0, 0, 1, 1], [], []>} : vector<16x75xbf16>, vector<75x1216xbf16>, vector<16x1216xf32> -> vector<16x1216xf32>
    %c0_5 = arith.constant 0 : index
    %c1 = arith.constant 1 : index
    %c0_6 = arith.constant 0 : index
    %c0_7 = arith.constant 0 : index
    %4 = vector.load %arg1[%c0_5, %c1, %c0_6, %c0_7] : memref<1x4x75x1216xbf16, #tpu.memory_space<vmem>>, vector<1x1x75x1216xbf16>
    %5 = vector.shape_cast %4 : vector<1x1x75x1216xbf16> to vector<75x1216xbf16>
    %cst_8 = arith.constant dense<0.000000e+00> : vector<16x1216xf32>
    %6 = tpu.matmul %0, %5, %cst_8 {dimension_numbers = #tpu.dot_dimension_numbers<[1], [0], [0], [1], [0, 0, 1, 1], [], []>} : vector<16x75xbf16>, vector<75x1216xbf16>, vector<16x1216xf32> -> vector<16x1216xf32>
    %7 = arith.maximumf %3, %6 : vector<16x1216xf32>
    %c0_9 = arith.constant 0 : index
    %c2 = arith.constant 2 : index
    %c0_10 = arith.constant 0 : index
    %c0_11 = arith.constant 0 : index
    %8 = vector.load %arg1[%c0_9, %c2, %c0_10, %c0_11] : memref<1x4x75x1216xbf16, #tpu.memory_space<vmem>>, vector<1x1x75x1216xbf16>
    %9 = vector.shape_cast %8 : vector<1x1x75x1216xbf16> to vector<75x1216xbf16>
    %cst_12 = arith.constant dense<0.000000e+00> : vector<16x1216xf32>
    %10 = tpu.matmul %0, %9, %cst_12 {dimension_numbers = #tpu.dot_dimension_numbers<[1], [0], [0], [1], [0, 0, 1, 1], [], []>} : vector<16x75xbf16>, vector<75x1216xbf16>, vector<16x1216xf32> -> vector<16x1216xf32>
    %11 = arith.maximumf %7, %10 : vector<16x1216xf32>
    %c0_13 = arith.constant 0 : index
    %c3 = arith.constant 3 : index
    %c0_14 = arith.constant 0 : index
    %c0_15 = arith.constant 0 : index
    %12 = vector.load %arg1[%c0_13, %c3, %c0_14, %c0_15] : memref<1x4x75x1216xbf16, #tpu.memory_space<vmem>>, vector<1x1x75x1216xbf16>
    %13 = vector.shape_cast %12 : vector<1x1x75x1216xbf16> to vector<75x1216xbf16>
    %cst_16 = arith.constant dense<0.000000e+00> : vector<16x1216xf32>
    %14 = tpu.matmul %0, %13, %cst_16 {dimension_numbers = #tpu.dot_dimension_numbers<[1], [0], [0], [1], [0, 0, 1, 1], [], []>} : vector<16x75xbf16>, vector<75x1216xbf16>, vector<16x1216xf32> -> vector<16x1216xf32>
    %15 = arith.maximumf %11, %14 : vector<16x1216xf32>
    %c0_17 = arith.constant 0 : index
    %c0_18 = arith.constant 0 : index
    %16 = vector.load %arg3[%c0_17, %c0_18] : memref<16x1xf32, #tpu.memory_space<vmem>>, vector<16x1xf32>
    %17 = vector.broadcast %16 : vector<16x1xf32> to vector<16x1216xf32>
    %18 = arith.addf %15, %17 : vector<16x1216xf32>
    %cst_19 = arith.constant 0.000000e+00 : f32
    %19 = vector.broadcast %cst_19 : f32 to vector<16x1216xf32>
    %20 = arith.maximumf %18, %19 : vector<16x1216xf32>
    %21 = arith.truncf %20 : vector<16x1216xf32> to vector<16x1216xbf16>
    %c0_20 = arith.constant 0 : index
    %c0_21 = arith.constant 0 : index
    %c0_22 = arith.constant 0 : index
    %22 = vector.load %arg4[%c0_20, %c0_21, %c0_22] : memref<1x16x1216xbf16, #tpu.memory_space<vmem>>, vector<1x16x1216xbf16>
    %23 = vector.shape_cast %22 : vector<1x16x1216xbf16> to vector<16x1216xbf16>
    %24 = vector.shape_cast %21 : vector<16x1216xbf16> to vector<1x16x1216xbf16>
    tpu.vector_store %arg4[%c0_20, %c0_21, %c0_22], %24 {strides = array<i32>} : memref<1x16x1216xbf16, #tpu.memory_space<vmem>>, vector<1x16x1216xbf16>,
    return
  }
  func.func @transform_0(%arg0: i32) -> (i32, i32, i32, i32) {
    %c0_i32 = arith.constant 0 : i32
    %c0_i32_0 = arith.constant 0 : i32
    %c0_i32_1 = arith.constant 0 : i32
    %c0_i32_2 = arith.constant 0 : i32
    return %arg0, %c0_i32, %c0_i32_0, %c0_i32_1 : i32, i32, i32, i32
  }
  func.func @transform_1(%arg0: i32) -> (i32, i32) {
    %c0_i32 = arith.constant 0 : i32
    %c0_i32_0 = arith.constant 0 : i32
    %c0_i32_1 = arith.constant 0 : i32
    return %c0_i32, %c0_i32_0 : i32, i32
  }
  func.func @transform_2(%arg0: i32) -> (i32, i32) {
    %c0_i32 = arith.constant 0 : i32
    %c0_i32_0 = arith.constant 0 : i32
    %c0_i32_1 = arith.constant 0 : i32
    return %c0_i32, %c0_i32_0 : i32, i32
  }
  func.func @transform_3(%arg0: i32) -> (i32, i32, i32) {
    %c0_i32 = arith.constant 0 : i32
    %c0_i32_0 = arith.constant 0 : i32
    %c0_i32_1 = arith.constant 0 : i32
    return %arg0, %c0_i32, %c0_i32_0 : i32, i32, i32
  }
}

module attributes {stable_mosaic.version = 11 : i64} {
  func.func @_conv_relu_pool_t_kernel(%arg0: i32, %arg1: memref<1x1x400x120xbf16, #tpu.memory_space<vmem>>, %arg2: memref<32x400xbf16, #tpu.memory_space<vmem>>, %arg3: memref<32x1xf32, #tpu.memory_space<vmem>>, %arg4: memref<1x32x120xbf16, #tpu.memory_space<vmem>>) attributes {dimension_semantics = [#tpu.dimension_semantics<parallel>], iteration_bounds = array<i64: 2>, scalar_prefetch = 0 : i64, scratch_operands = 0 : i64, tpu.core_type = #tpu.core_type<tc>, window_params = [{transform_indices = @transform_0, window_bounds = array<i64: 1, 1, 400, 120>}, {pipeline_mode = #tpu.pipeline_mode<synchronous>, transform_indices = @transform_1, window_bounds = array<i64: 32, 400>}, {pipeline_mode = #tpu.pipeline_mode<synchronous>, transform_indices = @transform_2, window_bounds = array<i64: 32, 1>}, {transform_indices = @transform_3, window_bounds = array<i64: 1, 32, 120>}]} {
    %c0 = arith.constant 0 : index
    %c0_0 = arith.constant 0 : index
    %0 = vector.load %arg2[%c0, %c0_0] : memref<32x400xbf16, #tpu.memory_space<vmem>>, vector<32x400xbf16>
    %c0_1 = arith.constant 0 : index
    %c0_2 = arith.constant 0 : index
    %c0_3 = arith.constant 0 : index
    %c0_4 = arith.constant 0 : index
    %1 = vector.load %arg1[%c0_1, %c0_2, %c0_3, %c0_4] : memref<1x1x400x120xbf16, #tpu.memory_space<vmem>>, vector<1x1x400x120xbf16>
    %2 = vector.shape_cast %1 : vector<1x1x400x120xbf16> to vector<400x120xbf16>
    %cst = arith.constant dense<0.000000e+00> : vector<32x120xf32>
    %3 = tpu.matmul %0, %2, %cst {dimension_numbers = #tpu.dot_dimension_numbers<[1], [0], [0], [1], [0, 0, 1, 1], [], []>} : vector<32x400xbf16>, vector<400x120xbf16>, vector<32x120xf32> -> vector<32x120xf32>
    %c0_5 = arith.constant 0 : index
    %c0_6 = arith.constant 0 : index
    %4 = vector.load %arg3[%c0_5, %c0_6] : memref<32x1xf32, #tpu.memory_space<vmem>>, vector<32x1xf32>
    %5 = vector.broadcast %4 : vector<32x1xf32> to vector<32x120xf32>
    %6 = arith.addf %3, %5 : vector<32x120xf32>
    %cst_7 = arith.constant 0.000000e+00 : f32
    %7 = vector.broadcast %cst_7 : f32 to vector<32x120xf32>
    %8 = arith.maximumf %6, %7 : vector<32x120xf32>
    %9 = arith.truncf %8 : vector<32x120xf32> to vector<32x120xbf16>
    %c0_8 = arith.constant 0 : index
    %c0_9 = arith.constant 0 : index
    %c0_10 = arith.constant 0 : index
    %10 = vector.load %arg4[%c0_8, %c0_9, %c0_10] : memref<1x32x120xbf16, #tpu.memory_space<vmem>>, vector<1x32x120xbf16>
    %11 = vector.shape_cast %10 : vector<1x32x120xbf16> to vector<32x120xbf16>
    %12 = vector.shape_cast %9 : vector<32x120xbf16> to vector<1x32x120xbf16>
    tpu.vector_store %arg4[%c0_8, %c0_9, %c0_10], %12 {strides = array<i32>} : memref<1x32x120xbf16, #tpu.memory_space<vmem>>, vector<1x32x120xbf16>,
    return
  }
  func.func @transform_0(%arg0: i32) -> (i32, i32, i32, i32) {
    %c0_i32 = arith.constant 0 : i32
    %c0_i32_0 = arith.constant 0 : i32
    %c0_i32_1 = arith.constant 0 : i32
    %c0_i32_2 = arith.constant 0 : i32
    return %arg0, %c0_i32, %c0_i32_0, %c0_i32_1 : i32, i32, i32, i32
  }
  func.func @transform_1(%arg0: i32) -> (i32, i32) {
    %c0_i32 = arith.constant 0 : i32
    %c0_i32_0 = arith.constant 0 : i32
    %c0_i32_1 = arith.constant 0 : i32
    return %c0_i32, %c0_i32_0 : i32, i32
  }
  func.func @transform_2(%arg0: i32) -> (i32, i32) {
    %c0_i32 = arith.constant 0 : i32
    %c0_i32_0 = arith.constant 0 : i32
    %c0_i32_1 = arith.constant 0 : i32
    return %c0_i32, %c0_i32_0 : i32, i32
  }
  func.func @transform_3(%arg0: i32) -> (i32, i32, i32) {
    %c0_i32 = arith.constant 0 : i32
    %c0_i32_0 = arith.constant 0 : i32
    %c0_i32_1 = arith.constant 0 : i32
    return %arg0, %c0_i32, %c0_i32_0 : i32, i32, i32
  }
}

module attributes {stable_mosaic.version = 11 : i64} {
  func.func @_conv3_fc_fused_kernel(%arg0: i32, %arg1: memref<2x4x20x288xbf16, #tpu.memory_space<vmem>>, %arg2: memref<288x64xbf16, #tpu.memory_space<vmem>>, %arg3: memref<1x64xf32, #tpu.memory_space<vmem>>, %arg4: memref<20x64x640xbf16, #tpu.memory_space<vmem>>, %arg5: memref<1x640xf32, #tpu.memory_space<vmem>>, %arg6: memref<640x245xbf16, #tpu.memory_space<vmem>>, %arg7: memref<1x245xf32, #tpu.memory_space<vmem>>, %arg8: memref<2x245xf32, #tpu.memory_space<vmem>>) attributes {dimension_semantics = [#tpu.dimension_semantics<arbitrary>], iteration_bounds = array<i64: 1>, scalar_prefetch = 0 : i64, scratch_operands = 0 : i64, tpu.core_type = #tpu.core_type<tc>, window_params = [{pipeline_mode = #tpu.pipeline_mode<synchronous>, transform_indices = @transform_0, window_bounds = array<i64: 2, 4, 20, 288>}, {pipeline_mode = #tpu.pipeline_mode<synchronous>, transform_indices = @transform_1, window_bounds = array<i64: 288, 64>}, {pipeline_mode = #tpu.pipeline_mode<synchronous>, transform_indices = @transform_2, window_bounds = array<i64: 1, 64>}, {pipeline_mode = #tpu.pipeline_mode<synchronous>, transform_indices = @transform_3, window_bounds = array<i64: 20, 64, 640>}, {pipeline_mode = #tpu.pipeline_mode<synchronous>, transform_indices = @transform_4, window_bounds = array<i64: 1, 640>}, {pipeline_mode = #tpu.pipeline_mode<synchronous>, transform_indices = @transform_5, window_bounds = array<i64: 640, 245>}, {pipeline_mode = #tpu.pipeline_mode<synchronous>, transform_indices = @transform_6, window_bounds = array<i64: 1, 245>}, {pipeline_mode = #tpu.pipeline_mode<synchronous>, transform_indices = @transform_7, window_bounds = array<i64: 2, 245>}]} {
    %c0 = arith.constant 0 : index
    %c0_0 = arith.constant 0 : index
    %0 = vector.load %arg2[%c0, %c0_0] : memref<288x64xbf16, #tpu.memory_space<vmem>>, vector<288x64xbf16>
    %c0_1 = arith.constant 0 : index
    %c0_2 = arith.constant 0 : index
    %1 = vector.load %arg3[%c0_1, %c0_2] : memref<1x64xf32, #tpu.memory_space<vmem>>, vector<1x64xf32>
    %c0_3 = arith.constant 0 : index
    %c0_4 = arith.constant 0 : index
    %c0_5 = arith.constant 0 : index
    %c0_6 = arith.constant 0 : index
    %2 = vector.load %arg1[%c0_3, %c0_4, %c0_5, %c0_6] : memref<2x4x20x288xbf16, #tpu.memory_space<vmem>>, vector<1x1x20x288xbf16>
    %3 = vector.shape_cast %2 : vector<1x1x20x288xbf16> to vector<20x288xbf16>
    %cst = arith.constant dense<0.000000e+00> : vector<20x64xf32>
    %4 = tpu.matmul %3, %0, %cst {dimension_numbers = #tpu.dot_dimension_numbers<[1], [0], [0], [1], [0, 0, 1, 1], [], []>} : vector<20x288xbf16>, vector<288x64xbf16>, vector<20x64xf32> -> vector<20x64xf32>
    %c0_7 = arith.constant 0 : index
    %c1 = arith.constant 1 : index
    %c0_8 = arith.constant 0 : index
    %c0_9 = arith.constant 0 : index
    %5 = vector.load %arg1[%c0_7, %c1, %c0_8, %c0_9] : memref<2x4x20x288xbf16, #tpu.memory_space<vmem>>, vector<1x1x20x288xbf16>
    %6 = vector.shape_cast %5 : vector<1x1x20x288xbf16> to vector<20x288xbf16>
    %cst_10 = arith.constant dense<0.000000e+00> : vector<20x64xf32>
    %7 = tpu.matmul %6, %0, %cst_10 {dimension_numbers = #tpu.dot_dimension_numbers<[1], [0], [0], [1], [0, 0, 1, 1], [], []>} : vector<20x288xbf16>, vector<288x64xbf16>, vector<20x64xf32> -> vector<20x64xf32>
    %8 = arith.maximumf %4, %7 : vector<20x64xf32>
    %c0_11 = arith.constant 0 : index
    %c2 = arith.constant 2 : index
    %c0_12 = arith.constant 0 : index
    %c0_13 = arith.constant 0 : index
    %9 = vector.load %arg1[%c0_11, %c2, %c0_12, %c0_13] : memref<2x4x20x288xbf16, #tpu.memory_space<vmem>>, vector<1x1x20x288xbf16>
    %10 = vector.shape_cast %9 : vector<1x1x20x288xbf16> to vector<20x288xbf16>
    %cst_14 = arith.constant dense<0.000000e+00> : vector<20x64xf32>
    %11 = tpu.matmul %10, %0, %cst_14 {dimension_numbers = #tpu.dot_dimension_numbers<[1], [0], [0], [1], [0, 0, 1, 1], [], []>} : vector<20x288xbf16>, vector<288x64xbf16>, vector<20x64xf32> -> vector<20x64xf32>
    %12 = arith.maximumf %8, %11 : vector<20x64xf32>
    %c0_15 = arith.constant 0 : index
    %c3 = arith.constant 3 : index
    %c0_16 = arith.constant 0 : index
    %c0_17 = arith.constant 0 : index
    %13 = vector.load %arg1[%c0_15, %c3, %c0_16, %c0_17] : memref<2x4x20x288xbf16, #tpu.memory_space<vmem>>, vector<1x1x20x288xbf16>
    %14 = vector.shape_cast %13 : vector<1x1x20x288xbf16> to vector<20x288xbf16>
    %cst_18 = arith.constant dense<0.000000e+00> : vector<20x64xf32>
    %15 = tpu.matmul %14, %0, %cst_18 {dimension_numbers = #tpu.dot_dimension_numbers<[1], [0], [0], [1], [0, 0, 1, 1], [], []>} : vector<20x288xbf16>, vector<288x64xbf16>, vector<20x64xf32> -> vector<20x64xf32>
    %16 = arith.maximumf %12, %15 : vector<20x64xf32>
    %17 = vector.broadcast %1 : vector<1x64xf32> to vector<20x64xf32>
    %18 = arith.addf %16, %17 : vector<20x64xf32>
    %cst_19 = arith.constant 0.000000e+00 : f32
    %19 = vector.broadcast %cst_19 : f32 to vector<20x64xf32>
    %20 = arith.maximumf %18, %19 : vector<20x64xf32>
    %21 = arith.truncf %20 : vector<20x64xf32> to vector<20x64xbf16>
    %c1_20 = arith.constant 1 : index
    %c0_21 = arith.constant 0 : index
    %c0_22 = arith.constant 0 : index
    %c0_23 = arith.constant 0 : index
    %22 = vector.load %arg1[%c1_20, %c0_21, %c0_22, %c0_23] : memref<2x4x20x288xbf16, #tpu.memory_space<vmem>>, vector<1x1x20x288xbf16>
    %23 = vector.shape_cast %22 : vector<1x1x20x288xbf16> to vector<20x288xbf16>
    %cst_24 = arith.constant dense<0.000000e+00> : vector<20x64xf32>
    %24 = tpu.matmul %23, %0, %cst_24 {dimension_numbers = #tpu.dot_dimension_numbers<[1], [0], [0], [1], [0, 0, 1, 1], [], []>} : vector<20x288xbf16>, vector<288x64xbf16>, vector<20x64xf32> -> vector<20x64xf32>
    %c1_25 = arith.constant 1 : index
    %c1_26 = arith.constant 1 : index
    %c0_27 = arith.constant 0 : index
    %c0_28 = arith.constant 0 : index
    %25 = vector.load %arg1[%c1_25, %c1_26, %c0_27, %c0_28] : memref<2x4x20x288xbf16, #tpu.memory_space<vmem>>, vector<1x1x20x288xbf16>
    %26 = vector.shape_cast %25 : vector<1x1x20x288xbf16> to vector<20x288xbf16>
    %cst_29 = arith.constant dense<0.000000e+00> : vector<20x64xf32>
    %27 = tpu.matmul %26, %0, %cst_29 {dimension_numbers = #tpu.dot_dimension_numbers<[1], [0], [0], [1], [0, 0, 1, 1], [], []>} : vector<20x288xbf16>, vector<288x64xbf16>, vector<20x64xf32> -> vector<20x64xf32>
    %28 = arith.maximumf %24, %27 : vector<20x64xf32>
    %c1_30 = arith.constant 1 : index
    %c2_31 = arith.constant 2 : index
    %c0_32 = arith.constant 0 : index
    %c0_33 = arith.constant 0 : index
    %29 = vector.load %arg1[%c1_30, %c2_31, %c0_32, %c0_33] : memref<2x4x20x288xbf16, #tpu.memory_space<vmem>>, vector<1x1x20x288xbf16>
    %30 = vector.shape_cast %29 : vector<1x1x20x288xbf16> to vector<20x288xbf16>
    %cst_34 = arith.constant dense<0.000000e+00> : vector<20x64xf32>
    %31 = tpu.matmul %30, %0, %cst_34 {dimension_numbers = #tpu.dot_dimension_numbers<[1], [0], [0], [1], [0, 0, 1, 1], [], []>} : vector<20x288xbf16>, vector<288x64xbf16>, vector<20x64xf32> -> vector<20x64xf32>
    %32 = arith.maximumf %28, %31 : vector<20x64xf32>
    %c1_35 = arith.constant 1 : index
    %c3_36 = arith.constant 3 : index
    %c0_37 = arith.constant 0 : index
    %c0_38 = arith.constant 0 : index
    %33 = vector.load %arg1[%c1_35, %c3_36, %c0_37, %c0_38] : memref<2x4x20x288xbf16, #tpu.memory_space<vmem>>, vector<1x1x20x288xbf16>
    %34 = vector.shape_cast %33 : vector<1x1x20x288xbf16> to vector<20x288xbf16>
    %cst_39 = arith.constant dense<0.000000e+00> : vector<20x64xf32>
    %35 = tpu.matmul %34, %0, %cst_39 {dimension_numbers = #tpu.dot_dimension_numbers<[1], [0], [0], [1], [0, 0, 1, 1], [], []>} : vector<20x288xbf16>, vector<288x64xbf16>, vector<20x64xf32> -> vector<20x64xf32>
    %36 = arith.maximumf %32, %35 : vector<20x64xf32>
    %37 = vector.broadcast %1 : vector<1x64xf32> to vector<20x64xf32>
    %38 = arith.addf %36, %37 : vector<20x64xf32>
    %cst_40 = arith.constant 0.000000e+00 : f32
    %39 = vector.broadcast %cst_40 : f32 to vector<20x64xf32>
    %40 = arith.maximumf %38, %39 : vector<20x64xf32>
    %41 = arith.truncf %40 : vector<20x64xf32> to vector<20x64xbf16>
    %cst_41 = arith.constant 0.000000e+00 : f32
    %42 = vector.broadcast %cst_41 : f32 to vector<2x640xf32>
    %43 = vector.extract_strided_slice %21 {offsets = [0, 0], sizes = [1, 64], strides = [1, 1]} : vector<20x64xbf16> to vector<1x64xbf16>
    %44 = vector.extract_strided_slice %41 {offsets = [0, 0], sizes = [1, 64], strides = [1, 1]} : vector<20x64xbf16> to vector<1x64xbf16>
    %45 = tpu.concatenate %43, %44 in 0 : vector<1x64xbf16>, vector<1x64xbf16> -> vector<2x64xbf16>
    %c0_42 = arith.constant 0 : index
    %c0_43 = arith.constant 0 : index
    %c0_44 = arith.constant 0 : index
    %46 = vector.load %arg4[%c0_42, %c0_43, %c0_44] : memref<20x64x640xbf16, #tpu.memory_space<vmem>>, vector<1x64x640xbf16>
    %47 = vector.shape_cast %46 : vector<1x64x640xbf16> to vector<64x640xbf16>
    %cst_45 = arith.constant dense<0.000000e+00> : vector<2x640xf32>
    %48 = tpu.matmul %45, %47, %cst_45 {dimension_numbers = #tpu.dot_dimension_numbers<[1], [0], [0], [1], [0, 0, 1, 1], [], []>} : vector<2x64xbf16>, vector<64x640xbf16>, vector<2x640xf32> -> vector<2x640xf32>
    %49 = arith.addf %42, %48 : vector<2x640xf32>
    %50 = vector.extract_strided_slice %21 {offsets = [1, 0], sizes = [1, 64], strides = [1, 1]} : vector<20x64xbf16> to vector<1x64xbf16>
    %51 = vector.extract_strided_slice %41 {offsets = [1, 0], sizes = [1, 64], strides = [1, 1]} : vector<20x64xbf16> to vector<1x64xbf16>
    %52 = tpu.concatenate %50, %51 in 0 : vector<1x64xbf16>, vector<1x64xbf16> -> vector<2x64xbf16>
    %c1_46 = arith.constant 1 : index
    %c0_47 = arith.constant 0 : index
    %c0_48 = arith.constant 0 : index
    %53 = vector.load %arg4[%c1_46, %c0_47, %c0_48] : memref<20x64x640xbf16, #tpu.memory_space<vmem>>, vector<1x64x640xbf16>
    %54 = vector.shape_cast %53 : vector<1x64x640xbf16> to vector<64x640xbf16>
    %cst_49 = arith.constant dense<0.000000e+00> : vector<2x640xf32>
    %55 = tpu.matmul %52, %54, %cst_49 {dimension_numbers = #tpu.dot_dimension_numbers<[1], [0], [0], [1], [0, 0, 1, 1], [], []>} : vector<2x64xbf16>, vector<64x640xbf16>, vector<2x640xf32> -> vector<2x640xf32>
    %56 = arith.addf %49, %55 : vector<2x640xf32>
    %57 = vector.extract_strided_slice %21 {offsets = [2, 0], sizes = [1, 64], strides = [1, 1]} : vector<20x64xbf16> to vector<1x64xbf16>
    %58 = vector.extract_strided_slice %41 {offsets = [2, 0], sizes = [1, 64], strides = [1, 1]} : vector<20x64xbf16> to vector<1x64xbf16>
    %59 = tpu.concatenate %57, %58 in 0 : vector<1x64xbf16>, vector<1x64xbf16> -> vector<2x64xbf16>
    %c2_50 = arith.constant 2 : index
    %c0_51 = arith.constant 0 : index
    %c0_52 = arith.constant 0 : index
    %60 = vector.load %arg4[%c2_50, %c0_51, %c0_52] : memref<20x64x640xbf16, #tpu.memory_space<vmem>>, vector<1x64x640xbf16>
    %61 = vector.shape_cast %60 : vector<1x64x640xbf16> to vector<64x640xbf16>
    %cst_53 = arith.constant dense<0.000000e+00> : vector<2x640xf32>
    %62 = tpu.matmul %59, %61, %cst_53 {dimension_numbers = #tpu.dot_dimension_numbers<[1], [0], [0], [1], [0, 0, 1, 1], [], []>} : vector<2x64xbf16>, vector<64x640xbf16>, vector<2x640xf32> -> vector<2x640xf32>
    %63 = arith.addf %56, %62 : vector<2x640xf32>
    %64 = vector.extract_strided_slice %21 {offsets = [3, 0], sizes = [1, 64], strides = [1, 1]} : vector<20x64xbf16> to vector<1x64xbf16>
    %65 = vector.extract_strided_slice %41 {offsets = [3, 0], sizes = [1, 64], strides = [1, 1]} : vector<20x64xbf16> to vector<1x64xbf16>
    %66 = tpu.concatenate %64, %65 in 0 : vector<1x64xbf16>, vector<1x64xbf16> -> vector<2x64xbf16>
    %c3_54 = arith.constant 3 : index
    %c0_55 = arith.constant 0 : index
    %c0_56 = arith.constant 0 : index
    %67 = vector.load %arg4[%c3_54, %c0_55, %c0_56] : memref<20x64x640xbf16, #tpu.memory_space<vmem>>, vector<1x64x640xbf16>
    %68 = vector.shape_cast %67 : vector<1x64x640xbf16> to vector<64x640xbf16>
    %cst_57 = arith.constant dense<0.000000e+00> : vector<2x640xf32>
    %69 = tpu.matmul %66, %68, %cst_57 {dimension_numbers = #tpu.dot_dimension_numbers<[1], [0], [0], [1], [0, 0, 1, 1], [], []>} : vector<2x64xbf16>, vector<64x640xbf16>, vector<2x640xf32> -> vector<2x640xf32>
    %70 = arith.addf %63, %69 : vector<2x640xf32>
    %71 = vector.extract_strided_slice %21 {offsets = [4, 0], sizes = [1, 64], strides = [1, 1]} : vector<20x64xbf16> to vector<1x64xbf16>
    %72 = vector.extract_strided_slice %41 {offsets = [4, 0], sizes = [1, 64], strides = [1, 1]} : vector<20x64xbf16> to vector<1x64xbf16>
    %73 = tpu.concatenate %71, %72 in 0 : vector<1x64xbf16>, vector<1x64xbf16> -> vector<2x64xbf16>
    %c4 = arith.constant 4 : index
    %c0_58 = arith.constant 0 : index
    %c0_59 = arith.constant 0 : index
    %74 = vector.load %arg4[%c4, %c0_58, %c0_59] : memref<20x64x640xbf16, #tpu.memory_space<vmem>>, vector<1x64x640xbf16>
    %75 = vector.shape_cast %74 : vector<1x64x640xbf16> to vector<64x640xbf16>
    %cst_60 = arith.constant dense<0.000000e+00> : vector<2x640xf32>
    %76 = tpu.matmul %73, %75, %cst_60 {dimension_numbers = #tpu.dot_dimension_numbers<[1], [0], [0], [1], [0, 0, 1, 1], [], []>} : vector<2x64xbf16>, vector<64x640xbf16>, vector<2x640xf32> -> vector<2x640xf32>
    %77 = arith.addf %70, %76 : vector<2x640xf32>
    %78 = vector.extract_strided_slice %21 {offsets = [5, 0], sizes = [1, 64], strides = [1, 1]} : vector<20x64xbf16> to vector<1x64xbf16>
    %79 = vector.extract_strided_slice %41 {offsets = [5, 0], sizes = [1, 64], strides = [1, 1]} : vector<20x64xbf16> to vector<1x64xbf16>
    %80 = tpu.concatenate %78, %79 in 0 : vector<1x64xbf16>, vector<1x64xbf16> -> vector<2x64xbf16>
    %c5 = arith.constant 5 : index
    %c0_61 = arith.constant 0 : index
    %c0_62 = arith.constant 0 : index
    %81 = vector.load %arg4[%c5, %c0_61, %c0_62] : memref<20x64x640xbf16, #tpu.memory_space<vmem>>, vector<1x64x640xbf16>
    %82 = vector.shape_cast %81 : vector<1x64x640xbf16> to vector<64x640xbf16>
    %cst_63 = arith.constant dense<0.000000e+00> : vector<2x640xf32>
    %83 = tpu.matmul %80, %82, %cst_63 {dimension_numbers = #tpu.dot_dimension_numbers<[1], [0], [0], [1], [0, 0, 1, 1], [], []>} : vector<2x64xbf16>, vector<64x640xbf16>, vector<2x640xf32> -> vector<2x640xf32>
    %84 = arith.addf %77, %83 : vector<2x640xf32>
    %85 = vector.extract_strided_slice %21 {offsets = [6, 0], sizes = [1, 64], strides = [1, 1]} : vector<20x64xbf16> to vector<1x64xbf16>
    %86 = vector.extract_strided_slice %41 {offsets = [6, 0], sizes = [1, 64], strides = [1, 1]} : vector<20x64xbf16> to vector<1x64xbf16>
    %87 = tpu.concatenate %85, %86 in 0 : vector<1x64xbf16>, vector<1x64xbf16> -> vector<2x64xbf16>
    %c6 = arith.constant 6 : index
    %c0_64 = arith.constant 0 : index
    %c0_65 = arith.constant 0 : index
    %88 = vector.load %arg4[%c6, %c0_64, %c0_65] : memref<20x64x640xbf16, #tpu.memory_space<vmem>>, vector<1x64x640xbf16>
    %89 = vector.shape_cast %88 : vector<1x64x640xbf16> to vector<64x640xbf16>
    %cst_66 = arith.constant dense<0.000000e+00> : vector<2x640xf32>
    %90 = tpu.matmul %87, %89, %cst_66 {dimension_numbers = #tpu.dot_dimension_numbers<[1], [0], [0], [1], [0, 0, 1, 1], [], []>} : vector<2x64xbf16>, vector<64x640xbf16>, vector<2x640xf32> -> vector<2x640xf32>
    %91 = arith.addf %84, %90 : vector<2x640xf32>
    %92 = vector.extract_strided_slice %21 {offsets = [7, 0], sizes = [1, 64], strides = [1, 1]} : vector<20x64xbf16> to vector<1x64xbf16>
    %93 = vector.extract_strided_slice %41 {offsets = [7, 0], sizes = [1, 64], strides = [1, 1]} : vector<20x64xbf16> to vector<1x64xbf16>
    %94 = tpu.concatenate %92, %93 in 0 : vector<1x64xbf16>, vector<1x64xbf16> -> vector<2x64xbf16>
    %c7 = arith.constant 7 : index
    %c0_67 = arith.constant 0 : index
    %c0_68 = arith.constant 0 : index
    %95 = vector.load %arg4[%c7, %c0_67, %c0_68] : memref<20x64x640xbf16, #tpu.memory_space<vmem>>, vector<1x64x640xbf16>
    %96 = vector.shape_cast %95 : vector<1x64x640xbf16> to vector<64x640xbf16>
    %cst_69 = arith.constant dense<0.000000e+00> : vector<2x640xf32>
    %97 = tpu.matmul %94, %96, %cst_69 {dimension_numbers = #tpu.dot_dimension_numbers<[1], [0], [0], [1], [0, 0, 1, 1], [], []>} : vector<2x64xbf16>, vector<64x640xbf16>, vector<2x640xf32> -> vector<2x640xf32>
    %98 = arith.addf %91, %97 : vector<2x640xf32>
    %99 = vector.extract_strided_slice %21 {offsets = [8, 0], sizes = [1, 64], strides = [1, 1]} : vector<20x64xbf16> to vector<1x64xbf16>
    %100 = vector.extract_strided_slice %41 {offsets = [8, 0], sizes = [1, 64], strides = [1, 1]} : vector<20x64xbf16> to vector<1x64xbf16>
    %101 = tpu.concatenate %99, %100 in 0 : vector<1x64xbf16>, vector<1x64xbf16> -> vector<2x64xbf16>
    %c8 = arith.constant 8 : index
    %c0_70 = arith.constant 0 : index
    %c0_71 = arith.constant 0 : index
    %102 = vector.load %arg4[%c8, %c0_70, %c0_71] : memref<20x64x640xbf16, #tpu.memory_space<vmem>>, vector<1x64x640xbf16>
    %103 = vector.shape_cast %102 : vector<1x64x640xbf16> to vector<64x640xbf16>
    %cst_72 = arith.constant dense<0.000000e+00> : vector<2x640xf32>
    %104 = tpu.matmul %101, %103, %cst_72 {dimension_numbers = #tpu.dot_dimension_numbers<[1], [0], [0], [1], [0, 0, 1, 1], [], []>} : vector<2x64xbf16>, vector<64x640xbf16>, vector<2x640xf32> -> vector<2x640xf32>
    %105 = arith.addf %98, %104 : vector<2x640xf32>
    %106 = vector.extract_strided_slice %21 {offsets = [9, 0], sizes = [1, 64], strides = [1, 1]} : vector<20x64xbf16> to vector<1x64xbf16>
    %107 = vector.extract_strided_slice %41 {offsets = [9, 0], sizes = [1, 64], strides = [1, 1]} : vector<20x64xbf16> to vector<1x64xbf16>
    %108 = tpu.concatenate %106, %107 in 0 : vector<1x64xbf16>, vector<1x64xbf16> -> vector<2x64xbf16>
    %c9 = arith.constant 9 : index
    %c0_73 = arith.constant 0 : index
    %c0_74 = arith.constant 0 : index
    %109 = vector.load %arg4[%c9, %c0_73, %c0_74] : memref<20x64x640xbf16, #tpu.memory_space<vmem>>, vector<1x64x640xbf16>
    %110 = vector.shape_cast %109 : vector<1x64x640xbf16> to vector<64x640xbf16>
    %cst_75 = arith.constant dense<0.000000e+00> : vector<2x640xf32>
    %111 = tpu.matmul %108, %110, %cst_75 {dimension_numbers = #tpu.dot_dimension_numbers<[1], [0], [0], [1], [0, 0, 1, 1], [], []>} : vector<2x64xbf16>, vector<64x640xbf16>, vector<2x640xf32> -> vector<2x640xf32>
    %112 = arith.addf %105, %111 : vector<2x640xf32>
    %113 = vector.extract_strided_slice %21 {offsets = [10, 0], sizes = [1, 64], strides = [1, 1]} : vector<20x64xbf16> to vector<1x64xbf16>
    %114 = vector.extract_strided_slice %41 {offsets = [10, 0], sizes = [1, 64], strides = [1, 1]} : vector<20x64xbf16> to vector<1x64xbf16>
    %115 = tpu.concatenate %113, %114 in 0 : vector<1x64xbf16>, vector<1x64xbf16> -> vector<2x64xbf16>
    %c10 = arith.constant 10 : index
    %c0_76 = arith.constant 0 : index
    %c0_77 = arith.constant 0 : index
    %116 = vector.load %arg4[%c10, %c0_76, %c0_77] : memref<20x64x640xbf16, #tpu.memory_space<vmem>>, vector<1x64x640xbf16>
    %117 = vector.shape_cast %116 : vector<1x64x640xbf16> to vector<64x640xbf16>
    %cst_78 = arith.constant dense<0.000000e+00> : vector<2x640xf32>
    %118 = tpu.matmul %115, %117, %cst_78 {dimension_numbers = #tpu.dot_dimension_numbers<[1], [0], [0], [1], [0, 0, 1, 1], [], []>} : vector<2x64xbf16>, vector<64x640xbf16>, vector<2x640xf32> -> vector<2x640xf32>
    %119 = arith.addf %112, %118 : vector<2x640xf32>
    %120 = vector.extract_strided_slice %21 {offsets = [11, 0], sizes = [1, 64], strides = [1, 1]} : vector<20x64xbf16> to vector<1x64xbf16>
    %121 = vector.extract_strided_slice %41 {offsets = [11, 0], sizes = [1, 64], strides = [1, 1]} : vector<20x64xbf16> to vector<1x64xbf16>
    %122 = tpu.concatenate %120, %121 in 0 : vector<1x64xbf16>, vector<1x64xbf16> -> vector<2x64xbf16>
    %c11 = arith.constant 11 : index
    %c0_79 = arith.constant 0 : index
    %c0_80 = arith.constant 0 : index
    %123 = vector.load %arg4[%c11, %c0_79, %c0_80] : memref<20x64x640xbf16, #tpu.memory_space<vmem>>, vector<1x64x640xbf16>
    %124 = vector.shape_cast %123 : vector<1x64x640xbf16> to vector<64x640xbf16>
    %cst_81 = arith.constant dense<0.000000e+00> : vector<2x640xf32>
    %125 = tpu.matmul %122, %124, %cst_81 {dimension_numbers = #tpu.dot_dimension_numbers<[1], [0], [0], [1], [0, 0, 1, 1], [], []>} : vector<2x64xbf16>, vector<64x640xbf16>, vector<2x640xf32> -> vector<2x640xf32>
    %126 = arith.addf %119, %125 : vector<2x640xf32>
    %127 = vector.extract_strided_slice %21 {offsets = [12, 0], sizes = [1, 64], strides = [1, 1]} : vector<20x64xbf16> to vector<1x64xbf16>
    %128 = vector.extract_strided_slice %41 {offsets = [12, 0], sizes = [1, 64], strides = [1, 1]} : vector<20x64xbf16> to vector<1x64xbf16>
    %129 = tpu.concatenate %127, %128 in 0 : vector<1x64xbf16>, vector<1x64xbf16> -> vector<2x64xbf16>
    %c12 = arith.constant 12 : index
    %c0_82 = arith.constant 0 : index
    %c0_83 = arith.constant 0 : index
    %130 = vector.load %arg4[%c12, %c0_82, %c0_83] : memref<20x64x640xbf16, #tpu.memory_space<vmem>>, vector<1x64x640xbf16>
    %131 = vector.shape_cast %130 : vector<1x64x640xbf16> to vector<64x640xbf16>
    %cst_84 = arith.constant dense<0.000000e+00> : vector<2x640xf32>
    %132 = tpu.matmul %129, %131, %cst_84 {dimension_numbers = #tpu.dot_dimension_numbers<[1], [0], [0], [1], [0, 0, 1, 1], [], []>} : vector<2x64xbf16>, vector<64x640xbf16>, vector<2x640xf32> -> vector<2x640xf32>
    %133 = arith.addf %126, %132 : vector<2x640xf32>
    %134 = vector.extract_strided_slice %21 {offsets = [13, 0], sizes = [1, 64], strides = [1, 1]} : vector<20x64xbf16> to vector<1x64xbf16>
    %135 = vector.extract_strided_slice %41 {offsets = [13, 0], sizes = [1, 64], strides = [1, 1]} : vector<20x64xbf16> to vector<1x64xbf16>
    %136 = tpu.concatenate %134, %135 in 0 : vector<1x64xbf16>, vector<1x64xbf16> -> vector<2x64xbf16>
    %c13 = arith.constant 13 : index
    %c0_85 = arith.constant 0 : index
    %c0_86 = arith.constant 0 : index
    %137 = vector.load %arg4[%c13, %c0_85, %c0_86] : memref<20x64x640xbf16, #tpu.memory_space<vmem>>, vector<1x64x640xbf16>
    %138 = vector.shape_cast %137 : vector<1x64x640xbf16> to vector<64x640xbf16>
    %cst_87 = arith.constant dense<0.000000e+00> : vector<2x640xf32>
    %139 = tpu.matmul %136, %138, %cst_87 {dimension_numbers = #tpu.dot_dimension_numbers<[1], [0], [0], [1], [0, 0, 1, 1], [], []>} : vector<2x64xbf16>, vector<64x640xbf16>, vector<2x640xf32> -> vector<2x640xf32>
    %140 = arith.addf %133, %139 : vector<2x640xf32>
    %141 = vector.extract_strided_slice %21 {offsets = [14, 0], sizes = [1, 64], strides = [1, 1]} : vector<20x64xbf16> to vector<1x64xbf16>
    %142 = vector.extract_strided_slice %41 {offsets = [14, 0], sizes = [1, 64], strides = [1, 1]} : vector<20x64xbf16> to vector<1x64xbf16>
    %143 = tpu.concatenate %141, %142 in 0 : vector<1x64xbf16>, vector<1x64xbf16> -> vector<2x64xbf16>
    %c14 = arith.constant 14 : index
    %c0_88 = arith.constant 0 : index
    %c0_89 = arith.constant 0 : index
    %144 = vector.load %arg4[%c14, %c0_88, %c0_89] : memref<20x64x640xbf16, #tpu.memory_space<vmem>>, vector<1x64x640xbf16>
    %145 = vector.shape_cast %144 : vector<1x64x640xbf16> to vector<64x640xbf16>
    %cst_90 = arith.constant dense<0.000000e+00> : vector<2x640xf32>
    %146 = tpu.matmul %143, %145, %cst_90 {dimension_numbers = #tpu.dot_dimension_numbers<[1], [0], [0], [1], [0, 0, 1, 1], [], []>} : vector<2x64xbf16>, vector<64x640xbf16>, vector<2x640xf32> -> vector<2x640xf32>
    %147 = arith.addf %140, %146 : vector<2x640xf32>
    %148 = vector.extract_strided_slice %21 {offsets = [15, 0], sizes = [1, 64], strides = [1, 1]} : vector<20x64xbf16> to vector<1x64xbf16>
    %149 = vector.extract_strided_slice %41 {offsets = [15, 0], sizes = [1, 64], strides = [1, 1]} : vector<20x64xbf16> to vector<1x64xbf16>
    %150 = tpu.concatenate %148, %149 in 0 : vector<1x64xbf16>, vector<1x64xbf16> -> vector<2x64xbf16>
    %c15 = arith.constant 15 : index
    %c0_91 = arith.constant 0 : index
    %c0_92 = arith.constant 0 : index
    %151 = vector.load %arg4[%c15, %c0_91, %c0_92] : memref<20x64x640xbf16, #tpu.memory_space<vmem>>, vector<1x64x640xbf16>
    %152 = vector.shape_cast %151 : vector<1x64x640xbf16> to vector<64x640xbf16>
    %cst_93 = arith.constant dense<0.000000e+00> : vector<2x640xf32>
    %153 = tpu.matmul %150, %152, %cst_93 {dimension_numbers = #tpu.dot_dimension_numbers<[1], [0], [0], [1], [0, 0, 1, 1], [], []>} : vector<2x64xbf16>, vector<64x640xbf16>, vector<2x640xf32> -> vector<2x640xf32>
    %154 = arith.addf %147, %153 : vector<2x640xf32>
    %155 = vector.extract_strided_slice %21 {offsets = [16, 0], sizes = [1, 64], strides = [1, 1]} : vector<20x64xbf16> to vector<1x64xbf16>
    %156 = vector.extract_strided_slice %41 {offsets = [16, 0], sizes = [1, 64], strides = [1, 1]} : vector<20x64xbf16> to vector<1x64xbf16>
    %157 = tpu.concatenate %155, %156 in 0 : vector<1x64xbf16>, vector<1x64xbf16> -> vector<2x64xbf16>
    %c16 = arith.constant 16 : index
    %c0_94 = arith.constant 0 : index
    %c0_95 = arith.constant 0 : index
    %158 = vector.load %arg4[%c16, %c0_94, %c0_95] : memref<20x64x640xbf16, #tpu.memory_space<vmem>>, vector<1x64x640xbf16>
    %159 = vector.shape_cast %158 : vector<1x64x640xbf16> to vector<64x640xbf16>
    %cst_96 = arith.constant dense<0.000000e+00> : vector<2x640xf32>
    %160 = tpu.matmul %157, %159, %cst_96 {dimension_numbers = #tpu.dot_dimension_numbers<[1], [0], [0], [1], [0, 0, 1, 1], [], []>} : vector<2x64xbf16>, vector<64x640xbf16>, vector<2x640xf32> -> vector<2x640xf32>
    %161 = arith.addf %154, %160 : vector<2x640xf32>
    %162 = vector.extract_strided_slice %21 {offsets = [17, 0], sizes = [1, 64], strides = [1, 1]} : vector<20x64xbf16> to vector<1x64xbf16>
    %163 = vector.extract_strided_slice %41 {offsets = [17, 0], sizes = [1, 64], strides = [1, 1]} : vector<20x64xbf16> to vector<1x64xbf16>
    %164 = tpu.concatenate %162, %163 in 0 : vector<1x64xbf16>, vector<1x64xbf16> -> vector<2x64xbf16>
    %c17 = arith.constant 17 : index
    %c0_97 = arith.constant 0 : index
    %c0_98 = arith.constant 0 : index
    %165 = vector.load %arg4[%c17, %c0_97, %c0_98] : memref<20x64x640xbf16, #tpu.memory_space<vmem>>, vector<1x64x640xbf16>
    %166 = vector.shape_cast %165 : vector<1x64x640xbf16> to vector<64x640xbf16>
    %cst_99 = arith.constant dense<0.000000e+00> : vector<2x640xf32>
    %167 = tpu.matmul %164, %166, %cst_99 {dimension_numbers = #tpu.dot_dimension_numbers<[1], [0], [0], [1], [0, 0, 1, 1], [], []>} : vector<2x64xbf16>, vector<64x640xbf16>, vector<2x640xf32> -> vector<2x640xf32>
    %168 = arith.addf %161, %167 : vector<2x640xf32>
    %169 = vector.extract_strided_slice %21 {offsets = [18, 0], sizes = [1, 64], strides = [1, 1]} : vector<20x64xbf16> to vector<1x64xbf16>
    %170 = vector.extract_strided_slice %41 {offsets = [18, 0], sizes = [1, 64], strides = [1, 1]} : vector<20x64xbf16> to vector<1x64xbf16>
    %171 = tpu.concatenate %169, %170 in 0 : vector<1x64xbf16>, vector<1x64xbf16> -> vector<2x64xbf16>
    %c18 = arith.constant 18 : index
    %c0_100 = arith.constant 0 : index
    %c0_101 = arith.constant 0 : index
    %172 = vector.load %arg4[%c18, %c0_100, %c0_101] : memref<20x64x640xbf16, #tpu.memory_space<vmem>>, vector<1x64x640xbf16>
    %173 = vector.shape_cast %172 : vector<1x64x640xbf16> to vector<64x640xbf16>
    %cst_102 = arith.constant dense<0.000000e+00> : vector<2x640xf32>
    %174 = tpu.matmul %171, %173, %cst_102 {dimension_numbers = #tpu.dot_dimension_numbers<[1], [0], [0], [1], [0, 0, 1, 1], [], []>} : vector<2x64xbf16>, vector<64x640xbf16>, vector<2x640xf32> -> vector<2x640xf32>
    %175 = arith.addf %168, %174 : vector<2x640xf32>
    %176 = vector.extract_strided_slice %21 {offsets = [19, 0], sizes = [1, 64], strides = [1, 1]} : vector<20x64xbf16> to vector<1x64xbf16>
    %177 = vector.extract_strided_slice %41 {offsets = [19, 0], sizes = [1, 64], strides = [1, 1]} : vector<20x64xbf16> to vector<1x64xbf16>
    %178 = tpu.concatenate %176, %177 in 0 : vector<1x64xbf16>, vector<1x64xbf16> -> vector<2x64xbf16>
    %c19 = arith.constant 19 : index
    %c0_103 = arith.constant 0 : index
    %c0_104 = arith.constant 0 : index
    %179 = vector.load %arg4[%c19, %c0_103, %c0_104] : memref<20x64x640xbf16, #tpu.memory_space<vmem>>, vector<1x64x640xbf16>
    %180 = vector.shape_cast %179 : vector<1x64x640xbf16> to vector<64x640xbf16>
    %cst_105 = arith.constant dense<0.000000e+00> : vector<2x640xf32>
    %181 = tpu.matmul %178, %180, %cst_105 {dimension_numbers = #tpu.dot_dimension_numbers<[1], [0], [0], [1], [0, 0, 1, 1], [], []>} : vector<2x64xbf16>, vector<64x640xbf16>, vector<2x640xf32> -> vector<2x640xf32>
    %182 = arith.addf %175, %181 : vector<2x640xf32>
    %c0_106 = arith.constant 0 : index
    %c0_107 = arith.constant 0 : index
    %183 = vector.load %arg5[%c0_106, %c0_107] : memref<1x640xf32, #tpu.memory_space<vmem>>, vector<1x640xf32>
    %184 = vector.broadcast %183 : vector<1x640xf32> to vector<2x640xf32>
    %185 = arith.addf %182, %184 : vector<2x640xf32>
    %186 = arith.truncf %185 : vector<2x640xf32> to vector<2x640xbf16>
    %c0_108 = arith.constant 0 : index
    %c0_109 = arith.constant 0 : index
    %187 = vector.load %arg6[%c0_108, %c0_109] : memref<640x245xbf16, #tpu.memory_space<vmem>>, vector<640x245xbf16>
    %cst_110 = arith.constant dense<0.000000e+00> : vector<2x245xf32>
    %188 = tpu.matmul %186, %187, %cst_110 {dimension_numbers = #tpu.dot_dimension_numbers<[1], [0], [0], [1], [0, 0, 1, 1], [], []>} : vector<2x640xbf16>, vector<640x245xbf16>, vector<2x245xf32> -> vector<2x245xf32>
    %c0_111 = arith.constant 0 : index
    %c0_112 = arith.constant 0 : index
    %189 = vector.load %arg7[%c0_111, %c0_112] : memref<1x245xf32, #tpu.memory_space<vmem>>, vector<1x245xf32>
    %190 = vector.broadcast %189 : vector<1x245xf32> to vector<2x245xf32>
    %191 = arith.addf %188, %190 : vector<2x245xf32>
    %c0_113 = arith.constant 0 : index
    %c0_114 = arith.constant 0 : index
    %192 = vector.load %arg8[%c0_113, %c0_114] : memref<2x245xf32, #tpu.memory_space<vmem>>, vector<2x245xf32>
    tpu.vector_store %arg8[%c0_113, %c0_114], %191 {strides = array<i32>} : memref<2x245xf32, #tpu.memory_space<vmem>>, vector<2x245xf32>,
    return
  }
  func.func @transform_0(%arg0: i32) -> (i32, i32, i32, i32) {
    %c0_i32 = arith.constant 0 : i32
    %c0_i32_0 = arith.constant 0 : i32
    %c0_i32_1 = arith.constant 0 : i32
    %c0_i32_2 = arith.constant 0 : i32
    %c0_i32_3 = arith.constant 0 : i32
    return %c0_i32, %c0_i32_0, %c0_i32_1, %c0_i32_2 : i32, i32, i32, i32
  }
  func.func @transform_1(%arg0: i32) -> (i32, i32) {
    %c0_i32 = arith.constant 0 : i32
    %c0_i32_0 = arith.constant 0 : i32
    %c0_i32_1 = arith.constant 0 : i32
    return %c0_i32, %c0_i32_0 : i32, i32
  }
  func.func @transform_2(%arg0: i32) -> (i32, i32) {
    %c0_i32 = arith.constant 0 : i32
    %c0_i32_0 = arith.constant 0 : i32
    %c0_i32_1 = arith.constant 0 : i32
    return %c0_i32, %c0_i32_0 : i32, i32
  }
  func.func @transform_3(%arg0: i32) -> (i32, i32, i32) {
    %c0_i32 = arith.constant 0 : i32
    %c0_i32_0 = arith.constant 0 : i32
    %c0_i32_1 = arith.constant 0 : i32
    %c0_i32_2 = arith.constant 0 : i32
    return %c0_i32, %c0_i32_0, %c0_i32_1 : i32, i32, i32
  }
  func.func @transform_4(%arg0: i32) -> (i32, i32) {
    %c0_i32 = arith.constant 0 : i32
    %c0_i32_0 = arith.constant 0 : i32
    %c0_i32_1 = arith.constant 0 : i32
    return %c0_i32, %c0_i32_0 : i32, i32
  }
  func.func @transform_5(%arg0: i32) -> (i32, i32) {
    %c0_i32 = arith.constant 0 : i32
    %c0_i32_0 = arith.constant 0 : i32
    %c0_i32_1 = arith.constant 0 : i32
    return %c0_i32, %c0_i32_0 : i32, i32
  }
  func.func @transform_6(%arg0: i32) -> (i32, i32) {
    %c0_i32 = arith.constant 0 : i32
    %c0_i32_0 = arith.constant 0 : i32
    %c0_i32_1 = arith.constant 0 : i32
    return %c0_i32, %c0_i32_0 : i32, i32
  }
  func.func @transform_7(%arg0: i32) -> (i32, i32) {
    %c0_i32 = arith.constant 0 : i32
    %c0_i32_0 = arith.constant 0 : i32
    %c0_i32_1 = arith.constant 0 : i32
    return %c0_i32, %c0_i32_0 : i32, i32
  }
}

</mosaic_0001>

<llo_original>
// kernel: cnn_first_forward.3
$region0: #{cnn_first_forward.3}
  #allocation0 [shape = 'u32[]', space=smem, size = 0x4, offset = 0x4, fixed_abs, tag = 'smem constant byte address 0x4 - core index']
  #allocation1 [shape = 'u32[144,128]{1,0:T(1,128)}', space=vmem, size = 0x12000, scoped, tag = 'internal scratch']
  %s0 = inlined_call_operand.vmem [shape: bf16[2,4,75,1216], index: 0, kind: input, shape index: {}]
  %s1 = inlined_call_operand.vmem [shape: bf16[16,75], index: 1, kind: input, shape index: {}]
  %s2 = inlined_call_operand.vmem [shape: f32[16,1], index: 2, kind: input, shape index: {}]
  %s3 = inlined_call_operand.vmem [shape: bf16[2,16,1216], index: 3, kind: output, shape index: {}]
  %s4 = sld [smem:[#allocation0]]
  $region45: #{cnn_first_forward.3} parent=0
    _
  %s6 = ssub.s32 1, %s4
  %s7 = scalar_select 0, %s6, %s4
  loop: start=0, step=1, limit=4
  $region2: #{cnn_first_forward.3} parent=0 // loop_pre_header
    _
  $region3: #{cnn_first_forward.3} parent=0 // loop_header
    %s9 = sphi 0, %s13
    %p10 = scmp.ge.s32.totalorder %s9, 4
    %s19 = sphi 0, %s21
    %s22 = sphi 0, %s19
    %s23 = sphi 0, %s22
    %s39 = sphi 0, %s23
    %s43 = sphi 0, %s43
    %s45 = sphi 0, %s43
    %s46 = sphi 0, %s45
    %s60 = sphi 0, %s46
    %s64 = sphi 0, %s64
    %s66 = sphi 0, %s64
    %s67 = sphi 0, %s66
    %s81 = sphi 0, %s67
    %s87 = sphi 0, %s89
    %s90 = sphi 0, %s87
    %s91 = sphi 0, %s90
    %s107 = sphi 0, %s91
  $region4: #{cnn_first_forward.3} parent=0 // loop_header_branch
    %12 = sbr.rel (%p10) target = $region8
  $region5: #{cnn_first_forward.3} parent=0 // loop_body
    %s14 = ssub.s32 %s9, 1
    %s15 = ssub.s32 %s9, 2
    %s16 = sadd.s32 %s9, 1
    %s17 = ssub.s32 %s9, %s16
    %p18 = scmp.eq.s32.totalorder %s17, 0
    %s20 = sadd.s32 %s19, 1
    %s21 = scalar_select %p18, %s19, %s20
    %p24 = pneg %p18
    %p25 = scmp.eq.s32.totalorder %s9, 1
    %p26 = por %p24, %p25
    %p27 = scmp.ne.s32.totalorder %s19, %s22
    %p28 = scmp.eq.s32.totalorder %s9, 0
    %p29 = por %p27, %p28
    %p30 = scmp.ne.s32.totalorder %s19, %s22
    %p31 = scmp.eq.s32.totalorder %s14, 1
    %p32 = por %p30, %p31
    %p33 = scmp.ne.s32.totalorder %s22, %s23
    %p34 = scmp.eq.s32.totalorder %s14, 0
    %p35 = por %p33, %p34
    %p36 = scmp.ne.s32.totalorder %s22, %s23
    %p37 = scmp.eq.s32.totalorder %s15, 1
    %p38 = por %p36, %p37
    %p40 = scmp.ne.s32.totalorder %s23, %s39
    %p41 = scmp.eq.s32.totalorder %s15, 0
    %p42 = por %p40, %p41
    %s44 = sadd.s32 %s43, 1
    %p47 = scmp.eq.s32.totalorder %s9, 1
    %p48 = scmp.ne.s32.totalorder %s43, %s45
    %p49 = scmp.eq.s32.totalorder %s9, 0
    %p50 = por %p48, %p49
    %p51 = scmp.ne.s32.totalorder %s43, %s45
    %p52 = scmp.eq.s32.totalorder %s14, 1
    %p53 = por %p51, %p52
    %p54 = scmp.ne.s32.totalorder %s45, %s46
    %p55 = scmp.eq.s32.totalorder %s14, 0
    %p56 = por %p54, %p55
    %p57 = scmp.ne.s32.totalorder %s45, %s46
    %p58 = scmp.eq.s32.totalorder %s15, 1
    %p59 = por %p57, %p58
    %p61 = scmp.ne.s32.totalorder %s46, %s60
    %p62 = scmp.eq.s32.totalorder %s15, 0
    %p63 = por %p61, %p62
    %s65 = sadd.s32 %s64, 1
    %p68 = scmp.eq.s32.totalorder %s9, 1
    %p69 = scmp.ne.s32.totalorder %s64, %s66
    %p70 = scmp.eq.s32.totalorder %s9, 0
    %p71 = por %p69, %p70
    %p72 = scmp.ne.s32.totalorder %s64, %s66
    %p73 = scmp.eq.s32.totalorder %s14, 1
    %p74 = por %p72, %p73
    %p75 = scmp.ne.s32.totalorder %s66, %s67
    %p76 = scmp.eq.s32.totalorder %s14, 0
    %p77 = por %p75, %p76
    %p78 = scmp.ne.s32.totalorder %s66, %s67
    %p79 = scmp.eq.s32.totalorder %s15, 1
    %p80 = por %p78, %p79
    %p82 = scmp.ne.s32.totalorder %s67, %s81
    %p83 = scmp.eq.s32.totalorder %s15, 0
    %p84 = por %p82, %p83
    %s85 = ssub.s32 %s9, %s16
    %p86 = scmp.eq.s32.totalorder %s85, 0
    %s88 = sadd.s32 %s87, 1
    %s89 = scalar_select %p86, %s87, %s88
    %p92 = pneg %p86
    %p93 = scmp.eq.s32.totalorder %s9, 1
    %p94 = por %p92, %p93
    %p95 = scmp.ne.s32.totalorder %s87, %s90
    %p96 = scmp.eq.s32.totalorder %s9, 0
    %p97 = por %p95, %p96
    %p98 = scmp.ne.s32.totalorder %s87, %s90
    %p99 = scmp.eq.s32.totalorder %s14, 1
    %p100 = por %p98, %p99
    %p101 = scmp.ne.s32.totalorder %s90, %s91
    %p102 = scmp.eq.s32.totalorder %s14, 0
    %p103 = por %p101, %p102
    %p104 = scmp.ne.s32.totalorder %s90, %s91
    %p105 = scmp.eq.s32.totalorder %s15, 1
    %p106 = por %p104, %p105
    %p108 = scmp.ne.s32.totalorder %s91, %s107
    %p109 = scmp.eq.s32.totalorder %s15, 0
    %p110 = por %p108, %p109
    %p111 = scmp.le.s32.totalorder 1, %s9
    %p112 = scmp.lt.s32.totalorder %s9, 3
    %p113 = pnand %p111, %p112
    %p114 = pneg %p113
    // Predicated region
    $region9: #{cnn_first_forward.3} parent=5 // pred_check
      _
    $region10: #{cnn_first_forward.3} parent=5 // pred_check_branch
      %116 = sbr.rel (%p113) target = $region12
    $region11: #{cnn_first_forward.3} parent=5 // pred_region
      %s117 = ssub.s32 %s9, 1
      // Predicated region
      $region13: #{cnn_first_forward.3} parent=11 // pred_check
        %p118 = pneg %p56
      $region14: #{cnn_first_forward.3} parent=11 // pred_check_branch
        %120 = sbr.rel (%p118) target = $region16
      $region15: #{cnn_first_forward.3} parent=11 // pred_region
        _
      $region16: #{cnn_first_forward.3} parent=11 // pred_fallthru
        _
      // Predicated region
      $region17: #{cnn_first_forward.3} parent=11 // pred_check
        %p121 = pneg %p77
      $region18: #{cnn_first_forward.3} parent=11 // pred_check_branch
        %123 = sbr.rel (%p121) target = $region20
      $region19: #{cnn_first_forward.3} parent=11 // pred_region
        _
      $region20: #{cnn_first_forward.3} parent=11 // pred_fallthru
        _
    $region12: #{cnn_first_forward.3} parent=5 // pred_fallthru
      _
    %p124 = scmp.lt.s32.totalorder %s9, 2
    // Predicated region
    $region21: #{cnn_first_forward.3} parent=5 // pred_check
      %p125 = pneg %p124
    $region22: #{cnn_first_forward.3} parent=5 // pred_check_branch
      %127 = sbr.rel (%p125) target = $region24
    $region23: #{cnn_first_forward.3} parent=5 // pred_region
      // Predicated region
      $region25: #{cnn_first_forward.3} parent=23 // pred_check
        %p128 = pneg %p29
      $region26: #{cnn_first_forward.3} parent=23 // pred_check_branch
        %130 = sbr.rel (%p128) target = $region28
      $region27: #{cnn_first_forward.3} parent=23 // pred_region
        %p131 = scmp.lt.s32.totalorder %s9, 1
        %s132 = scalar_select %p131, %s9, 1
        %s133 = smul.addr %s132, 400
        %s134 = smul.addr %s133, 4
        %s135 = scalar_lea.vmem %s0, %s134
      $region28: #{cnn_first_forward.3} parent=23 // pred_fallthru
        _
    $region24: #{cnn_first_forward.3} parent=5 // pred_fallthru
      _
    %p136 = scmp.le.s32.totalorder 1, %s9
    %p137 = scmp.lt.s32.totalorder %s9, 3
    %p138 = pnand %p136, %p137
    %p139 = pneg %p138
    // Predicated region
    $region29: #{cnn_first_forward.3} parent=5 // pred_check
      _
    $region30: #{cnn_first_forward.3} parent=5 // pred_check_branch
      %141 = sbr.rel (%p138) target = $region32
    $region31: #{cnn_first_forward.3} parent=5 // pred_region
      %s142 = ssub.s32 %s9, 1
      %p143 = scmp.lt.s32.totalorder %s14, 1
      %s144 = scalar_select %p143, %s14, 1
      %s145 = smul.addr %s144, 400
      %s146 = smul.addr %s145, 4
      %s147 = scalar_lea.vmem %s0, %s146
      %p148 = pneg %p35
      %p149 = pneg %p32
      %p150 = pneg %p56
      %p151 = pneg %p53
      %p152 = pneg %p77
      %p153 = pneg %p74
      %p154 = pneg %p103
      %p155 = pneg %p100
      %p156 = scmp.lt.s32.totalorder %s14, 1
      %s157 = scalar_select %p156, %s14, 1
      %s158 = smul.addr %s157, 20
      %s159 = smul.addr %s158, 4
      %s160 = scalar_lea.vmem %s3, %s159
      %p161 = scmp.lt.s32.totalorder %s14, 1
      %s162 = scalar_select %p161, %s14, 1
      %s163 = smul.addr %s162, 400
      %s164 = smul.addr %s163, 4
      %s165 = scalar_lea.vmem %s0, %s164
      %p166 = scmp.lt.s32.totalorder %s14, 1
      %s167 = scalar_select %p166, %s14, 1
      %s168 = smul.addr %s167, 20
      %s169 = smul.addr %s168, 4
      %s170 = scalar_lea.vmem %s3, %s169
      %v172 = vld [vmem:[%s1] sm:$0xf]
      %v173 = vld [vmem:[%s1 + $0x4] sm:$0xf]
      %v174 = vld [vmem:[%s165] sm:$0xff]
      %v175 = vld [vmem:[%s165 + $0x8] sm:$0xff]
      %v176 = vld [vmem:[%s165 + $0x10] sm:$0xff]
      %v177 = vld [vmem:[%s165 + $0x18] sm:$0xff]
      %v178 = vld [vmem:[%s165 + $0x20] sm:$0xff]
      %v179 = vld [vmem:[%s165 + $0x28] sm:$0xff]
      %v180 = vld [vmem:[%s165 + $0x30] sm:$0xff]
      %v181 = vld [vmem:[%s165 + $0x38] sm:$0xff]
      %v182 = vld [vmem:[%s165 + $0x40] sm:$0xff]
      %v183 = vld [vmem:[%s165 + $0x48] sm:$0xff]
      %v184 = vld [vmem:[%s165 + $0x50] sm:$0xff]
      %v185 = vld [vmem:[%s165 + $0x58] sm:$0xff]
      %v186 = vld [vmem:[%s165 + $0x60] sm:$0xff]
      %v187 = vld [vmem:[%s165 + $0x68] sm:$0xff]
      %v188 = vld [vmem:[%s165 + $0x70] sm:$0xff]
      %v189 = vld [vmem:[%s165 + $0x78] sm:$0xff]
      %v190 = vld [vmem:[%s165 + $0x80] sm:$0xff]
      %v191 = vld [vmem:[%s165 + $0x88] sm:$0xff]
      %v192 = vld [vmem:[%s165 + $0x90] sm:$0xff]
      %v193 = vld [vmem:[%s165 + $0x98] sm:$0xff]
      %v194 = vld [vmem:[%s165 + $0xa0] sm:$0xff]
      %v195 = vld [vmem:[%s165 + $0xa8] sm:$0xff]
      %v196 = vld [vmem:[%s165 + $0xb0] sm:$0xff]
      %v197 = vld [vmem:[%s165 + $0xb8] sm:$0xff]
      %v198 = vld [vmem:[%s165 + $0xc0] sm:$0xff]
      %v199 = vld [vmem:[%s165 + $0xc8] sm:$0xff]
      %v200 = vld [vmem:[%s165 + $0xd0] sm:$0xff]
      %v201 = vld [vmem:[%s165 + $0xd8] sm:$0xff]
      %v202 = vld [vmem:[%s165 + $0xe0] sm:$0xff]
      %v203 = vld [vmem:[%s165 + $0xe8] sm:$0xff]
      %v204 = vld [vmem:[%s165 + $0xf0] sm:$0xff]
      %v205 = vld [vmem:[%s165 + $0xf8] sm:$0xff]
      %v206 = vld [vmem:[%s165 + $0x100] sm:$0xff]
      %v207 = vld [vmem:[%s165 + $0x108] sm:$0xff]
      %v208 = vld [vmem:[%s165 + $0x110] sm:$0xff]
      %v209 = vld [vmem:[%s165 + $0x118] sm:$0xff]
      %v210 = vld [vmem:[%s165 + $0x120] sm:$0xff]
      %v211 = vld [vmem:[%s165 + $0x128] sm:$0xff]
      %v212 = vld [vmem:[%s165 + $0x130] sm:$0xff]
      %v213 = vld [vmem:[%s165 + $0x138] sm:$0xff]
      %v214 = vld [vmem:[%s165 + $0x140] sm:$0xff]
      %v215 = vld [vmem:[%s165 + $0x148] sm:$0xff]
      %v216 = vld [vmem:[%s165 + $0x150] sm:$0xff]
      %v217 = vld [vmem:[%s165 + $0x158] sm:$0xff]
      %v218 = vld [vmem:[%s165 + $0x160] sm:$0xff]
      %v219 = vld [vmem:[%s165 + $0x168] sm:$0x33]
      %v220 = vld [vmem:[%s165 + $0x170] sm:$0x33]
      %v221 = vld [vmem:[%s165 + $0x178] sm:$0x33]
      %v222 = vld [vmem:[%s165 + $0x180] sm:$0x33]
      %v223 = vld [vmem:[%s165 + $0x188] sm:$0x33]
      %v226 = vunpack.c.l.b16 %v172
      %v227 = vunpack.c.l.b16 %v173
      %v228 = vpack.c.b16 %v227, %v226
      %v279 = vunpack.c.l.b16 %v174
      %v280 = vunpack.c.h.b16 %v174
      %v281 = vunpack.c.l.b16 %v175
      %v282 = vunpack.c.h.b16 %v175
      %v283 = vunpack.c.l.b16 %v176
      %v284 = vunpack.c.h.b16 %v176
      %v285 = vunpack.c.l.b16 %v177
      %v286 = vunpack.c.h.b16 %v177
      %v287 = vunpack.c.l.b16 %v178
      %v288 = vunpack.c.h.b16 %v178
      %v289 = vunpack.c.l.b16 %v179
      %v290 = vunpack.c.h.b16 %v179
      %v291 = vunpack.c.l.b16 %v180
      %v292 = vunpack.c.h.b16 %v180
      %v293 = vunpack.c.l.b16 %v181
      %v294 = vunpack.c.h.b16 %v181
      %v295 = vunpack.c.l.b16 %v182
      %v296 = vunpack.c.h.b16 %v182
      %v297 = vunpack.c.l.b16 %v183
      %v298 = vunpack.c.h.b16 %v183
      %v299 = vunpack.c.l.b16 %v184
      %v300 = vunpack.c.h.b16 %v184
      %v301 = vunpack.c.l.b16 %v185
      %v302 = vunpack.c.h.b16 %v185
      %v303 = vunpack.c.l.b16 %v186
      %v304 = vunpack.c.h.b16 %v186
      %v305 = vunpack.c.l.b16 %v187
      %v306 = vunpack.c.h.b16 %v187
      %v307 = vunpack.c.l.b16 %v188
      %v308 = vunpack.c.h.b16 %v188
      %v309 = vunpack.c.l.b16 %v189
      %v310 = vunpack.c.h.b16 %v189
      %v311 = vunpack.c.l.b16 %v190
      %v312 = vunpack.c.h.b16 %v190
      %v313 = vunpack.c.l.b16 %v191
      %v314 = vunpack.c.h.b16 %v191
      %v315 = vunpack.c.l.b16 %v192
      %v316 = vunpack.c.h.b16 %v192
      %v317 = vunpack.c.l.b16 %v193
      %v318 = vunpack.c.h.b16 %v193
      %v319 = vunpack.c.l.b16 %v194
      %v320 = vunpack.c.h.b16 %v194
      %v321 = vunpack.c.l.b16 %v195
      %v322 = vunpack.c.h.b16 %v195
      %v323 = vunpack.c.l.b16 %v196
      %v324 = vunpack.c.h.b16 %v196
      %v325 = vunpack.c.l.b16 %v197
      %v326 = vunpack.c.h.b16 %v197
      %v327 = vunpack.c.l.b16 %v198
      %v328 = vunpack.c.h.b16 %v198
      %v329 = vunpack.c.l.b16 %v199
      %v330 = vunpack.c.h.b16 %v199
      %v331 = vunpack.c.l.b16 %v200
      %v332 = vunpack.c.h.b16 %v200
      %v333 = vunpack.c.l.b16 %v201
      %v334 = vunpack.c.h.b16 %v201
      %v335 = vunpack.c.l.b16 %v202
      %v336 = vunpack.c.h.b16 %v202
      %v337 = vunpack.c.l.b16 %v203
      %v338 = vunpack.c.h.b16 %v203
      %v339 = vunpack.c.l.b16 %v204
      %v340 = vunpack.c.h.b16 %v204
      %v341 = vunpack.c.l.b16 %v205
      %v342 = vunpack.c.h.b16 %v205
      %v343 = vunpack.c.l.b16 %v206
      %v344 = vunpack.c.h.b16 %v206
      %v345 = vunpack.c.l.b16 %v207
      %v346 = vunpack.c.h.b16 %v207
      %v347 = vunpack.c.l.b16 %v208
      %v348 = vunpack.c.h.b16 %v208
      %v349 = vunpack.c.l.b16 %v209
      %v350 = vunpack.c.h.b16 %v209
      %v351 = vunpack.c.l.b16 %v210
      %v352 = vunpack.c.h.b16 %v210
      %v353 = vunpack.c.l.b16 %v211
      %v354 = vunpack.c.h.b16 %v211
      %v355 = vunpack.c.l.b16 %v212
      %v356 = vunpack.c.h.b16 %v212
      %v357 = vunpack.c.l.b16 %v213
      %v358 = vunpack.c.h.b16 %v213
      %v359 = vunpack.c.l.b16 %v214
      %v360 = vunpack.c.h.b16 %v214
      %v361 = vunpack.c.l.b16 %v215
      %v362 = vunpack.c.h.b16 %v215
      %v363 = vunpack.c.l.b16 %v216
      %v364 = vunpack.c.h.b16 %v216
      %v365 = vunpack.c.l.b16 %v217
      %v366 = vunpack.c.h.b16 %v217
      %v367 = vunpack.c.l.b16 %v218
      %v368 = vunpack.c.h.b16 %v218
      %v369 = vunpack.c.l.b16 %v219
      %v370 = vunpack.c.h.b16 %v219
      %v371 = vunpack.c.l.b16 %v220
      %v372 = vunpack.c.h.b16 %v220
      %v373 = vunpack.c.l.b16 %v221
      %v374 = vunpack.c.h.b16 %v221
      %v375 = vunpack.c.l.b16 %v222
      %v376 = vunpack.c.h.b16 %v222
      %v377 = vunpack.c.l.b16 %v223
      %v378 = vunpack.c.h.b16 %v223
      %v379 = vpack.c.b16 %v289, %v279
      %v380 = vpack.c.b16 %v290, %v280
      %v381 = vpack.c.b16 %v291, %v281
      %v382 = vpack.c.b16 %v292, %v282
      %v383 = vpack.c.b16 %v293, %v283
      %v384 = vpack.c.b16 %v294, %v284
      %v385 = vpack.c.b16 %v295, %v285
      %v386 = vpack.c.b16 %v296, %v286
      %v387 = vpack.c.b16 %v297, %v287
      %v388 = vpack.c.b16 %v298, %v288
      %v389 = vpack.c.b16 %v309, %v299
      %v390 = vpack.c.b16 %v310, %v300
      %v391 = vpack.c.b16 %v311, %v301
      %v392 = vpack.c.b16 %v312, %v302
      %v393 = vpack.c.b16 %v313, %v303
      %v394 = vpack.c.b16 %v314, %v304
      %v395 = vpack.c.b16 %v315, %v305
      %v396 = vpack.c.b16 %v316, %v306
      %v397 = vpack.c.b16 %v317, %v307
      %v398 = vpack.c.b16 %v318, %v308
      %v399 = vpack.c.b16 %v329, %v319
      %v400 = vpack.c.b16 %v330, %v320
      %v401 = vpack.c.b16 %v331, %v321
      %v402 = vpack.c.b16 %v332, %v322
      %v403 = vpack.c.b16 %v333, %v323
      %v404 = vpack.c.b16 %v334, %v324
      %v405 = vpack.c.b16 %v335, %v325
      %v406 = vpack.c.b16 %v336, %v326
      %v407 = vpack.c.b16 %v337, %v327
      %v408 = vpack.c.b16 %v338, %v328
      %v409 = vpack.c.b16 %v349, %v339
      %v410 = vpack.c.b16 %v350, %v340
      %v411 = vpack.c.b16 %v351, %v341
      %v412 = vpack.c.b16 %v352, %v342
      %v413 = vpack.c.b16 %v353, %v343
      %v414 = vpack.c.b16 %v354, %v344
      %v415 = vpack.c.b16 %v355, %v345
      %v416 = vpack.c.b16 %v356, %v346
      %v417 = vpack.c.b16 %v357, %v347
      %v418 = vpack.c.b16 %v358, %v348
      %v419 = vpack.c.b16 %v369, %v359
      %v420 = vpack.c.b16 %v370, %v360
      %v421 = vpack.c.b16 %v371, %v361
      %v422 = vpack.c.b16 %v372, %v362
      %v423 = vpack.c.b16 %v373, %v363
      %v424 = vpack.c.b16 %v374, %v364
      %v425 = vpack.c.b16 %v375, %v365
      %v426 = vpack.c.b16 %v376, %v366
      %v427 = vpack.c.b16 %v377, %v367
      %v428 = vpack.c.b16 %v378, %v368
      %vm469 = vcmask 613376
      %v471 = vsel %vm469, %v228, 0
      %vm473 = vcmask 1044480
      %vm474 = vcmask 1045504
      %v475 = vsel %vm473, 4294967295, 65535
      %v476 = vsel %vm474, %v475, 0
      %v478 = vand.u32 %v419, %v476
      %v481 = vand.u32 %v420, %v476
      %v484 = vand.u32 %v421, %v476
      %v487 = vand.u32 %v422, %v476
      %v490 = vand.u32 %v423, %v476
      %v493 = vand.u32 %v424, %v476
      %v496 = vand.u32 %v425, %v476
      %v499 = vand.u32 %v426, %v476
      %v502 = vand.u32 %v427, %v476
      %v505 = vand.u32 %v428, %v476
      %507 = vmatprep.subr.bf16.mxu0 0
      %508 = vmatpush1.bf16.msra.mxu0 0
      %509 = vmatprep.subr.bf16.mxu0 0
      %510 = vmatpush1.bf16.msra.mxu0 0
      %511 = vmatprep.subr.bf16.mxu0 0
      %512 = vmatpush1.bf16.msra.mxu0 0
      %513 = vmatprep.subr.bf16.mxu0 %v481
      %514 = vmatpush1.bf16.msra.mxu0 %v478
      %515 = vmatprep.subr.bf16.mxu0 %v410
      %516 = vmatpush1.bf16.msra.mxu0 %v409
      %517 = vmatprep.subr.bf16.mxu0 %v400
      %518 = vmatpush1.bf16.msra.mxu0 %v399
      %519 = vmatprep.subr.bf16.mxu0 %v390
      %520 = vmatpush1.bf16.msra.mxu0 %v389
      %521 = vmatprep.subr.bf16.mxu0 %v380
      %522 = vmatpush1.bf16.msra.mxu0 %v379
      %523 = vmatprep.subr.bf16.mxu0 0
      %524 = vmatpush2.bf16.msra.mxu0 0
      %525 = vmatprep.subr.bf16.mxu0 0
      %526 = vmatpush2.bf16.msra.mxu0 0
      %527 = vmatprep.subr.bf16.mxu0 0
      %528 = vmatpush2.bf16.msra.mxu0 0
      %529 = vmatprep.subr.bf16.mxu0 0
      %530 = vmatpush2.bf16.msra.mxu0 0
      %531 = vmatprep.subr.bf16.mxu0 0
      %532 = vmatpush2.bf16.msra.mxu0 0
      %533 = vmatprep.subr.bf16.mxu0 0
      %534 = vmatpush2.bf16.msra.mxu0 0
      %535 = vmatprep.subr.bf16.mxu0 0
      %536 = vmatpush2.bf16.msra.mxu0 0
      %537 = vmatprep.subr.bf16.mxu0 0
      %538 = vmatpush2.bf16.msra.mxu0 0
      %539 = vmatprep.mubr.bf16.mxu0 0
      %540 = vmatmul.mubr.bf16.gmra.mxu0 %v471
      %v541 = vpop.f32.mrf.mxu0
      %v542 = vadd.f32 0.0, %v541
      %v543 = vpop.f32.mrf.mxu0
      %v544 = vadd.f32 0.0, %v543
      %v545 = vpop.f32.mrf.mxu0
      %v546 = vadd.f32 0.0, %v545
      %v547 = vpop.f32.mrf.mxu0
      %v548 = vadd.f32 0.0, %v547
      %549 = vdwg.mxu0
      %550 = vmatprep.subr.bf16.mxu0 0
      %551 = vmatpush1.bf16.msra.mxu0 0
      %552 = vmatprep.subr.bf16.mxu0 0
      %553 = vmatpush1.bf16.msra.mxu0 0
      %554 = vmatprep.subr.bf16.mxu0 0
      %555 = vmatpush1.bf16.msra.mxu0 0
      %556 = vmatprep.subr.bf16.mxu0 %v487
      %557 = vmatpush1.bf16.msra.mxu0 %v484
      %558 = vmatprep.subr.bf16.mxu0 %v412
      %559 = vmatpush1.bf16.msra.mxu0 %v411
      %560 = vmatprep.subr.bf16.mxu0 %v402
      %561 = vmatpush1.bf16.msra.mxu0 %v401
      %562 = vmatprep.subr.bf16.mxu0 %v392
      %563 = vmatpush1.bf16.msra.mxu0 %v391
      %564 = vmatprep.subr.bf16.mxu0 %v382
      %565 = vmatpush1.bf16.msra.mxu0 %v381
      %566 = vmatprep.subr.bf16.mxu0 0
      %567 = vmatpush2.bf16.msra.mxu0 0
      %568 = vmatprep.subr.bf16.mxu0 0
      %569 = vmatpush2.bf16.msra.mxu0 0
      %570 = vmatprep.subr.bf16.mxu0 0
      %571 = vmatpush2.bf16.msra.mxu0 0
      %572 = vmatprep.subr.bf16.mxu0 0
      %573 = vmatpush2.bf16.msra.mxu0 0
      %574 = vmatprep.subr.bf16.mxu0 0
      %575 = vmatpush2.bf16.msra.mxu0 0
      %576 = vmatprep.subr.bf16.mxu0 0
      %577 = vmatpush2.bf16.msra.mxu0 0
      %578 = vmatprep.subr.bf16.mxu0 0
      %579 = vmatpush2.bf16.msra.mxu0 0
      %580 = vmatprep.subr.bf16.mxu0 0
      %581 = vmatpush2.bf16.msra.mxu0 0
      %582 = vmatprep.mubr.bf16.mxu0 0
      %583 = vmatmul.mubr.bf16.gmra.mxu0 %v471
      %v584 = vpop.f32.mrf.mxu0
      %v585 = vadd.f32 0.0, %v584
      %v586 = vpop.f32.mrf.mxu0
      %v587 = vadd.f32 0.0, %v586
      %v588 = vpop.f32.mrf.mxu0
      %v589 = vadd.f32 0.0, %v588
      %v590 = vpop.f32.mrf.mxu0
      %v591 = vadd.f32 0.0, %v590
      %592 = vdwg.mxu0
      %593 = vmatprep.subr.bf16.mxu0 0
      %594 = vmatpush1.bf16.msra.mxu0 0
      %595 = vmatprep.subr.bf16.mxu0 0
      %596 = vmatpush1.bf16.msra.mxu0 0
      %597 = vmatprep.subr.bf16.mxu0 0
      %598 = vmatpush1.bf16.msra.mxu0 0
      %599 = vmatprep.subr.bf16.mxu0 %v493
      %600 = vmatpush1.bf16.msra.mxu0 %v490
      %601 = vmatprep.subr.bf16.mxu0 %v414
      %602 = vmatpush1.bf16.msra.mxu0 %v413
      %603 = vmatprep.subr.bf16.mxu0 %v404
      %604 = vmatpush1.bf16.msra.mxu0 %v403
      %605 = vmatprep.subr.bf16.mxu0 %v394
      %606 = vmatpush1.bf16.msra.mxu0 %v393
      %607 = vmatprep.subr.bf16.mxu0 %v384
      %608 = vmatpush1.bf16.msra.mxu0 %v383
      %609 = vmatprep.subr.bf16.mxu0 0
      %610 = vmatpush2.bf16.msra.mxu0 0
      %611 = vmatprep.subr.bf16.mxu0 0
      %612 = vmatpush2.bf16.msra.mxu0 0
      %613 = vmatprep.subr.bf16.mxu0 0
      %614 = vmatpush2.bf16.msra.mxu0 0
      %615 = vmatprep.subr.bf16.mxu0 0
      %616 = vmatpush2.bf16.msra.mxu0 0
      %617 = vmatprep.subr.bf16.mxu0 0
      %618 = vmatpush2.bf16.msra.mxu0 0
      %619 = vmatprep.subr.bf16.mxu0 0
      %620 = vmatpush2.bf16.msra.mxu0 0
      %621 = vmatprep.subr.bf16.mxu0 0
      %622 = vmatpush2.bf16.msra.mxu0 0
      %623 = vmatprep.subr.bf16.mxu0 0
      %624 = vmatpush2.bf16.msra.mxu0 0
      %625 = vmatprep.mubr.bf16.mxu0 0
      %626 = vmatmul.mubr.bf16.gmra.mxu0 %v471
      %v627 = vpop.f32.mrf.mxu0
      %v628 = vadd.f32 0.0, %v627
      %v629 = vpop.f32.mrf.mxu0
      %v630 = vadd.f32 0.0, %v629
      %v631 = vpop.f32.mrf.mxu0
      %v632 = vadd.f32 0.0, %v631
      %v633 = vpop.f32.mrf.mxu0
      %v634 = vadd.f32 0.0, %v633
      %635 = vdwg.mxu0
      %636 = vmatprep.subr.bf16.mxu0 0
      %637 = vmatpush1.bf16.msra.mxu0 0
      %638 = vmatprep.subr.bf16.mxu0 0
      %639 = vmatpush1.bf16.msra.mxu0 0
      %640 = vmatprep.subr.bf16.mxu0 0
      %641 = vmatpush1.bf16.msra.mxu0 0
      %642 = vmatprep.subr.bf16.mxu0 %v499
      %643 = vmatpush1.bf16.msra.mxu0 %v496
      %644 = vmatprep.subr.bf16.mxu0 %v416
      %645 = vmatpush1.bf16.msra.mxu0 %v415
      %646 = vmatprep.subr.bf16.mxu0 %v406
      %647 = vmatpush1.bf16.msra.mxu0 %v405
      %648 = vmatprep.subr.bf16.mxu0 %v396
      %649 = vmatpush1.bf16.msra.mxu0 %v395
      %650 = vmatprep.subr.bf16.mxu0 %v386
      %651 = vmatpush1.bf16.msra.mxu0 %v385
      %652 = vmatprep.subr.bf16.mxu0 0
      %653 = vmatpush2.bf16.msra.mxu0 0
      %654 = vmatprep.subr.bf16.mxu0 0
      %655 = vmatpush2.bf16.msra.mxu0 0
      %656 = vmatprep.subr.bf16.mxu0 0
      %657 = vmatpush2.bf16.msra.mxu0 0
      %658 = vmatprep.subr.bf16.mxu0 0
      %659 = vmatpush2.bf16.msra.mxu0 0
      %660 = vmatprep.subr.bf16.mxu0 0
      %661 = vmatpush2.bf16.msra.mxu0 0
      %662 = vmatprep.subr.bf16.mxu0 0
      %663 = vmatpush2.bf16.msra.mxu0 0
      %664 = vmatprep.subr.bf16.mxu0 0
      %665 = vmatpush2.bf16.msra.mxu0 0
      %666 = vmatprep.subr.bf16.mxu0 0
      %667 = vmatpush2.bf16.msra.mxu0 0
      %668 = vmatprep.mubr.bf16.mxu0 0
      %669 = vmatmul.mubr.bf16.gmra.mxu0 %v471
      %v670 = vpop.f32.mrf.mxu0
      %v671 = vadd.f32 0.0, %v670
      %v672 = vpop.f32.mrf.mxu0
      %v673 = vadd.f32 0.0, %v672
      %v674 = vpop.f32.mrf.mxu0
      %v675 = vadd.f32 0.0, %v674
      %v676 = vpop.f32.mrf.mxu0
      %v677 = vadd.f32 0.0, %v676
      %678 = vdwg.mxu0
      %679 = vmatprep.subr.bf16.mxu0 0
      %680 = vmatpush1.bf16.msra.mxu0 0
      %681 = vmatprep.subr.bf16.mxu0 0
      %682 = vmatpush1.bf16.msra.mxu0 0
      %683 = vmatprep.subr.bf16.mxu0 0
      %684 = vmatpush1.bf16.msra.mxu0 0
      %685 = vmatprep.subr.bf16.mxu0 %v505
      %686 = vmatpush1.bf16.msra.mxu0 %v502
      %687 = vmatprep.subr.bf16.mxu0 %v418
      %688 = vmatpush1.bf16.msra.mxu0 %v417
      %689 = vmatprep.subr.bf16.mxu0 %v408
      %690 = vmatpush1.bf16.msra.mxu0 %v407
      %691 = vmatprep.subr.bf16.mxu0 %v398
      %692 = vmatpush1.bf16.msra.mxu0 %v397
      %693 = vmatprep.subr.bf16.mxu0 %v388
      %694 = vmatpush1.bf16.msra.mxu0 %v387
      %695 = vmatprep.subr.bf16.mxu0 0
      %696 = vmatpush2.bf16.msra.mxu0 0
      %697 = vmatprep.subr.bf16.mxu0 0
      %698 = vmatpush2.bf16.msra.mxu0 0
      %699 = vmatprep.subr.bf16.mxu0 0
      %700 = vmatpush2.bf16.msra.mxu0 0
      %701 = vmatprep.subr.bf16.mxu0 0
      %702 = vmatpush2.bf16.msra.mxu0 0
      %703 = vmatprep.subr.bf16.mxu0 0
      %704 = vmatpush2.bf16.msra.mxu0 0
      %705 = vmatprep.subr.bf16.mxu0 0
      %706 = vmatpush2.bf16.msra.mxu0 0
      %707 = vmatprep.subr.bf16.mxu0 0
      %708 = vmatpush2.bf16.msra.mxu0 0
      %709 = vmatprep.subr.bf16.mxu0 0
      %710 = vmatpush2.bf16.msra.mxu0 0
      %711 = vmatprep.mubr.bf16.mxu0 0
      %712 = vmatmul.mubr.bf16.gmra.mxu0 %v471
      %v713 = vpop.f32.mrf.mxu0
      %v714 = vadd.f32 0.0, %v713
      %v715 = vpop.f32.mrf.mxu0
      %v716 = vadd.f32 0.0, %v715
      %v717 = vpop.f32.mrf.mxu0
      %v718 = vadd.f32 0.0, %v717
      %v719 = vpop.f32.mrf.mxu0
      %v720 = vadd.f32 0.0, %v719
      %721 = vdwg.mxu0
      %s722 = scalar_lea.vmem %s165, 400
      %v723 = vld [vmem:[%s722] sm:$0xff]
      %v724 = vld [vmem:[%s722 + $0x8] sm:$0xff]
      %v725 = vld [vmem:[%s722 + $0x10] sm:$0xff]
      %v726 = vld [vmem:[%s722 + $0x18] sm:$0xff]
      %v727 = vld [vmem:[%s722 + $0x20] sm:$0xff]
      %v728 = vld [vmem:[%s722 + $0x28] sm:$0xff]
      %v729 = vld [vmem:[%s722 + $0x30] sm:$0xff]
      %v730 = vld [vmem:[%s722 + $0x38] sm:$0xff]
      %v731 = vld [vmem:[%s722 + $0x40] sm:$0xff]
      %v732 = vld [vmem:[%s722 + $0x48] sm:$0xff]
      %v733 = vld [vmem:[%s722 + $0x50] sm:$0xff]
      %v734 = vld [vmem:[%s722 + $0x58] sm:$0xff]
      %v735 = vld [vmem:[%s722 + $0x60] sm:$0xff]
      %v736 = vld [vmem:[%s722 + $0x68] sm:$0xff]
      %v737 = vld [vmem:[%s722 + $0x70] sm:$0xff]
      %v738 = vld [vmem:[%s722 + $0x78] sm:$0xff]
      %v739 = vld [vmem:[%s722 + $0x80] sm:$0xff]
      %v740 = vld [vmem:[%s722 + $0x88] sm:$0xff]
      %v741 = vld [vmem:[%s722 + $0x90] sm:$0xff]
      %v742 = vld [vmem:[%s722 + $0x98] sm:$0xff]
      %v743 = vld [vmem:[%s722 + $0xa0] sm:$0xff]
      %v744 = vld [vmem:[%s722 + $0xa8] sm:$0xff]
      %v745 = vld [vmem:[%s722 + $0xb0] sm:$0xff]
      %v746 = vld [vmem:[%s722 + $0xb8] sm:$0xff]
      %v747 = vld [vmem:[%s722 + $0xc0] sm:$0xff]
      %v748 = vld [vmem:[%s722 + $0xc8] sm:$0xff]
      %v749 = vld [vmem:[%s722 + $0xd0] sm:$0xff]
      %v750 = vld [vmem:[%s722 + $0xd8] sm:$0xff]
      %v751 = vld [vmem:[%s722 + $0xe0] sm:$0xff]
      %v752 = vld [vmem:[%s722 + $0xe8] sm:$0xff]
      %v753 = vld [vmem:[%s722 + $0xf0] sm:$0xff]
      %v754 = vld [vmem:[%s722 + $0xf8] sm:$0xff]
      %v755 = vld [vmem:[%s722 + $0x100] sm:$0xff]
      %v756 = vld [vmem:[%s722 + $0x108] sm:$0xff]
      %v757 = vld [vmem:[%s722 + $0x110] sm:$0xff]
      %v758 = vld [vmem:[%s722 + $0x118] sm:$0xff]
      %v759 = vld [vmem:[%s722 + $0x120] sm:$0xff]
      %v760 = vld [vmem:[%s722 + $0x128] sm:$0xff]
      %v761 = vld [vmem:[%s722 + $0x130] sm:$0xff]
      %v762 = vld [vmem:[%s722 + $0x138] sm:$0xff]
      %v763 = vld [vmem:[%s722 + $0x140] sm:$0xff]
      %v764 = vld [vmem:[%s722 + $0x148] sm:$0xff]
      %v765 = vld [vmem:[%s722 + $0x150] sm:$0xff]
      %v766 = vld [vmem:[%s722 + $0x158] sm:$0xff]
      %v767 = vld [vmem:[%s722 + $0x160] sm:$0xff]
      %v768 = vld [vmem:[%s722 + $0x168] sm:$0x33]
      %v769 = vld [vmem:[%s722 + $0x170] sm:$0x33]
      %v770 = vld [vmem:[%s722 + $0x178] sm:$0x33]
      %v771 = vld [vmem:[%s722 + $0x180] sm:$0x33]
      %v772 = vld [vmem:[%s722 + $0x188] sm:$0x33]
      %v823 = vunpack.c.l.b16 %v723
      %v824 = vunpack.c.h.b16 %v723
      %v825 = vunpack.c.l.b16 %v724
      %v826 = vunpack.c.h.b16 %v724
      %v827 = vunpack.c.l.b16 %v725
      %v828 = vunpack.c.h.b16 %v725
      %v829 = vunpack.c.l.b16 %v726
      %v830 = vunpack.c.h.b16 %v726
      %v831 = vunpack.c.l.b16 %v727
      %v832 = vunpack.c.h.b16 %v727
      %v833 = vunpack.c.l.b16 %v728
      %v834 = vunpack.c.h.b16 %v728
      %v835 = vunpack.c.l.b16 %v729
      %v836 = vunpack.c.h.b16 %v729
      %v837 = vunpack.c.l.b16 %v730
      %v838 = vunpack.c.h.b16 %v730
      %v839 = vunpack.c.l.b16 %v731
      %v840 = vunpack.c.h.b16 %v731
      %v841 = vunpack.c.l.b16 %v732
      %v842 = vunpack.c.h.b16 %v732
      %v843 = vunpack.c.l.b16 %v733
      %v844 = vunpack.c.h.b16 %v733
      %v845 = vunpack.c.l.b16 %v734
      %v846 = vunpack.c.h.b16 %v734
      %v847 = vunpack.c.l.b16 %v735
      %v848 = vunpack.c.h.b16 %v735
      %v849 = vunpack.c.l.b16 %v736
      %v850 = vunpack.c.h.b16 %v736
      %v851 = vunpack.c.l.b16 %v737
      %v852 = vunpack.c.h.b16 %v737
      %v853 = vunpack.c.l.b16 %v738
      %v854 = vunpack.c.h.b16 %v738
      %v855 = vunpack.c.l.b16 %v739
      %v856 = vunpack.c.h.b16 %v739
      %v857 = vunpack.c.l.b16 %v740
      %v858 = vunpack.c.h.b16 %v740
      %v859 = vunpack.c.l.b16 %v741
      %v860 = vunpack.c.h.b16 %v741
      %v861 = vunpack.c.l.b16 %v742
      %v862 = vunpack.c.h.b16 %v742
      %v863 = vunpack.c.l.b16 %v743
      %v864 = vunpack.c.h.b16 %v743
      %v865 = vunpack.c.l.b16 %v744
      %v866 = vunpack.c.h.b16 %v744
      %v867 = vunpack.c.l.b16 %v745
      %v868 = vunpack.c.h.b16 %v745
      %v869 = vunpack.c.l.b16 %v746
      %v870 = vunpack.c.h.b16 %v746
      %v871 = vunpack.c.l.b16 %v747
      %v872 = vunpack.c.h.b16 %v747
      %v873 = vunpack.c.l.b16 %v748
      %v874 = vunpack.c.h.b16 %v748
      %v875 = vunpack.c.l.b16 %v749
      %v876 = vunpack.c.h.b16 %v749
      %v877 = vunpack.c.l.b16 %v750
      %v878 = vunpack.c.h.b16 %v750
      %v879 = vunpack.c.l.b16 %v751
      %v880 = vunpack.c.h.b16 %v751
      %v881 = vunpack.c.l.b16 %v752
      %v882 = vunpack.c.h.b16 %v752
      %v883 = vunpack.c.l.b16 %v753
      %v884 = vunpack.c.h.b16 %v753
      %v885 = vunpack.c.l.b16 %v754
      %v886 = vunpack.c.h.b16 %v754
      %v887 = vunpack.c.l.b16 %v755
      %v888 = vunpack.c.h.b16 %v755
      %v889 = vunpack.c.l.b16 %v756
      %v890 = vunpack.c.h.b16 %v756
      %v891 = vunpack.c.l.b16 %v757
      %v892 = vunpack.c.h.b16 %v757
      %v893 = vunpack.c.l.b16 %v758
      %v894 = vunpack.c.h.b16 %v758
      %v895 = vunpack.c.l.b16 %v759
      %v896 = vunpack.c.h.b16 %v759
      %v897 = vunpack.c.l.b16 %v760
      %v898 = vunpack.c.h.b16 %v760
      %v899 = vunpack.c.l.b16 %v761
      %v900 = vunpack.c.h.b16 %v761
      %v901 = vunpack.c.l.b16 %v762
      %v902 = vunpack.c.h.b16 %v762
      %v903 = vunpack.c.l.b16 %v763
      %v904 = vunpack.c.h.b16 %v763
      %v905 = vunpack.c.l.b16 %v764
      %v906 = vunpack.c.h.b16 %v764
      %v907 = vunpack.c.l.b16 %v765
      %v908 = vunpack.c.h.b16 %v765
      %v909 = vunpack.c.l.b16 %v766
      %v910 = vunpack.c.h.b16 %v766
      %v911 = vunpack.c.l.b16 %v767
      %v912 = vunpack.c.h.b16 %v767
      %v913 = vunpack.c.l.b16 %v768
      %v914 = vunpack.c.h.b16 %v768
      %v915 = vunpack.c.l.b16 %v769
      %v916 = vunpack.c.h.b16 %v769
      %v917 = vunpack.c.l.b16 %v770
      %v918 = vunpack.c.h.b16 %v770
      %v919 = vunpack.c.l.b16 %v771
      %v920 = vunpack.c.h.b16 %v771
      %v921 = vunpack.c.l.b16 %v772
      %v922 = vunpack.c.h.b16 %v772
      %v923 = vpack.c.b16 %v833, %v823
      %v924 = vpack.c.b16 %v834, %v824
      %v925 = vpack.c.b16 %v835, %v825
      %v926 = vpack.c.b16 %v836, %v826
      %v927 = vpack.c.b16 %v837, %v827
      %v928 = vpack.c.b16 %v838, %v828
      %v929 = vpack.c.b16 %v839, %v829
      %v930 = vpack.c.b16 %v840, %v830
      %v931 = vpack.c.b16 %v841, %v831
      %v932 = vpack.c.b16 %v842, %v832
      %v933 = vpack.c.b16 %v853, %v843
      %v934 = vpack.c.b16 %v854, %v844
      %v935 = vpack.c.b16 %v855, %v845
      %v936 = vpack.c.b16 %v856, %v846
      %v937 = vpack.c.b16 %v857, %v847
      %v938 = vpack.c.b16 %v858, %v848
      %v939 = vpack.c.b16 %v859, %v849
      %v940 = vpack.c.b16 %v860, %v850
      %v941 = vpack.c.b16 %v861, %v851
      %v942 = vpack.c.b16 %v862, %v852
      %v943 = vpack.c.b16 %v873, %v863
      %v944 = vpack.c.b16 %v874, %v864
      %v945 = vpack.c.b16 %v875, %v865
      %v946 = vpack.c.b16 %v876, %v866
      %v947 = vpack.c.b16 %v877, %v867
      %v948 = vpack.c.b16 %v878, %v868
      %v949 = vpack.c.b16 %v879, %v869
      %v950 = vpack.c.b16 %v880, %v870
      %v951 = vpack.c.b16 %v881, %v871
      %v952 = vpack.c.b16 %v882, %v872
      %v953 = vpack.c.b16 %v893, %v883
      %v954 = vpack.c.b16 %v894, %v884
      %v955 = vpack.c.b16 %v895, %v885
      %v956 = vpack.c.b16 %v896, %v886
      %v957 = vpack.c.b16 %v897, %v887
      %v958 = vpack.c.b16 %v898, %v888
      %v959 = vpack.c.b16 %v899, %v889
      %v960 = vpack.c.b16 %v900, %v890
      %v961 = vpack.c.b16 %v901, %v891
      %v962 = vpack.c.b16 %v902, %v892
      %v963 = vpack.c.b16 %v913, %v903
      %v964 = vpack.c.b16 %v914, %v904
      %v965 = vpack.c.b16 %v915, %v905
      %v966 = vpack.c.b16 %v916, %v906
      %v967 = vpack.c.b16 %v917, %v907
      %v968 = vpack.c.b16 %v918, %v908
      %v969 = vpack.c.b16 %v919, %v909
      %v970 = vpack.c.b16 %v920, %v910
      %v971 = vpack.c.b16 %v921, %v911
      %v972 = vpack.c.b16 %v922, %v912
      %v1014 = vand.u32 %v963, %v476
      %v1017 = vand.u32 %v964, %v476
      %v1020 = vand.u32 %v965, %v476
      %v1023 = vand.u32 %v966, %v476
      %v1026 = vand.u32 %v967, %v476
      %v1029 = vand.u32 %v968, %v476
      %v1032 = vand.u32 %v969, %v476
      %v1035 = vand.u32 %v970, %v476
      %v1038 = vand.u32 %v971, %v476
      %v1041 = vand.u32 %v972, %v476
      %1043 = vmatprep.subr.bf16.mxu0 0
      %1044 = vmatpush1.bf16.msra.mxu0 0
      %1045 = vmatprep.subr.bf16.mxu0 0
      %1046 = vmatpush1.bf16.msra.mxu0 0
      %1047 = vmatprep.subr.bf16.mxu0 0
      %1048 = vmatpush1.bf16.msra.mxu0 0
      %1049 = vmatprep.subr.bf16.mxu0 %v1017
      %1050 = vmatpush1.bf16.msra.mxu0 %v1014
      %1051 = vmatprep.subr.bf16.mxu0 %v954
      %1052 = vmatpush1.bf16.msra.mxu0 %v953
      %1053 = vmatprep.subr.bf16.mxu0 %v944
      %1054 = vmatpush1.bf16.msra.mxu0 %v943
      %1055 = vmatprep.subr.bf16.mxu0 %v934
      %1056 = vmatpush1.bf16.msra.mxu0 %v933
      %1057 = vmatprep.subr.bf16.mxu0 %v924
      %1058 = vmatpush1.bf16.msra.mxu0 %v923
      %1059 = vmatprep.subr.bf16.mxu0 0
      %1060 = vmatpush2.bf16.msra.mxu0 0
      %1061 = vmatprep.subr.bf16.mxu0 0
      %1062 = vmatpush2.bf16.msra.mxu0 0
      %1063 = vmatprep.subr.bf16.mxu0 0
      %1064 = vmatpush2.bf16.msra.mxu0 0
      %1065 = vmatprep.subr.bf16.mxu0 0
      %1066 = vmatpush2.bf16.msra.mxu0 0
      %1067 = vmatprep.subr.bf16.mxu0 0
      %1068 = vmatpush2.bf16.msra.mxu0 0
      %1069 = vmatprep.subr.bf16.mxu0 0
      %1070 = vmatpush2.bf16.msra.mxu0 0
      %1071 = vmatprep.subr.bf16.mxu0 0
      %1072 = vmatpush2.bf16.msra.mxu0 0
      %1073 = vmatprep.subr.bf16.mxu0 0
      %1074 = vmatpush2.bf16.msra.mxu0 0
      %1075 = vmatprep.mubr.bf16.mxu0 0
      %1076 = vmatmul.mubr.bf16.gmra.mxu0 %v471
      %v1077 = vpop.f32.mrf.mxu0
      %v1078 = vadd.f32 0.0, %v1077
      %v1079 = vpop.f32.mrf.mxu0
      %v1080 = vadd.f32 0.0, %v1079
      %v1081 = vpop.f32.mrf.mxu0
      %v1082 = vadd.f32 0.0, %v1081
      %v1083 = vpop.f32.mrf.mxu0
      %v1084 = vadd.f32 0.0, %v1083
      %1085 = vdwg.mxu0
      %1086 = vmatprep.subr.bf16.mxu0 0
      %1087 = vmatpush1.bf16.msra.mxu0 0
      %1088 = vmatprep.subr.bf16.mxu0 0
      %1089 = vmatpush1.bf16.msra.mxu0 0
      %1090 = vmatprep.subr.bf16.mxu0 0
      %1091 = vmatpush1.bf16.msra.mxu0 0
      %1092 = vmatprep.subr.bf16.mxu0 %v1023
      %1093 = vmatpush1.bf16.msra.mxu0 %v1020
      %1094 = vmatprep.subr.bf16.mxu0 %v956
      %1095 = vmatpush1.bf16.msra.mxu0 %v955
      %1096 = vmatprep.subr.bf16.mxu0 %v946
      %1097 = vmatpush1.bf16.msra.mxu0 %v945
      %1098 = vmatprep.subr.bf16.mxu0 %v936
      %1099 = vmatpush1.bf16.msra.mxu0 %v935
      %1100 = vmatprep.subr.bf16.mxu0 %v926
      %1101 = vmatpush1.bf16.msra.mxu0 %v925
      %1102 = vmatprep.subr.bf16.mxu0 0
      %1103 = vmatpush2.bf16.msra.mxu0 0
      %1104 = vmatprep.subr.bf16.mxu0 0
      %1105 = vmatpush2.bf16.msra.mxu0 0
      %1106 = vmatprep.subr.bf16.mxu0 0
      %1107 = vmatpush2.bf16.msra.mxu0 0
      %1108 = vmatprep.subr.bf16.mxu0 0
      %1109 = vmatpush2.bf16.msra.mxu0 0
      %1110 = vmatprep.subr.bf16.mxu0 0
      %1111 = vmatpush2.bf16.msra.mxu0 0
      %1112 = vmatprep.subr.bf16.mxu0 0
      %1113 = vmatpush2.bf16.msra.mxu0 0
      %1114 = vmatprep.subr.bf16.mxu0 0
      %1115 = vmatpush2.bf16.msra.mxu0 0
      %1116 = vmatprep.subr.bf16.mxu0 0
      %1117 = vmatpush2.bf16.msra.mxu0 0
      %1118 = vmatprep.mubr.bf16.mxu0 0
      %1119 = vmatmul.mubr.bf16.gmra.mxu0 %v471
      %v1120 = vpop.f32.mrf.mxu0
      %v1121 = vadd.f32 0.0, %v1120
      %v1122 = vpop.f32.mrf.mxu0
      %v1123 = vadd.f32 0.0, %v1122
      %v1124 = vpop.f32.mrf.mxu0
      %v1125 = vadd.f32 0.0, %v1124
      %v1126 = vpop.f32.mrf.mxu0
      %v1127 = vadd.f32 0.0, %v1126
      %1128 = vdwg.mxu0
      %1129 = vmatprep.subr.bf16.mxu0 0
      %1130 = vmatpush1.bf16.msra.mxu0 0
      %1131 = vmatprep.subr.bf16.mxu0 0
      %1132 = vmatpush1.bf16.msra.mxu0 0
      %1133 = vmatprep.subr.bf16.mxu0 0
      %1134 = vmatpush1.bf16.msra.mxu0 0
      %1135 = vmatprep.subr.bf16.mxu0 %v1029
      %1136 = vmatpush1.bf16.msra.mxu0 %v1026
      %1137 = vmatprep.subr.bf16.mxu0 %v958
      %1138 = vmatpush1.bf16.msra.mxu0 %v957
      %1139 = vmatprep.subr.bf16.mxu0 %v948
      %1140 = vmatpush1.bf16.msra.mxu0 %v947
      %1141 = vmatprep.subr.bf16.mxu0 %v938
      %1142 = vmatpush1.bf16.msra.mxu0 %v937
      %1143 = vmatprep.subr.bf16.mxu0 %v928
      %1144 = vmatpush1.bf16.msra.mxu0 %v927
      %1145 = vmatprep.subr.bf16.mxu0 0
      %1146 = vmatpush2.bf16.msra.mxu0 0
      %1147 = vmatprep.subr.bf16.mxu0 0
      %1148 = vmatpush2.bf16.msra.mxu0 0
      %1149 = vmatprep.subr.bf16.mxu0 0
      %1150 = vmatpush2.bf16.msra.mxu0 0
      %1151 = vmatprep.subr.bf16.mxu0 0
      %1152 = vmatpush2.bf16.msra.mxu0 0
      %1153 = vmatprep.subr.bf16.mxu0 0
      %1154 = vmatpush2.bf16.msra.mxu0 0
      %1155 = vmatprep.subr.bf16.mxu0 0
      %1156 = vmatpush2.bf16.msra.mxu0 0
      %1157 = vmatprep.subr.bf16.mxu0 0
      %1158 = vmatpush2.bf16.msra.mxu0 0
      %1159 = vmatprep.subr.bf16.mxu0 0
      %1160 = vmatpush2.bf16.msra.mxu0 0
      %1161 = vmatprep.mubr.bf16.mxu0 0
      %1162 = vmatmul.mubr.bf16.gmra.mxu0 %v471
      %v1163 = vpop.f32.mrf.mxu0
      %v1164 = vadd.f32 0.0, %v1163
      %v1165 = vpop.f32.mrf.mxu0
      %v1166 = vadd.f32 0.0, %v1165
      %v1167 = vpop.f32.mrf.mxu0
      %v1168 = vadd.f32 0.0, %v1167
      %v1169 = vpop.f32.mrf.mxu0
      %v1170 = vadd.f32 0.0, %v1169
      %1171 = vdwg.mxu0
      %1172 = vmatprep.subr.bf16.mxu0 0
      %1173 = vmatpush1.bf16.msra.mxu0 0
      %1174 = vmatprep.subr.bf16.mxu0 0
      %1175 = vmatpush1.bf16.msra.mxu0 0
      %1176 = vmatprep.subr.bf16.mxu0 0
      %1177 = vmatpush1.bf16.msra.mxu0 0
      %1178 = vmatprep.subr.bf16.mxu0 %v1035
      %1179 = vmatpush1.bf16.msra.mxu0 %v1032
      %1180 = vmatprep.subr.bf16.mxu0 %v960
      %1181 = vmatpush1.bf16.msra.mxu0 %v959
      %1182 = vmatprep.subr.bf16.mxu0 %v950
      %1183 = vmatpush1.bf16.msra.mxu0 %v949
      %1184 = vmatprep.subr.bf16.mxu0 %v940
      %1185 = vmatpush1.bf16.msra.mxu0 %v939
      %1186 = vmatprep.subr.bf16.mxu0 %v930
      %1187 = vmatpush1.bf16.msra.mxu0 %v929
      %1188 = vmatprep.subr.bf16.mxu0 0
      %1189 = vmatpush2.bf16.msra.mxu0 0
      %1190 = vmatprep.subr.bf16.mxu0 0
      %1191 = vmatpush2.bf16.msra.mxu0 0
      %1192 = vmatprep.subr.bf16.mxu0 0
      %1193 = vmatpush2.bf16.msra.mxu0 0
      %1194 = vmatprep.subr.bf16.mxu0 0
      %1195 = vmatpush2.bf16.msra.mxu0 0
      %1196 = vmatprep.subr.bf16.mxu0 0
      %1197 = vmatpush2.bf16.msra.mxu0 0
      %1198 = vmatprep.subr.bf16.mxu0 0
      %1199 = vmatpush2.bf16.msra.mxu0 0
      %1200 = vmatprep.subr.bf16.mxu0 0
      %1201 = vmatpush2.bf16.msra.mxu0 0
      %1202 = vmatprep.subr.bf16.mxu0 0
      %1203 = vmatpush2.bf16.msra.mxu0 0
      %1204 = vmatprep.mubr.bf16.mxu0 0
      %1205 = vmatmul.mubr.bf16.gmra.mxu0 %v471
      %v1206 = vpop.f32.mrf.mxu0
      %v1207 = vadd.f32 0.0, %v1206
      %v1208 = vpop.f32.mrf.mxu0
      %v1209 = vadd.f32 0.0, %v1208
      %v1210 = vpop.f32.mrf.mxu0
      %v1211 = vadd.f32 0.0, %v1210
      %v1212 = vpop.f32.mrf.mxu0
      %v1213 = vadd.f32 0.0, %v1212
      %1214 = vdwg.mxu0
      %1215 = vmatprep.subr.bf16.mxu0 0
      %1216 = vmatpush1.bf16.msra.mxu0 0
      %1217 = vmatprep.subr.bf16.mxu0 0
      %1218 = vmatpush1.bf16.msra.mxu0 0
      %1219 = vmatprep.subr.bf16.mxu0 0
      %1220 = vmatpush1.bf16.msra.mxu0 0
      %1221 = vmatprep.subr.bf16.mxu0 %v1041
      %1222 = vmatpush1.bf16.msra.mxu0 %v1038
      %1223 = vmatprep.subr.bf16.mxu0 %v962
      %1224 = vmatpush1.bf16.msra.mxu0 %v961
      %1225 = vmatprep.subr.bf16.mxu0 %v952
      %1226 = vmatpush1.bf16.msra.mxu0 %v951
      %1227 = vmatprep.subr.bf16.mxu0 %v942
      %1228 = vmatpush1.bf16.msra.mxu0 %v941
      %1229 = vmatprep.subr.bf16.mxu0 %v932
      %1230 = vmatpush1.bf16.msra.mxu0 %v931
      %1231 = vmatprep.subr.bf16.mxu0 0
      %1232 = vmatpush2.bf16.msra.mxu0 0
      %1233 = vmatprep.subr.bf16.mxu0 0
      %1234 = vmatpush2.bf16.msra.mxu0 0
      %1235 = vmatprep.subr.bf16.mxu0 0
      %1236 = vmatpush2.bf16.msra.mxu0 0
      %1237 = vmatprep.subr.bf16.mxu0 0
      %1238 = vmatpush2.bf16.msra.mxu0 0
      %1239 = vmatprep.subr.bf16.mxu0 0
      %1240 = vmatpush2.bf16.msra.mxu0 0
      %1241 = vmatprep.subr.bf16.mxu0 0
      %1242 = vmatpush2.bf16.msra.mxu0 0
      %1243 = vmatprep.subr.bf16.mxu0 0
      %1244 = vmatpush2.bf16.msra.mxu0 0
      %1245 = vmatprep.subr.bf16.mxu0 0
      %1246 = vmatpush2.bf16.msra.mxu0 0
      %1247 = vmatprep.mubr.bf16.mxu0 0
      %1248 = vmatmul.mubr.bf16.gmra.mxu0 %v471
      %v1249 = vpop.f32.mrf.mxu0
      %v1250 = vadd.f32 0.0, %v1249
      %v1251 = vpop.f32.mrf.mxu0
      %v1252 = vadd.f32 0.0, %v1251
      %v1253 = vpop.f32.mrf.mxu0
      %v1254 = vadd.f32 0.0, %v1253
      %v1255 = vpop.f32.mrf.mxu0
      %v1256 = vadd.f32 0.0, %v1255
      %1257 = vdwg.mxu0
      %v1258 = vmax.f32 %v542, %v1078
      %v1259 = vmax.f32 %v544, %v1080
      %v1260 = vmax.f32 %v585, %v1121
      %v1261 = vmax.f32 %v587, %v1123
      %v1262 = vmax.f32 %v628, %v1164
      %v1263 = vmax.f32 %v630, %v1166
      %v1264 = vmax.f32 %v671, %v1207
      %v1265 = vmax.f32 %v673, %v1209
      %v1266 = vmax.f32 %v714, %v1250
      %v1267 = vmax.f32 %v716, %v1252
      %v1268 = vmax.f32 %v546, %v1082
      %v1269 = vmax.f32 %v548, %v1084
      %v1270 = vmax.f32 %v589, %v1125
      %v1271 = vmax.f32 %v591, %v1127
      %v1272 = vmax.f32 %v632, %v1168
      %v1273 = vmax.f32 %v634, %v1170
      %v1274 = vmax.f32 %v675, %v1211
      %v1275 = vmax.f32 %v677, %v1213
      %v1276 = vmax.f32 %v718, %v1254
      %v1277 = vmax.f32 %v720, %v1256
      %s1278 = scalar_lea.vmem %s165, 800
      %v1279 = vld [vmem:[%s1278] sm:$0xff]
      %v1280 = vld [vmem:[%s1278 + $0x8] sm:$0xff]
      %v1281 = vld [vmem:[%s1278 + $0x10] sm:$0xff]
      %v1282 = vld [vmem:[%s1278 + $0x18] sm:$0xff]
      %v1283 = vld [vmem:[%s1278 + $0x20] sm:$0xff]
      %v1284 = vld [vmem:[%s1278 + $0x28] sm:$0xff]
      %v1285 = vld [vmem:[%s1278 + $0x30] sm:$0xff]
      %v1286 = vld [vmem:[%s1278 + $0x38] sm:$0xff]
      %v1287 = vld [vmem:[%s1278 + $0x40] sm:$0xff]
      %v1288 = vld [vmem:[%s1278 + $0x48] sm:$0xff]
      %v1289 = vld [vmem:[%s1278 + $0x50] sm:$0xff]
      %v1290 = vld [vmem:[%s1278 + $0x58] sm:$0xff]
      %v1291 = vld [vmem:[%s1278 + $0x60] sm:$0xff]
      %v1292 = vld [vmem:[%s1278 + $0x68] sm:$0xff]
      %v1293 = vld [vmem:[%s1278 + $0x70] sm:$0xff]
      %v1294 = vld [vmem:[%s1278 + $0x78] sm:$0xff]
      %v1295 = vld [vmem:[%s1278 + $0x80] sm:$0xff]
      %v1296 = vld [vmem:[%s1278 + $0x88] sm:$0xff]
      %v1297 = vld [vmem:[%s1278 + $0x90] sm:$0xff]
      %v1298 = vld [vmem:[%s1278 + $0x98] sm:$0xff]
      %v1299 = vld [vmem:[%s1278 + $0xa0] sm:$0xff]
      %v1300 = vld [vmem:[%s1278 + $0xa8] sm:$0xff]
      %v1301 = vld [vmem:[%s1278 + $0xb0] sm:$0xff]
      %v1302 = vld [vmem:[%s1278 + $0xb8] sm:$0xff]
      %v1303 = vld [vmem:[%s1278 + $0xc0] sm:$0xff]
      %v1304 = vld [vmem:[%s1278 + $0xc8] sm:$0xff]
      %v1305 = vld [vmem:[%s1278 + $0xd0] sm:$0xff]
      %v1306 = vld [vmem:[%s1278 + $0xd8] sm:$0xff]
      %v1307 = vld [vmem:[%s1278 + $0xe0] sm:$0xff]
      %v1308 = vld [vmem:[%s1278 + $0xe8] sm:$0xff]
      %v1309 = vld [vmem:[%s1278 + $0xf0] sm:$0xff]
      %v1310 = vld [vmem:[%s1278 + $0xf8] sm:$0xff]
      %v1311 = vld [vmem:[%s1278 + $0x100] sm:$0xff]
      %v1312 = vld [vmem:[%s1278 + $0x108] sm:$0xff]
      %v1313 = vld [vmem:[%s1278 + $0x110] sm:$0xff]
      %v1314 = vld [vmem:[%s1278 + $0x118] sm:$0xff]
      %v1315 = vld [vmem:[%s1278 + $0x120] sm:$0xff]
      %v1316 = vld [vmem:[%s1278 + $0x128] sm:$0xff]
      %v1317 = vld [vmem:[%s1278 + $0x130] sm:$0xff]
      %v1318 = vld [vmem:[%s1278 + $0x138] sm:$0xff]
      %v1319 = vld [vmem:[%s1278 + $0x140] sm:$0xff]
      %v1320 = vld [vmem:[%s1278 + $0x148] sm:$0xff]
      %v1321 = vld [vmem:[%s1278 + $0x150] sm:$0xff]
      %v1322 = vld [vmem:[%s1278 + $0x158] sm:$0xff]
      %v1323 = vld [vmem:[%s1278 + $0x160] sm:$0xff]
      %v1324 = vld [vmem:[%s1278 + $0x168] sm:$0x33]
      %v1325 = vld [vmem:[%s1278 + $0x170] sm:$0x33]
      %v1326 = vld [vmem:[%s1278 + $0x178] sm:$0x33]
      %v1327 = vld [vmem:[%s1278 + $0x180] sm:$0x33]
      %v1328 = vld [vmem:[%s1278 + $0x188] sm:$0x33]
      %v1379 = vunpack.c.l.b16 %v1279
      %v1380 = vunpack.c.h.b16 %v1279
      %v1381 = vunpack.c.l.b16 %v1280
      %v1382 = vunpack.c.h.b16 %v1280
      %v1383 = vunpack.c.l.b16 %v1281
      %v1384 = vunpack.c.h.b16 %v1281
      %v1385 = vunpack.c.l.b16 %v1282
      %v1386 = vunpack.c.h.b16 %v1282
      %v1387 = vunpack.c.l.b16 %v1283
      %v1388 = vunpack.c.h.b16 %v1283
      %v1389 = vunpack.c.l.b16 %v1284
      %v1390 = vunpack.c.h.b16 %v1284
      %v1391 = vunpack.c.l.b16 %v1285
      %v1392 = vunpack.c.h.b16 %v1285
      %v1393 = vunpack.c.l.b16 %v1286
      %v1394 = vunpack.c.h.b16 %v1286
      %v1395 = vunpack.c.l.b16 %v1287
      %v1396 = vunpack.c.h.b16 %v1287
      %v1397 = vunpack.c.l.b16 %v1288
      %v1398 = vunpack.c.h.b16 %v1288
      %v1399 = vunpack.c.l.b16 %v1289
      %v1400 = vunpack.c.h.b16 %v1289
      %v1401 = vunpack.c.l.b16 %v1290
      %v1402 = vunpack.c.h.b16 %v1290
      %v1403 = vunpack.c.l.b16 %v1291
      %v1404 = vunpack.c.h.b16 %v1291
      %v1405 = vunpack.c.l.b16 %v1292
      %v1406 = vunpack.c.h.b16 %v1292
      %v1407 = vunpack.c.l.b16 %v1293
      %v1408 = vunpack.c.h.b16 %v1293
      %v1409 = vunpack.c.l.b16 %v1294
      %v1410 = vunpack.c.h.b16 %v1294
      %v1411 = vunpack.c.l.b16 %v1295
      %v1412 = vunpack.c.h.b16 %v1295
      %v1413 = vunpack.c.l.b16 %v1296
      %v1414 = vunpack.c.h.b16 %v1296
      %v1415 = vunpack.c.l.b16 %v1297
      %v1416 = vunpack.c.h.b16 %v1297
      %v1417 = vunpack.c.l.b16 %v1298
      %v1418 = vunpack.c.h.b16 %v1298
      %v1419 = vunpack.c.l.b16 %v1299
      %v1420 = vunpack.c.h.b16 %v1299
      %v1421 = vunpack.c.l.b16 %v1300
      %v1422 = vunpack.c.h.b16 %v1300
      %v1423 = vunpack.c.l.b16 %v1301
      %v1424 = vunpack.c.h.b16 %v1301
      %v1425 = vunpack.c.l.b16 %v1302
      %v1426 = vunpack.c.h.b16 %v1302
      %v1427 = vunpack.c.l.b16 %v1303
      %v1428 = vunpack.c.h.b16 %v1303
      %v1429 = vunpack.c.l.b16 %v1304
      %v1430 = vunpack.c.h.b16 %v1304
      %v1431 = vunpack.c.l.b16 %v1305
      %v1432 = vunpack.c.h.b16 %v1305
      %v1433 = vunpack.c.l.b16 %v1306
      %v1434 = vunpack.c.h.b16 %v1306
      %v1435 = vunpack.c.l.b16 %v1307
      %v1436 = vunpack.c.h.b16 %v1307
      %v1437 = vunpack.c.l.b16 %v1308
      %v1438 = vunpack.c.h.b16 %v1308
      %v1439 = vunpack.c.l.b16 %v1309
      %v1440 = vunpack.c.h.b16 %v1309
      %v1441 = vunpack.c.l.b16 %v1310
      %v1442 = vunpack.c.h.b16 %v1310
      %v1443 = vunpack.c.l.b16 %v1311
      %v1444 = vunpack.c.h.b16 %v1311
      %v1445 = vunpack.c.l.b16 %v1312
      %v1446 = vunpack.c.h.b16 %v1312
      %v1447 = vunpack.c.l.b16 %v1313
      %v1448 = vunpack.c.h.b16 %v1313
      %v1449 = vunpack.c.l.b16 %v1314
      %v1450 = vunpack.c.h.b16 %v1314
      %v1451 = vunpack.c.l.b16 %v1315
      %v1452 = vunpack.c.h.b16 %v1315
      %v1453 = vunpack.c.l.b16 %v1316
      %v1454 = vunpack.c.h.b16 %v1316
      %v1455 = vunpack.c.l.b16 %v1317
      %v1456 = vunpack.c.h.b16 %v1317
      %v1457 = vunpack.c.l.b16 %v1318
      %v1458 = vunpack.c.h.b16 %v1318
      %v1459 = vunpack.c.l.b16 %v1319
      %v1460 = vunpack.c.h.b16 %v1319
      %v1461 = vunpack.c.l.b16 %v1320
      %v1462 = vunpack.c.h.b16 %v1320
      %v1463 = vunpack.c.l.b16 %v1321
      %v1464 = vunpack.c.h.b16 %v1321
      %v1465 = vunpack.c.l.b16 %v1322
      %v1466 = vunpack.c.h.b16 %v1322
      %v1467 = vunpack.c.l.b16 %v1323
      %v1468 = vunpack.c.h.b16 %v1323
      %v1469 = vunpack.c.l.b16 %v1324
      %v1470 = vunpack.c.h.b16 %v1324
      %v1471 = vunpack.c.l.b16 %v1325
      %v1472 = vunpack.c.h.b16 %v1325
      %v1473 = vunpack.c.l.b16 %v1326
      %v1474 = vunpack.c.h.b16 %v1326
      %v1475 = vunpack.c.l.b16 %v1327
      %v1476 = vunpack.c.h.b16 %v1327
      %v1477 = vunpack.c.l.b16 %v1328
      %v1478 = vunpack.c.h.b16 %v1328
      %v1479 = vpack.c.b16 %v1389, %v1379
      %v1480 = vpack.c.b16 %v1390, %v1380
      %v1481 = vpack.c.b16 %v1391, %v1381
      %v1482 = vpack.c.b16 %v1392, %v1382
      %v1483 = vpack.c.b16 %v1393, %v1383
      %v1484 = vpack.c.b16 %v1394, %v1384
      %v1485 = vpack.c.b16 %v1395, %v1385
      %v1486 = vpack.c.b16 %v1396, %v1386
      %v1487 = vpack.c.b16 %v1397, %v1387
      %v1488 = vpack.c.b16 %v1398, %v1388
      %v1489 = vpack.c.b16 %v1409, %v1399
      %v1490 = vpack.c.b16 %v1410, %v1400
      %v1491 = vpack.c.b16 %v1411, %v1401
      %v1492 = vpack.c.b16 %v1412, %v1402
      %v1493 = vpack.c.b16 %v1413, %v1403
      %v1494 = vpack.c.b16 %v1414, %v1404
      %v1495 = vpack.c.b16 %v1415, %v1405
      %v1496 = vpack.c.b16 %v1416, %v1406
      %v1497 = vpack.c.b16 %v1417, %v1407
      %v1498 = vpack.c.b16 %v1418, %v1408
      %v1499 = vpack.c.b16 %v1429, %v1419
      %v1500 = vpack.c.b16 %v1430, %v1420
      %v1501 = vpack.c.b16 %v1431, %v1421
      %v1502 = vpack.c.b16 %v1432, %v1422
      %v1503 = vpack.c.b16 %v1433, %v1423
      %v1504 = vpack.c.b16 %v1434, %v1424
      %v1505 = vpack.c.b16 %v1435, %v1425
      %v1506 = vpack.c.b16 %v1436, %v1426
      %v1507 = vpack.c.b16 %v1437, %v1427
      %v1508 = vpack.c.b16 %v1438, %v1428
      %v1509 = vpack.c.b16 %v1449, %v1439
      %v1510 = vpack.c.b16 %v1450, %v1440
      %v1511 = vpack.c.b16 %v1451, %v1441
      %v1512 = vpack.c.b16 %v1452, %v1442
      %v1513 = vpack.c.b16 %v1453, %v1443
      %v1514 = vpack.c.b16 %v1454, %v1444
      %v1515 = vpack.c.b16 %v1455, %v1445
      %v1516 = vpack.c.b16 %v1456, %v1446
      %v1517 = vpack.c.b16 %v1457, %v1447
      %v1518 = vpack.c.b16 %v1458, %v1448
      %v1519 = vpack.c.b16 %v1469, %v1459
      %v1520 = vpack.c.b16 %v1470, %v1460
      %v1521 = vpack.c.b16 %v1471, %v1461
      %v1522 = vpack.c.b16 %v1472, %v1462
      %v1523 = vpack.c.b16 %v1473, %v1463
      %v1524 = vpack.c.b16 %v1474, %v1464
      %v1525 = vpack.c.b16 %v1475, %v1465
      %v1526 = vpack.c.b16 %v1476, %v1466
      %v1527 = vpack.c.b16 %v1477, %v1467
      %v1528 = vpack.c.b16 %v1478, %v1468
      %v1570 = vand.u32 %v1519, %v476
      %v1573 = vand.u32 %v1520, %v476
      %v1576 = vand.u32 %v1521, %v476
      %v1579 = vand.u32 %v1522, %v476
      %v1582 = vand.u32 %v1523, %v476
      %v1585 = vand.u32 %v1524, %v476
      %v1588 = vand.u32 %v1525, %v476
      %v1591 = vand.u32 %v1526, %v476
      %v1594 = vand.u32 %v1527, %v476
      %v1597 = vand.u32 %v1528, %v476
      %1599 = vmatprep.subr.bf16.mxu0 0
      %1600 = vmatpush1.bf16.msra.mxu0 0
      %1601 = vmatprep.subr.bf16.mxu0 0
      %1602 = vmatpush1.bf16.msra.mxu0 0
      %1603 = vmatprep.subr.bf16.mxu0 0
      %1604 = vmatpush1.bf16.msra.mxu0 0
      %1605 = vmatprep.subr.bf16.mxu0 %v1573
      %1606 = vmatpush1.bf16.msra.mxu0 %v1570
      %1607 = vmatprep.subr.bf16.mxu0 %v1510
      %1608 = vmatpush1.bf16.msra.mxu0 %v1509
      %1609 = vmatprep.subr.bf16.mxu0 %v1500
      %1610 = vmatpush1.bf16.msra.mxu0 %v1499
      %1611 = vmatprep.subr.bf16.mxu0 %v1490
      %1612 = vmatpush1.bf16.msra.mxu0 %v1489
      %1613 = vmatprep.subr.bf16.mxu0 %v1480
      %1614 = vmatpush1.bf16.msra.mxu0 %v1479
      %1615 = vmatprep.subr.bf16.mxu0 0
      %1616 = vmatpush2.bf16.msra.mxu0 0
      %1617 = vmatprep.subr.bf16.mxu0 0
      %1618 = vmatpush2.bf16.msra.mxu0 0
      %1619 = vmatprep.subr.bf16.mxu0 0
      %1620 = vmatpush2.bf16.msra.mxu0 0
      %1621 = vmatprep.subr.bf16.mxu0 0
      %1622 = vmatpush2.bf16.msra.mxu0 0
      %1623 = vmatprep.subr.bf16.mxu0 0
      %1624 = vmatpush2.bf16.msra.mxu0 0
      %1625 = vmatprep.subr.bf16.mxu0 0
      %1626 = vmatpush2.bf16.msra.mxu0 0
      %1627 = vmatprep.subr.bf16.mxu0 0
      %1628 = vmatpush2.bf16.msra.mxu0 0
      %1629 = vmatprep.subr.bf16.mxu0 0
      %1630 = vmatpush2.bf16.msra.mxu0 0
      %1631 = vmatprep.mubr.bf16.mxu0 0
      %1632 = vmatmul.mubr.bf16.gmra.mxu0 %v471
      %v1633 = vpop.f32.mrf.mxu0
      %v1634 = vadd.f32 0.0, %v1633
      %v1635 = vpop.f32.mrf.mxu0
      %v1636 = vadd.f32 0.0, %v1635
      %v1637 = vpop.f32.mrf.mxu0
      %v1638 = vadd.f32 0.0, %v1637
      %v1639 = vpop.f32.mrf.mxu0
      %v1640 = vadd.f32 0.0, %v1639
      %1641 = vdwg.mxu0
      %1642 = vmatprep.subr.bf16.mxu0 0
      %1643 = vmatpush1.bf16.msra.mxu0 0
      %1644 = vmatprep.subr.bf16.mxu0 0
      %1645 = vmatpush1.bf16.msra.mxu0 0
      %1646 = vmatprep.subr.bf16.mxu0 0
      %1647 = vmatpush1.bf16.msra.mxu0 0
      %1648 = vmatprep.subr.bf16.mxu0 %v1579
      %1649 = vmatpush1.bf16.msra.mxu0 %v1576
      %1650 = vmatprep.subr.bf16.mxu0 %v1512
      %1651 = vmatpush1.bf16.msra.mxu0 %v1511
      %1652 = vmatprep.subr.bf16.mxu0 %v1502
      %1653 = vmatpush1.bf16.msra.mxu0 %v1501
      %1654 = vmatprep.subr.bf16.mxu0 %v1492
      %1655 = vmatpush1.bf16.msra.mxu0 %v1491
      %1656 = vmatprep.subr.bf16.mxu0 %v1482
      %1657 = vmatpush1.bf16.msra.mxu0 %v1481
      %1658 = vmatprep.subr.bf16.mxu0 0
      %1659 = vmatpush2.bf16.msra.mxu0 0
      %1660 = vmatprep.subr.bf16.mxu0 0
      %1661 = vmatpush2.bf16.msra.mxu0 0
      %1662 = vmatprep.subr.bf16.mxu0 0
      %1663 = vmatpush2.bf16.msra.mxu0 0
      %1664 = vmatprep.subr.bf16.mxu0 0
      %1665 = vmatpush2.bf16.msra.mxu0 0
      %1666 = vmatprep.subr.bf16.mxu0 0
      %1667 = vmatpush2.bf16.msra.mxu0 0
      %1668 = vmatprep.subr.bf16.mxu0 0
      %1669 = vmatpush2.bf16.msra.mxu0 0
      %1670 = vmatprep.subr.bf16.mxu0 0
      %1671 = vmatpush2.bf16.msra.mxu0 0
      %1672 = vmatprep.subr.bf16.mxu0 0
      %1673 = vmatpush2.bf16.msra.mxu0 0
      %1674 = vmatprep.mubr.bf16.mxu0 0
      %1675 = vmatmul.mubr.bf16.gmra.mxu0 %v471
      %v1676 = vpop.f32.mrf.mxu0
      %v1677 = vadd.f32 0.0, %v1676
      %v1678 = vpop.f32.mrf.mxu0
      %v1679 = vadd.f32 0.0, %v1678
      %v1680 = vpop.f32.mrf.mxu0
      %v1681 = vadd.f32 0.0, %v1680
      %v1682 = vpop.f32.mrf.mxu0
      %v1683 = vadd.f32 0.0, %v1682
      %1684 = vdwg.mxu0
      %1685 = vmatprep.subr.bf16.mxu0 0
      %1686 = vmatpush1.bf16.msra.mxu0 0
      %1687 = vmatprep.subr.bf16.mxu0 0
      %1688 = vmatpush1.bf16.msra.mxu0 0
      %1689 = vmatprep.subr.bf16.mxu0 0
      %1690 = vmatpush1.bf16.msra.mxu0 0
      %1691 = vmatprep.subr.bf16.mxu0 %v1585
      %1692 = vmatpush1.bf16.msra.mxu0 %v1582
      %1693 = vmatprep.subr.bf16.mxu0 %v1514
      %1694 = vmatpush1.bf16.msra.mxu0 %v1513
      %1695 = vmatprep.subr.bf16.mxu0 %v1504
      %1696 = vmatpush1.bf16.msra.mxu0 %v1503
      %1697 = vmatprep.subr.bf16.mxu0 %v1494
      %1698 = vmatpush1.bf16.msra.mxu0 %v1493
      %1699 = vmatprep.subr.bf16.mxu0 %v1484
      %1700 = vmatpush1.bf16.msra.mxu0 %v1483
      %1701 = vmatprep.subr.bf16.mxu0 0
      %1702 = vmatpush2.bf16.msra.mxu0 0
      %1703 = vmatprep.subr.bf16.mxu0 0
      %1704 = vmatpush2.bf16.msra.mxu0 0
      %1705 = vmatprep.subr.bf16.mxu0 0
      %1706 = vmatpush2.bf16.msra.mxu0 0
      %1707 = vmatprep.subr.bf16.mxu0 0
      %1708 = vmatpush2.bf16.msra.mxu0 0
      %1709 = vmatprep.subr.bf16.mxu0 0
      %1710 = vmatpush2.bf16.msra.mxu0 0
      %1711 = vmatprep.subr.bf16.mxu0 0
      %1712 = vmatpush2.bf16.msra.mxu0 0
      %1713 = vmatprep.subr.bf16.mxu0 0
      %1714 = vmatpush2.bf16.msra.mxu0 0
      %1715 = vmatprep.subr.bf16.mxu0 0
      %1716 = vmatpush2.bf16.msra.mxu0 0
      %1717 = vmatprep.mubr.bf16.mxu0 0
      %1718 = vmatmul.mubr.bf16.gmra.mxu0 %v471
      %v1719 = vpop.f32.mrf.mxu0
      %v1720 = vadd.f32 0.0, %v1719
      %v1721 = vpop.f32.mrf.mxu0
      %v1722 = vadd.f32 0.0, %v1721
      %v1723 = vpop.f32.mrf.mxu0
      %v1724 = vadd.f32 0.0, %v1723
      %v1725 = vpop.f32.mrf.mxu0
      %v1726 = vadd.f32 0.0, %v1725
      %1727 = vdwg.mxu0
      %1728 = vmatprep.subr.bf16.mxu0 0
      %1729 = vmatpush1.bf16.msra.mxu0 0
      %1730 = vmatprep.subr.bf16.mxu0 0
      %1731 = vmatpush1.bf16.msra.mxu0 0
      %1732 = vmatprep.subr.bf16.mxu0 0
      %1733 = vmatpush1.bf16.msra.mxu0 0
      %1734 = vmatprep.subr.bf16.mxu0 %v1591
      %1735 = vmatpush1.bf16.msra.mxu0 %v1588
      %1736 = vmatprep.subr.bf16.mxu0 %v1516
      %1737 = vmatpush1.bf16.msra.mxu0 %v1515
      %1738 = vmatprep.subr.bf16.mxu0 %v1506
      %1739 = vmatpush1.bf16.msra.mxu0 %v1505
      %1740 = vmatprep.subr.bf16.mxu0 %v1496
      %1741 = vmatpush1.bf16.msra.mxu0 %v1495
      %1742 = vmatprep.subr.bf16.mxu0 %v1486
      %1743 = vmatpush1.bf16.msra.mxu0 %v1485
      %1744 = vmatprep.subr.bf16.mxu0 0
      %1745 = vmatpush2.bf16.msra.mxu0 0
      %1746 = vmatprep.subr.bf16.mxu0 0
      %1747 = vmatpush2.bf16.msra.mxu0 0
      %1748 = vmatprep.subr.bf16.mxu0 0
      %1749 = vmatpush2.bf16.msra.mxu0 0
      %1750 = vmatprep.subr.bf16.mxu0 0
      %1751 = vmatpush2.bf16.msra.mxu0 0
      %1752 = vmatprep.subr.bf16.mxu0 0
      %1753 = vmatpush2.bf16.msra.mxu0 0
      %1754 = vmatprep.subr.bf16.mxu0 0
      %1755 = vmatpush2.bf16.msra.mxu0 0
      %1756 = vmatprep.subr.bf16.mxu0 0
      %1757 = vmatpush2.bf16.msra.mxu0 0
      %1758 = vmatprep.subr.bf16.mxu0 0
      %1759 = vmatpush2.bf16.msra.mxu0 0
      %1760 = vmatprep.mubr.bf16.mxu0 0
      %1761 = vmatmul.mubr.bf16.gmra.mxu0 %v471
      %v1762 = vpop.f32.mrf.mxu0
      %v1763 = vadd.f32 0.0, %v1762
      %v1764 = vpop.f32.mrf.mxu0
      %v1765 = vadd.f32 0.0, %v1764
      %v1766 = vpop.f32.mrf.mxu0
      %v1767 = vadd.f32 0.0, %v1766
      %v1768 = vpop.f32.mrf.mxu0
      %v1769 = vadd.f32 0.0, %v1768
      %1770 = vdwg.mxu0
      %1771 = vmatprep.subr.bf16.mxu0 0
      %1772 = vmatpush1.bf16.msra.mxu0 0
      %1773 = vmatprep.subr.bf16.mxu0 0
      %1774 = vmatpush1.bf16.msra.mxu0 0
      %1775 = vmatprep.subr.bf16.mxu0 0
      %1776 = vmatpush1.bf16.msra.mxu0 0
      %1777 = vmatprep.subr.bf16.mxu0 %v1597
      %1778 = vmatpush1.bf16.msra.mxu0 %v1594
      %1779 = vmatprep.subr.bf16.mxu0 %v1518
      %1780 = vmatpush1.bf16.msra.mxu0 %v1517
      %1781 = vmatprep.subr.bf16.mxu0 %v1508
      %1782 = vmatpush1.bf16.msra.mxu0 %v1507
      %1783 = vmatprep.subr.bf16.mxu0 %v1498
      %1784 = vmatpush1.bf16.msra.mxu0 %v1497
      %1785 = vmatprep.subr.bf16.mxu0 %v1488
      %1786 = vmatpush1.bf16.msra.mxu0 %v1487
      %1787 = vmatprep.subr.bf16.mxu0 0
      %1788 = vmatpush2.bf16.msra.mxu0 0
      %1789 = vmatprep.subr.bf16.mxu0 0
      %1790 = vmatpush2.bf16.msra.mxu0 0
      %1791 = vmatprep.subr.bf16.mxu0 0
      %1792 = vmatpush2.bf16.msra.mxu0 0
      %1793 = vmatprep.subr.bf16.mxu0 0
      %1794 = vmatpush2.bf16.msra.mxu0 0
      %1795 = vmatprep.subr.bf16.mxu0 0
      %1796 = vmatpush2.bf16.msra.mxu0 0
      %1797 = vmatprep.subr.bf16.mxu0 0
      %1798 = vmatpush2.bf16.msra.mxu0 0
      %1799 = vmatprep.subr.bf16.mxu0 0
      %1800 = vmatpush2.bf16.msra.mxu0 0
      %1801 = vmatprep.subr.bf16.mxu0 0
      %1802 = vmatpush2.bf16.msra.mxu0 0
      %1803 = vmatprep.mubr.bf16.mxu0 0
      %1804 = vmatmul.mubr.bf16.gmra.mxu0 %v471
      %v1805 = vpop.f32.mrf.mxu0
      %v1806 = vadd.f32 0.0, %v1805
      %v1807 = vpop.f32.mrf.mxu0
      %v1808 = vadd.f32 0.0, %v1807
      %v1809 = vpop.f32.mrf.mxu0
      %v1810 = vadd.f32 0.0, %v1809
      %v1811 = vpop.f32.mrf.mxu0
      %v1812 = vadd.f32 0.0, %v1811
      %1813 = vdwg.mxu0
      %v1814 = vmax.f32 %v1258, %v1634
      %v1815 = vmax.f32 %v1259, %v1636
      %v1816 = vmax.f32 %v1260, %v1677
      %v1817 = vmax.f32 %v1261, %v1679
      %v1818 = vmax.f32 %v1262, %v1720
      %v1819 = vmax.f32 %v1263, %v1722
      %v1820 = vmax.f32 %v1264, %v1763
      %v1821 = vmax.f32 %v1265, %v1765
      %v1822 = vmax.f32 %v1266, %v1806
      %v1823 = vmax.f32 %v1267, %v1808
      %v1824 = vmax.f32 %v1268, %v1638
      %v1825 = vmax.f32 %v1269, %v1640
      %v1826 = vmax.f32 %v1270, %v1681
      %v1827 = vmax.f32 %v1271, %v1683
      %v1828 = vmax.f32 %v1272, %v1724
      %v1829 = vmax.f32 %v1273, %v1726
      %v1830 = vmax.f32 %v1274, %v1767
      %v1831 = vmax.f32 %v1275, %v1769
      %v1832 = vmax.f32 %v1276, %v1810
      %v1833 = vmax.f32 %v1277, %v1812
      %s1834 = scalar_lea.vmem %s165, 1200
      %v1835 = vld [vmem:[%s1834] sm:$0xff]
      %v1836 = vld [vmem:[%s1834 + $0x8] sm:$0xff]
      %v1837 = vld [vmem:[%s1834 + $0x10] sm:$0xff]
      %v1838 = vld [vmem:[%s1834 + $0x18] sm:$0xff]
      %v1839 = vld [vmem:[%s1834 + $0x20] sm:$0xff]
      %v1840 = vld [vmem:[%s1834 + $0x28] sm:$0xff]
      %v1841 = vld [vmem:[%s1834 + $0x30] sm:$0xff]
      %v1842 = vld [vmem:[%s1834 + $0x38] sm:$0xff]
      %v1843 = vld [vmem:[%s1834 + $0x40] sm:$0xff]
      %v1844 = vld [vmem:[%s1834 + $0x48] sm:$0xff]
      %v1845 = vld [vmem:[%s1834 + $0x50] sm:$0xff]
      %v1846 = vld [vmem:[%s1834 + $0x58] sm:$0xff]
      %v1847 = vld [vmem:[%s1834 + $0x60] sm:$0xff]
      %v1848 = vld [vmem:[%s1834 + $0x68] sm:$0xff]
      %v1849 = vld [vmem:[%s1834 + $0x70] sm:$0xff]
      %v1850 = vld [vmem:[%s1834 + $0x78] sm:$0xff]
      %v1851 = vld [vmem:[%s1834 + $0x80] sm:$0xff]
      %v1852 = vld [vmem:[%s1834 + $0x88] sm:$0xff]
      %v1853 = vld [vmem:[%s1834 + $0x90] sm:$0xff]
      %v1854 = vld [vmem:[%s1834 + $0x98] sm:$0xff]
      %v1855 = vld [vmem:[%s1834 + $0xa0] sm:$0xff]
      %v1856 = vld [vmem:[%s1834 + $0xa8] sm:$0xff]
      %v1857 = vld [vmem:[%s1834 + $0xb0] sm:$0xff]
      %v1858 = vld [vmem:[%s1834 + $0xb8] sm:$0xff]
      %v1859 = vld [vmem:[%s1834 + $0xc0] sm:$0xff]
      %v1860 = vld [vmem:[%s1834 + $0xc8] sm:$0xff]
      %v1861 = vld [vmem:[%s1834 + $0xd0] sm:$0xff]
      %v1862 = vld [vmem:[%s1834 + $0xd8] sm:$0xff]
      %v1863 = vld [vmem:[%s1834 + $0xe0] sm:$0xff]
      %v1864 = vld [vmem:[%s1834 + $0xe8] sm:$0xff]
      %v1865 = vld [vmem:[%s1834 + $0xf0] sm:$0xff]
      %v1866 = vld [vmem:[%s1834 + $0xf8] sm:$0xff]
      %v1867 = vld [vmem:[%s1834 + $0x100] sm:$0xff]
      %v1868 = vld [vmem:[%s1834 + $0x108] sm:$0xff]
      %v1869 = vld [vmem:[%s1834 + $0x110] sm:$0xff]
      %v1870 = vld [vmem:[%s1834 + $0x118] sm:$0xff]
      %v1871 = vld [vmem:[%s1834 + $0x120] sm:$0xff]
      %v1872 = vld [vmem:[%s1834 + $0x128] sm:$0xff]
      %v1873 = vld [vmem:[%s1834 + $0x130] sm:$0xff]
      %v1874 = vld [vmem:[%s1834 + $0x138] sm:$0xff]
      %v1875 = vld [vmem:[%s1834 + $0x140] sm:$0xff]
      %v1876 = vld [vmem:[%s1834 + $0x148] sm:$0xff]
      %v1877 = vld [vmem:[%s1834 + $0x150] sm:$0xff]
      %v1878 = vld [vmem:[%s1834 + $0x158] sm:$0xff]
      %v1879 = vld [vmem:[%s1834 + $0x160] sm:$0xff]
      %v1880 = vld [vmem:[%s1834 + $0x168] sm:$0x33]
      %v1881 = vld [vmem:[%s1834 + $0x170] sm:$0x33]
      %v1882 = vld [vmem:[%s1834 + $0x178] sm:$0x33]
      %v1883 = vld [vmem:[%s1834 + $0x180] sm:$0x33]
      %v1884 = vld [vmem:[%s1834 + $0x188] sm:$0x33]
      %v1935 = vunpack.c.l.b16 %v1835
      %v1936 = vunpack.c.h.b16 %v1835
      %v1937 = vunpack.c.l.b16 %v1836
      %v1938 = vunpack.c.h.b16 %v1836
      %v1939 = vunpack.c.l.b16 %v1837
      %v1940 = vunpack.c.h.b16 %v1837
      %v1941 = vunpack.c.l.b16 %v1838
      %v1942 = vunpack.c.h.b16 %v1838
      %v1943 = vunpack.c.l.b16 %v1839
      %v1944 = vunpack.c.h.b16 %v1839
      %v1945 = vunpack.c.l.b16 %v1840
      %v1946 = vunpack.c.h.b16 %v1840
      %v1947 = vunpack.c.l.b16 %v1841
      %v1948 = vunpack.c.h.b16 %v1841
      %v1949 = vunpack.c.l.b16 %v1842
      %v1950 = vunpack.c.h.b16 %v1842
      %v1951 = vunpack.c.l.b16 %v1843
      %v1952 = vunpack.c.h.b16 %v1843
      %v1953 = vunpack.c.l.b16 %v1844
      %v1954 = vunpack.c.h.b16 %v1844
      %v1955 = vunpack.c.l.b16 %v1845
      %v1956 = vunpack.c.h.b16 %v1845
      %v1957 = vunpack.c.l.b16 %v1846
      %v1958 = vunpack.c.h.b16 %v1846
      %v1959 = vunpack.c.l.b16 %v1847
      %v1960 = vunpack.c.h.b16 %v1847
      %v1961 = vunpack.c.l.b16 %v1848
      %v1962 = vunpack.c.h.b16 %v1848
      %v1963 = vunpack.c.l.b16 %v1849
      %v1964 = vunpack.c.h.b16 %v1849
      %v1965 = vunpack.c.l.b16 %v1850
      %v1966 = vunpack.c.h.b16 %v1850
      %v1967 = vunpack.c.l.b16 %v1851
      %v1968 = vunpack.c.h.b16 %v1851
      %v1969 = vunpack.c.l.b16 %v1852
      %v1970 = vunpack.c.h.b16 %v1852
      %v1971 = vunpack.c.l.b16 %v1853
      %v1972 = vunpack.c.h.b16 %v1853
      %v1973 = vunpack.c.l.b16 %v1854
      %v1974 = vunpack.c.h.b16 %v1854
      %v1975 = vunpack.c.l.b16 %v1855
      %v1976 = vunpack.c.h.b16 %v1855
      %v1977 = vunpack.c.l.b16 %v1856
      %v1978 = vunpack.c.h.b16 %v1856
      %v1979 = vunpack.c.l.b16 %v1857
      %v1980 = vunpack.c.h.b16 %v1857
      %v1981 = vunpack.c.l.b16 %v1858
      %v1982 = vunpack.c.h.b16 %v1858
      %v1983 = vunpack.c.l.b16 %v1859
      %v1984 = vunpack.c.h.b16 %v1859
      %v1985 = vunpack.c.l.b16 %v1860
      %v1986 = vunpack.c.h.b16 %v1860
      %v1987 = vunpack.c.l.b16 %v1861
      %v1988 = vunpack.c.h.b16 %v1861
      %v1989 = vunpack.c.l.b16 %v1862
      %v1990 = vunpack.c.h.b16 %v1862
      %v1991 = vunpack.c.l.b16 %v1863
      %v1992 = vunpack.c.h.b16 %v1863
      %v1993 = vunpack.c.l.b16 %v1864
      %v1994 = vunpack.c.h.b16 %v1864
      %v1995 = vunpack.c.l.b16 %v1865
      %v1996 = vunpack.c.h.b16 %v1865
      %v1997 = vunpack.c.l.b16 %v1866
      %v1998 = vunpack.c.h.b16 %v1866
      %v1999 = vunpack.c.l.b16 %v1867
      %v2000 = vunpack.c.h.b16 %v1867
      %v2001 = vunpack.c.l.b16 %v1868
      %v2002 = vunpack.c.h.b16 %v1868
      %v2003 = vunpack.c.l.b16 %v1869
      %v2004 = vunpack.c.h.b16 %v1869
      %v2005 = vunpack.c.l.b16 %v1870
      %v2006 = vunpack.c.h.b16 %v1870
      %v2007 = vunpack.c.l.b16 %v1871
      %v2008 = vunpack.c.h.b16 %v1871
      %v2009 = vunpack.c.l.b16 %v1872
      %v2010 = vunpack.c.h.b16 %v1872
      %v2011 = vunpack.c.l.b16 %v1873
      %v2012 = vunpack.c.h.b16 %v1873
      %v2013 = vunpack.c.l.b16 %v1874
      %v2014 = vunpack.c.h.b16 %v1874
      %v2015 = vunpack.c.l.b16 %v1875
      %v2016 = vunpack.c.h.b16 %v1875
      %v2017 = vunpack.c.l.b16 %v1876
      %v2018 = vunpack.c.h.b16 %v1876
      %v2019 = vunpack.c.l.b16 %v1877
      %v2020 = vunpack.c.h.b16 %v1877
      %v2021 = vunpack.c.l.b16 %v1878
      %v2022 = vunpack.c.h.b16 %v1878
      %v2023 = vunpack.c.l.b16 %v1879
      %v2024 = vunpack.c.h.b16 %v1879
      %v2025 = vunpack.c.l.b16 %v1880
      %v2026 = vunpack.c.h.b16 %v1880
      %v2027 = vunpack.c.l.b16 %v1881
      %v2028 = vunpack.c.h.b16 %v1881
      %v2029 = vunpack.c.l.b16 %v1882
      %v2030 = vunpack.c.h.b16 %v1882
      %v2031 = vunpack.c.l.b16 %v1883
      %v2032 = vunpack.c.h.b16 %v1883
      %v2033 = vunpack.c.l.b16 %v1884
      %v2034 = vunpack.c.h.b16 %v1884
      %v2035 = vpack.c.b16 %v1945, %v1935
      %v2036 = vpack.c.b16 %v1946, %v1936
      %v2037 = vpack.c.b16 %v1947, %v1937
      %v2038 = vpack.c.b16 %v1948, %v1938
      %v2039 = vpack.c.b16 %v1949, %v1939
      %v2040 = vpack.c.b16 %v1950, %v1940
      %v2041 = vpack.c.b16 %v1951, %v1941
      %v2042 = vpack.c.b16 %v1952, %v1942
      %v2043 = vpack.c.b16 %v1953, %v1943
      %v2044 = vpack.c.b16 %v1954, %v1944
      %v2045 = vpack.c.b16 %v1965, %v1955
      %v2046 = vpack.c.b16 %v1966, %v1956
      %v2047 = vpack.c.b16 %v1967, %v1957
      %v2048 = vpack.c.b16 %v1968, %v1958
      %v2049 = vpack.c.b16 %v1969, %v1959
      %v2050 = vpack.c.b16 %v1970, %v1960
      %v2051 = vpack.c.b16 %v1971, %v1961
      %v2052 = vpack.c.b16 %v1972, %v1962
      %v2053 = vpack.c.b16 %v1973, %v1963
      %v2054 = vpack.c.b16 %v1974, %v1964
      %v2055 = vpack.c.b16 %v1985, %v1975
      %v2056 = vpack.c.b16 %v1986, %v1976
      %v2057 = vpack.c.b16 %v1987, %v1977
      %v2058 = vpack.c.b16 %v1988, %v1978
      %v2059 = vpack.c.b16 %v1989, %v1979
      %v2060 = vpack.c.b16 %v1990, %v1980
      %v2061 = vpack.c.b16 %v1991, %v1981
      %v2062 = vpack.c.b16 %v1992, %v1982
      %v2063 = vpack.c.b16 %v1993, %v1983
      %v2064 = vpack.c.b16 %v1994, %v1984
      %v2065 = vpack.c.b16 %v2005, %v1995
      %v2066 = vpack.c.b16 %v2006, %v1996
      %v2067 = vpack.c.b16 %v2007, %v1997
      %v2068 = vpack.c.b16 %v2008, %v1998
      %v2069 = vpack.c.b16 %v2009, %v1999
      %v2070 = vpack.c.b16 %v2010, %v2000
      %v2071 = vpack.c.b16 %v2011, %v2001
      %v2072 = vpack.c.b16 %v2012, %v2002
      %v2073 = vpack.c.b16 %v2013, %v2003
      %v2074 = vpack.c.b16 %v2014, %v2004
      %v2075 = vpack.c.b16 %v2025, %v2015
      %v2076 = vpack.c.b16 %v2026, %v2016
      %v2077 = vpack.c.b16 %v2027, %v2017
      %v2078 = vpack.c.b16 %v2028, %v2018
      %v2079 = vpack.c.b16 %v2029, %v2019
      %v2080 = vpack.c.b16 %v2030, %v2020
      %v2081 = vpack.c.b16 %v2031, %v2021
      %v2082 = vpack.c.b16 %v2032, %v2022
      %v2083 = vpack.c.b16 %v2033, %v2023
      %v2084 = vpack.c.b16 %v2034, %v2024
      %v2126 = vand.u32 %v2075, %v476
      %v2129 = vand.u32 %v2076, %v476
      %v2132 = vand.u32 %v2077, %v476
      %v2135 = vand.u32 %v2078, %v476
      %v2138 = vand.u32 %v2079, %v476
      %v2141 = vand.u32 %v2080, %v476
      %v2144 = vand.u32 %v2081, %v476
      %v2147 = vand.u32 %v2082, %v476
      %v2150 = vand.u32 %v2083, %v476
      %v2153 = vand.u32 %v2084, %v476
      %2155 = vmatprep.subr.bf16.mxu0 0
      %2156 = vmatpush1.bf16.msra.mxu0 0
      %2157 = vmatprep.subr.bf16.mxu0 0
      %2158 = vmatpush1.bf16.msra.mxu0 0
      %2159 = vmatprep.subr.bf16.mxu0 0
      %2160 = vmatpush1.bf16.msra.mxu0 0
      %2161 = vmatprep.subr.bf16.mxu0 %v2129
      %2162 = vmatpush1.bf16.msra.mxu0 %v2126
      %2163 = vmatprep.subr.bf16.mxu0 %v2066
      %2164 = vmatpush1.bf16.msra.mxu0 %v2065
      %2165 = vmatprep.subr.bf16.mxu0 %v2056
      %2166 = vmatpush1.bf16.msra.mxu0 %v2055
      %2167 = vmatprep.subr.bf16.mxu0 %v2046
      %2168 = vmatpush1.bf16.msra.mxu0 %v2045
      %2169 = vmatprep.subr.bf16.mxu0 %v2036
      %2170 = vmatpush1.bf16.msra.mxu0 %v2035
      %2171 = vmatprep.subr.bf16.mxu0 0
      %2172 = vmatpush2.bf16.msra.mxu0 0
      %2173 = vmatprep.subr.bf16.mxu0 0
      %2174 = vmatpush2.bf16.msra.mxu0 0
      %2175 = vmatprep.subr.bf16.mxu0 0
      %2176 = vmatpush2.bf16.msra.mxu0 0
      %2177 = vmatprep.subr.bf16.mxu0 0
      %2178 = vmatpush2.bf16.msra.mxu0 0
      %2179 = vmatprep.subr.bf16.mxu0 0
      %2180 = vmatpush2.bf16.msra.mxu0 0
      %2181 = vmatprep.subr.bf16.mxu0 0
      %2182 = vmatpush2.bf16.msra.mxu0 0
      %2183 = vmatprep.subr.bf16.mxu0 0
      %2184 = vmatpush2.bf16.msra.mxu0 0
      %2185 = vmatprep.subr.bf16.mxu0 0
      %2186 = vmatpush2.bf16.msra.mxu0 0
      %2187 = vmatprep.mubr.bf16.mxu0 0
      %2188 = vmatmul.mubr.bf16.gmra.mxu0 %v471
      %v2189 = vpop.f32.mrf.mxu0
      %v2190 = vadd.f32 0.0, %v2189
      %v2191 = vpop.f32.mrf.mxu0
      %v2192 = vadd.f32 0.0, %v2191
      %v2193 = vpop.f32.mrf.mxu0
      %v2194 = vadd.f32 0.0, %v2193
      %v2195 = vpop.f32.mrf.mxu0
      %v2196 = vadd.f32 0.0, %v2195
      %2197 = vdwg.mxu0
      %2198 = vmatprep.subr.bf16.mxu0 0
      %2199 = vmatpush1.bf16.msra.mxu0 0
      %2200 = vmatprep.subr.bf16.mxu0 0
      %2201 = vmatpush1.bf16.msra.mxu0 0
      %2202 = vmatprep.subr.bf16.mxu0 0
      %2203 = vmatpush1.bf16.msra.mxu0 0
      %2204 = vmatprep.subr.bf16.mxu0 %v2135
      %2205 = vmatpush1.bf16.msra.mxu0 %v2132
      %2206 = vmatprep.subr.bf16.mxu0 %v2068
      %2207 = vmatpush1.bf16.msra.mxu0 %v2067
      %2208 = vmatprep.subr.bf16.mxu0 %v2058
      %2209 = vmatpush1.bf16.msra.mxu0 %v2057
      %2210 = vmatprep.subr.bf16.mxu0 %v2048
      %2211 = vmatpush1.bf16.msra.mxu0 %v2047
      %2212 = vmatprep.subr.bf16.mxu0 %v2038
      %2213 = vmatpush1.bf16.msra.mxu0 %v2037
      %2214 = vmatprep.subr.bf16.mxu0 0
      %2215 = vmatpush2.bf16.msra.mxu0 0
      %2216 = vmatprep.subr.bf16.mxu0 0
      %2217 = vmatpush2.bf16.msra.mxu0 0
      %2218 = vmatprep.subr.bf16.mxu0 0
      %2219 = vmatpush2.bf16.msra.mxu0 0
      %2220 = vmatprep.subr.bf16.mxu0 0
      %2221 = vmatpush2.bf16.msra.mxu0 0
      %2222 = vmatprep.subr.bf16.mxu0 0
      %2223 = vmatpush2.bf16.msra.mxu0 0
      %2224 = vmatprep.subr.bf16.mxu0 0
      %2225 = vmatpush2.bf16.msra.mxu0 0
      %2226 = vmatprep.subr.bf16.mxu0 0
      %2227 = vmatpush2.bf16.msra.mxu0 0
      %2228 = vmatprep.subr.bf16.mxu0 0
      %2229 = vmatpush2.bf16.msra.mxu0 0
      %2230 = vmatprep.mubr.bf16.mxu0 0
      %2231 = vmatmul.mubr.bf16.gmra.mxu0 %v471
      %v2232 = vpop.f32.mrf.mxu0
      %v2233 = vadd.f32 0.0, %v2232
      %v2234 = vpop.f32.mrf.mxu0
      %v2235 = vadd.f32 0.0, %v2234
      %v2236 = vpop.f32.mrf.mxu0
      %v2237 = vadd.f32 0.0, %v2236
      %v2238 = vpop.f32.mrf.mxu0
      %v2239 = vadd.f32 0.0, %v2238
      %2240 = vdwg.mxu0
      %2241 = vmatprep.subr.bf16.mxu0 0
      %2242 = vmatpush1.bf16.msra.mxu0 0
      %2243 = vmatprep.subr.bf16.mxu0 0
      %2244 = vmatpush1.bf16.msra.mxu0 0
      %2245 = vmatprep.subr.bf16.mxu0 0
      %2246 = vmatpush1.bf16.msra.mxu0 0
      %2247 = vmatprep.subr.bf16.mxu0 %v2141
      %2248 = vmatpush1.bf16.msra.mxu0 %v2138
      %2249 = vmatprep.subr.bf16.mxu0 %v2070
      %2250 = vmatpush1.bf16.msra.mxu0 %v2069
      %2251 = vmatprep.subr.bf16.mxu0 %v2060
      %2252 = vmatpush1.bf16.msra.mxu0 %v2059
      %2253 = vmatprep.subr.bf16.mxu0 %v2050
      %2254 = vmatpush1.bf16.msra.mxu0 %v2049
      %2255 = vmatprep.subr.bf16.mxu0 %v2040
      %2256 = vmatpush1.bf16.msra.mxu0 %v2039
      %2257 = vmatprep.subr.bf16.mxu0 0
      %2258 = vmatpush2.bf16.msra.mxu0 0
      %2259 = vmatprep.subr.bf16.mxu0 0
      %2260 = vmatpush2.bf16.msra.mxu0 0
      %2261 = vmatprep.subr.bf16.mxu0 0
      %2262 = vmatpush2.bf16.msra.mxu0 0
      %2263 = vmatprep.subr.bf16.mxu0 0
      %2264 = vmatpush2.bf16.msra.mxu0 0
      %2265 = vmatprep.subr.bf16.mxu0 0
      %2266 = vmatpush2.bf16.msra.mxu0 0
      %2267 = vmatprep.subr.bf16.mxu0 0
      %2268 = vmatpush2.bf16.msra.mxu0 0
      %2269 = vmatprep.subr.bf16.mxu0 0
      %2270 = vmatpush2.bf16.msra.mxu0 0
      %2271 = vmatprep.subr.bf16.mxu0 0
      %2272 = vmatpush2.bf16.msra.mxu0 0
      %2273 = vmatprep.mubr.bf16.mxu0 0
      %2274 = vmatmul.mubr.bf16.gmra.mxu0 %v471
      %v2275 = vpop.f32.mrf.mxu0
      %v2276 = vadd.f32 0.0, %v2275
      %v2277 = vpop.f32.mrf.mxu0
      %v2278 = vadd.f32 0.0, %v2277
      %v2279 = vpop.f32.mrf.mxu0
      %v2280 = vadd.f32 0.0, %v2279
      %v2281 = vpop.f32.mrf.mxu0
      %v2282 = vadd.f32 0.0, %v2281
      %2283 = vdwg.mxu0
      %2284 = vmatprep.subr.bf16.mxu0 0
      %2285 = vmatpush1.bf16.msra.mxu0 0
      %2286 = vmatprep.subr.bf16.mxu0 0
      %2287 = vmatpush1.bf16.msra.mxu0 0
      %2288 = vmatprep.subr.bf16.mxu0 0
      %2289 = vmatpush1.bf16.msra.mxu0 0
      %2290 = vmatprep.subr.bf16.mxu0 %v2147
      %2291 = vmatpush1.bf16.msra.mxu0 %v2144
      %2292 = vmatprep.subr.bf16.mxu0 %v2072
      %2293 = vmatpush1.bf16.msra.mxu0 %v2071
      %2294 = vmatprep.subr.bf16.mxu0 %v2062
      %2295 = vmatpush1.bf16.msra.mxu0 %v2061
      %2296 = vmatprep.subr.bf16.mxu0 %v2052
      %2297 = vmatpush1.bf16.msra.mxu0 %v2051
      %2298 = vmatprep.subr.bf16.mxu0 %v2042
      %2299 = vmatpush1.bf16.msra.mxu0 %v2041
      %2300 = vmatprep.subr.bf16.mxu0 0
      %2301 = vmatpush2.bf16.msra.mxu0 0
      %2302 = vmatprep.subr.bf16.mxu0 0
      %2303 = vmatpush2.bf16.msra.mxu0 0
      %2304 = vmatprep.subr.bf16.mxu0 0
      %2305 = vmatpush2.bf16.msra.mxu0 0
      %2306 = vmatprep.subr.bf16.mxu0 0
      %2307 = vmatpush2.bf16.msra.mxu0 0
      %2308 = vmatprep.subr.bf16.mxu0 0
      %2309 = vmatpush2.bf16.msra.mxu0 0
      %2310 = vmatprep.subr.bf16.mxu0 0
      %2311 = vmatpush2.bf16.msra.mxu0 0
      %2312 = vmatprep.subr.bf16.mxu0 0
      %2313 = vmatpush2.bf16.msra.mxu0 0
      %2314 = vmatprep.subr.bf16.mxu0 0
      %2315 = vmatpush2.bf16.msra.mxu0 0
      %2316 = vmatprep.mubr.bf16.mxu0 0
      %2317 = vmatmul.mubr.bf16.gmra.mxu0 %v471
      %v2318 = vpop.f32.mrf.mxu0
      %v2319 = vadd.f32 0.0, %v2318
      %v2320 = vpop.f32.mrf.mxu0
      %v2321 = vadd.f32 0.0, %v2320
      %v2322 = vpop.f32.mrf.mxu0
      %v2323 = vadd.f32 0.0, %v2322
      %v2324 = vpop.f32.mrf.mxu0
      %v2325 = vadd.f32 0.0, %v2324
      %2326 = vdwg.mxu0
      %2327 = vmatprep.subr.bf16.mxu0 0
      %2328 = vmatpush1.bf16.msra.mxu0 0
      %2329 = vmatprep.subr.bf16.mxu0 0
      %2330 = vmatpush1.bf16.msra.mxu0 0
      %2331 = vmatprep.subr.bf16.mxu0 0
      %2332 = vmatpush1.bf16.msra.mxu0 0
      %2333 = vmatprep.subr.bf16.mxu0 %v2153
      %2334 = vmatpush1.bf16.msra.mxu0 %v2150
      %2335 = vmatprep.subr.bf16.mxu0 %v2074
      %2336 = vmatpush1.bf16.msra.mxu0 %v2073
      %2337 = vmatprep.subr.bf16.mxu0 %v2064
      %2338 = vmatpush1.bf16.msra.mxu0 %v2063
      %2339 = vmatprep.subr.bf16.mxu0 %v2054
      %2340 = vmatpush1.bf16.msra.mxu0 %v2053
      %2341 = vmatprep.subr.bf16.mxu0 %v2044
      %2342 = vmatpush1.bf16.msra.mxu0 %v2043
      %2343 = vmatprep.subr.bf16.mxu0 0
      %2344 = vmatpush2.bf16.msra.mxu0 0
      %2345 = vmatprep.subr.bf16.mxu0 0
      %2346 = vmatpush2.bf16.msra.mxu0 0
      %2347 = vmatprep.subr.bf16.mxu0 0
      %2348 = vmatpush2.bf16.msra.mxu0 0
      %2349 = vmatprep.subr.bf16.mxu0 0
      %2350 = vmatpush2.bf16.msra.mxu0 0
      %2351 = vmatprep.subr.bf16.mxu0 0
      %2352 = vmatpush2.bf16.msra.mxu0 0
      %2353 = vmatprep.subr.bf16.mxu0 0
      %2354 = vmatpush2.bf16.msra.mxu0 0
      %2355 = vmatprep.subr.bf16.mxu0 0
      %2356 = vmatpush2.bf16.msra.mxu0 0
      %2357 = vmatprep.subr.bf16.mxu0 0
      %2358 = vmatpush2.bf16.msra.mxu0 0
      %2359 = vmatprep.mubr.bf16.mxu0 0
      %2360 = vmatmul.mubr.bf16.gmra.mxu0 %v471
      %v2361 = vpop.f32.mrf.mxu0
      %v2362 = vadd.f32 0.0, %v2361
      %v2363 = vpop.f32.mrf.mxu0
      %v2364 = vadd.f32 0.0, %v2363
      %v2365 = vpop.f32.mrf.mxu0
      %v2366 = vadd.f32 0.0, %v2365
      %v2367 = vpop.f32.mrf.mxu0
      %v2368 = vadd.f32 0.0, %v2367
      %2369 = vdwg.mxu0
      %v2370 = vmax.f32 %v1814, %v2190
      %v2371 = vmax.f32 %v1815, %v2192
      %v2372 = vmax.f32 %v1816, %v2233
      %v2373 = vmax.f32 %v1817, %v2235
      %v2374 = vmax.f32 %v1818, %v2276
      %v2375 = vmax.f32 %v1819, %v2278
      %v2376 = vmax.f32 %v1820, %v2319
      %v2377 = vmax.f32 %v1821, %v2321
      %v2378 = vmax.f32 %v1822, %v2362
      %v2379 = vmax.f32 %v1823, %v2364
      %v2380 = vmax.f32 %v1824, %v2194
      %v2381 = vmax.f32 %v1825, %v2196
      %v2382 = vmax.f32 %v1826, %v2237
      %v2383 = vmax.f32 %v1827, %v2239
      %v2384 = vmax.f32 %v1828, %v2280
      %v2385 = vmax.f32 %v1829, %v2282
      %v2386 = vmax.f32 %v1830, %v2323
      %v2387 = vmax.f32 %v1831, %v2325
      %v2388 = vmax.f32 %v1832, %v2366
      %v2389 = vmax.f32 %v1833, %v2368
      %v2390 = vld [vmem:[%s2] sm:$0xff]
      %v2391 = vld [vmem:[%s2 + $0x8] sm:$0xff]
      %2393 = vset.pattern.permute.xlu0 0
      %2394 = vperm.xlu0 %2393, %v2390
      %v2395 = vpop.permute.xlu0 %2394
      %2398 = vset.pattern.permute.xlu0 0
      %2399 = vperm.xlu0 %2398, %v2391
      %v2400 = vpop.permute.xlu0 %2399
      %v2402 = vadd.f32 %v2370, %v2395
      %v2403 = vadd.f32 %v2371, %v2395
      %v2404 = vadd.f32 %v2372, %v2395
      %v2405 = vadd.f32 %v2373, %v2395
      %v2406 = vadd.f32 %v2374, %v2395
      %v2407 = vadd.f32 %v2375, %v2395
      %v2408 = vadd.f32 %v2376, %v2395
      %v2409 = vadd.f32 %v2377, %v2395
      %v2410 = vadd.f32 %v2378, %v2395
      %v2411 = vadd.f32 %v2379, %v2395
      %v2412 = vadd.f32 %v2380, %v2400
      %v2413 = vadd.f32 %v2381, %v2400
      %v2414 = vadd.f32 %v2382, %v2400
      %v2415 = vadd.f32 %v2383, %v2400
      %v2416 = vadd.f32 %v2384, %v2400
      %v2417 = vadd.f32 %v2385, %v2400
      %v2418 = vadd.f32 %v2386, %v2400
      %v2419 = vadd.f32 %v2387, %v2400
      %v2420 = vadd.f32 %v2388, %v2400
      %v2421 = vadd.f32 %v2389, %v2400
      %v2422 = vmax.f32 %v2402, 0.0
      %v2423 = vmax.f32 %v2403, 0.0
      %v2424 = vmax.f32 %v2404, 0.0
      %v2425 = vmax.f32 %v2405, 0.0
      %v2426 = vmax.f32 %v2406, 0.0
      %v2427 = vmax.f32 %v2407, 0.0
      %v2428 = vmax.f32 %v2408, 0.0
      %v2429 = vmax.f32 %v2409, 0.0
      %v2430 = vmax.f32 %v2410, 0.0
      %v2431 = vmax.f32 %v2411, 0.0
      %v2432 = vmax.f32 %v2412, 0.0
      %v2433 = vmax.f32 %v2413, 0.0
      %v2434 = vmax.f32 %v2414, 0.0
      %v2435 = vmax.f32 %v2415, 0.0
      %v2436 = vmax.f32 %v2416, 0.0
      %v2437 = vmax.f32 %v2417, 0.0
      %v2438 = vmax.f32 %v2418, 0.0
      %v2439 = vmax.f32 %v2419, 0.0
      %v2440 = vmax.f32 %v2420, 0.0
      %v2441 = vmax.f32 %v2421, 0.0
      %v2442 = vpack.c.bf16 %v2432, %v2422
      %v2443 = vpack.c.bf16 %v2433, %v2423
      %v2444 = vpack.c.bf16 %v2434, %v2424
      %v2445 = vpack.c.bf16 %v2435, %v2425
      %v2446 = vpack.c.bf16 %v2436, %v2426
      %v2447 = vpack.c.bf16 %v2437, %v2427
      %v2448 = vpack.c.bf16 %v2438, %v2428
      %v2449 = vpack.c.bf16 %v2439, %v2429
      %v2450 = vpack.c.bf16 %v2440, %v2430
      %v2451 = vpack.c.bf16 %v2441, %v2431
      %v2462 = vunpack.c.l.b16 %v2442
      %v2463 = vunpack.c.l.b16 %v2443
      %v2464 = vunpack.c.l.b16 %v2444
      %v2465 = vunpack.c.l.b16 %v2445
      %v2466 = vunpack.c.l.b16 %v2446
      %v2467 = vunpack.c.l.b16 %v2447
      %v2468 = vunpack.c.l.b16 %v2448
      %v2469 = vunpack.c.l.b16 %v2449
      %v2470 = vunpack.c.l.b16 %v2450
      %v2471 = vunpack.c.l.b16 %v2451
      %v2472 = vunpack.c.h.b16 %v2442
      %v2473 = vunpack.c.h.b16 %v2443
      %v2474 = vunpack.c.h.b16 %v2444
      %v2475 = vunpack.c.h.b16 %v2445
      %v2476 = vunpack.c.h.b16 %v2446
      %v2477 = vunpack.c.h.b16 %v2447
      %v2478 = vunpack.c.h.b16 %v2448
      %v2479 = vunpack.c.h.b16 %v2449
      %v2480 = vunpack.c.h.b16 %v2450
      %v2481 = vunpack.c.h.b16 %v2451
      %v2482 = vpack.c.b16 %v2463, %v2462
      %v2483 = vpack.c.b16 %v2465, %v2464
      %v2484 = vpack.c.b16 %v2467, %v2466
      %v2485 = vpack.c.b16 %v2469, %v2468
      %v2486 = vpack.c.b16 %v2471, %v2470
      %v2487 = vpack.c.b16 %v2473, %v2472
      %v2488 = vpack.c.b16 %v2475, %v2474
      %v2489 = vpack.c.b16 %v2477, %v2476
      %v2490 = vpack.c.b16 %v2479, %v2478
      %v2491 = vpack.c.b16 %v2481, %v2480
      %2502 = vst [vmem:[%s170] sm:$0xff] %v2482
      %2503 = vst [vmem:[%s170 + $0x8] sm:$0xff] %v2483
      %2504 = vst [vmem:[%s170 + $0x10] sm:$0xff] %v2484
      %2505 = vst [vmem:[%s170 + $0x18] sm:$0xff] %v2485
      %vm2506 = vcmask 1043456
      %vm2507 = vcmask 523268
      %vm2508 = vmor %vm2507, %vm2506
      %2509 = vst.msk [vmem:[%s170 + $0x20] sm:$0xff] %vm2508, %v2486
      %2510 = vst [vmem:[%s170 + $0x28] sm:$0xff] %v2487
      %2511 = vst [vmem:[%s170 + $0x30] sm:$0xff] %v2488
      %2512 = vst [vmem:[%s170 + $0x38] sm:$0xff] %v2489
      %2513 = vst [vmem:[%s170 + $0x40] sm:$0xff] %v2490
      %2514 = vst.msk [vmem:[%s170 + $0x48] sm:$0xff] %vm2508, %v2491
      %p2515 = scmp.lt.s32.totalorder %s14, 1
      %s2516 = scalar_select %p2515, %s14, 1
      %s2517 = smul.addr %s2516, 20
      %s2518 = smul.addr %s2517, 4
      %s2519 = scalar_lea.vmem %s3, %s2518
      // Predicated region
      $region33: #{cnn_first_forward.3} parent=31 // pred_check
        %p2520 = pneg %p100
      $region34: #{cnn_first_forward.3} parent=31 // pred_check_branch
        %2522 = sbr.rel (%p2520) target = $region36
      $region35: #{cnn_first_forward.3} parent=31 // pred_region
        _
      $region36: #{cnn_first_forward.3} parent=31 // pred_fallthru
        _
    $region32: #{cnn_first_forward.3} parent=5 // pred_fallthru
      _
    %p2523 = scmp.le.s32.totalorder 2, %s9
    // Predicated region
    $region37: #{cnn_first_forward.3} parent=5 // pred_check
      %p2524 = pneg %p2523
    $region38: #{cnn_first_forward.3} parent=5 // pred_check_branch
      %2526 = sbr.rel (%p2524) target = $region40
    $region39: #{cnn_first_forward.3} parent=5 // pred_region
      %s2527 = ssub.s32 %s9, 2
      // Predicated region
      $region41: #{cnn_first_forward.3} parent=39 // pred_check
        %p2528 = pneg %p106
      $region42: #{cnn_first_forward.3} parent=39 // pred_check_branch
        %2530 = sbr.rel (%p2528) target = $region44
      $region43: #{cnn_first_forward.3} parent=39 // pred_region
        %p2531 = scmp.lt.s32.totalorder %s15, 1
        %s2532 = scalar_select %p2531, %s15, 1
        %s2533 = smul.addr %s2532, 20
        %s2534 = smul.addr %s2533, 4
        %s2535 = scalar_lea.vmem %s3, %s2534
      $region44: #{cnn_first_forward.3} parent=39 // pred_fallthru
        _
    $region40: #{cnn_first_forward.3} parent=5 // pred_fallthru
      _
  $region6: #{cnn_first_forward.3} parent=0 // loop_footer
    %s13 = sadd.s32 1, %s9
  $region7: #{cnn_first_forward.3} parent=0 // loop_footer_branch
    %8 = sbr.rel target = $region3
  $region8: #{cnn_first_forward.3} parent=0 // loop_exit
    _

// kernel: cnn_first_forward.4
$region0: #{cnn_first_forward.4}
  #allocation0 [shape = 'u32[]', space=smem, size = 0x4, offset = 0x4, fixed_abs, tag = 'smem constant byte address 0x4 - core index']
  #allocation1 [shape = 'u32[144,128]{1,0:T(1,128)}', space=vmem, size = 0x12000, scoped, tag = 'internal scratch']
  %s0 = inlined_call_operand.vmem [shape: bf16[2,1,400,120], index: 0, kind: input, shape index: {}]
  %s1 = inlined_call_operand.vmem [shape: bf16[32,400], index: 1, kind: input, shape index: {}]
  %s2 = inlined_call_operand.vmem [shape: f32[32,1], index: 2, kind: input, shape index: {}]
  %s3 = inlined_call_operand.vmem [shape: bf16[2,32,120], index: 3, kind: output, shape index: {}]
  %s4 = sld [smem:[#allocation0]]
  $region45: #{cnn_first_forward.4} parent=0
    _
  %s6 = ssub.s32 1, %s4
  %s7 = scalar_select 0, %s6, %s4
  loop: start=0, step=1, limit=4
  $region2: #{cnn_first_forward.4} parent=0 // loop_pre_header
    _
  $region3: #{cnn_first_forward.4} parent=0 // loop_header
    %s9 = sphi 0, %s13
    %p10 = scmp.ge.s32.totalorder %s9, 4
    %s19 = sphi 0, %s21
    %s22 = sphi 0, %s19
    %s23 = sphi 0, %s22
    %s39 = sphi 0, %s23
    %s43 = sphi 0, %s43
    %s45 = sphi 0, %s43
    %s46 = sphi 0, %s45
    %s60 = sphi 0, %s46
    %s64 = sphi 0, %s64
    %s66 = sphi 0, %s64
    %s67 = sphi 0, %s66
    %s81 = sphi 0, %s67
    %s87 = sphi 0, %s89
    %s90 = sphi 0, %s87
    %s91 = sphi 0, %s90
    %s107 = sphi 0, %s91
  $region4: #{cnn_first_forward.4} parent=0 // loop_header_branch
    %12 = sbr.rel (%p10) target = $region8
  $region5: #{cnn_first_forward.4} parent=0 // loop_body
    %s14 = ssub.s32 %s9, 1
    %s15 = ssub.s32 %s9, 2
    %s16 = sadd.s32 %s9, 1
    %s17 = ssub.s32 %s9, %s16
    %p18 = scmp.eq.s32.totalorder %s17, 0
    %s20 = sadd.s32 %s19, 1
    %s21 = scalar_select %p18, %s19, %s20
    %p24 = pneg %p18
    %p25 = scmp.eq.s32.totalorder %s9, 1
    %p26 = por %p24, %p25
    %p27 = scmp.ne.s32.totalorder %s19, %s22
    %p28 = scmp.eq.s32.totalorder %s9, 0
    %p29 = por %p27, %p28
    %p30 = scmp.ne.s32.totalorder %s19, %s22
    %p31 = scmp.eq.s32.totalorder %s14, 1
    %p32 = por %p30, %p31
    %p33 = scmp.ne.s32.totalorder %s22, %s23
    %p34 = scmp.eq.s32.totalorder %s14, 0
    %p35 = por %p33, %p34
    %p36 = scmp.ne.s32.totalorder %s22, %s23
    %p37 = scmp.eq.s32.totalorder %s15, 1
    %p38 = por %p36, %p37
    %p40 = scmp.ne.s32.totalorder %s23, %s39
    %p41 = scmp.eq.s32.totalorder %s15, 0
    %p42 = por %p40, %p41
    %s44 = sadd.s32 %s43, 1
    %p47 = scmp.eq.s32.totalorder %s9, 1
    %p48 = scmp.ne.s32.totalorder %s43, %s45
    %p49 = scmp.eq.s32.totalorder %s9, 0
    %p50 = por %p48, %p49
    %p51 = scmp.ne.s32.totalorder %s43, %s45
    %p52 = scmp.eq.s32.totalorder %s14, 1
    %p53 = por %p51, %p52
    %p54 = scmp.ne.s32.totalorder %s45, %s46
    %p55 = scmp.eq.s32.totalorder %s14, 0
    %p56 = por %p54, %p55
    %p57 = scmp.ne.s32.totalorder %s45, %s46
    %p58 = scmp.eq.s32.totalorder %s15, 1
    %p59 = por %p57, %p58
    %p61 = scmp.ne.s32.totalorder %s46, %s60
    %p62 = scmp.eq.s32.totalorder %s15, 0
    %p63 = por %p61, %p62
    %s65 = sadd.s32 %s64, 1
    %p68 = scmp.eq.s32.totalorder %s9, 1
    %p69 = scmp.ne.s32.totalorder %s64, %s66
    %p70 = scmp.eq.s32.totalorder %s9, 0
    %p71 = por %p69, %p70
    %p72 = scmp.ne.s32.totalorder %s64, %s66
    %p73 = scmp.eq.s32.totalorder %s14, 1
    %p74 = por %p72, %p73
    %p75 = scmp.ne.s32.totalorder %s66, %s67
    %p76 = scmp.eq.s32.totalorder %s14, 0
    %p77 = por %p75, %p76
    %p78 = scmp.ne.s32.totalorder %s66, %s67
    %p79 = scmp.eq.s32.totalorder %s15, 1
    %p80 = por %p78, %p79
    %p82 = scmp.ne.s32.totalorder %s67, %s81
    %p83 = scmp.eq.s32.totalorder %s15, 0
    %p84 = por %p82, %p83
    %s85 = ssub.s32 %s9, %s16
    %p86 = scmp.eq.s32.totalorder %s85, 0
    %s88 = sadd.s32 %s87, 1
    %s89 = scalar_select %p86, %s87, %s88
    %p92 = pneg %p86
    %p93 = scmp.eq.s32.totalorder %s9, 1
    %p94 = por %p92, %p93
    %p95 = scmp.ne.s32.totalorder %s87, %s90
    %p96 = scmp.eq.s32.totalorder %s9, 0
    %p97 = por %p95, %p96
    %p98 = scmp.ne.s32.totalorder %s87, %s90
    %p99 = scmp.eq.s32.totalorder %s14, 1
    %p100 = por %p98, %p99
    %p101 = scmp.ne.s32.totalorder %s90, %s91
    %p102 = scmp.eq.s32.totalorder %s14, 0
    %p103 = por %p101, %p102
    %p104 = scmp.ne.s32.totalorder %s90, %s91
    %p105 = scmp.eq.s32.totalorder %s15, 1
    %p106 = por %p104, %p105
    %p108 = scmp.ne.s32.totalorder %s91, %s107
    %p109 = scmp.eq.s32.totalorder %s15, 0
    %p110 = por %p108, %p109
    %p111 = scmp.le.s32.totalorder 1, %s9
    %p112 = scmp.lt.s32.totalorder %s9, 3
    %p113 = pnand %p111, %p112
    %p114 = pneg %p113
    // Predicated region
    $region9: #{cnn_first_forward.4} parent=5 // pred_check
      _
    $region10: #{cnn_first_forward.4} parent=5 // pred_check_branch
      %116 = sbr.rel (%p113) target = $region12
    $region11: #{cnn_first_forward.4} parent=5 // pred_region
      %s117 = ssub.s32 %s9, 1
      // Predicated region
      $region13: #{cnn_first_forward.4} parent=11 // pred_check
        %p118 = pneg %p56
      $region14: #{cnn_first_forward.4} parent=11 // pred_check_branch
        %120 = sbr.rel (%p118) target = $region16
      $region15: #{cnn_first_forward.4} parent=11 // pred_region
        _
      $region16: #{cnn_first_forward.4} parent=11 // pred_fallthru
        _
      // Predicated region
      $region17: #{cnn_first_forward.4} parent=11 // pred_check
        %p121 = pneg %p77
      $region18: #{cnn_first_forward.4} parent=11 // pred_check_branch
        %123 = sbr.rel (%p121) target = $region20
      $region19: #{cnn_first_forward.4} parent=11 // pred_region
        _
      $region20: #{cnn_first_forward.4} parent=11 // pred_fallthru
        _
    $region12: #{cnn_first_forward.4} parent=5 // pred_fallthru
      _
    %p124 = scmp.lt.s32.totalorder %s9, 2
    // Predicated region
    $region21: #{cnn_first_forward.4} parent=5 // pred_check
      %p125 = pneg %p124
    $region22: #{cnn_first_forward.4} parent=5 // pred_check_branch
      %127 = sbr.rel (%p125) target = $region24
    $region23: #{cnn_first_forward.4} parent=5 // pred_region
      // Predicated region
      $region25: #{cnn_first_forward.4} parent=23 // pred_check
        %p128 = pneg %p29
      $region26: #{cnn_first_forward.4} parent=23 // pred_check_branch
        %130 = sbr.rel (%p128) target = $region28
      $region27: #{cnn_first_forward.4} parent=23 // pred_region
        %p131 = scmp.lt.s32.totalorder %s9, 1
        %s132 = scalar_select %p131, %s9, 1
        %s133 = smul.addr %s132, 50
        %s134 = smul.addr %s133, 4
        %s135 = scalar_lea.vmem %s0, %s134
      $region28: #{cnn_first_forward.4} parent=23 // pred_fallthru
        _
    $region24: #{cnn_first_forward.4} parent=5 // pred_fallthru
      _
    %p136 = scmp.le.s32.totalorder 1, %s9
    %p137 = scmp.lt.s32.totalorder %s9, 3
    %p138 = pnand %p136, %p137
    %p139 = pneg %p138
    // Predicated region
    $region29: #{cnn_first_forward.4} parent=5 // pred_check
      _
    $region30: #{cnn_first_forward.4} parent=5 // pred_check_branch
      %141 = sbr.rel (%p138) target = $region32
    $region31: #{cnn_first_forward.4} parent=5 // pred_region
      %s142 = ssub.s32 %s9, 1
      %p143 = scmp.lt.s32.totalorder %s14, 1
      %s144 = scalar_select %p143, %s14, 1
      %s145 = smul.addr %s144, 50
      %s146 = smul.addr %s145, 4
      %s147 = scalar_lea.vmem %s0, %s146
      %p148 = pneg %p35
      %p149 = pneg %p32
      %p150 = pneg %p56
      %p151 = pneg %p53
      %p152 = pneg %p77
      %p153 = pneg %p74
      %p154 = pneg %p103
      %p155 = pneg %p100
      %p156 = scmp.lt.s32.totalorder %s14, 1
      %s157 = scalar_select %p156, %s14, 1
      %s158 = smul.addr %s157, 4
      %s159 = smul.addr %s158, 4
      %s160 = scalar_lea.vmem %s3, %s159
      %p161 = scmp.lt.s32.totalorder %s14, 1
      %s162 = scalar_select %p161, %s14, 1
      %s163 = smul.addr %s162, 50
      %s164 = smul.addr %s163, 4
      %s165 = scalar_lea.vmem %s0, %s164
      %p166 = scmp.lt.s32.totalorder %s14, 1
      %s167 = scalar_select %p166, %s14, 1
      %s168 = smul.addr %s167, 4
      %s169 = smul.addr %s168, 4
      %s170 = scalar_lea.vmem %s3, %s169
      %v172 = vld [vmem:[%s1] sm:$0xff]
      %v173 = vld [vmem:[%s1 + $0x8] sm:$0xff]
      %v174 = vld [vmem:[%s1 + $0x10] sm:$0xff]
      %v175 = vld [vmem:[%s1 + $0x18] sm:$0xff]
      %v176 = vld [vmem:[%s1 + $0x20] sm:$0xff]
      %v177 = vld [vmem:[%s1 + $0x28] sm:$0xff]
      %v178 = vld [vmem:[%s1 + $0x30] sm:$0xff]
      %v179 = vld [vmem:[%s1 + $0x38] sm:$0xff]
      %v180 = vld [vmem:[%s165] sm:$0xf]
      %v181 = vld [vmem:[%s165 + $0x4] sm:$0xf]
      %v182 = vld [vmem:[%s165 + $0x8] sm:$0xf]
      %v183 = vld [vmem:[%s165 + $0xc] sm:$0xf]
      %v184 = vld [vmem:[%s165 + $0x10] sm:$0xf]
      %v185 = vld [vmem:[%s165 + $0x14] sm:$0xf]
      %v186 = vld [vmem:[%s165 + $0x18] sm:$0xf]
      %v187 = vld [vmem:[%s165 + $0x1c] sm:$0xf]
      %v188 = vld [vmem:[%s165 + $0x20] sm:$0xf]
      %v189 = vld [vmem:[%s165 + $0x24] sm:$0xf]
      %v190 = vld [vmem:[%s165 + $0x28] sm:$0xf]
      %v191 = vld [vmem:[%s165 + $0x2c] sm:$0xf]
      %v192 = vld [vmem:[%s165 + $0x30] sm:$0xf]
      %v193 = vld [vmem:[%s165 + $0x34] sm:$0xf]
      %v194 = vld [vmem:[%s165 + $0x38] sm:$0xf]
      %v195 = vld [vmem:[%s165 + $0x3c] sm:$0xf]
      %v196 = vld [vmem:[%s165 + $0x40] sm:$0xf]
      %v197 = vld [vmem:[%s165 + $0x44] sm:$0xf]
      %v198 = vld [vmem:[%s165 + $0x48] sm:$0xf]
      %v199 = vld [vmem:[%s165 + $0x4c] sm:$0xf]
      %v200 = vld [vmem:[%s165 + $0x50] sm:$0xf]
      %v201 = vld [vmem:[%s165 + $0x54] sm:$0xf]
      %v202 = vld [vmem:[%s165 + $0x58] sm:$0xf]
      %v203 = vld [vmem:[%s165 + $0x5c] sm:$0xf]
      %v204 = vld [vmem:[%s165 + $0x60] sm:$0xf]
      %v205 = vld [vmem:[%s165 + $0x64] sm:$0xf]
      %v206 = vld [vmem:[%s165 + $0x68] sm:$0xf]
      %v207 = vld [vmem:[%s165 + $0x6c] sm:$0xf]
      %v208 = vld [vmem:[%s165 + $0x70] sm:$0xf]
      %v209 = vld [vmem:[%s165 + $0x74] sm:$0xf]
      %v210 = vld [vmem:[%s165 + $0x78] sm:$0xf]
      %v211 = vld [vmem:[%s165 + $0x7c] sm:$0xf]
      %v212 = vld [vmem:[%s165 + $0x80] sm:$0xf]
      %v213 = vld [vmem:[%s165 + $0x84] sm:$0xf]
      %v214 = vld [vmem:[%s165 + $0x88] sm:$0xf]
      %v215 = vld [vmem:[%s165 + $0x8c] sm:$0xf]
      %v216 = vld [vmem:[%s165 + $0x90] sm:$0xf]
      %v217 = vld [vmem:[%s165 + $0x94] sm:$0xf]
      %v218 = vld [vmem:[%s165 + $0x98] sm:$0xf]
      %v219 = vld [vmem:[%s165 + $0x9c] sm:$0xf]
      %v220 = vld [vmem:[%s165 + $0xa0] sm:$0xf]
      %v221 = vld [vmem:[%s165 + $0xa4] sm:$0xf]
      %v222 = vld [vmem:[%s165 + $0xa8] sm:$0xf]
      %v223 = vld [vmem:[%s165 + $0xac] sm:$0xf]
      %v224 = vld [vmem:[%s165 + $0xb0] sm:$0xf]
      %v225 = vld [vmem:[%s165 + $0xb4] sm:$0xf]
      %v226 = vld [vmem:[%s165 + $0xb8] sm:$0xf]
      %v227 = vld [vmem:[%s165 + $0xbc] sm:$0xf]
      %v228 = vld [vmem:[%s165 + $0xc0] sm:$0xf]
      %v229 = vld [vmem:[%s165 + $0xc4] sm:$0xf]
      %v230 = vld [vmem:[%s2] sm:$0xff]
      %v231 = vld [vmem:[%s2 + $0x8] sm:$0xff]
      %v232 = vld [vmem:[%s2 + $0x10] sm:$0xff]
      %v233 = vld [vmem:[%s2 + $0x18] sm:$0xff]
      %235 = vset.pattern.permute.xlu0 0
      %236 = vperm.xlu0 %235, %v230
      %v237 = vpop.permute.xlu0 %236
      %240 = vset.pattern.permute.xlu0 0
      %241 = vperm.xlu0 %240, %v231
      %v242 = vpop.permute.xlu0 %241
      %245 = vset.pattern.permute.xlu0 0
      %246 = vperm.xlu0 %245, %v232
      %v247 = vpop.permute.xlu0 %246
      %250 = vset.pattern.permute.xlu0 0
      %251 = vperm.xlu0 %250, %v233
      %v252 = vpop.permute.xlu0 %251
      %v262 = vunpack.c.l.b16 %v172
      %v263 = vunpack.c.h.b16 %v172
      %v264 = vunpack.c.l.b16 %v173
      %v265 = vunpack.c.h.b16 %v173
      %v266 = vunpack.c.l.b16 %v174
      %v267 = vunpack.c.h.b16 %v174
      %v268 = vunpack.c.l.b16 %v175
      %v269 = vunpack.c.h.b16 %v175
      %v270 = vunpack.c.l.b16 %v176
      %v271 = vunpack.c.h.b16 %v176
      %v272 = vunpack.c.l.b16 %v177
      %v273 = vunpack.c.h.b16 %v177
      %v274 = vunpack.c.l.b16 %v178
      %v275 = vunpack.c.h.b16 %v178
      %v276 = vunpack.c.l.b16 %v179
      %v277 = vunpack.c.h.b16 %v179
      %v278 = vpack.c.b16 %v266, %v262
      %v279 = vpack.c.b16 %v267, %v263
      %v280 = vpack.c.b16 %v268, %v264
      %v281 = vpack.c.b16 %v269, %v265
      %v282 = vpack.c.b16 %v274, %v270
      %v283 = vpack.c.b16 %v275, %v271
      %v284 = vpack.c.b16 %v276, %v272
      %v285 = vpack.c.b16 %v277, %v273
      %v342 = vunpack.c.l.b16 %v180
      %v343 = vunpack.c.l.b16 %v181
      %v344 = vunpack.c.l.b16 %v182
      %v345 = vunpack.c.l.b16 %v183
      %v346 = vunpack.c.l.b16 %v184
      %v347 = vunpack.c.l.b16 %v185
      %v348 = vunpack.c.l.b16 %v186
      %v349 = vunpack.c.l.b16 %v187
      %v350 = vunpack.c.l.b16 %v188
      %v351 = vunpack.c.l.b16 %v189
      %v352 = vunpack.c.l.b16 %v190
      %v353 = vunpack.c.l.b16 %v191
      %v354 = vunpack.c.l.b16 %v192
      %v355 = vunpack.c.l.b16 %v193
      %v356 = vunpack.c.l.b16 %v194
      %v357 = vunpack.c.l.b16 %v195
      %v358 = vunpack.c.l.b16 %v196
      %v359 = vunpack.c.l.b16 %v197
      %v360 = vunpack.c.l.b16 %v198
      %v361 = vunpack.c.l.b16 %v199
      %v362 = vunpack.c.l.b16 %v200
      %v363 = vunpack.c.l.b16 %v201
      %v364 = vunpack.c.l.b16 %v202
      %v365 = vunpack.c.l.b16 %v203
      %v366 = vunpack.c.l.b16 %v204
      %v367 = vunpack.c.l.b16 %v205
      %v368 = vunpack.c.l.b16 %v206
      %v369 = vunpack.c.l.b16 %v207
      %v370 = vunpack.c.l.b16 %v208
      %v371 = vunpack.c.l.b16 %v209
      %v372 = vunpack.c.l.b16 %v210
      %v373 = vunpack.c.l.b16 %v211
      %v374 = vunpack.c.l.b16 %v212
      %v375 = vunpack.c.l.b16 %v213
      %v376 = vunpack.c.l.b16 %v214
      %v377 = vunpack.c.l.b16 %v215
      %v378 = vunpack.c.l.b16 %v216
      %v379 = vunpack.c.l.b16 %v217
      %v380 = vunpack.c.l.b16 %v218
      %v381 = vunpack.c.l.b16 %v219
      %v382 = vunpack.c.l.b16 %v220
      %v383 = vunpack.c.l.b16 %v221
      %v384 = vunpack.c.l.b16 %v222
      %v385 = vunpack.c.l.b16 %v223
      %v386 = vunpack.c.l.b16 %v224
      %v387 = vunpack.c.l.b16 %v225
      %v388 = vunpack.c.l.b16 %v226
      %v389 = vunpack.c.l.b16 %v227
      %v390 = vunpack.c.l.b16 %v228
      %v391 = vunpack.c.l.b16 %v229
      %v392 = vpack.c.b16 %v343, %v342
      %v393 = vpack.c.b16 %v345, %v344
      %v394 = vpack.c.b16 %v347, %v346
      %v395 = vpack.c.b16 %v349, %v348
      %v396 = vpack.c.b16 %v351, %v350
      %v397 = vpack.c.b16 %v353, %v352
      %v398 = vpack.c.b16 %v355, %v354
      %v399 = vpack.c.b16 %v357, %v356
      %v400 = vpack.c.b16 %v359, %v358
      %v401 = vpack.c.b16 %v361, %v360
      %v402 = vpack.c.b16 %v363, %v362
      %v403 = vpack.c.b16 %v365, %v364
      %v404 = vpack.c.b16 %v367, %v366
      %v405 = vpack.c.b16 %v369, %v368
      %v406 = vpack.c.b16 %v371, %v370
      %v407 = vpack.c.b16 %v373, %v372
      %v408 = vpack.c.b16 %v375, %v374
      %v409 = vpack.c.b16 %v377, %v376
      %v410 = vpack.c.b16 %v379, %v378
      %v411 = vpack.c.b16 %v381, %v380
      %v412 = vpack.c.b16 %v383, %v382
      %v413 = vpack.c.b16 %v385, %v384
      %v414 = vpack.c.b16 %v387, %v386
      %v415 = vpack.c.b16 %v389, %v388
      %v416 = vpack.c.b16 %v391, %v390
      %vm442 = vcmask 130048
      %v444 = vsel %vm442, %v281, 0
      %v447 = vsel %vm442, %v285, 0
      %449 = vmatprep.subr.bf16.mxu0 0
      %450 = vmatpush1.bf16.msra.mxu0 %v399
      %451 = vmatprep.subr.bf16.mxu0 0
      %452 = vmatpush1.bf16.msra.mxu0 %v398
      %453 = vmatprep.subr.bf16.mxu0 0
      %454 = vmatpush1.bf16.msra.mxu0 %v397
      %455 = vmatprep.subr.bf16.mxu0 0
      %456 = vmatpush1.bf16.msra.mxu0 %v396
      %457 = vmatprep.subr.bf16.mxu0 0
      %458 = vmatpush1.bf16.msra.mxu0 %v395
      %459 = vmatprep.subr.bf16.mxu0 0
      %460 = vmatpush1.bf16.msra.mxu0 %v394
      %461 = vmatprep.subr.bf16.mxu0 0
      %462 = vmatpush1.bf16.msra.mxu0 %v393
      %463 = vmatprep.subr.bf16.mxu0 0
      %464 = vmatpush1.bf16.msra.mxu0 %v392
      %465 = vmatprep.subr.bf16.mxu0 0
      %466 = vmatpush2.bf16.msra.mxu0 %v407
      %467 = vmatprep.subr.bf16.mxu0 0
      %468 = vmatpush2.bf16.msra.mxu0 %v406
      %469 = vmatprep.subr.bf16.mxu0 0
      %470 = vmatpush2.bf16.msra.mxu0 %v405
      %471 = vmatprep.subr.bf16.mxu0 0
      %472 = vmatpush2.bf16.msra.mxu0 %v404
      %473 = vmatprep.subr.bf16.mxu0 0
      %474 = vmatpush2.bf16.msra.mxu0 %v403
      %475 = vmatprep.subr.bf16.mxu0 0
      %476 = vmatpush2.bf16.msra.mxu0 %v402
      %477 = vmatprep.subr.bf16.mxu0 0
      %478 = vmatpush2.bf16.msra.mxu0 %v401
      %479 = vmatprep.subr.bf16.mxu0 0
      %480 = vmatpush2.bf16.msra.mxu0 %v400
      %481 = vmatprep.mubr.bf16.mxu0 %v279
      %482 = vmatmul.mubr.bf16.gmra.mxu0 %v278
      %v483 = vpop.f32.mrf.mxu0
      %v484 = vadd.f32 %v237, %v483
      %v485 = vpop.f32.mrf.mxu0
      %v486 = vpop.f32.mrf.mxu0
      %v487 = vadd.f32 %v242, %v486
      %v488 = vpop.f32.mrf.mxu0
      %489 = vmatprep.mubr.bf16.mxu0 %v283
      %490 = vmatmul.mubr.bf16.gmra.mxu0 %v282
      %v491 = vpop.f32.mrf.mxu0
      %v492 = vadd.f32 %v247, %v491
      %v493 = vpop.f32.mrf.mxu0
      %v494 = vpop.f32.mrf.mxu0
      %v495 = vadd.f32 %v252, %v494
      %v496 = vpop.f32.mrf.mxu0
      %497 = vdwg.mxu0
      %498 = vmatprep.subr.bf16.mxu0 0
      %499 = vmatpush1.bf16.msra.mxu0 %v415
      %500 = vmatprep.subr.bf16.mxu0 0
      %501 = vmatpush1.bf16.msra.mxu0 %v414
      %502 = vmatprep.subr.bf16.mxu0 0
      %503 = vmatpush1.bf16.msra.mxu0 %v413
      %504 = vmatprep.subr.bf16.mxu0 0
      %505 = vmatpush1.bf16.msra.mxu0 %v412
      %506 = vmatprep.subr.bf16.mxu0 0
      %507 = vmatpush1.bf16.msra.mxu0 %v411
      %508 = vmatprep.subr.bf16.mxu0 0
      %509 = vmatpush1.bf16.msra.mxu0 %v410
      %510 = vmatprep.subr.bf16.mxu0 0
      %511 = vmatpush1.bf16.msra.mxu0 %v409
      %512 = vmatprep.subr.bf16.mxu0 0
      %513 = vmatpush1.bf16.msra.mxu0 %v408
      %514 = vmatprep.subr.bf16.mxu0 0
      %515 = vmatpush2.bf16.msra.mxu0 0
      %516 = vmatprep.subr.bf16.mxu0 0
      %517 = vmatpush2.bf16.msra.mxu0 0
      %518 = vmatprep.subr.bf16.mxu0 0
      %519 = vmatpush2.bf16.msra.mxu0 0
      %520 = vmatprep.subr.bf16.mxu0 0
      %521 = vmatpush2.bf16.msra.mxu0 0
      %522 = vmatprep.subr.bf16.mxu0 0
      %523 = vmatpush2.bf16.msra.mxu0 0
      %524 = vmatprep.subr.bf16.mxu0 0
      %525 = vmatpush2.bf16.msra.mxu0 0
      %526 = vmatprep.subr.bf16.mxu0 0
      %527 = vmatpush2.bf16.msra.mxu0 0
      %528 = vmatprep.subr.bf16.mxu0 0
      %529 = vmatpush2.bf16.msra.mxu0 %v416
      %530 = vmatprep.mubr.bf16.mxu0 %v444
      %531 = vmatmul.mubr.bf16.gmra.mxu0 %v280
      %v532 = vpop.f32.mrf.mxu0
      %v533 = vadd.f32 %v484, %v532
      %v534 = vpop.f32.mrf.mxu0
      %v535 = vpop.f32.mrf.mxu0
      %v536 = vadd.f32 %v487, %v535
      %v537 = vpop.f32.mrf.mxu0
      %538 = vmatprep.mubr.bf16.mxu0 %v447
      %539 = vmatmul.mubr.bf16.gmra.mxu0 %v284
      %v540 = vpop.f32.mrf.mxu0
      %v541 = vadd.f32 %v492, %v540
      %v542 = vpop.f32.mrf.mxu0
      %v543 = vpop.f32.mrf.mxu0
      %v544 = vadd.f32 %v495, %v543
      %v545 = vpop.f32.mrf.mxu0
      %546 = vdwg.mxu0
      %v547 = vmax.f32 %v533, 0.0
      %v548 = vmax.f32 %v536, 0.0
      %v549 = vmax.f32 %v541, 0.0
      %v550 = vmax.f32 %v544, 0.0
      %v551 = vpack.c.bf16 %v548, %v547
      %v552 = vpack.c.bf16 %v550, %v549
      %v555 = vunpack.c.l.b16 %v551
      %v556 = vunpack.c.h.b16 %v551
      %v557 = vunpack.c.l.b16 %v552
      %v558 = vunpack.c.h.b16 %v552
      %v559 = vpack.c.b16 %v555, %v555
      %v560 = vpack.c.b16 %v556, %v556
      %v561 = vpack.c.b16 %v557, %v557
      %v562 = vpack.c.b16 %v558, %v558
      %vm567 = vcmask 977920
      %568 = vst.msk [vmem:[%s170] sm:$0xf] %vm567, %v559
      %569 = vst.msk [vmem:[%s170 + $0x4] sm:$0xf] %vm567, %v560
      %570 = vst.msk [vmem:[%s170 + $0x8] sm:$0xf] %vm567, %v561
      %571 = vst.msk [vmem:[%s170 + $0xc] sm:$0xf] %vm567, %v562
      %p572 = scmp.lt.s32.totalorder %s14, 1
      %s573 = scalar_select %p572, %s14, 1
      %s574 = smul.addr %s573, 4
      %s575 = smul.addr %s574, 4
      %s576 = scalar_lea.vmem %s3, %s575
      // Predicated region
      $region33: #{cnn_first_forward.4} parent=31 // pred_check
        %p577 = pneg %p100
      $region34: #{cnn_first_forward.4} parent=31 // pred_check_branch
        %579 = sbr.rel (%p577) target = $region36
      $region35: #{cnn_first_forward.4} parent=31 // pred_region
        _
      $region36: #{cnn_first_forward.4} parent=31 // pred_fallthru
        _
    $region32: #{cnn_first_forward.4} parent=5 // pred_fallthru
      _
    %p580 = scmp.le.s32.totalorder 2, %s9
    // Predicated region
    $region37: #{cnn_first_forward.4} parent=5 // pred_check
      %p581 = pneg %p580
    $region38: #{cnn_first_forward.4} parent=5 // pred_check_branch
      %583 = sbr.rel (%p581) target = $region40
    $region39: #{cnn_first_forward.4} parent=5 // pred_region
      %s584 = ssub.s32 %s9, 2
      // Predicated region
      $region41: #{cnn_first_forward.4} parent=39 // pred_check
        %p585 = pneg %p106
      $region42: #{cnn_first_forward.4} parent=39 // pred_check_branch
        %587 = sbr.rel (%p585) target = $region44
      $region43: #{cnn_first_forward.4} parent=39 // pred_region
        %p588 = scmp.lt.s32.totalorder %s15, 1
        %s589 = scalar_select %p588, %s15, 1
        %s590 = smul.addr %s589, 4
        %s591 = smul.addr %s590, 4
        %s592 = scalar_lea.vmem %s3, %s591
      $region44: #{cnn_first_forward.4} parent=39 // pred_fallthru
        _
    $region40: #{cnn_first_forward.4} parent=5 // pred_fallthru
      _
  $region6: #{cnn_first_forward.4} parent=0 // loop_footer
    %s13 = sadd.s32 1, %s9
  $region7: #{cnn_first_forward.4} parent=0 // loop_footer_branch
    %8 = sbr.rel target = $region3
  $region8: #{cnn_first_forward.4} parent=0 // loop_exit
    _

// kernel: cnn_first_forward.5
$region0: #{cnn_first_forward.5}
  #allocation0 [shape = 'u32[]', space=smem, size = 0x4, offset = 0x4, fixed_abs, tag = 'smem constant byte address 0x4 - core index']
  #allocation1 [shape = 'u32[144,128]{1,0:T(1,128)}', space=vmem, size = 0x12000, scoped, tag = 'internal scratch']
  %s0 = inlined_call_operand.vmem [shape: bf16[2,4,20,288], index: 0, kind: input, shape index: {}]
  %s1 = inlined_call_operand.vmem [shape: bf16[288,64], index: 1, kind: input, shape index: {}]
  %s2 = inlined_call_operand.vmem [shape: f32[1,64], index: 2, kind: input, shape index: {}]
  %s3 = inlined_call_operand.vmem [shape: bf16[20,64,640], index: 3, kind: input, shape index: {}]
  %s4 = inlined_call_operand.vmem [shape: f32[1,640], index: 4, kind: input, shape index: {}]
  %s5 = inlined_call_operand.vmem [shape: bf16[640,245], index: 5, kind: input, shape index: {}]
  %s6 = inlined_call_operand.vmem [shape: f32[1,245], index: 6, kind: input, shape index: {}]
  %s7 = inlined_call_operand.hbm [shape: f32[2,245], index: 7, kind: output, shape index: {}]
  %s8 = sld [smem:[#allocation0]]
  $region38: #{cnn_first_forward.5} parent=0
    _
  %s10 = ssub.s32 1, %s8
  %s11 = scalar_select 0, %s10, %s8
  $region1: #{cnn_first_forward.5} parent=0
    #allocation2 [shape = 'u8[2048]{0}', space=vmem, size = 0x800, scoped, tag = 'output window, operand 0, single buffered']
    #allocation3 [shape = 's32[1]{0}', space=sflag, size = 0x4, scoped, tag = 'scoped memory for cnn_first_forward.5']
    %12 = vsyncpa [#allocation3], 0
    // Predicated region
    $region2: #{cnn_first_forward.5} parent=1 // pred_check
      _
    $region3: #{cnn_first_forward.5} parent=1 // pred_check_branch
      %14 = sbr.rel (0) target = $region5
    $region4: #{cnn_first_forward.5} parent=1 // pred_region
      _
    $region5: #{cnn_first_forward.5} parent=1 // pred_fallthru
      _
    // Predicated region
    $region6: #{cnn_first_forward.5} parent=1 // pred_check
      _
    $region7: #{cnn_first_forward.5} parent=1 // pred_check_branch
      %16 = sbr.rel (0) target = $region9
    $region8: #{cnn_first_forward.5} parent=1 // pred_region
      _
    $region9: #{cnn_first_forward.5} parent=1 // pred_fallthru
      _
    // Predicated region
    $region10: #{cnn_first_forward.5} parent=1 // pred_check
      _
    $region11: #{cnn_first_forward.5} parent=1 // pred_check_branch
      %18 = sbr.rel (0) target = $region13
    $region12: #{cnn_first_forward.5} parent=1 // pred_region
      _
    $region13: #{cnn_first_forward.5} parent=1 // pred_fallthru
      _
    // Predicated region
    $region14: #{cnn_first_forward.5} parent=1 // pred_check
      _
    $region15: #{cnn_first_forward.5} parent=1 // pred_check_branch
      %20 = sbr.rel (0) target = $region17
    $region16: #{cnn_first_forward.5} parent=1 // pred_region
      _
    $region17: #{cnn_first_forward.5} parent=1 // pred_fallthru
      _
    // Predicated region
    $region18: #{cnn_first_forward.5} parent=1 // pred_check
      _
    $region19: #{cnn_first_forward.5} parent=1 // pred_check_branch
      %22 = sbr.rel (0) target = $region21
    $region20: #{cnn_first_forward.5} parent=1 // pred_region
      _
    $region21: #{cnn_first_forward.5} parent=1 // pred_fallthru
      _
    // Predicated region
    $region22: #{cnn_first_forward.5} parent=1 // pred_check
      _
    $region23: #{cnn_first_forward.5} parent=1 // pred_check_branch
      %24 = sbr.rel (0) target = $region25
    $region24: #{cnn_first_forward.5} parent=1 // pred_region
      _
    $region25: #{cnn_first_forward.5} parent=1 // pred_fallthru
      _
    // Predicated region
    $region26: #{cnn_first_forward.5} parent=1 // pred_check
      _
    $region27: #{cnn_first_forward.5} parent=1 // pred_check_branch
      %26 = sbr.rel (0) target = $region29
    $region28: #{cnn_first_forward.5} parent=1 // pred_region
      _
    $region29: #{cnn_first_forward.5} parent=1 // pred_fallthru
      _
    %v28 = vld [vmem:[%s1] sm:$0xf]
    %v29 = vld [vmem:[%s1 + $0x4] sm:$0xf]
    %v30 = vld [vmem:[%s1 + $0x8] sm:$0xf]
    %v31 = vld [vmem:[%s1 + $0xc] sm:$0xf]
    %v32 = vld [vmem:[%s1 + $0x10] sm:$0xf]
    %v33 = vld [vmem:[%s1 + $0x14] sm:$0xf]
    %v34 = vld [vmem:[%s1 + $0x18] sm:$0xf]
    %v35 = vld [vmem:[%s1 + $0x1c] sm:$0xf]
    %v36 = vld [vmem:[%s1 + $0x20] sm:$0xf]
    %v37 = vld [vmem:[%s1 + $0x24] sm:$0xf]
    %v38 = vld [vmem:[%s1 + $0x28] sm:$0xf]
    %v39 = vld [vmem:[%s1 + $0x2c] sm:$0xf]
    %v40 = vld [vmem:[%s1 + $0x30] sm:$0xf]
    %v41 = vld [vmem:[%s1 + $0x34] sm:$0xf]
    %v42 = vld [vmem:[%s1 + $0x38] sm:$0xf]
    %v43 = vld [vmem:[%s1 + $0x3c] sm:$0xf]
    %v44 = vld [vmem:[%s1 + $0x40] sm:$0xf]
    %v45 = vld [vmem:[%s1 + $0x44] sm:$0xf]
    %v46 = vld [vmem:[%s1 + $0x48] sm:$0xf]
    %v47 = vld [vmem:[%s1 + $0x4c] sm:$0xf]
    %v48 = vld [vmem:[%s1 + $0x50] sm:$0xf]
    %v49 = vld [vmem:[%s1 + $0x54] sm:$0xf]
    %v50 = vld [vmem:[%s1 + $0x58] sm:$0xf]
    %v51 = vld [vmem:[%s1 + $0x5c] sm:$0xf]
    %v52 = vld [vmem:[%s1 + $0x60] sm:$0xf]
    %v53 = vld [vmem:[%s1 + $0x64] sm:$0xf]
    %v54 = vld [vmem:[%s1 + $0x68] sm:$0xf]
    %v55 = vld [vmem:[%s1 + $0x6c] sm:$0xf]
    %v56 = vld [vmem:[%s1 + $0x70] sm:$0xf]
    %v57 = vld [vmem:[%s1 + $0x74] sm:$0xf]
    %v58 = vld [vmem:[%s1 + $0x78] sm:$0xf]
    %v59 = vld [vmem:[%s1 + $0x7c] sm:$0xf]
    %v60 = vld [vmem:[%s1 + $0x80] sm:$0xf]
    %v61 = vld [vmem:[%s1 + $0x84] sm:$0xf]
    %v62 = vld [vmem:[%s1 + $0x88] sm:$0xf]
    %v63 = vld [vmem:[%s1 + $0x8c] sm:$0xf]
    %v64 = vld [vmem:[%s2] sm:$0x1]
    %v65 = vld [vmem:[%s0] sm:$0xff]
    %v66 = vld [vmem:[%s0 + $0x8] sm:$0xf]
    %v67 = vld [vmem:[%s0 + $0xc] sm:$0xff]
    %v68 = vld [vmem:[%s0 + $0x14] sm:$0xf]
    %v69 = vld [vmem:[%s0 + $0x18] sm:$0x33]
    %v70 = vld [vmem:[%s0 + $0x20] sm:$0x3]
    %v77 = vunpack.c.l.b16 %v65
    %v78 = vunpack.c.h.b16 %v65
    %v79 = vunpack.c.l.b16 %v66
    %v80 = vunpack.c.l.b16 %v67
    %v81 = vunpack.c.h.b16 %v67
    %v82 = vunpack.c.l.b16 %v68
    %v83 = vunpack.c.l.b16 %v69
    %v84 = vunpack.c.h.b16 %v69
    %v85 = vunpack.c.l.b16 %v70
    %v86 = vpack.c.b16 %v80, %v77
    %v87 = vpack.c.b16 %v81, %v78
    %v88 = vpack.c.b16 %v82, %v79
    %v89 = vpack.c.b16 %v83, %v83
    %v90 = vpack.c.b16 %v84, %v84
    %v91 = vpack.c.b16 %v85, %v85
    %v132 = vunpack.c.l.b16 %v28
    %v133 = vunpack.c.l.b16 %v29
    %v134 = vunpack.c.l.b16 %v30
    %v135 = vunpack.c.l.b16 %v31
    %v136 = vunpack.c.l.b16 %v32
    %v137 = vunpack.c.l.b16 %v33
    %v138 = vunpack.c.l.b16 %v34
    %v139 = vunpack.c.l.b16 %v35
    %v140 = vunpack.c.l.b16 %v36
    %v141 = vunpack.c.l.b16 %v37
    %v142 = vunpack.c.l.b16 %v38
    %v143 = vunpack.c.l.b16 %v39
    %v144 = vunpack.c.l.b16 %v40
    %v145 = vunpack.c.l.b16 %v41
    %v146 = vunpack.c.l.b16 %v42
    %v147 = vunpack.c.l.b16 %v43
    %v148 = vunpack.c.l.b16 %v44
    %v149 = vunpack.c.l.b16 %v45
    %v150 = vunpack.c.l.b16 %v46
    %v151 = vunpack.c.l.b16 %v47
    %v152 = vunpack.c.l.b16 %v48
    %v153 = vunpack.c.l.b16 %v49
    %v154 = vunpack.c.l.b16 %v50
    %v155 = vunpack.c.l.b16 %v51
    %v156 = vunpack.c.l.b16 %v52
    %v157 = vunpack.c.l.b16 %v53
    %v158 = vunpack.c.l.b16 %v54
    %v159 = vunpack.c.l.b16 %v55
    %v160 = vunpack.c.l.b16 %v56
    %v161 = vunpack.c.l.b16 %v57
    %v162 = vunpack.c.l.b16 %v58
    %v163 = vunpack.c.l.b16 %v59
    %v164 = vunpack.c.l.b16 %v60
    %v165 = vunpack.c.l.b16 %v61
    %v166 = vunpack.c.l.b16 %v62
    %v167 = vunpack.c.l.b16 %v63
    %v168 = vpack.c.b16 %v133, %v132
    %v169 = vpack.c.b16 %v135, %v134
    %v170 = vpack.c.b16 %v137, %v136
    %v171 = vpack.c.b16 %v139, %v138
    %v172 = vpack.c.b16 %v141, %v140
    %v173 = vpack.c.b16 %v143, %v142
    %v174 = vpack.c.b16 %v145, %v144
    %v175 = vpack.c.b16 %v147, %v146
    %v176 = vpack.c.b16 %v149, %v148
    %v177 = vpack.c.b16 %v151, %v150
    %v178 = vpack.c.b16 %v153, %v152
    %v179 = vpack.c.b16 %v155, %v154
    %v180 = vpack.c.b16 %v157, %v156
    %v181 = vpack.c.b16 %v159, %v158
    %v182 = vpack.c.b16 %v161, %v160
    %v183 = vpack.c.b16 %v163, %v162
    %v184 = vpack.c.b16 %v165, %v164
    %v185 = vpack.c.b16 %v167, %v166
    %vm204 = vcmask 261120
    %v206 = vsel %vm204, %v88, 0
    %v209 = vsel %vm204, %v91, 0
    %211 = vmatprep.subr.bf16.mxu0 0
    %212 = vmatpush1.bf16.msra.mxu0 %v175
    %213 = vmatprep.subr.bf16.mxu0 0
    %214 = vmatpush1.bf16.msra.mxu0 %v174
    %215 = vmatprep.subr.bf16.mxu0 0
    %216 = vmatpush1.bf16.msra.mxu0 %v173
    %217 = vmatprep.subr.bf16.mxu0 0
    %218 = vmatpush1.bf16.msra.mxu0 %v172
    %219 = vmatprep.subr.bf16.mxu0 0
    %220 = vmatpush1.bf16.msra.mxu0 %v171
    %221 = vmatprep.subr.bf16.mxu0 0
    %222 = vmatpush1.bf16.msra.mxu0 %v170
    %223 = vmatprep.subr.bf16.mxu0 0
    %224 = vmatpush1.bf16.msra.mxu0 %v169
    %225 = vmatprep.subr.bf16.mxu0 0
    %226 = vmatpush1.bf16.msra.mxu0 %v168
    %227 = vmatprep.subr.bf16.mxu0 0
    %228 = vmatpush2.bf16.msra.mxu0 %v183
    %229 = vmatprep.subr.bf16.mxu0 0
    %230 = vmatpush2.bf16.msra.mxu0 %v182
    %231 = vmatprep.subr.bf16.mxu0 0
    %232 = vmatpush2.bf16.msra.mxu0 %v181
    %233 = vmatprep.subr.bf16.mxu0 0
    %234 = vmatpush2.bf16.msra.mxu0 %v180
    %235 = vmatprep.subr.bf16.mxu0 0
    %236 = vmatpush2.bf16.msra.mxu0 %v179
    %237 = vmatprep.subr.bf16.mxu0 0
    %238 = vmatpush2.bf16.msra.mxu0 %v178
    %239 = vmatprep.subr.bf16.mxu0 0
    %240 = vmatpush2.bf16.msra.mxu0 %v177
    %241 = vmatprep.subr.bf16.mxu0 0
    %242 = vmatpush2.bf16.msra.mxu0 %v176
    %243 = vmatprep.mubr.bf16.mxu0 %v87
    %244 = vmatmul.mubr.bf16.gmra.mxu0 %v86
    %v245 = vpop.f32.mrf.mxu0
    %v246 = vadd.f32 0.0, %v245
    %v247 = vpop.f32.mrf.mxu0
    %v248 = vpop.f32.mrf.mxu0
    %v249 = vadd.f32 0.0, %v248
    %v250 = vpop.f32.mrf.mxu0
    %251 = vmatprep.mubr.bf16.mxu0 %v90
    %252 = vmatmul.mubr.bf16.gmra.mxu0 %v89
    %v253 = vpop.f32.mrf.mxu0
    %v254 = vadd.f32 0.0, %v253
    %v255 = vpop.f32.mrf.mxu0
    %v256 = vpop.f32.mrf.mxu0
    %v257 = vpop.f32.mrf.mxu0
    %258 = vdwg.mxu0
    %259 = vmatprep.subr.bf16.mxu0 0
    %260 = vmatpush1.bf16.msra.mxu0 0
    %261 = vmatprep.subr.bf16.mxu0 0
    %262 = vmatpush1.bf16.msra.mxu0 0
    %263 = vmatprep.subr.bf16.mxu0 0
    %264 = vmatpush1.bf16.msra.mxu0 0
    %265 = vmatprep.subr.bf16.mxu0 0
    %266 = vmatpush1.bf16.msra.mxu0 0
    %267 = vmatprep.subr.bf16.mxu0 0
    %268 = vmatpush1.bf16.msra.mxu0 0
    %269 = vmatprep.subr.bf16.mxu0 0
    %270 = vmatpush1.bf16.msra.mxu0 0
    %271 = vmatprep.subr.bf16.mxu0 0
    %272 = vmatpush1.bf16.msra.mxu0 %v185
    %273 = vmatprep.subr.bf16.mxu0 0
    %274 = vmatpush1.bf16.msra.mxu0 %v184
    %275 = vmatprep.subr.bf16.mxu0 0
    %276 = vmatpush2.bf16.msra.mxu0 0
    %277 = vmatprep.subr.bf16.mxu0 0
    %278 = vmatpush2.bf16.msra.mxu0 0
    %279 = vmatprep.subr.bf16.mxu0 0
    %280 = vmatpush2.bf16.msra.mxu0 0
    %281 = vmatprep.subr.bf16.mxu0 0
    %282 = vmatpush2.bf16.msra.mxu0 0
    %283 = vmatprep.subr.bf16.mxu0 0
    %284 = vmatpush2.bf16.msra.mxu0 0
    %285 = vmatprep.subr.bf16.mxu0 0
    %286 = vmatpush2.bf16.msra.mxu0 0
    %287 = vmatprep.subr.bf16.mxu0 0
    %288 = vmatpush2.bf16.msra.mxu0 0
    %289 = vmatprep.subr.bf16.mxu0 0
    %290 = vmatpush2.bf16.msra.mxu0 0
    %291 = vmatprep.mubr.bf16.mxu0 0
    %292 = vmatmul.mubr.bf16.gmra.mxu0 %v206
    %v293 = vpop.f32.mrf.mxu0
    %v294 = vadd.f32 %v246, %v293
    %v295 = vpop.f32.mrf.mxu0
    %v296 = vpop.f32.mrf.mxu0
    %v297 = vadd.f32 %v249, %v296
    %v298 = vpop.f32.mrf.mxu0
    %299 = vmatprep.mubr.bf16.mxu0 0
    %300 = vmatmul.mubr.bf16.gmra.mxu0 %v209
    %v301 = vpop.f32.mrf.mxu0
    %v302 = vadd.f32 %v254, %v301
    %v303 = vpop.f32.mrf.mxu0
    %v304 = vpop.f32.mrf.mxu0
    %v305 = vpop.f32.mrf.mxu0
    %306 = vdwg.mxu0
    %s307 = scalar_lea.vmem %s0, 36
    %v308 = vld [vmem:[%s307] sm:$0xff]
    %v309 = vld [vmem:[%s307 + $0x8] sm:$0xf]
    %v310 = vld [vmem:[%s307 + $0xc] sm:$0xff]
    %v311 = vld [vmem:[%s307 + $0x14] sm:$0xf]
    %v312 = vld [vmem:[%s307 + $0x18] sm:$0x33]
    %v313 = vld [vmem:[%s307 + $0x20] sm:$0x3]
    %v320 = vunpack.c.l.b16 %v308
    %v321 = vunpack.c.h.b16 %v308
    %v322 = vunpack.c.l.b16 %v309
    %v323 = vunpack.c.l.b16 %v310
    %v324 = vunpack.c.h.b16 %v310
    %v325 = vunpack.c.l.b16 %v311
    %v326 = vunpack.c.l.b16 %v312
    %v327 = vunpack.c.h.b16 %v312
    %v328 = vunpack.c.l.b16 %v313
    %v329 = vpack.c.b16 %v323, %v320
    %v330 = vpack.c.b16 %v324, %v321
    %v331 = vpack.c.b16 %v325, %v322
    %v332 = vpack.c.b16 %v326, %v326
    %v333 = vpack.c.b16 %v327, %v327
    %v334 = vpack.c.b16 %v328, %v328
    %v340 = vsel %vm204, %v331, 0
    %v343 = vsel %vm204, %v334, 0
    %345 = vmatprep.subr.bf16.mxu0 0
    %346 = vmatpush1.bf16.msra.mxu0 %v175
    %347 = vmatprep.subr.bf16.mxu0 0
    %348 = vmatpush1.bf16.msra.mxu0 %v174
    %349 = vmatprep.subr.bf16.mxu0 0
    %350 = vmatpush1.bf16.msra.mxu0 %v173
    %351 = vmatprep.subr.bf16.mxu0 0
    %352 = vmatpush1.bf16.msra.mxu0 %v172
    %353 = vmatprep.subr.bf16.mxu0 0
    %354 = vmatpush1.bf16.msra.mxu0 %v171
    %355 = vmatprep.subr.bf16.mxu0 0
    %356 = vmatpush1.bf16.msra.mxu0 %v170
    %357 = vmatprep.subr.bf16.mxu0 0
    %358 = vmatpush1.bf16.msra.mxu0 %v169
    %359 = vmatprep.subr.bf16.mxu0 0
    %360 = vmatpush1.bf16.msra.mxu0 %v168
    %361 = vmatprep.subr.bf16.mxu0 0
    %362 = vmatpush2.bf16.msra.mxu0 %v183
    %363 = vmatprep.subr.bf16.mxu0 0
    %364 = vmatpush2.bf16.msra.mxu0 %v182
    %365 = vmatprep.subr.bf16.mxu0 0
    %366 = vmatpush2.bf16.msra.mxu0 %v181
    %367 = vmatprep.subr.bf16.mxu0 0
    %368 = vmatpush2.bf16.msra.mxu0 %v180
    %369 = vmatprep.subr.bf16.mxu0 0
    %370 = vmatpush2.bf16.msra.mxu0 %v179
    %371 = vmatprep.subr.bf16.mxu0 0
    %372 = vmatpush2.bf16.msra.mxu0 %v178
    %373 = vmatprep.subr.bf16.mxu0 0
    %374 = vmatpush2.bf16.msra.mxu0 %v177
    %375 = vmatprep.subr.bf16.mxu0 0
    %376 = vmatpush2.bf16.msra.mxu0 %v176
    %377 = vmatprep.mubr.bf16.mxu0 %v330
    %378 = vmatmul.mubr.bf16.gmra.mxu0 %v329
    %v379 = vpop.f32.mrf.mxu0
    %v380 = vadd.f32 0.0, %v379
    %v381 = vpop.f32.mrf.mxu0
    %v382 = vpop.f32.mrf.mxu0
    %v383 = vadd.f32 0.0, %v382
    %v384 = vpop.f32.mrf.mxu0
    %385 = vmatprep.mubr.bf16.mxu0 %v333
    %386 = vmatmul.mubr.bf16.gmra.mxu0 %v332
    %v387 = vpop.f32.mrf.mxu0
    %v388 = vadd.f32 0.0, %v387
    %v389 = vpop.f32.mrf.mxu0
    %v390 = vpop.f32.mrf.mxu0
    %v391 = vpop.f32.mrf.mxu0
    %392 = vdwg.mxu0
    %393 = vmatprep.subr.bf16.mxu0 0
    %394 = vmatpush1.bf16.msra.mxu0 0
    %395 = vmatprep.subr.bf16.mxu0 0
    %396 = vmatpush1.bf16.msra.mxu0 0
    %397 = vmatprep.subr.bf16.mxu0 0
    %398 = vmatpush1.bf16.msra.mxu0 0
    %399 = vmatprep.subr.bf16.mxu0 0
    %400 = vmatpush1.bf16.msra.mxu0 0
    %401 = vmatprep.subr.bf16.mxu0 0
    %402 = vmatpush1.bf16.msra.mxu0 0
    %403 = vmatprep.subr.bf16.mxu0 0
    %404 = vmatpush1.bf16.msra.mxu0 0
    %405 = vmatprep.subr.bf16.mxu0 0
    %406 = vmatpush1.bf16.msra.mxu0 %v185
    %407 = vmatprep.subr.bf16.mxu0 0
    %408 = vmatpush1.bf16.msra.mxu0 %v184
    %409 = vmatprep.subr.bf16.mxu0 0
    %410 = vmatpush2.bf16.msra.mxu0 0
    %411 = vmatprep.subr.bf16.mxu0 0
    %412 = vmatpush2.bf16.msra.mxu0 0
    %413 = vmatprep.subr.bf16.mxu0 0
    %414 = vmatpush2.bf16.msra.mxu0 0
    %415 = vmatprep.subr.bf16.mxu0 0
    %416 = vmatpush2.bf16.msra.mxu0 0
    %417 = vmatprep.subr.bf16.mxu0 0
    %418 = vmatpush2.bf16.msra.mxu0 0
    %419 = vmatprep.subr.bf16.mxu0 0
    %420 = vmatpush2.bf16.msra.mxu0 0
    %421 = vmatprep.subr.bf16.mxu0 0
    %422 = vmatpush2.bf16.msra.mxu0 0
    %423 = vmatprep.subr.bf16.mxu0 0
    %424 = vmatpush2.bf16.msra.mxu0 0
    %425 = vmatprep.mubr.bf16.mxu0 0
    %426 = vmatmul.mubr.bf16.gmra.mxu0 %v340
    %v427 = vpop.f32.mrf.mxu0
    %v428 = vadd.f32 %v380, %v427
    %v429 = vpop.f32.mrf.mxu0
    %v430 = vpop.f32.mrf.mxu0
    %v431 = vadd.f32 %v383, %v430
    %v432 = vpop.f32.mrf.mxu0
    %433 = vmatprep.mubr.bf16.mxu0 0
    %434 = vmatmul.mubr.bf16.gmra.mxu0 %v343
    %v435 = vpop.f32.mrf.mxu0
    %v436 = vadd.f32 %v388, %v435
    %v437 = vpop.f32.mrf.mxu0
    %v438 = vpop.f32.mrf.mxu0
    %v439 = vpop.f32.mrf.mxu0
    %440 = vdwg.mxu0
    %v441 = vmax.f32 %v294, %v428
    %v442 = vmax.f32 %v297, %v431
    %v443 = vmax.f32 %v302, %v436
    %s444 = scalar_lea.vmem %s0, 72
    %v445 = vld [vmem:[%s444] sm:$0xff]
    %v446 = vld [vmem:[%s444 + $0x8] sm:$0xf]
    %v447 = vld [vmem:[%s444 + $0xc] sm:$0xff]
    %v448 = vld [vmem:[%s444 + $0x14] sm:$0xf]
    %v449 = vld [vmem:[%s444 + $0x18] sm:$0x33]
    %v450 = vld [vmem:[%s444 + $0x20] sm:$0x3]
    %v457 = vunpack.c.l.b16 %v445
    %v458 = vunpack.c.h.b16 %v445
    %v459 = vunpack.c.l.b16 %v446
    %v460 = vunpack.c.l.b16 %v447
    %v461 = vunpack.c.h.b16 %v447
    %v462 = vunpack.c.l.b16 %v448
    %v463 = vunpack.c.l.b16 %v449
    %v464 = vunpack.c.h.b16 %v449
    %v465 = vunpack.c.l.b16 %v450
    %v466 = vpack.c.b16 %v460, %v457
    %v467 = vpack.c.b16 %v461, %v458
    %v468 = vpack.c.b16 %v462, %v459
    %v469 = vpack.c.b16 %v463, %v463
    %v470 = vpack.c.b16 %v464, %v464
    %v471 = vpack.c.b16 %v465, %v465
    %v477 = vsel %vm204, %v468, 0
    %v480 = vsel %vm204, %v471, 0
    %482 = vmatprep.subr.bf16.mxu0 0
    %483 = vmatpush1.bf16.msra.mxu0 %v175
    %484 = vmatprep.subr.bf16.mxu0 0
    %485 = vmatpush1.bf16.msra.mxu0 %v174
    %486 = vmatprep.subr.bf16.mxu0 0
    %487 = vmatpush1.bf16.msra.mxu0 %v173
    %488 = vmatprep.subr.bf16.mxu0 0
    %489 = vmatpush1.bf16.msra.mxu0 %v172
    %490 = vmatprep.subr.bf16.mxu0 0
    %491 = vmatpush1.bf16.msra.mxu0 %v171
    %492 = vmatprep.subr.bf16.mxu0 0
    %493 = vmatpush1.bf16.msra.mxu0 %v170
    %494 = vmatprep.subr.bf16.mxu0 0
    %495 = vmatpush1.bf16.msra.mxu0 %v169
    %496 = vmatprep.subr.bf16.mxu0 0
    %497 = vmatpush1.bf16.msra.mxu0 %v168
    %498 = vmatprep.subr.bf16.mxu0 0
    %499 = vmatpush2.bf16.msra.mxu0 %v183
    %500 = vmatprep.subr.bf16.mxu0 0
    %501 = vmatpush2.bf16.msra.mxu0 %v182
    %502 = vmatprep.subr.bf16.mxu0 0
    %503 = vmatpush2.bf16.msra.mxu0 %v181
    %504 = vmatprep.subr.bf16.mxu0 0
    %505 = vmatpush2.bf16.msra.mxu0 %v180
    %506 = vmatprep.subr.bf16.mxu0 0
    %507 = vmatpush2.bf16.msra.mxu0 %v179
    %508 = vmatprep.subr.bf16.mxu0 0
    %509 = vmatpush2.bf16.msra.mxu0 %v178
    %510 = vmatprep.subr.bf16.mxu0 0
    %511 = vmatpush2.bf16.msra.mxu0 %v177
    %512 = vmatprep.subr.bf16.mxu0 0
    %513 = vmatpush2.bf16.msra.mxu0 %v176
    %514 = vmatprep.mubr.bf16.mxu0 %v467
    %515 = vmatmul.mubr.bf16.gmra.mxu0 %v466
    %v516 = vpop.f32.mrf.mxu0
    %v517 = vadd.f32 0.0, %v516
    %v518 = vpop.f32.mrf.mxu0
    %v519 = vpop.f32.mrf.mxu0
    %v520 = vadd.f32 0.0, %v519
    %v521 = vpop.f32.mrf.mxu0
    %522 = vmatprep.mubr.bf16.mxu0 %v470
    %523 = vmatmul.mubr.bf16.gmra.mxu0 %v469
    %v524 = vpop.f32.mrf.mxu0
    %v525 = vadd.f32 0.0, %v524
    %v526 = vpop.f32.mrf.mxu0
    %v527 = vpop.f32.mrf.mxu0
    %v528 = vpop.f32.mrf.mxu0
    %529 = vdwg.mxu0
    %530 = vmatprep.subr.bf16.mxu0 0
    %531 = vmatpush1.bf16.msra.mxu0 0
    %532 = vmatprep.subr.bf16.mxu0 0
    %533 = vmatpush1.bf16.msra.mxu0 0
    %534 = vmatprep.subr.bf16.mxu0 0
    %535 = vmatpush1.bf16.msra.mxu0 0
    %536 = vmatprep.subr.bf16.mxu0 0
    %537 = vmatpush1.bf16.msra.mxu0 0
    %538 = vmatprep.subr.bf16.mxu0 0
    %539 = vmatpush1.bf16.msra.mxu0 0
    %540 = vmatprep.subr.bf16.mxu0 0
    %541 = vmatpush1.bf16.msra.mxu0 0
    %542 = vmatprep.subr.bf16.mxu0 0
    %543 = vmatpush1.bf16.msra.mxu0 %v185
    %544 = vmatprep.subr.bf16.mxu0 0
    %545 = vmatpush1.bf16.msra.mxu0 %v184
    %546 = vmatprep.subr.bf16.mxu0 0
    %547 = vmatpush2.bf16.msra.mxu0 0
    %548 = vmatprep.subr.bf16.mxu0 0
    %549 = vmatpush2.bf16.msra.mxu0 0
    %550 = vmatprep.subr.bf16.mxu0 0
    %551 = vmatpush2.bf16.msra.mxu0 0
    %552 = vmatprep.subr.bf16.mxu0 0
    %553 = vmatpush2.bf16.msra.mxu0 0
    %554 = vmatprep.subr.bf16.mxu0 0
    %555 = vmatpush2.bf16.msra.mxu0 0
    %556 = vmatprep.subr.bf16.mxu0 0
    %557 = vmatpush2.bf16.msra.mxu0 0
    %558 = vmatprep.subr.bf16.mxu0 0
    %559 = vmatpush2.bf16.msra.mxu0 0
    %560 = vmatprep.subr.bf16.mxu0 0
    %561 = vmatpush2.bf16.msra.mxu0 0
    %562 = vmatprep.mubr.bf16.mxu0 0
    %563 = vmatmul.mubr.bf16.gmra.mxu0 %v477
    %v564 = vpop.f32.mrf.mxu0
    %v565 = vadd.f32 %v517, %v564
    %v566 = vpop.f32.mrf.mxu0
    %v567 = vpop.f32.mrf.mxu0
    %v568 = vadd.f32 %v520, %v567
    %v569 = vpop.f32.mrf.mxu0
    %570 = vmatprep.mubr.bf16.mxu0 0
    %571 = vmatmul.mubr.bf16.gmra.mxu0 %v480
    %v572 = vpop.f32.mrf.mxu0
    %v573 = vadd.f32 %v525, %v572
    %v574 = vpop.f32.mrf.mxu0
    %v575 = vpop.f32.mrf.mxu0
    %v576 = vpop.f32.mrf.mxu0
    %577 = vdwg.mxu0
    %v578 = vmax.f32 %v441, %v565
    %v579 = vmax.f32 %v442, %v568
    %v580 = vmax.f32 %v443, %v573
    %s581 = scalar_lea.vmem %s0, 108
    %v582 = vld [vmem:[%s581] sm:$0xff]
    %v583 = vld [vmem:[%s581 + $0x8] sm:$0xf]
    %v584 = vld [vmem:[%s581 + $0xc] sm:$0xff]
    %v585 = vld [vmem:[%s581 + $0x14] sm:$0xf]
    %v586 = vld [vmem:[%s581 + $0x18] sm:$0x33]
    %v587 = vld [vmem:[%s581 + $0x20] sm:$0x3]
    %v594 = vunpack.c.l.b16 %v582
    %v595 = vunpack.c.h.b16 %v582
    %v596 = vunpack.c.l.b16 %v583
    %v597 = vunpack.c.l.b16 %v584
    %v598 = vunpack.c.h.b16 %v584
    %v599 = vunpack.c.l.b16 %v585
    %v600 = vunpack.c.l.b16 %v586
    %v601 = vunpack.c.h.b16 %v586
    %v602 = vunpack.c.l.b16 %v587
    %v603 = vpack.c.b16 %v597, %v594
    %v604 = vpack.c.b16 %v598, %v595
    %v605 = vpack.c.b16 %v599, %v596
    %v606 = vpack.c.b16 %v600, %v600
    %v607 = vpack.c.b16 %v601, %v601
    %v608 = vpack.c.b16 %v602, %v602
    %v614 = vsel %vm204, %v605, 0
    %v617 = vsel %vm204, %v608, 0
    %619 = vmatprep.subr.bf16.mxu0 0
    %620 = vmatpush1.bf16.msra.mxu0 %v175
    %621 = vmatprep.subr.bf16.mxu0 0
    %622 = vmatpush1.bf16.msra.mxu0 %v174
    %623 = vmatprep.subr.bf16.mxu0 0
    %624 = vmatpush1.bf16.msra.mxu0 %v173
    %625 = vmatprep.subr.bf16.mxu0 0
    %626 = vmatpush1.bf16.msra.mxu0 %v172
    %627 = vmatprep.subr.bf16.mxu0 0
    %628 = vmatpush1.bf16.msra.mxu0 %v171
    %629 = vmatprep.subr.bf16.mxu0 0
    %630 = vmatpush1.bf16.msra.mxu0 %v170
    %631 = vmatprep.subr.bf16.mxu0 0
    %632 = vmatpush1.bf16.msra.mxu0 %v169
    %633 = vmatprep.subr.bf16.mxu0 0
    %634 = vmatpush1.bf16.msra.mxu0 %v168
    %635 = vmatprep.subr.bf16.mxu0 0
    %636 = vmatpush2.bf16.msra.mxu0 %v183
    %637 = vmatprep.subr.bf16.mxu0 0
    %638 = vmatpush2.bf16.msra.mxu0 %v182
    %639 = vmatprep.subr.bf16.mxu0 0
    %640 = vmatpush2.bf16.msra.mxu0 %v181
    %641 = vmatprep.subr.bf16.mxu0 0
    %642 = vmatpush2.bf16.msra.mxu0 %v180
    %643 = vmatprep.subr.bf16.mxu0 0
    %644 = vmatpush2.bf16.msra.mxu0 %v179
    %645 = vmatprep.subr.bf16.mxu0 0
    %646 = vmatpush2.bf16.msra.mxu0 %v178
    %647 = vmatprep.subr.bf16.mxu0 0
    %648 = vmatpush2.bf16.msra.mxu0 %v177
    %649 = vmatprep.subr.bf16.mxu0 0
    %650 = vmatpush2.bf16.msra.mxu0 %v176
    %651 = vmatprep.mubr.bf16.mxu0 %v604
    %652 = vmatmul.mubr.bf16.gmra.mxu0 %v603
    %v653 = vpop.f32.mrf.mxu0
    %v654 = vadd.f32 0.0, %v653
    %v655 = vpop.f32.mrf.mxu0
    %v656 = vpop.f32.mrf.mxu0
    %v657 = vadd.f32 0.0, %v656
    %v658 = vpop.f32.mrf.mxu0
    %659 = vmatprep.mubr.bf16.mxu0 %v607
    %660 = vmatmul.mubr.bf16.gmra.mxu0 %v606
    %v661 = vpop.f32.mrf.mxu0
    %v662 = vadd.f32 0.0, %v661
    %v663 = vpop.f32.mrf.mxu0
    %v664 = vpop.f32.mrf.mxu0
    %v665 = vpop.f32.mrf.mxu0
    %666 = vdwg.mxu0
    %667 = vmatprep.subr.bf16.mxu0 0
    %668 = vmatpush1.bf16.msra.mxu0 0
    %669 = vmatprep.subr.bf16.mxu0 0
    %670 = vmatpush1.bf16.msra.mxu0 0
    %671 = vmatprep.subr.bf16.mxu0 0
    %672 = vmatpush1.bf16.msra.mxu0 0
    %673 = vmatprep.subr.bf16.mxu0 0
    %674 = vmatpush1.bf16.msra.mxu0 0
    %675 = vmatprep.subr.bf16.mxu0 0
    %676 = vmatpush1.bf16.msra.mxu0 0
    %677 = vmatprep.subr.bf16.mxu0 0
    %678 = vmatpush1.bf16.msra.mxu0 0
    %679 = vmatprep.subr.bf16.mxu0 0
    %680 = vmatpush1.bf16.msra.mxu0 %v185
    %681 = vmatprep.subr.bf16.mxu0 0
    %682 = vmatpush1.bf16.msra.mxu0 %v184
    %683 = vmatprep.subr.bf16.mxu0 0
    %684 = vmatpush2.bf16.msra.mxu0 0
    %685 = vmatprep.subr.bf16.mxu0 0
    %686 = vmatpush2.bf16.msra.mxu0 0
    %687 = vmatprep.subr.bf16.mxu0 0
    %688 = vmatpush2.bf16.msra.mxu0 0
    %689 = vmatprep.subr.bf16.mxu0 0
    %690 = vmatpush2.bf16.msra.mxu0 0
    %691 = vmatprep.subr.bf16.mxu0 0
    %692 = vmatpush2.bf16.msra.mxu0 0
    %693 = vmatprep.subr.bf16.mxu0 0
    %694 = vmatpush2.bf16.msra.mxu0 0
    %695 = vmatprep.subr.bf16.mxu0 0
    %696 = vmatpush2.bf16.msra.mxu0 0
    %697 = vmatprep.subr.bf16.mxu0 0
    %698 = vmatpush2.bf16.msra.mxu0 0
    %699 = vmatprep.mubr.bf16.mxu0 0
    %700 = vmatmul.mubr.bf16.gmra.mxu0 %v614
    %v701 = vpop.f32.mrf.mxu0
    %v702 = vadd.f32 %v654, %v701
    %v703 = vpop.f32.mrf.mxu0
    %v704 = vpop.f32.mrf.mxu0
    %v705 = vadd.f32 %v657, %v704
    %v706 = vpop.f32.mrf.mxu0
    %707 = vmatprep.mubr.bf16.mxu0 0
    %708 = vmatmul.mubr.bf16.gmra.mxu0 %v617
    %v709 = vpop.f32.mrf.mxu0
    %v710 = vadd.f32 %v662, %v709
    %v711 = vpop.f32.mrf.mxu0
    %v712 = vpop.f32.mrf.mxu0
    %v713 = vpop.f32.mrf.mxu0
    %714 = vdwg.mxu0
    %v715 = vmax.f32 %v578, %v702
    %v716 = vmax.f32 %v579, %v705
    %v717 = vmax.f32 %v580, %v710
    %v719 = vlaneseq
    %v720 = vshrl.u32 %v719, 7
    %v721 = vsub.s32 0, %v720
    %v722 = vrot.slane %v64, %v721
    %v724 = vadd.f32 %v715, %v722
    %v725 = vadd.f32 %v716, %v722
    %v726 = vadd.f32 %v717, %v722
    %v727 = vmax.f32 %v724, 0.0
    %v728 = vmax.f32 %v725, 0.0
    %v729 = vmax.f32 %v726, 0.0
    %v730 = vpack.c.bf16 %v728, %v727
    %v731 = vpack.c.bf16 %v729, %v729
    %s732 = scalar_lea.vmem %s0, 144
    %v733 = vld [vmem:[%s732] sm:$0xff]
    %v734 = vld [vmem:[%s732 + $0x8] sm:$0xf]
    %v735 = vld [vmem:[%s732 + $0xc] sm:$0xff]
    %v736 = vld [vmem:[%s732 + $0x14] sm:$0xf]
    %v737 = vld [vmem:[%s732 + $0x18] sm:$0x33]
    %v738 = vld [vmem:[%s732 + $0x20] sm:$0x3]
    %v745 = vunpack.c.l.b16 %v733
    %v746 = vunpack.c.h.b16 %v733
    %v747 = vunpack.c.l.b16 %v734
    %v748 = vunpack.c.l.b16 %v735
    %v749 = vunpack.c.h.b16 %v735
    %v750 = vunpack.c.l.b16 %v736
    %v751 = vunpack.c.l.b16 %v737
    %v752 = vunpack.c.h.b16 %v737
    %v753 = vunpack.c.l.b16 %v738
    %v754 = vpack.c.b16 %v748, %v745
    %v755 = vpack.c.b16 %v749, %v746
    %v756 = vpack.c.b16 %v750, %v747
    %v757 = vpack.c.b16 %v751, %v751
    %v758 = vpack.c.b16 %v752, %v752
    %v759 = vpack.c.b16 %v753, %v753
    %v765 = vsel %vm204, %v756, 0
    %v768 = vsel %vm204, %v759, 0
    %770 = vmatprep.subr.bf16.mxu0 0
    %771 = vmatpush1.bf16.msra.mxu0 %v175
    %772 = vmatprep.subr.bf16.mxu0 0
    %773 = vmatpush1.bf16.msra.mxu0 %v174
    %774 = vmatprep.subr.bf16.mxu0 0
    %775 = vmatpush1.bf16.msra.mxu0 %v173
    %776 = vmatprep.subr.bf16.mxu0 0
    %777 = vmatpush1.bf16.msra.mxu0 %v172
    %778 = vmatprep.subr.bf16.mxu0 0
    %779 = vmatpush1.bf16.msra.mxu0 %v171
    %780 = vmatprep.subr.bf16.mxu0 0
    %781 = vmatpush1.bf16.msra.mxu0 %v170
    %782 = vmatprep.subr.bf16.mxu0 0
    %783 = vmatpush1.bf16.msra.mxu0 %v169
    %784 = vmatprep.subr.bf16.mxu0 0
    %785 = vmatpush1.bf16.msra.mxu0 %v168
    %786 = vmatprep.subr.bf16.mxu0 0
    %787 = vmatpush2.bf16.msra.mxu0 %v183
    %788 = vmatprep.subr.bf16.mxu0 0
    %789 = vmatpush2.bf16.msra.mxu0 %v182
    %790 = vmatprep.subr.bf16.mxu0 0
    %791 = vmatpush2.bf16.msra.mxu0 %v181
    %792 = vmatprep.subr.bf16.mxu0 0
    %793 = vmatpush2.bf16.msra.mxu0 %v180
    %794 = vmatprep.subr.bf16.mxu0 0
    %795 = vmatpush2.bf16.msra.mxu0 %v179
    %796 = vmatprep.subr.bf16.mxu0 0
    %797 = vmatpush2.bf16.msra.mxu0 %v178
    %798 = vmatprep.subr.bf16.mxu0 0
    %799 = vmatpush2.bf16.msra.mxu0 %v177
    %800 = vmatprep.subr.bf16.mxu0 0
    %801 = vmatpush2.bf16.msra.mxu0 %v176
    %802 = vmatprep.mubr.bf16.mxu0 %v755
    %803 = vmatmul.mubr.bf16.gmra.mxu0 %v754
    %v804 = vpop.f32.mrf.mxu0
    %v805 = vadd.f32 0.0, %v804
    %v806 = vpop.f32.mrf.mxu0
    %v807 = vpop.f32.mrf.mxu0
    %v808 = vadd.f32 0.0, %v807
    %v809 = vpop.f32.mrf.mxu0
    %810 = vmatprep.mubr.bf16.mxu0 %v758
    %811 = vmatmul.mubr.bf16.gmra.mxu0 %v757
    %v812 = vpop.f32.mrf.mxu0
    %v813 = vadd.f32 0.0, %v812
    %v814 = vpop.f32.mrf.mxu0
    %v815 = vpop.f32.mrf.mxu0
    %v816 = vpop.f32.mrf.mxu0
    %817 = vdwg.mxu0
    %818 = vmatprep.subr.bf16.mxu0 0
    %819 = vmatpush1.bf16.msra.mxu0 0
    %820 = vmatprep.subr.bf16.mxu0 0
    %821 = vmatpush1.bf16.msra.mxu0 0
    %822 = vmatprep.subr.bf16.mxu0 0
    %823 = vmatpush1.bf16.msra.mxu0 0
    %824 = vmatprep.subr.bf16.mxu0 0
    %825 = vmatpush1.bf16.msra.mxu0 0
    %826 = vmatprep.subr.bf16.mxu0 0
    %827 = vmatpush1.bf16.msra.mxu0 0
    %828 = vmatprep.subr.bf16.mxu0 0
    %829 = vmatpush1.bf16.msra.mxu0 0
    %830 = vmatprep.subr.bf16.mxu0 0
    %831 = vmatpush1.bf16.msra.mxu0 %v185
    %832 = vmatprep.subr.bf16.mxu0 0
    %833 = vmatpush1.bf16.msra.mxu0 %v184
    %834 = vmatprep.subr.bf16.mxu0 0
    %835 = vmatpush2.bf16.msra.mxu0 0
    %836 = vmatprep.subr.bf16.mxu0 0
    %837 = vmatpush2.bf16.msra.mxu0 0
    %838 = vmatprep.subr.bf16.mxu0 0
    %839 = vmatpush2.bf16.msra.mxu0 0
    %840 = vmatprep.subr.bf16.mxu0 0
    %841 = vmatpush2.bf16.msra.mxu0 0
    %842 = vmatprep.subr.bf16.mxu0 0
    %843 = vmatpush2.bf16.msra.mxu0 0
    %844 = vmatprep.subr.bf16.mxu0 0
    %845 = vmatpush2.bf16.msra.mxu0 0
    %846 = vmatprep.subr.bf16.mxu0 0
    %847 = vmatpush2.bf16.msra.mxu0 0
    %848 = vmatprep.subr.bf16.mxu0 0
    %849 = vmatpush2.bf16.msra.mxu0 0
    %850 = vmatprep.mubr.bf16.mxu0 0
    %851 = vmatmul.mubr.bf16.gmra.mxu0 %v765
    %v852 = vpop.f32.mrf.mxu0
    %v853 = vadd.f32 %v805, %v852
    %v854 = vpop.f32.mrf.mxu0
    %v855 = vpop.f32.mrf.mxu0
    %v856 = vadd.f32 %v808, %v855
    %v857 = vpop.f32.mrf.mxu0
    %858 = vmatprep.mubr.bf16.mxu0 0
    %859 = vmatmul.mubr.bf16.gmra.mxu0 %v768
    %v860 = vpop.f32.mrf.mxu0
    %v861 = vadd.f32 %v813, %v860
    %v862 = vpop.f32.mrf.mxu0
    %v863 = vpop.f32.mrf.mxu0
    %v864 = vpop.f32.mrf.mxu0
    %865 = vdwg.mxu0
    %s866 = scalar_lea.vmem %s0, 180
    %v867 = vld [vmem:[%s866] sm:$0xff]
    %v868 = vld [vmem:[%s866 + $0x8] sm:$0xf]
    %v869 = vld [vmem:[%s866 + $0xc] sm:$0xff]
    %v870 = vld [vmem:[%s866 + $0x14] sm:$0xf]
    %v871 = vld [vmem:[%s866 + $0x18] sm:$0x33]
    %v872 = vld [vmem:[%s866 + $0x20] sm:$0x3]
    %v879 = vunpack.c.l.b16 %v867
    %v880 = vunpack.c.h.b16 %v867
    %v881 = vunpack.c.l.b16 %v868
    %v882 = vunpack.c.l.b16 %v869
    %v883 = vunpack.c.h.b16 %v869
    %v884 = vunpack.c.l.b16 %v870
    %v885 = vunpack.c.l.b16 %v871
    %v886 = vunpack.c.h.b16 %v871
    %v887 = vunpack.c.l.b16 %v872
    %v888 = vpack.c.b16 %v882, %v879
    %v889 = vpack.c.b16 %v883, %v880
    %v890 = vpack.c.b16 %v884, %v881
    %v891 = vpack.c.b16 %v885, %v885
    %v892 = vpack.c.b16 %v886, %v886
    %v893 = vpack.c.b16 %v887, %v887
    %v899 = vsel %vm204, %v890, 0
    %v902 = vsel %vm204, %v893, 0
    %904 = vmatprep.subr.bf16.mxu0 0
    %905 = vmatpush1.bf16.msra.mxu0 %v175
    %906 = vmatprep.subr.bf16.mxu0 0
    %907 = vmatpush1.bf16.msra.mxu0 %v174
    %908 = vmatprep.subr.bf16.mxu0 0
    %909 = vmatpush1.bf16.msra.mxu0 %v173
    %910 = vmatprep.subr.bf16.mxu0 0
    %911 = vmatpush1.bf16.msra.mxu0 %v172
    %912 = vmatprep.subr.bf16.mxu0 0
    %913 = vmatpush1.bf16.msra.mxu0 %v171
    %914 = vmatprep.subr.bf16.mxu0 0
    %915 = vmatpush1.bf16.msra.mxu0 %v170
    %916 = vmatprep.subr.bf16.mxu0 0
    %917 = vmatpush1.bf16.msra.mxu0 %v169
    %918 = vmatprep.subr.bf16.mxu0 0
    %919 = vmatpush1.bf16.msra.mxu0 %v168
    %920 = vmatprep.subr.bf16.mxu0 0
    %921 = vmatpush2.bf16.msra.mxu0 %v183
    %922 = vmatprep.subr.bf16.mxu0 0
    %923 = vmatpush2.bf16.msra.mxu0 %v182
    %924 = vmatprep.subr.bf16.mxu0 0
    %925 = vmatpush2.bf16.msra.mxu0 %v181
    %926 = vmatprep.subr.bf16.mxu0 0
    %927 = vmatpush2.bf16.msra.mxu0 %v180
    %928 = vmatprep.subr.bf16.mxu0 0
    %929 = vmatpush2.bf16.msra.mxu0 %v179
    %930 = vmatprep.subr.bf16.mxu0 0
    %931 = vmatpush2.bf16.msra.mxu0 %v178
    %932 = vmatprep.subr.bf16.mxu0 0
    %933 = vmatpush2.bf16.msra.mxu0 %v177
    %934 = vmatprep.subr.bf16.mxu0 0
    %935 = vmatpush2.bf16.msra.mxu0 %v176
    %936 = vmatprep.mubr.bf16.mxu0 %v889
    %937 = vmatmul.mubr.bf16.gmra.mxu0 %v888
    %v938 = vpop.f32.mrf.mxu0
    %v939 = vadd.f32 0.0, %v938
    %v940 = vpop.f32.mrf.mxu0
    %v941 = vpop.f32.mrf.mxu0
    %v942 = vadd.f32 0.0, %v941
    %v943 = vpop.f32.mrf.mxu0
    %944 = vmatprep.mubr.bf16.mxu0 %v892
    %945 = vmatmul.mubr.bf16.gmra.mxu0 %v891
    %v946 = vpop.f32.mrf.mxu0
    %v947 = vadd.f32 0.0, %v946
    %v948 = vpop.f32.mrf.mxu0
    %v949 = vpop.f32.mrf.mxu0
    %v950 = vpop.f32.mrf.mxu0
    %951 = vdwg.mxu0
    %952 = vmatprep.subr.bf16.mxu0 0
    %953 = vmatpush1.bf16.msra.mxu0 0
    %954 = vmatprep.subr.bf16.mxu0 0
    %955 = vmatpush1.bf16.msra.mxu0 0
    %956 = vmatprep.subr.bf16.mxu0 0
    %957 = vmatpush1.bf16.msra.mxu0 0
    %958 = vmatprep.subr.bf16.mxu0 0
    %959 = vmatpush1.bf16.msra.mxu0 0
    %960 = vmatprep.subr.bf16.mxu0 0
    %961 = vmatpush1.bf16.msra.mxu0 0
    %962 = vmatprep.subr.bf16.mxu0 0
    %963 = vmatpush1.bf16.msra.mxu0 0
    %964 = vmatprep.subr.bf16.mxu0 0
    %965 = vmatpush1.bf16.msra.mxu0 %v185
    %966 = vmatprep.subr.bf16.mxu0 0
    %967 = vmatpush1.bf16.msra.mxu0 %v184
    %968 = vmatprep.subr.bf16.mxu0 0
    %969 = vmatpush2.bf16.msra.mxu0 0
    %970 = vmatprep.subr.bf16.mxu0 0
    %971 = vmatpush2.bf16.msra.mxu0 0
    %972 = vmatprep.subr.bf16.mxu0 0
    %973 = vmatpush2.bf16.msra.mxu0 0
    %974 = vmatprep.subr.bf16.mxu0 0
    %975 = vmatpush2.bf16.msra.mxu0 0
    %976 = vmatprep.subr.bf16.mxu0 0
    %977 = vmatpush2.bf16.msra.mxu0 0
    %978 = vmatprep.subr.bf16.mxu0 0
    %979 = vmatpush2.bf16.msra.mxu0 0
    %980 = vmatprep.subr.bf16.mxu0 0
    %981 = vmatpush2.bf16.msra.mxu0 0
    %982 = vmatprep.subr.bf16.mxu0 0
    %983 = vmatpush2.bf16.msra.mxu0 0
    %984 = vmatprep.mubr.bf16.mxu0 0
    %985 = vmatmul.mubr.bf16.gmra.mxu0 %v899
    %v986 = vpop.f32.mrf.mxu0
    %v987 = vadd.f32 %v939, %v986
    %v988 = vpop.f32.mrf.mxu0
    %v989 = vpop.f32.mrf.mxu0
    %v990 = vadd.f32 %v942, %v989
    %v991 = vpop.f32.mrf.mxu0
    %992 = vmatprep.mubr.bf16.mxu0 0
    %993 = vmatmul.mubr.bf16.gmra.mxu0 %v902
    %v994 = vpop.f32.mrf.mxu0
    %v995 = vadd.f32 %v947, %v994
    %v996 = vpop.f32.mrf.mxu0
    %v997 = vpop.f32.mrf.mxu0
    %v998 = vpop.f32.mrf.mxu0
    %999 = vdwg.mxu0
    %v1000 = vmax.f32 %v853, %v987
    %v1001 = vmax.f32 %v856, %v990
    %v1002 = vmax.f32 %v861, %v995
    %s1003 = scalar_lea.vmem %s0, 216
    %v1004 = vld [vmem:[%s1003] sm:$0xff]
    %v1005 = vld [vmem:[%s1003 + $0x8] sm:$0xf]
    %v1006 = vld [vmem:[%s1003 + $0xc] sm:$0xff]
    %v1007 = vld [vmem:[%s1003 + $0x14] sm:$0xf]
    %v1008 = vld [vmem:[%s1003 + $0x18] sm:$0x33]
    %v1009 = vld [vmem:[%s1003 + $0x20] sm:$0x3]
    %v1016 = vunpack.c.l.b16 %v1004
    %v1017 = vunpack.c.h.b16 %v1004
    %v1018 = vunpack.c.l.b16 %v1005
    %v1019 = vunpack.c.l.b16 %v1006
    %v1020 = vunpack.c.h.b16 %v1006
    %v1021 = vunpack.c.l.b16 %v1007
    %v1022 = vunpack.c.l.b16 %v1008
    %v1023 = vunpack.c.h.b16 %v1008
    %v1024 = vunpack.c.l.b16 %v1009
    %v1025 = vpack.c.b16 %v1019, %v1016
    %v1026 = vpack.c.b16 %v1020, %v1017
    %v1027 = vpack.c.b16 %v1021, %v1018
    %v1028 = vpack.c.b16 %v1022, %v1022
    %v1029 = vpack.c.b16 %v1023, %v1023
    %v1030 = vpack.c.b16 %v1024, %v1024
    %v1036 = vsel %vm204, %v1027, 0
    %v1039 = vsel %vm204, %v1030, 0
    %1041 = vmatprep.subr.bf16.mxu0 0
    %1042 = vmatpush1.bf16.msra.mxu0 %v175
    %1043 = vmatprep.subr.bf16.mxu0 0
    %1044 = vmatpush1.bf16.msra.mxu0 %v174
    %1045 = vmatprep.subr.bf16.mxu0 0
    %1046 = vmatpush1.bf16.msra.mxu0 %v173
    %1047 = vmatprep.subr.bf16.mxu0 0
    %1048 = vmatpush1.bf16.msra.mxu0 %v172
    %1049 = vmatprep.subr.bf16.mxu0 0
    %1050 = vmatpush1.bf16.msra.mxu0 %v171
    %1051 = vmatprep.subr.bf16.mxu0 0
    %1052 = vmatpush1.bf16.msra.mxu0 %v170
    %1053 = vmatprep.subr.bf16.mxu0 0
    %1054 = vmatpush1.bf16.msra.mxu0 %v169
    %1055 = vmatprep.subr.bf16.mxu0 0
    %1056 = vmatpush1.bf16.msra.mxu0 %v168
    %1057 = vmatprep.subr.bf16.mxu0 0
    %1058 = vmatpush2.bf16.msra.mxu0 %v183
    %1059 = vmatprep.subr.bf16.mxu0 0
    %1060 = vmatpush2.bf16.msra.mxu0 %v182
    %1061 = vmatprep.subr.bf16.mxu0 0
    %1062 = vmatpush2.bf16.msra.mxu0 %v181
    %1063 = vmatprep.subr.bf16.mxu0 0
    %1064 = vmatpush2.bf16.msra.mxu0 %v180
    %1065 = vmatprep.subr.bf16.mxu0 0
    %1066 = vmatpush2.bf16.msra.mxu0 %v179
    %1067 = vmatprep.subr.bf16.mxu0 0
    %1068 = vmatpush2.bf16.msra.mxu0 %v178
    %1069 = vmatprep.subr.bf16.mxu0 0
    %1070 = vmatpush2.bf16.msra.mxu0 %v177
    %1071 = vmatprep.subr.bf16.mxu0 0
    %1072 = vmatpush2.bf16.msra.mxu0 %v176
    %1073 = vmatprep.mubr.bf16.mxu0 %v1026
    %1074 = vmatmul.mubr.bf16.gmra.mxu0 %v1025
    %v1075 = vpop.f32.mrf.mxu0
    %v1076 = vadd.f32 0.0, %v1075
    %v1077 = vpop.f32.mrf.mxu0
    %v1078 = vpop.f32.mrf.mxu0
    %v1079 = vadd.f32 0.0, %v1078
    %v1080 = vpop.f32.mrf.mxu0
    %1081 = vmatprep.mubr.bf16.mxu0 %v1029
    %1082 = vmatmul.mubr.bf16.gmra.mxu0 %v1028
    %v1083 = vpop.f32.mrf.mxu0
    %v1084 = vadd.f32 0.0, %v1083
    %v1085 = vpop.f32.mrf.mxu0
    %v1086 = vpop.f32.mrf.mxu0
    %v1087 = vpop.f32.mrf.mxu0
    %1088 = vdwg.mxu0
    %1089 = vmatprep.subr.bf16.mxu0 0
    %1090 = vmatpush1.bf16.msra.mxu0 0
    %1091 = vmatprep.subr.bf16.mxu0 0
    %1092 = vmatpush1.bf16.msra.mxu0 0
    %1093 = vmatprep.subr.bf16.mxu0 0
    %1094 = vmatpush1.bf16.msra.mxu0 0
    %1095 = vmatprep.subr.bf16.mxu0 0
    %1096 = vmatpush1.bf16.msra.mxu0 0
    %1097 = vmatprep.subr.bf16.mxu0 0
    %1098 = vmatpush1.bf16.msra.mxu0 0
    %1099 = vmatprep.subr.bf16.mxu0 0
    %1100 = vmatpush1.bf16.msra.mxu0 0
    %1101 = vmatprep.subr.bf16.mxu0 0
    %1102 = vmatpush1.bf16.msra.mxu0 %v185
    %1103 = vmatprep.subr.bf16.mxu0 0
    %1104 = vmatpush1.bf16.msra.mxu0 %v184
    %1105 = vmatprep.subr.bf16.mxu0 0
    %1106 = vmatpush2.bf16.msra.mxu0 0
    %1107 = vmatprep.subr.bf16.mxu0 0
    %1108 = vmatpush2.bf16.msra.mxu0 0
    %1109 = vmatprep.subr.bf16.mxu0 0
    %1110 = vmatpush2.bf16.msra.mxu0 0
    %1111 = vmatprep.subr.bf16.mxu0 0
    %1112 = vmatpush2.bf16.msra.mxu0 0
    %1113 = vmatprep.subr.bf16.mxu0 0
    %1114 = vmatpush2.bf16.msra.mxu0 0
    %1115 = vmatprep.subr.bf16.mxu0 0
    %1116 = vmatpush2.bf16.msra.mxu0 0
    %1117 = vmatprep.subr.bf16.mxu0 0
    %1118 = vmatpush2.bf16.msra.mxu0 0
    %1119 = vmatprep.subr.bf16.mxu0 0
    %1120 = vmatpush2.bf16.msra.mxu0 0
    %1121 = vmatprep.mubr.bf16.mxu0 0
    %1122 = vmatmul.mubr.bf16.gmra.mxu0 %v1036
    %v1123 = vpop.f32.mrf.mxu0
    %v1124 = vadd.f32 %v1076, %v1123
    %v1125 = vpop.f32.mrf.mxu0
    %v1126 = vpop.f32.mrf.mxu0
    %v1127 = vadd.f32 %v1079, %v1126
    %v1128 = vpop.f32.mrf.mxu0
    %1129 = vmatprep.mubr.bf16.mxu0 0
    %1130 = vmatmul.mubr.bf16.gmra.mxu0 %v1039
    %v1131 = vpop.f32.mrf.mxu0
    %v1132 = vadd.f32 %v1084, %v1131
    %v1133 = vpop.f32.mrf.mxu0
    %v1134 = vpop.f32.mrf.mxu0
    %v1135 = vpop.f32.mrf.mxu0
    %1136 = vdwg.mxu0
    %v1137 = vmax.f32 %v1000, %v1124
    %v1138 = vmax.f32 %v1001, %v1127
    %v1139 = vmax.f32 %v1002, %v1132
    %s1140 = scalar_lea.vmem %s0, 252
    %v1141 = vld [vmem:[%s1140] sm:$0xff]
    %v1142 = vld [vmem:[%s1140 + $0x8] sm:$0xf]
    %v1143 = vld [vmem:[%s1140 + $0xc] sm:$0xff]
    %v1144 = vld [vmem:[%s1140 + $0x14] sm:$0xf]
    %v1145 = vld [vmem:[%s1140 + $0x18] sm:$0x33]
    %v1146 = vld [vmem:[%s1140 + $0x20] sm:$0x3]
    %v1153 = vunpack.c.l.b16 %v1141
    %v1154 = vunpack.c.h.b16 %v1141
    %v1155 = vunpack.c.l.b16 %v1142
    %v1156 = vunpack.c.l.b16 %v1143
    %v1157 = vunpack.c.h.b16 %v1143
    %v1158 = vunpack.c.l.b16 %v1144
    %v1159 = vunpack.c.l.b16 %v1145
    %v1160 = vunpack.c.h.b16 %v1145
    %v1161 = vunpack.c.l.b16 %v1146
    %v1162 = vpack.c.b16 %v1156, %v1153
    %v1163 = vpack.c.b16 %v1157, %v1154
    %v1164 = vpack.c.b16 %v1158, %v1155
    %v1165 = vpack.c.b16 %v1159, %v1159
    %v1166 = vpack.c.b16 %v1160, %v1160
    %v1167 = vpack.c.b16 %v1161, %v1161
    %v1173 = vsel %vm204, %v1164, 0
    %v1176 = vsel %vm204, %v1167, 0
    %1178 = vmatprep.subr.bf16.mxu0 0
    %1179 = vmatpush1.bf16.msra.mxu0 %v175
    %1180 = vmatprep.subr.bf16.mxu0 0
    %1181 = vmatpush1.bf16.msra.mxu0 %v174
    %1182 = vmatprep.subr.bf16.mxu0 0
    %1183 = vmatpush1.bf16.msra.mxu0 %v173
    %1184 = vmatprep.subr.bf16.mxu0 0
    %1185 = vmatpush1.bf16.msra.mxu0 %v172
    %1186 = vmatprep.subr.bf16.mxu0 0
    %1187 = vmatpush1.bf16.msra.mxu0 %v171
    %1188 = vmatprep.subr.bf16.mxu0 0
    %1189 = vmatpush1.bf16.msra.mxu0 %v170
    %1190 = vmatprep.subr.bf16.mxu0 0
    %1191 = vmatpush1.bf16.msra.mxu0 %v169
    %1192 = vmatprep.subr.bf16.mxu0 0
    %1193 = vmatpush1.bf16.msra.mxu0 %v168
    %1194 = vmatprep.subr.bf16.mxu0 0
    %1195 = vmatpush2.bf16.msra.mxu0 %v183
    %1196 = vmatprep.subr.bf16.mxu0 0
    %1197 = vmatpush2.bf16.msra.mxu0 %v182
    %1198 = vmatprep.subr.bf16.mxu0 0
    %1199 = vmatpush2.bf16.msra.mxu0 %v181
    %1200 = vmatprep.subr.bf16.mxu0 0
    %1201 = vmatpush2.bf16.msra.mxu0 %v180
    %1202 = vmatprep.subr.bf16.mxu0 0
    %1203 = vmatpush2.bf16.msra.mxu0 %v179
    %1204 = vmatprep.subr.bf16.mxu0 0
    %1205 = vmatpush2.bf16.msra.mxu0 %v178
    %1206 = vmatprep.subr.bf16.mxu0 0
    %1207 = vmatpush2.bf16.msra.mxu0 %v177
    %1208 = vmatprep.subr.bf16.mxu0 0
    %1209 = vmatpush2.bf16.msra.mxu0 %v176
    %1210 = vmatprep.mubr.bf16.mxu0 %v1163
    %1211 = vmatmul.mubr.bf16.gmra.mxu0 %v1162
    %v1212 = vpop.f32.mrf.mxu0
    %v1213 = vadd.f32 0.0, %v1212
    %v1214 = vpop.f32.mrf.mxu0
    %v1215 = vpop.f32.mrf.mxu0
    %v1216 = vadd.f32 0.0, %v1215
    %v1217 = vpop.f32.mrf.mxu0
    %1218 = vmatprep.mubr.bf16.mxu0 %v1166
    %1219 = vmatmul.mubr.bf16.gmra.mxu0 %v1165
    %v1220 = vpop.f32.mrf.mxu0
    %v1221 = vadd.f32 0.0, %v1220
    %v1222 = vpop.f32.mrf.mxu0
    %v1223 = vpop.f32.mrf.mxu0
    %v1224 = vpop.f32.mrf.mxu0
    %1225 = vdwg.mxu0
    %1226 = vmatprep.subr.bf16.mxu0 0
    %1227 = vmatpush1.bf16.msra.mxu0 0
    %1228 = vmatprep.subr.bf16.mxu0 0
    %1229 = vmatpush1.bf16.msra.mxu0 0
    %1230 = vmatprep.subr.bf16.mxu0 0
    %1231 = vmatpush1.bf16.msra.mxu0 0
    %1232 = vmatprep.subr.bf16.mxu0 0
    %1233 = vmatpush1.bf16.msra.mxu0 0
    %1234 = vmatprep.subr.bf16.mxu0 0
    %1235 = vmatpush1.bf16.msra.mxu0 0
    %1236 = vmatprep.subr.bf16.mxu0 0
    %1237 = vmatpush1.bf16.msra.mxu0 0
    %1238 = vmatprep.subr.bf16.mxu0 0
    %1239 = vmatpush1.bf16.msra.mxu0 %v185
    %1240 = vmatprep.subr.bf16.mxu0 0
    %1241 = vmatpush1.bf16.msra.mxu0 %v184
    %1242 = vmatprep.subr.bf16.mxu0 0
    %1243 = vmatpush2.bf16.msra.mxu0 0
    %1244 = vmatprep.subr.bf16.mxu0 0
    %1245 = vmatpush2.bf16.msra.mxu0 0
    %1246 = vmatprep.subr.bf16.mxu0 0
    %1247 = vmatpush2.bf16.msra.mxu0 0
    %1248 = vmatprep.subr.bf16.mxu0 0
    %1249 = vmatpush2.bf16.msra.mxu0 0
    %1250 = vmatprep.subr.bf16.mxu0 0
    %1251 = vmatpush2.bf16.msra.mxu0 0
    %1252 = vmatprep.subr.bf16.mxu0 0
    %1253 = vmatpush2.bf16.msra.mxu0 0
    %1254 = vmatprep.subr.bf16.mxu0 0
    %1255 = vmatpush2.bf16.msra.mxu0 0
    %1256 = vmatprep.subr.bf16.mxu0 0
    %1257 = vmatpush2.bf16.msra.mxu0 0
    %1258 = vmatprep.mubr.bf16.mxu0 0
    %1259 = vmatmul.mubr.bf16.gmra.mxu0 %v1173
    %v1260 = vpop.f32.mrf.mxu0
    %v1261 = vadd.f32 %v1213, %v1260
    %v1262 = vpop.f32.mrf.mxu0
    %v1263 = vpop.f32.mrf.mxu0
    %v1264 = vadd.f32 %v1216, %v1263
    %v1265 = vpop.f32.mrf.mxu0
    %1266 = vmatprep.mubr.bf16.mxu0 0
    %1267 = vmatmul.mubr.bf16.gmra.mxu0 %v1176
    %v1268 = vpop.f32.mrf.mxu0
    %v1269 = vadd.f32 %v1221, %v1268
    %v1270 = vpop.f32.mrf.mxu0
    %v1271 = vpop.f32.mrf.mxu0
    %v1272 = vpop.f32.mrf.mxu0
    %1273 = vdwg.mxu0
    %v1274 = vmax.f32 %v1137, %v1261
    %v1275 = vmax.f32 %v1138, %v1264
    %v1276 = vmax.f32 %v1139, %v1269
    %v1277 = vadd.f32 %v1274, %v722
    %v1278 = vadd.f32 %v1275, %v722
    %v1279 = vadd.f32 %v1276, %v722
    %v1280 = vmax.f32 %v1277, 0.0
    %v1281 = vmax.f32 %v1278, 0.0
    %v1282 = vmax.f32 %v1279, 0.0
    %v1283 = vpack.c.bf16 %v1281, %v1280
    %v1284 = vpack.c.bf16 %v1282, %v1282
    %v1286 = vshll.u32 %v1283, 16
    %vm1289 = vcmask 1040384
    %vm1290 = vsmask.f32 256
    %vm1291 = vmand %vm1289, %vm1290
    %v1292 = vsel %vm1291, %v730, %v1286
    %v1293 = vld [vmem:[%s3] sm:$0xff]
    %v1294 = vld [vmem:[%s3 + $0x8] sm:$0xff]
    %v1295 = vld [vmem:[%s3 + $0x10] sm:$0xf]
    %v1296 = vld [vmem:[%s3 + $0x14] sm:$0xff]
    %v1297 = vld [vmem:[%s3 + $0x1c] sm:$0xff]
    %v1298 = vld [vmem:[%s3 + $0x24] sm:$0xf]
    %v1299 = vld [vmem:[%s3 + $0x28] sm:$0xff]
    %v1300 = vld [vmem:[%s3 + $0x30] sm:$0xff]
    %v1301 = vld [vmem:[%s3 + $0x38] sm:$0xf]
    %v1302 = vld [vmem:[%s3 + $0x3c] sm:$0xff]
    %v1303 = vld [vmem:[%s3 + $0x44] sm:$0xff]
    %v1304 = vld [vmem:[%s3 + $0x4c] sm:$0xf]
    %v1305 = vld [vmem:[%s3 + $0x50] sm:$0xff]
    %v1306 = vld [vmem:[%s3 + $0x58] sm:$0xff]
    %v1307 = vld [vmem:[%s3 + $0x60] sm:$0xf]
    %v1308 = vld [vmem:[%s3 + $0x64] sm:$0xff]
    %v1309 = vld [vmem:[%s3 + $0x6c] sm:$0xff]
    %v1310 = vld [vmem:[%s3 + $0x74] sm:$0xf]
    %v1311 = vld [vmem:[%s3 + $0x78] sm:$0xff]
    %v1312 = vld [vmem:[%s3 + $0x80] sm:$0xff]
    %v1313 = vld [vmem:[%s3 + $0x88] sm:$0xf]
    %v1314 = vld [vmem:[%s3 + $0x8c] sm:$0xff]
    %v1315 = vld [vmem:[%s3 + $0x94] sm:$0xff]
    %v1316 = vld [vmem:[%s3 + $0x9c] sm:$0xf]
    %v1318 = vshrl.u32 %v730, 16
    %v1321 = vsel %vm1291, %v1318, %v1283
    %s1322 = scalar_lea.vmem %s3, 160
    %v1323 = vld [vmem:[%s1322] sm:$0xff]
    %v1324 = vld [vmem:[%s1322 + $0x8] sm:$0xff]
    %v1325 = vld [vmem:[%s1322 + $0x10] sm:$0xf]
    %v1326 = vld [vmem:[%s1322 + $0x14] sm:$0xff]
    %v1327 = vld [vmem:[%s1322 + $0x1c] sm:$0xff]
    %v1328 = vld [vmem:[%s1322 + $0x24] sm:$0xf]
    %v1329 = vld [vmem:[%s1322 + $0x28] sm:$0xff]
    %v1330 = vld [vmem:[%s1322 + $0x30] sm:$0xff]
    %v1331 = vld [vmem:[%s1322 + $0x38] sm:$0xf]
    %v1332 = vld [vmem:[%s1322 + $0x3c] sm:$0xff]
    %v1333 = vld [vmem:[%s1322 + $0x44] sm:$0xff]
    %v1334 = vld [vmem:[%s1322 + $0x4c] sm:$0xf]
    %v1335 = vld [vmem:[%s1322 + $0x50] sm:$0xff]
    %v1336 = vld [vmem:[%s1322 + $0x58] sm:$0xff]
    %v1337 = vld [vmem:[%s1322 + $0x60] sm:$0xf]
    %v1338 = vld [vmem:[%s1322 + $0x64] sm:$0xff]
    %v1339 = vld [vmem:[%s1322 + $0x6c] sm:$0xff]
    %v1340 = vld [vmem:[%s1322 + $0x74] sm:$0xf]
    %v1341 = vld [vmem:[%s1322 + $0x78] sm:$0xff]
    %v1342 = vld [vmem:[%s1322 + $0x80] sm:$0xff]
    %v1343 = vld [vmem:[%s1322 + $0x88] sm:$0xf]
    %v1344 = vld [vmem:[%s1322 + $0x8c] sm:$0xff]
    %v1345 = vld [vmem:[%s1322 + $0x94] sm:$0xff]
    %v1346 = vld [vmem:[%s1322 + $0x9c] sm:$0xf]
    %v1371 = vunpack.c.l.b16 %v1323
    %v1372 = vunpack.c.h.b16 %v1323
    %v1373 = vunpack.c.l.b16 %v1324
    %v1374 = vunpack.c.h.b16 %v1324
    %v1375 = vunpack.c.l.b16 %v1325
    %v1376 = vunpack.c.l.b16 %v1326
    %v1377 = vunpack.c.h.b16 %v1326
    %v1378 = vunpack.c.l.b16 %v1327
    %v1379 = vunpack.c.h.b16 %v1327
    %v1380 = vunpack.c.l.b16 %v1328
    %v1381 = vunpack.c.l.b16 %v1329
    %v1382 = vunpack.c.h.b16 %v1329
    %v1383 = vunpack.c.l.b16 %v1330
    %v1384 = vunpack.c.h.b16 %v1330
    %v1385 = vunpack.c.l.b16 %v1331
    %v1386 = vunpack.c.l.b16 %v1332
    %v1387 = vunpack.c.h.b16 %v1332
    %v1388 = vunpack.c.l.b16 %v1333
    %v1389 = vunpack.c.h.b16 %v1333
    %v1390 = vunpack.c.l.b16 %v1334
    %v1391 = vunpack.c.l.b16 %v1335
    %v1392 = vunpack.c.h.b16 %v1335
    %v1393 = vunpack.c.l.b16 %v1336
    %v1394 = vunpack.c.h.b16 %v1336
    %v1395 = vunpack.c.l.b16 %v1337
    %v1396 = vunpack.c.l.b16 %v1338
    %v1397 = vunpack.c.h.b16 %v1338
    %v1398 = vunpack.c.l.b16 %v1339
    %v1399 = vunpack.c.h.b16 %v1339
    %v1400 = vunpack.c.l.b16 %v1340
    %v1401 = vunpack.c.l.b16 %v1341
    %v1402 = vunpack.c.h.b16 %v1341
    %v1403 = vunpack.c.l.b16 %v1342
    %v1404 = vunpack.c.h.b16 %v1342
    %v1405 = vunpack.c.l.b16 %v1343
    %v1406 = vunpack.c.l.b16 %v1344
    %v1407 = vunpack.c.h.b16 %v1344
    %v1408 = vunpack.c.l.b16 %v1345
    %v1409 = vunpack.c.h.b16 %v1345
    %v1410 = vunpack.c.l.b16 %v1346
    %v1411 = vpack.c.b16 %v1376, %v1371
    %v1412 = vpack.c.b16 %v1377, %v1372
    %v1413 = vpack.c.b16 %v1378, %v1373
    %v1414 = vpack.c.b16 %v1379, %v1374
    %v1415 = vpack.c.b16 %v1380, %v1375
    %v1416 = vpack.c.b16 %v1386, %v1381
    %v1417 = vpack.c.b16 %v1387, %v1382
    %v1418 = vpack.c.b16 %v1388, %v1383
    %v1419 = vpack.c.b16 %v1389, %v1384
    %v1420 = vpack.c.b16 %v1390, %v1385
    %v1421 = vpack.c.b16 %v1396, %v1391
    %v1422 = vpack.c.b16 %v1397, %v1392
    %v1423 = vpack.c.b16 %v1398, %v1393
    %v1424 = vpack.c.b16 %v1399, %v1394
    %v1425 = vpack.c.b16 %v1400, %v1395
    %v1426 = vpack.c.b16 %v1406, %v1401
    %v1427 = vpack.c.b16 %v1407, %v1402
    %v1428 = vpack.c.b16 %v1408, %v1403
    %v1429 = vpack.c.b16 %v1409, %v1404
    %v1430 = vpack.c.b16 %v1410, %v1405
    %vm1451 = vcmask 523264
    %v1453 = vsel %vm1451, %v1321, 0
    %1455 = vmatprep.subr.bf16.mxu0 0
    %1456 = vmatpush1.bf16.msra.mxu0 0
    %1457 = vmatprep.subr.bf16.mxu0 0
    %1458 = vmatpush1.bf16.msra.mxu0 0
    %1459 = vmatprep.subr.bf16.mxu0 0
    %1460 = vmatpush1.bf16.msra.mxu0 0
    %1461 = vmatprep.subr.bf16.mxu0 0
    %1462 = vmatpush1.bf16.msra.mxu0 0
    %1463 = vmatprep.subr.bf16.mxu0 %v1427
    %1464 = vmatpush1.bf16.msra.mxu0 %v1426
    %1465 = vmatprep.subr.bf16.mxu0 %v1422
    %1466 = vmatpush1.bf16.msra.mxu0 %v1421
    %1467 = vmatprep.subr.bf16.mxu0 %v1417
    %1468 = vmatpush1.bf16.msra.mxu0 %v1416
    %1469 = vmatprep.subr.bf16.mxu0 %v1412
    %1470 = vmatpush1.bf16.msra.mxu0 %v1411
    %1471 = vmatprep.subr.bf16.mxu0 0
    %1472 = vmatpush2.bf16.msra.mxu0 0
    %1473 = vmatprep.subr.bf16.mxu0 0
    %1474 = vmatpush2.bf16.msra.mxu0 0
    %1475 = vmatprep.subr.bf16.mxu0 0
    %1476 = vmatpush2.bf16.msra.mxu0 0
    %1477 = vmatprep.subr.bf16.mxu0 0
    %1478 = vmatpush2.bf16.msra.mxu0 0
    %1479 = vmatprep.subr.bf16.mxu0 0
    %1480 = vmatpush2.bf16.msra.mxu0 0
    %1481 = vmatprep.subr.bf16.mxu0 0
    %1482 = vmatpush2.bf16.msra.mxu0 0
    %1483 = vmatprep.subr.bf16.mxu0 0
    %1484 = vmatpush2.bf16.msra.mxu0 0
    %1485 = vmatprep.subr.bf16.mxu0 0
    %1486 = vmatpush2.bf16.msra.mxu0 0
    %1487 = vmatprep.mubr.bf16.mxu0 0
    %1488 = vmatmul.mubr.bf16.gmra.mxu0 %v1453
    %v1489 = vpop.f32.mrf.mxu0
    %v1490 = vadd.f32 0.0, %v1489
    %v1491 = vpop.f32.mrf.mxu0
    %v1492 = vadd.f32 0.0, %v1491
    %v1493 = vpop.f32.mrf.mxu0
    %v1494 = vpop.f32.mrf.mxu0
    %1495 = vdwg.mxu0
    %1496 = vmatprep.subr.bf16.mxu0 0
    %1497 = vmatpush1.bf16.msra.mxu0 0
    %1498 = vmatprep.subr.bf16.mxu0 0
    %1499 = vmatpush1.bf16.msra.mxu0 0
    %1500 = vmatprep.subr.bf16.mxu0 0
    %1501 = vmatpush1.bf16.msra.mxu0 0
    %1502 = vmatprep.subr.bf16.mxu0 0
    %1503 = vmatpush1.bf16.msra.mxu0 0
    %1504 = vmatprep.subr.bf16.mxu0 %v1429
    %1505 = vmatpush1.bf16.msra.mxu0 %v1428
    %1506 = vmatprep.subr.bf16.mxu0 %v1424
    %1507 = vmatpush1.bf16.msra.mxu0 %v1423
    %1508 = vmatprep.subr.bf16.mxu0 %v1419
    %1509 = vmatpush1.bf16.msra.mxu0 %v1418
    %1510 = vmatprep.subr.bf16.mxu0 %v1414
    %1511 = vmatpush1.bf16.msra.mxu0 %v1413
    %1512 = vmatprep.subr.bf16.mxu0 0
    %1513 = vmatpush2.bf16.msra.mxu0 0
    %1514 = vmatprep.subr.bf16.mxu0 0
    %1515 = vmatpush2.bf16.msra.mxu0 0
    %1516 = vmatprep.subr.bf16.mxu0 0
    %1517 = vmatpush2.bf16.msra.mxu0 0
    %1518 = vmatprep.subr.bf16.mxu0 0
    %1519 = vmatpush2.bf16.msra.mxu0 0
    %1520 = vmatprep.subr.bf16.mxu0 0
    %1521 = vmatpush2.bf16.msra.mxu0 0
    %1522 = vmatprep.subr.bf16.mxu0 0
    %1523 = vmatpush2.bf16.msra.mxu0 0
    %1524 = vmatprep.subr.bf16.mxu0 0
    %1525 = vmatpush2.bf16.msra.mxu0 0
    %1526 = vmatprep.subr.bf16.mxu0 0
    %1527 = vmatpush2.bf16.msra.mxu0 0
    %1528 = vmatprep.mubr.bf16.mxu0 0
    %1529 = vmatmul.mubr.bf16.gmra.mxu0 %v1453
    %v1530 = vpop.f32.mrf.mxu0
    %v1531 = vadd.f32 0.0, %v1530
    %v1532 = vpop.f32.mrf.mxu0
    %v1533 = vadd.f32 0.0, %v1532
    %v1534 = vpop.f32.mrf.mxu0
    %v1535 = vpop.f32.mrf.mxu0
    %1536 = vdwg.mxu0
    %1537 = vmatprep.subr.bf16.mxu0 0
    %1538 = vmatpush1.bf16.msra.mxu0 0
    %1539 = vmatprep.subr.bf16.mxu0 0
    %1540 = vmatpush1.bf16.msra.mxu0 0
    %1541 = vmatprep.subr.bf16.mxu0 0
    %1542 = vmatpush1.bf16.msra.mxu0 0
    %1543 = vmatprep.subr.bf16.mxu0 0
    %1544 = vmatpush1.bf16.msra.mxu0 0
    %1545 = vmatprep.subr.bf16.mxu0 0
    %1546 = vmatpush1.bf16.msra.mxu0 %v1430
    %1547 = vmatprep.subr.bf16.mxu0 0
    %1548 = vmatpush1.bf16.msra.mxu0 %v1425
    %1549 = vmatprep.subr.bf16.mxu0 0
    %1550 = vmatpush1.bf16.msra.mxu0 %v1420
    %1551 = vmatprep.subr.bf16.mxu0 0
    %1552 = vmatpush1.bf16.msra.mxu0 %v1415
    %1553 = vmatprep.subr.bf16.mxu0 0
    %1554 = vmatpush2.bf16.msra.mxu0 0
    %1555 = vmatprep.subr.bf16.mxu0 0
    %1556 = vmatpush2.bf16.msra.mxu0 0
    %1557 = vmatprep.subr.bf16.mxu0 0
    %1558 = vmatpush2.bf16.msra.mxu0 0
    %1559 = vmatprep.subr.bf16.mxu0 0
    %1560 = vmatpush2.bf16.msra.mxu0 0
    %1561 = vmatprep.subr.bf16.mxu0 0
    %1562 = vmatpush2.bf16.msra.mxu0 0
    %1563 = vmatprep.subr.bf16.mxu0 0
    %1564 = vmatpush2.bf16.msra.mxu0 0
    %1565 = vmatprep.subr.bf16.mxu0 0
    %1566 = vmatpush2.bf16.msra.mxu0 0
    %1567 = vmatprep.subr.bf16.mxu0 0
    %1568 = vmatpush2.bf16.msra.mxu0 0
    %1569 = vmatprep.mubr.bf16.mxu0 0
    %1570 = vmatmul.mubr.bf16.gmra.mxu0 %v1453
    %v1571 = vpop.f32.mrf.mxu0
    %v1572 = vadd.f32 0.0, %v1571
    %v1573 = vpop.f32.mrf.mxu0
    %v1574 = vpop.f32.mrf.mxu0
    %v1575 = vpop.f32.mrf.mxu0
    %1576 = vdwg.mxu0
    %v1601 = vunpack.c.l.b16 %v1293
    %v1602 = vunpack.c.h.b16 %v1293
    %v1603 = vunpack.c.l.b16 %v1294
    %v1604 = vunpack.c.h.b16 %v1294
    %v1605 = vunpack.c.l.b16 %v1295
    %v1606 = vunpack.c.l.b16 %v1296
    %v1607 = vunpack.c.h.b16 %v1296
    %v1608 = vunpack.c.l.b16 %v1297
    %v1609 = vunpack.c.h.b16 %v1297
    %v1610 = vunpack.c.l.b16 %v1298
    %v1611 = vunpack.c.l.b16 %v1299
    %v1612 = vunpack.c.h.b16 %v1299
    %v1613 = vunpack.c.l.b16 %v1300
    %v1614 = vunpack.c.h.b16 %v1300
    %v1615 = vunpack.c.l.b16 %v1301
    %v1616 = vunpack.c.l.b16 %v1302
    %v1617 = vunpack.c.h.b16 %v1302
    %v1618 = vunpack.c.l.b16 %v1303
    %v1619 = vunpack.c.h.b16 %v1303
    %v1620 = vunpack.c.l.b16 %v1304
    %v1621 = vunpack.c.l.b16 %v1305
    %v1622 = vunpack.c.h.b16 %v1305
    %v1623 = vunpack.c.l.b16 %v1306
    %v1624 = vunpack.c.h.b16 %v1306
    %v1625 = vunpack.c.l.b16 %v1307
    %v1626 = vunpack.c.l.b16 %v1308
    %v1627 = vunpack.c.h.b16 %v1308
    %v1628 = vunpack.c.l.b16 %v1309
    %v1629 = vunpack.c.h.b16 %v1309
    %v1630 = vunpack.c.l.b16 %v1310
    %v1631 = vunpack.c.l.b16 %v1311
    %v1632 = vunpack.c.h.b16 %v1311
    %v1633 = vunpack.c.l.b16 %v1312
    %v1634 = vunpack.c.h.b16 %v1312
    %v1635 = vunpack.c.l.b16 %v1313
    %v1636 = vunpack.c.l.b16 %v1314
    %v1637 = vunpack.c.h.b16 %v1314
    %v1638 = vunpack.c.l.b16 %v1315
    %v1639 = vunpack.c.h.b16 %v1315
    %v1640 = vunpack.c.l.b16 %v1316
    %v1641 = vpack.c.b16 %v1606, %v1601
    %v1642 = vpack.c.b16 %v1607, %v1602
    %v1643 = vpack.c.b16 %v1608, %v1603
    %v1644 = vpack.c.b16 %v1609, %v1604
    %v1645 = vpack.c.b16 %v1610, %v1605
    %v1646 = vpack.c.b16 %v1616, %v1611
    %v1647 = vpack.c.b16 %v1617, %v1612
    %v1648 = vpack.c.b16 %v1618, %v1613
    %v1649 = vpack.c.b16 %v1619, %v1614
    %v1650 = vpack.c.b16 %v1620, %v1615
    %v1651 = vpack.c.b16 %v1626, %v1621
    %v1652 = vpack.c.b16 %v1627, %v1622
    %v1653 = vpack.c.b16 %v1628, %v1623
    %v1654 = vpack.c.b16 %v1629, %v1624
    %v1655 = vpack.c.b16 %v1630, %v1625
    %v1656 = vpack.c.b16 %v1636, %v1631
    %v1657 = vpack.c.b16 %v1637, %v1632
    %v1658 = vpack.c.b16 %v1638, %v1633
    %v1659 = vpack.c.b16 %v1639, %v1634
    %v1660 = vpack.c.b16 %v1640, %v1635
    %v1682 = vsel %vm1451, %v1292, 0
    %1684 = vmatprep.subr.bf16.mxu0 0
    %1685 = vmatpush1.bf16.msra.mxu0 0
    %1686 = vmatprep.subr.bf16.mxu0 0
    %1687 = vmatpush1.bf16.msra.mxu0 0
    %1688 = vmatprep.subr.bf16.mxu0 0
    %1689 = vmatpush1.bf16.msra.mxu0 0
    %1690 = vmatprep.subr.bf16.mxu0 0
    %1691 = vmatpush1.bf16.msra.mxu0 0
    %1692 = vmatprep.subr.bf16.mxu0 %v1657
    %1693 = vmatpush1.bf16.msra.mxu0 %v1656
    %1694 = vmatprep.subr.bf16.mxu0 %v1652
    %1695 = vmatpush1.bf16.msra.mxu0 %v1651
    %1696 = vmatprep.subr.bf16.mxu0 %v1647
    %1697 = vmatpush1.bf16.msra.mxu0 %v1646
    %1698 = vmatprep.subr.bf16.mxu0 %v1642
    %1699 = vmatpush1.bf16.msra.mxu0 %v1641
    %1700 = vmatprep.subr.bf16.mxu0 0
    %1701 = vmatpush2.bf16.msra.mxu0 0
    %1702 = vmatprep.subr.bf16.mxu0 0
    %1703 = vmatpush2.bf16.msra.mxu0 0
    %1704 = vmatprep.subr.bf16.mxu0 0
    %1705 = vmatpush2.bf16.msra.mxu0 0
    %1706 = vmatprep.subr.bf16.mxu0 0
    %1707 = vmatpush2.bf16.msra.mxu0 0
    %1708 = vmatprep.subr.bf16.mxu0 0
    %1709 = vmatpush2.bf16.msra.mxu0 0
    %1710 = vmatprep.subr.bf16.mxu0 0
    %1711 = vmatpush2.bf16.msra.mxu0 0
    %1712 = vmatprep.subr.bf16.mxu0 0
    %1713 = vmatpush2.bf16.msra.mxu0 0
    %1714 = vmatprep.subr.bf16.mxu0 0
    %1715 = vmatpush2.bf16.msra.mxu0 0
    %1716 = vmatprep.mubr.bf16.mxu0 0
    %1717 = vmatmul.mubr.bf16.gmra.mxu0 %v1682
    %v1718 = vpop.f32.mrf.mxu0
    %v1719 = vadd.f32 %v1490, %v1718
    %v1720 = vpop.f32.mrf.mxu0
    %v1721 = vadd.f32 %v1492, %v1720
    %v1722 = vpop.f32.mrf.mxu0
    %v1723 = vpop.f32.mrf.mxu0
    %1724 = vdwg.mxu0
    %1725 = vmatprep.subr.bf16.mxu0 0
    %1726 = vmatpush1.bf16.msra.mxu0 0
    %1727 = vmatprep.subr.bf16.mxu0 0
    %1728 = vmatpush1.bf16.msra.mxu0 0
    %1729 = vmatprep.subr.bf16.mxu0 0
    %1730 = vmatpush1.bf16.msra.mxu0 0
    %1731 = vmatprep.subr.bf16.mxu0 0
    %1732 = vmatpush1.bf16.msra.mxu0 0
    %1733 = vmatprep.subr.bf16.mxu0 %v1659
    %1734 = vmatpush1.bf16.msra.mxu0 %v1658
    %1735 = vmatprep.subr.bf16.mxu0 %v1654
    %1736 = vmatpush1.bf16.msra.mxu0 %v1653
    %1737 = vmatprep.subr.bf16.mxu0 %v1649
    %1738 = vmatpush1.bf16.msra.mxu0 %v1648
    %1739 = vmatprep.subr.bf16.mxu0 %v1644
    %1740 = vmatpush1.bf16.msra.mxu0 %v1643
    %1741 = vmatprep.subr.bf16.mxu0 0
    %1742 = vmatpush2.bf16.msra.mxu0 0
    %1743 = vmatprep.subr.bf16.mxu0 0
    %1744 = vmatpush2.bf16.msra.mxu0 0
    %1745 = vmatprep.subr.bf16.mxu0 0
    %1746 = vmatpush2.bf16.msra.mxu0 0
    %1747 = vmatprep.subr.bf16.mxu0 0
    %1748 = vmatpush2.bf16.msra.mxu0 0
    %1749 = vmatprep.subr.bf16.mxu0 0
    %1750 = vmatpush2.bf16.msra.mxu0 0
    %1751 = vmatprep.subr.bf16.mxu0 0
    %1752 = vmatpush2.bf16.msra.mxu0 0
    %1753 = vmatprep.subr.bf16.mxu0 0
    %1754 = vmatpush2.bf16.msra.mxu0 0
    %1755 = vmatprep.subr.bf16.mxu0 0
    %1756 = vmatpush2.bf16.msra.mxu0 0
    %1757 = vmatprep.mubr.bf16.mxu0 0
    %1758 = vmatmul.mubr.bf16.gmra.mxu0 %v1682
    %v1759 = vpop.f32.mrf.mxu0
    %v1760 = vadd.f32 %v1531, %v1759
    %v1761 = vpop.f32.mrf.mxu0
    %v1762 = vadd.f32 %v1533, %v1761
    %v1763 = vpop.f32.mrf.mxu0
    %v1764 = vpop.f32.mrf.mxu0
    %1765 = vdwg.mxu0
    %1766 = vmatprep.subr.bf16.mxu0 0
    %1767 = vmatpush1.bf16.msra.mxu0 0
    %1768 = vmatprep.subr.bf16.mxu0 0
    %1769 = vmatpush1.bf16.msra.mxu0 0
    %1770 = vmatprep.subr.bf16.mxu0 0
    %1771 = vmatpush1.bf16.msra.mxu0 0
    %1772 = vmatprep.subr.bf16.mxu0 0
    %1773 = vmatpush1.bf16.msra.mxu0 0
    %1774 = vmatprep.subr.bf16.mxu0 0
    %1775 = vmatpush1.bf16.msra.mxu0 %v1660
    %1776 = vmatprep.subr.bf16.mxu0 0
    %1777 = vmatpush1.bf16.msra.mxu0 %v1655
    %1778 = vmatprep.subr.bf16.mxu0 0
    %1779 = vmatpush1.bf16.msra.mxu0 %v1650
    %1780 = vmatprep.subr.bf16.mxu0 0
    %1781 = vmatpush1.bf16.msra.mxu0 %v1645
    %1782 = vmatprep.subr.bf16.mxu0 0
    %1783 = vmatpush2.bf16.msra.mxu0 0
    %1784 = vmatprep.subr.bf16.mxu0 0
    %1785 = vmatpush2.bf16.msra.mxu0 0
    %1786 = vmatprep.subr.bf16.mxu0 0
    %1787 = vmatpush2.bf16.msra.mxu0 0
    %1788 = vmatprep.subr.bf16.mxu0 0
    %1789 = vmatpush2.bf16.msra.mxu0 0
    %1790 = vmatprep.subr.bf16.mxu0 0
    %1791 = vmatpush2.bf16.msra.mxu0 0
    %1792 = vmatprep.subr.bf16.mxu0 0
    %1793 = vmatpush2.bf16.msra.mxu0 0
    %1794 = vmatprep.subr.bf16.mxu0 0
    %1795 = vmatpush2.bf16.msra.mxu0 0
    %1796 = vmatprep.subr.bf16.mxu0 0
    %1797 = vmatpush2.bf16.msra.mxu0 0
    %1798 = vmatprep.mubr.bf16.mxu0 0
    %1799 = vmatmul.mubr.bf16.gmra.mxu0 %v1682
    %v1800 = vpop.f32.mrf.mxu0
    %v1801 = vadd.f32 %v1572, %v1800
    %v1802 = vpop.f32.mrf.mxu0
    %v1803 = vpop.f32.mrf.mxu0
    %v1804 = vpop.f32.mrf.mxu0
    %1805 = vdwg.mxu0
    %v1807 = vrot.slane %v730, 1
    %v1809 = vrot.slane %v1286, 1
    %v1811 = vsel %vm1291, %v1807, %v1809
    %s1812 = scalar_lea.vmem %s3, 320
    %v1813 = vld [vmem:[%s1812] sm:$0xff]
    %v1814 = vld [vmem:[%s1812 + $0x8] sm:$0xff]
    %v1815 = vld [vmem:[%s1812 + $0x10] sm:$0xf]
    %v1816 = vld [vmem:[%s1812 + $0x14] sm:$0xff]
    %v1817 = vld [vmem:[%s1812 + $0x1c] sm:$0xff]
    %v1818 = vld [vmem:[%s1812 + $0x24] sm:$0xf]
    %v1819 = vld [vmem:[%s1812 + $0x28] sm:$0xff]
    %v1820 = vld [vmem:[%s1812 + $0x30] sm:$0xff]
    %v1821 = vld [vmem:[%s1812 + $0x38] sm:$0xf]
    %v1822 = vld [vmem:[%s1812 + $0x3c] sm:$0xff]
    %v1823 = vld [vmem:[%s1812 + $0x44] sm:$0xff]
    %v1824 = vld [vmem:[%s1812 + $0x4c] sm:$0xf]
    %v1825 = vld [vmem:[%s1812 + $0x50] sm:$0xff]
    %v1826 = vld [vmem:[%s1812 + $0x58] sm:$0xff]
    %v1827 = vld [vmem:[%s1812 + $0x60] sm:$0xf]
    %v1828 = vld [vmem:[%s1812 + $0x64] sm:$0xff]
    %v1829 = vld [vmem:[%s1812 + $0x6c] sm:$0xff]
    %v1830 = vld [vmem:[%s1812 + $0x74] sm:$0xf]
    %v1831 = vld [vmem:[%s1812 + $0x78] sm:$0xff]
    %v1832 = vld [vmem:[%s1812 + $0x80] sm:$0xff]
    %v1833 = vld [vmem:[%s1812 + $0x88] sm:$0xf]
    %v1834 = vld [vmem:[%s1812 + $0x8c] sm:$0xff]
    %v1835 = vld [vmem:[%s1812 + $0x94] sm:$0xff]
    %v1836 = vld [vmem:[%s1812 + $0x9c] sm:$0xf]
    %v1861 = vunpack.c.l.b16 %v1813
    %v1862 = vunpack.c.h.b16 %v1813
    %v1863 = vunpack.c.l.b16 %v1814
    %v1864 = vunpack.c.h.b16 %v1814
    %v1865 = vunpack.c.l.b16 %v1815
    %v1866 = vunpack.c.l.b16 %v1816
    %v1867 = vunpack.c.h.b16 %v1816
    %v1868 = vunpack.c.l.b16 %v1817
    %v1869 = vunpack.c.h.b16 %v1817
    %v1870 = vunpack.c.l.b16 %v1818
    %v1871 = vunpack.c.l.b16 %v1819
    %v1872 = vunpack.c.h.b16 %v1819
    %v1873 = vunpack.c.l.b16 %v1820
    %v1874 = vunpack.c.h.b16 %v1820
    %v1875 = vunpack.c.l.b16 %v1821
    %v1876 = vunpack.c.l.b16 %v1822
    %v1877 = vunpack.c.h.b16 %v1822
    %v1878 = vunpack.c.l.b16 %v1823
    %v1879 = vunpack.c.h.b16 %v1823
    %v1880 = vunpack.c.l.b16 %v1824
    %v1881 = vunpack.c.l.b16 %v1825
    %v1882 = vunpack.c.h.b16 %v1825
    %v1883 = vunpack.c.l.b16 %v1826
    %v1884 = vunpack.c.h.b16 %v1826
    %v1885 = vunpack.c.l.b16 %v1827
    %v1886 = vunpack.c.l.b16 %v1828
    %v1887 = vunpack.c.h.b16 %v1828
    %v1888 = vunpack.c.l.b16 %v1829
    %v1889 = vunpack.c.h.b16 %v1829
    %v1890 = vunpack.c.l.b16 %v1830
    %v1891 = vunpack.c.l.b16 %v1831
    %v1892 = vunpack.c.h.b16 %v1831
    %v1893 = vunpack.c.l.b16 %v1832
    %v1894 = vunpack.c.h.b16 %v1832
    %v1895 = vunpack.c.l.b16 %v1833
    %v1896 = vunpack.c.l.b16 %v1834
    %v1897 = vunpack.c.h.b16 %v1834
    %v1898 = vunpack.c.l.b16 %v1835
    %v1899 = vunpack.c.h.b16 %v1835
    %v1900 = vunpack.c.l.b16 %v1836
    %v1901 = vpack.c.b16 %v1866, %v1861
    %v1902 = vpack.c.b16 %v1867, %v1862
    %v1903 = vpack.c.b16 %v1868, %v1863
    %v1904 = vpack.c.b16 %v1869, %v1864
    %v1905 = vpack.c.b16 %v1870, %v1865
    %v1906 = vpack.c.b16 %v1876, %v1871
    %v1907 = vpack.c.b16 %v1877, %v1872
    %v1908 = vpack.c.b16 %v1878, %v1873
    %v1909 = vpack.c.b16 %v1879, %v1874
    %v1910 = vpack.c.b16 %v1880, %v1875
    %v1911 = vpack.c.b16 %v1886, %v1881
    %v1912 = vpack.c.b16 %v1887, %v1882
    %v1913 = vpack.c.b16 %v1888, %v1883
    %v1914 = vpack.c.b16 %v1889, %v1884
    %v1915 = vpack.c.b16 %v1890, %v1885
    %v1916 = vpack.c.b16 %v1896, %v1891
    %v1917 = vpack.c.b16 %v1897, %v1892
    %v1918 = vpack.c.b16 %v1898, %v1893
    %v1919 = vpack.c.b16 %v1899, %v1894
    %v1920 = vpack.c.b16 %v1900, %v1895
    %v1942 = vsel %vm1451, %v1811, 0
    %1944 = vmatprep.subr.bf16.mxu0 0
    %1945 = vmatpush1.bf16.msra.mxu0 0
    %1946 = vmatprep.subr.bf16.mxu0 0
    %1947 = vmatpush1.bf16.msra.mxu0 0
    %1948 = vmatprep.subr.bf16.mxu0 0
    %1949 = vmatpush1.bf16.msra.mxu0 0
    %1950 = vmatprep.subr.bf16.mxu0 0
    %1951 = vmatpush1.bf16.msra.mxu0 0
    %1952 = vmatprep.subr.bf16.mxu0 %v1917
    %1953 = vmatpush1.bf16.msra.mxu0 %v1916
    %1954 = vmatprep.subr.bf16.mxu0 %v1912
    %1955 = vmatpush1.bf16.msra.mxu0 %v1911
    %1956 = vmatprep.subr.bf16.mxu0 %v1907
    %1957 = vmatpush1.bf16.msra.mxu0 %v1906
    %1958 = vmatprep.subr.bf16.mxu0 %v1902
    %1959 = vmatpush1.bf16.msra.mxu0 %v1901
    %1960 = vmatprep.subr.bf16.mxu0 0
    %1961 = vmatpush2.bf16.msra.mxu0 0
    %1962 = vmatprep.subr.bf16.mxu0 0
    %1963 = vmatpush2.bf16.msra.mxu0 0
    %1964 = vmatprep.subr.bf16.mxu0 0
    %1965 = vmatpush2.bf16.msra.mxu0 0
    %1966 = vmatprep.subr.bf16.mxu0 0
    %1967 = vmatpush2.bf16.msra.mxu0 0
    %1968 = vmatprep.subr.bf16.mxu0 0
    %1969 = vmatpush2.bf16.msra.mxu0 0
    %1970 = vmatprep.subr.bf16.mxu0 0
    %1971 = vmatpush2.bf16.msra.mxu0 0
    %1972 = vmatprep.subr.bf16.mxu0 0
    %1973 = vmatpush2.bf16.msra.mxu0 0
    %1974 = vmatprep.subr.bf16.mxu0 0
    %1975 = vmatpush2.bf16.msra.mxu0 0
    %1976 = vmatprep.mubr.bf16.mxu0 0
    %1977 = vmatmul.mubr.bf16.gmra.mxu0 %v1942
    %v1978 = vpop.f32.mrf.mxu0
    %v1979 = vadd.f32 0.0, %v1978
    %v1980 = vpop.f32.mrf.mxu0
    %v1981 = vadd.f32 0.0, %v1980
    %v1982 = vpop.f32.mrf.mxu0
    %v1983 = vpop.f32.mrf.mxu0
    %1984 = vdwg.mxu0
    %1985 = vmatprep.subr.bf16.mxu0 0
    %1986 = vmatpush1.bf16.msra.mxu0 0
    %1987 = vmatprep.subr.bf16.mxu0 0
    %1988 = vmatpush1.bf16.msra.mxu0 0
    %1989 = vmatprep.subr.bf16.mxu0 0
    %1990 = vmatpush1.bf16.msra.mxu0 0
    %1991 = vmatprep.subr.bf16.mxu0 0
    %1992 = vmatpush1.bf16.msra.mxu0 0
    %1993 = vmatprep.subr.bf16.mxu0 %v1919
    %1994 = vmatpush1.bf16.msra.mxu0 %v1918
    %1995 = vmatprep.subr.bf16.mxu0 %v1914
    %1996 = vmatpush1.bf16.msra.mxu0 %v1913
    %1997 = vmatprep.subr.bf16.mxu0 %v1909
    %1998 = vmatpush1.bf16.msra.mxu0 %v1908
    %1999 = vmatprep.subr.bf16.mxu0 %v1904
    %2000 = vmatpush1.bf16.msra.mxu0 %v1903
    %2001 = vmatprep.subr.bf16.mxu0 0
    %2002 = vmatpush2.bf16.msra.mxu0 0
    %2003 = vmatprep.subr.bf16.mxu0 0
    %2004 = vmatpush2.bf16.msra.mxu0 0
    %2005 = vmatprep.subr.bf16.mxu0 0
    %2006 = vmatpush2.bf16.msra.mxu0 0
    %2007 = vmatprep.subr.bf16.mxu0 0
    %2008 = vmatpush2.bf16.msra.mxu0 0
    %2009 = vmatprep.subr.bf16.mxu0 0
    %2010 = vmatpush2.bf16.msra.mxu0 0
    %2011 = vmatprep.subr.bf16.mxu0 0
    %2012 = vmatpush2.bf16.msra.mxu0 0
    %2013 = vmatprep.subr.bf16.mxu0 0
    %2014 = vmatpush2.bf16.msra.mxu0 0
    %2015 = vmatprep.subr.bf16.mxu0 0
    %2016 = vmatpush2.bf16.msra.mxu0 0
    %2017 = vmatprep.mubr.bf16.mxu0 0
    %2018 = vmatmul.mubr.bf16.gmra.mxu0 %v1942
    %v2019 = vpop.f32.mrf.mxu0
    %v2020 = vadd.f32 0.0, %v2019
    %v2021 = vpop.f32.mrf.mxu0
    %v2022 = vadd.f32 0.0, %v2021
    %v2023 = vpop.f32.mrf.mxu0
    %v2024 = vpop.f32.mrf.mxu0
    %2025 = vdwg.mxu0
    %2026 = vmatprep.subr.bf16.mxu0 0
    %2027 = vmatpush1.bf16.msra.mxu0 0
    %2028 = vmatprep.subr.bf16.mxu0 0
    %2029 = vmatpush1.bf16.msra.mxu0 0
    %2030 = vmatprep.subr.bf16.mxu0 0
    %2031 = vmatpush1.bf16.msra.mxu0 0
    %2032 = vmatprep.subr.bf16.mxu0 0
    %2033 = vmatpush1.bf16.msra.mxu0 0
    %2034 = vmatprep.subr.bf16.mxu0 0
    %2035 = vmatpush1.bf16.msra.mxu0 %v1920
    %2036 = vmatprep.subr.bf16.mxu0 0
    %2037 = vmatpush1.bf16.msra.mxu0 %v1915
    %2038 = vmatprep.subr.bf16.mxu0 0
    %2039 = vmatpush1.bf16.msra.mxu0 %v1910
    %2040 = vmatprep.subr.bf16.mxu0 0
    %2041 = vmatpush1.bf16.msra.mxu0 %v1905
    %2042 = vmatprep.subr.bf16.mxu0 0
    %2043 = vmatpush2.bf16.msra.mxu0 0
    %2044 = vmatprep.subr.bf16.mxu0 0
    %2045 = vmatpush2.bf16.msra.mxu0 0
    %2046 = vmatprep.subr.bf16.mxu0 0
    %2047 = vmatpush2.bf16.msra.mxu0 0
    %2048 = vmatprep.subr.bf16.mxu0 0
    %2049 = vmatpush2.bf16.msra.mxu0 0
    %2050 = vmatprep.subr.bf16.mxu0 0
    %2051 = vmatpush2.bf16.msra.mxu0 0
    %2052 = vmatprep.subr.bf16.mxu0 0
    %2053 = vmatpush2.bf16.msra.mxu0 0
    %2054 = vmatprep.subr.bf16.mxu0 0
    %2055 = vmatpush2.bf16.msra.mxu0 0
    %2056 = vmatprep.subr.bf16.mxu0 0
    %2057 = vmatpush2.bf16.msra.mxu0 0
    %2058 = vmatprep.mubr.bf16.mxu0 0
    %2059 = vmatmul.mubr.bf16.gmra.mxu0 %v1942
    %v2060 = vpop.f32.mrf.mxu0
    %v2061 = vadd.f32 0.0, %v2060
    %v2062 = vpop.f32.mrf.mxu0
    %v2063 = vpop.f32.mrf.mxu0
    %v2064 = vpop.f32.mrf.mxu0
    %2065 = vdwg.mxu0
    %v2066 = vadd.f32 %v1719, %v1979
    %v2067 = vadd.f32 %v1721, %v1981
    %v2068 = vadd.f32 %v1760, %v2020
    %v2069 = vadd.f32 %v1762, %v2022
    %v2070 = vadd.f32 %v1801, %v2061
    %v2071 = vrot.slane %v1318, 1
    %v2074 = vrot.slane %v1283, 1
    %v2076 = vsel %vm1291, %v2071, %v2074
    %s2077 = scalar_lea.vmem %s3, 480
    %v2078 = vld [vmem:[%s2077] sm:$0xff]
    %v2079 = vld [vmem:[%s2077 + $0x8] sm:$0xff]
    %v2080 = vld [vmem:[%s2077 + $0x10] sm:$0xf]
    %v2081 = vld [vmem:[%s2077 + $0x14] sm:$0xff]
    %v2082 = vld [vmem:[%s2077 + $0x1c] sm:$0xff]
    %v2083 = vld [vmem:[%s2077 + $0x24] sm:$0xf]
    %v2084 = vld [vmem:[%s2077 + $0x28] sm:$0xff]
    %v2085 = vld [vmem:[%s2077 + $0x30] sm:$0xff]
    %v2086 = vld [vmem:[%s2077 + $0x38] sm:$0xf]
    %v2087 = vld [vmem:[%s2077 + $0x3c] sm:$0xff]
    %v2088 = vld [vmem:[%s2077 + $0x44] sm:$0xff]
    %v2089 = vld [vmem:[%s2077 + $0x4c] sm:$0xf]
    %v2090 = vld [vmem:[%s2077 + $0x50] sm:$0xff]
    %v2091 = vld [vmem:[%s2077 + $0x58] sm:$0xff]
    %v2092 = vld [vmem:[%s2077 + $0x60] sm:$0xf]
    %v2093 = vld [vmem:[%s2077 + $0x64] sm:$0xff]
    %v2094 = vld [vmem:[%s2077 + $0x6c] sm:$0xff]
    %v2095 = vld [vmem:[%s2077 + $0x74] sm:$0xf]
    %v2096 = vld [vmem:[%s2077 + $0x78] sm:$0xff]
    %v2097 = vld [vmem:[%s2077 + $0x80] sm:$0xff]
    %v2098 = vld [vmem:[%s2077 + $0x88] sm:$0xf]
    %v2099 = vld [vmem:[%s2077 + $0x8c] sm:$0xff]
    %v2100 = vld [vmem:[%s2077 + $0x94] sm:$0xff]
    %v2101 = vld [vmem:[%s2077 + $0x9c] sm:$0xf]
    %v2126 = vunpack.c.l.b16 %v2078
    %v2127 = vunpack.c.h.b16 %v2078
    %v2128 = vunpack.c.l.b16 %v2079
    %v2129 = vunpack.c.h.b16 %v2079
    %v2130 = vunpack.c.l.b16 %v2080
    %v2131 = vunpack.c.l.b16 %v2081
    %v2132 = vunpack.c.h.b16 %v2081
    %v2133 = vunpack.c.l.b16 %v2082
    %v2134 = vunpack.c.h.b16 %v2082
    %v2135 = vunpack.c.l.b16 %v2083
    %v2136 = vunpack.c.l.b16 %v2084
    %v2137 = vunpack.c.h.b16 %v2084
    %v2138 = vunpack.c.l.b16 %v2085
    %v2139 = vunpack.c.h.b16 %v2085
    %v2140 = vunpack.c.l.b16 %v2086
    %v2141 = vunpack.c.l.b16 %v2087
    %v2142 = vunpack.c.h.b16 %v2087
    %v2143 = vunpack.c.l.b16 %v2088
    %v2144 = vunpack.c.h.b16 %v2088
    %v2145 = vunpack.c.l.b16 %v2089
    %v2146 = vunpack.c.l.b16 %v2090
    %v2147 = vunpack.c.h.b16 %v2090
    %v2148 = vunpack.c.l.b16 %v2091
    %v2149 = vunpack.c.h.b16 %v2091
    %v2150 = vunpack.c.l.b16 %v2092
    %v2151 = vunpack.c.l.b16 %v2093
    %v2152 = vunpack.c.h.b16 %v2093
    %v2153 = vunpack.c.l.b16 %v2094
    %v2154 = vunpack.c.h.b16 %v2094
    %v2155 = vunpack.c.l.b16 %v2095
    %v2156 = vunpack.c.l.b16 %v2096
    %v2157 = vunpack.c.h.b16 %v2096
    %v2158 = vunpack.c.l.b16 %v2097
    %v2159 = vunpack.c.h.b16 %v2097
    %v2160 = vunpack.c.l.b16 %v2098
    %v2161 = vunpack.c.l.b16 %v2099
    %v2162 = vunpack.c.h.b16 %v2099
    %v2163 = vunpack.c.l.b16 %v2100
    %v2164 = vunpack.c.h.b16 %v2100
    %v2165 = vunpack.c.l.b16 %v2101
    %v2166 = vpack.c.b16 %v2131, %v2126
    %v2167 = vpack.c.b16 %v2132, %v2127
    %v2168 = vpack.c.b16 %v2133, %v2128
    %v2169 = vpack.c.b16 %v2134, %v2129
    %v2170 = vpack.c.b16 %v2135, %v2130
    %v2171 = vpack.c.b16 %v2141, %v2136
    %v2172 = vpack.c.b16 %v2142, %v2137
    %v2173 = vpack.c.b16 %v2143, %v2138
    %v2174 = vpack.c.b16 %v2144, %v2139
    %v2175 = vpack.c.b16 %v2145, %v2140
    %v2176 = vpack.c.b16 %v2151, %v2146
    %v2177 = vpack.c.b16 %v2152, %v2147
    %v2178 = vpack.c.b16 %v2153, %v2148
    %v2179 = vpack.c.b16 %v2154, %v2149
    %v2180 = vpack.c.b16 %v2155, %v2150
    %v2181 = vpack.c.b16 %v2161, %v2156
    %v2182 = vpack.c.b16 %v2162, %v2157
    %v2183 = vpack.c.b16 %v2163, %v2158
    %v2184 = vpack.c.b16 %v2164, %v2159
    %v2185 = vpack.c.b16 %v2165, %v2160
    %v2207 = vsel %vm1451, %v2076, 0
    %2209 = vmatprep.subr.bf16.mxu0 0
    %2210 = vmatpush1.bf16.msra.mxu0 0
    %2211 = vmatprep.subr.bf16.mxu0 0
    %2212 = vmatpush1.bf16.msra.mxu0 0
    %2213 = vmatprep.subr.bf16.mxu0 0
    %2214 = vmatpush1.bf16.msra.mxu0 0
    %2215 = vmatprep.subr.bf16.mxu0 0
    %2216 = vmatpush1.bf16.msra.mxu0 0
    %2217 = vmatprep.subr.bf16.mxu0 %v2182
    %2218 = vmatpush1.bf16.msra.mxu0 %v2181
    %2219 = vmatprep.subr.bf16.mxu0 %v2177
    %2220 = vmatpush1.bf16.msra.mxu0 %v2176
    %2221 = vmatprep.subr.bf16.mxu0 %v2172
    %2222 = vmatpush1.bf16.msra.mxu0 %v2171
    %2223 = vmatprep.subr.bf16.mxu0 %v2167
    %2224 = vmatpush1.bf16.msra.mxu0 %v2166
    %2225 = vmatprep.subr.bf16.mxu0 0
    %2226 = vmatpush2.bf16.msra.mxu0 0
    %2227 = vmatprep.subr.bf16.mxu0 0
    %2228 = vmatpush2.bf16.msra.mxu0 0
    %2229 = vmatprep.subr.bf16.mxu0 0
    %2230 = vmatpush2.bf16.msra.mxu0 0
    %2231 = vmatprep.subr.bf16.mxu0 0
    %2232 = vmatpush2.bf16.msra.mxu0 0
    %2233 = vmatprep.subr.bf16.mxu0 0
    %2234 = vmatpush2.bf16.msra.mxu0 0
    %2235 = vmatprep.subr.bf16.mxu0 0
    %2236 = vmatpush2.bf16.msra.mxu0 0
    %2237 = vmatprep.subr.bf16.mxu0 0
    %2238 = vmatpush2.bf16.msra.mxu0 0
    %2239 = vmatprep.subr.bf16.mxu0 0
    %2240 = vmatpush2.bf16.msra.mxu0 0
    %2241 = vmatprep.mubr.bf16.mxu0 0
    %2242 = vmatmul.mubr.bf16.gmra.mxu0 %v2207
    %v2243 = vpop.f32.mrf.mxu0
    %v2244 = vadd.f32 0.0, %v2243
    %v2245 = vpop.f32.mrf.mxu0
    %v2246 = vadd.f32 0.0, %v2245
    %v2247 = vpop.f32.mrf.mxu0
    %v2248 = vpop.f32.mrf.mxu0
    %2249 = vdwg.mxu0
    %2250 = vmatprep.subr.bf16.mxu0 0
    %2251 = vmatpush1.bf16.msra.mxu0 0
    %2252 = vmatprep.subr.bf16.mxu0 0
    %2253 = vmatpush1.bf16.msra.mxu0 0
    %2254 = vmatprep.subr.bf16.mxu0 0
    %2255 = vmatpush1.bf16.msra.mxu0 0
    %2256 = vmatprep.subr.bf16.mxu0 0
    %2257 = vmatpush1.bf16.msra.mxu0 0
    %2258 = vmatprep.subr.bf16.mxu0 %v2184
    %2259 = vmatpush1.bf16.msra.mxu0 %v2183
    %2260 = vmatprep.subr.bf16.mxu0 %v2179
    %2261 = vmatpush1.bf16.msra.mxu0 %v2178
    %2262 = vmatprep.subr.bf16.mxu0 %v2174
    %2263 = vmatpush1.bf16.msra.mxu0 %v2173
    %2264 = vmatprep.subr.bf16.mxu0 %v2169
    %2265 = vmatpush1.bf16.msra.mxu0 %v2168
    %2266 = vmatprep.subr.bf16.mxu0 0
    %2267 = vmatpush2.bf16.msra.mxu0 0
    %2268 = vmatprep.subr.bf16.mxu0 0
    %2269 = vmatpush2.bf16.msra.mxu0 0
    %2270 = vmatprep.subr.bf16.mxu0 0
    %2271 = vmatpush2.bf16.msra.mxu0 0
    %2272 = vmatprep.subr.bf16.mxu0 0
    %2273 = vmatpush2.bf16.msra.mxu0 0
    %2274 = vmatprep.subr.bf16.mxu0 0
    %2275 = vmatpush2.bf16.msra.mxu0 0
    %2276 = vmatprep.subr.bf16.mxu0 0
    %2277 = vmatpush2.bf16.msra.mxu0 0
    %2278 = vmatprep.subr.bf16.mxu0 0
    %2279 = vmatpush2.bf16.msra.mxu0 0
    %2280 = vmatprep.subr.bf16.mxu0 0
    %2281 = vmatpush2.bf16.msra.mxu0 0
    %2282 = vmatprep.mubr.bf16.mxu0 0
    %2283 = vmatmul.mubr.bf16.gmra.mxu0 %v2207
    %v2284 = vpop.f32.mrf.mxu0
    %v2285 = vadd.f32 0.0, %v2284
    %v2286 = vpop.f32.mrf.mxu0
    %v2287 = vadd.f32 0.0, %v2286
    %v2288 = vpop.f32.mrf.mxu0
    %v2289 = vpop.f32.mrf.mxu0
    %2290 = vdwg.mxu0
    %2291 = vmatprep.subr.bf16.mxu0 0
    %2292 = vmatpush1.bf16.msra.mxu0 0
    %2293 = vmatprep.subr.bf16.mxu0 0
    %2294 = vmatpush1.bf16.msra.mxu0 0
    %2295 = vmatprep.subr.bf16.mxu0 0
    %2296 = vmatpush1.bf16.msra.mxu0 0
    %2297 = vmatprep.subr.bf16.mxu0 0
    %2298 = vmatpush1.bf16.msra.mxu0 0
    %2299 = vmatprep.subr.bf16.mxu0 0
    %2300 = vmatpush1.bf16.msra.mxu0 %v2185
    %2301 = vmatprep.subr.bf16.mxu0 0
    %2302 = vmatpush1.bf16.msra.mxu0 %v2180
    %2303 = vmatprep.subr.bf16.mxu0 0
    %2304 = vmatpush1.bf16.msra.mxu0 %v2175
    %2305 = vmatprep.subr.bf16.mxu0 0
    %2306 = vmatpush1.bf16.msra.mxu0 %v2170
    %2307 = vmatprep.subr.bf16.mxu0 0
    %2308 = vmatpush2.bf16.msra.mxu0 0
    %2309 = vmatprep.subr.bf16.mxu0 0
    %2310 = vmatpush2.bf16.msra.mxu0 0
    %2311 = vmatprep.subr.bf16.mxu0 0
    %2312 = vmatpush2.bf16.msra.mxu0 0
    %2313 = vmatprep.subr.bf16.mxu0 0
    %2314 = vmatpush2.bf16.msra.mxu0 0
    %2315 = vmatprep.subr.bf16.mxu0 0
    %2316 = vmatpush2.bf16.msra.mxu0 0
    %2317 = vmatprep.subr.bf16.mxu0 0
    %2318 = vmatpush2.bf16.msra.mxu0 0
    %2319 = vmatprep.subr.bf16.mxu0 0
    %2320 = vmatpush2.bf16.msra.mxu0 0
    %2321 = vmatprep.subr.bf16.mxu0 0
    %2322 = vmatpush2.bf16.msra.mxu0 0
    %2323 = vmatprep.mubr.bf16.mxu0 0
    %2324 = vmatmul.mubr.bf16.gmra.mxu0 %v2207
    %v2325 = vpop.f32.mrf.mxu0
    %v2326 = vadd.f32 0.0, %v2325
    %v2327 = vpop.f32.mrf.mxu0
    %v2328 = vpop.f32.mrf.mxu0
    %v2329 = vpop.f32.mrf.mxu0
    %2330 = vdwg.mxu0
    %v2331 = vadd.f32 %v2066, %v2244
    %v2332 = vadd.f32 %v2067, %v2246
    %v2333 = vadd.f32 %v2068, %v2285
    %v2334 = vadd.f32 %v2069, %v2287
    %v2335 = vadd.f32 %v2070, %v2326
    %v2336 = vrot.slane %v730, 2
    %v2338 = vrot.slane %v1286, 2
    %v2340 = vsel %vm1291, %v2336, %v2338
    %s2341 = scalar_lea.vmem %s3, 640
    %v2342 = vld [vmem:[%s2341] sm:$0xff]
    %v2343 = vld [vmem:[%s2341 + $0x8] sm:$0xff]
    %v2344 = vld [vmem:[%s2341 + $0x10] sm:$0xf]
    %v2345 = vld [vmem:[%s2341 + $0x14] sm:$0xff]
    %v2346 = vld [vmem:[%s2341 + $0x1c] sm:$0xff]
    %v2347 = vld [vmem:[%s2341 + $0x24] sm:$0xf]
    %v2348 = vld [vmem:[%s2341 + $0x28] sm:$0xff]
    %v2349 = vld [vmem:[%s2341 + $0x30] sm:$0xff]
    %v2350 = vld [vmem:[%s2341 + $0x38] sm:$0xf]
    %v2351 = vld [vmem:[%s2341 + $0x3c] sm:$0xff]
    %v2352 = vld [vmem:[%s2341 + $0x44] sm:$0xff]
    %v2353 = vld [vmem:[%s2341 + $0x4c] sm:$0xf]
    %v2354 = vld [vmem:[%s2341 + $0x50] sm:$0xff]
    %v2355 = vld [vmem:[%s2341 + $0x58] sm:$0xff]
    %v2356 = vld [vmem:[%s2341 + $0x60] sm:$0xf]
    %v2357 = vld [vmem:[%s2341 + $0x64] sm:$0xff]
    %v2358 = vld [vmem:[%s2341 + $0x6c] sm:$0xff]
    %v2359 = vld [vmem:[%s2341 + $0x74] sm:$0xf]
    %v2360 = vld [vmem:[%s2341 + $0x78] sm:$0xff]
    %v2361 = vld [vmem:[%s2341 + $0x80] sm:$0xff]
    %v2362 = vld [vmem:[%s2341 + $0x88] sm:$0xf]
    %v2363 = vld [vmem:[%s2341 + $0x8c] sm:$0xff]
    %v2364 = vld [vmem:[%s2341 + $0x94] sm:$0xff]
    %v2365 = vld [vmem:[%s2341 + $0x9c] sm:$0xf]
    %v2390 = vunpack.c.l.b16 %v2342
    %v2391 = vunpack.c.h.b16 %v2342
    %v2392 = vunpack.c.l.b16 %v2343
    %v2393 = vunpack.c.h.b16 %v2343
    %v2394 = vunpack.c.l.b16 %v2344
    %v2395 = vunpack.c.l.b16 %v2345
    %v2396 = vunpack.c.h.b16 %v2345
    %v2397 = vunpack.c.l.b16 %v2346
    %v2398 = vunpack.c.h.b16 %v2346
    %v2399 = vunpack.c.l.b16 %v2347
    %v2400 = vunpack.c.l.b16 %v2348
    %v2401 = vunpack.c.h.b16 %v2348
    %v2402 = vunpack.c.l.b16 %v2349
    %v2403 = vunpack.c.h.b16 %v2349
    %v2404 = vunpack.c.l.b16 %v2350
    %v2405 = vunpack.c.l.b16 %v2351
    %v2406 = vunpack.c.h.b16 %v2351
    %v2407 = vunpack.c.l.b16 %v2352
    %v2408 = vunpack.c.h.b16 %v2352
    %v2409 = vunpack.c.l.b16 %v2353
    %v2410 = vunpack.c.l.b16 %v2354
    %v2411 = vunpack.c.h.b16 %v2354
    %v2412 = vunpack.c.l.b16 %v2355
    %v2413 = vunpack.c.h.b16 %v2355
    %v2414 = vunpack.c.l.b16 %v2356
    %v2415 = vunpack.c.l.b16 %v2357
    %v2416 = vunpack.c.h.b16 %v2357
    %v2417 = vunpack.c.l.b16 %v2358
    %v2418 = vunpack.c.h.b16 %v2358
    %v2419 = vunpack.c.l.b16 %v2359
    %v2420 = vunpack.c.l.b16 %v2360
    %v2421 = vunpack.c.h.b16 %v2360
    %v2422 = vunpack.c.l.b16 %v2361
    %v2423 = vunpack.c.h.b16 %v2361
    %v2424 = vunpack.c.l.b16 %v2362
    %v2425 = vunpack.c.l.b16 %v2363
    %v2426 = vunpack.c.h.b16 %v2363
    %v2427 = vunpack.c.l.b16 %v2364
    %v2428 = vunpack.c.h.b16 %v2364
    %v2429 = vunpack.c.l.b16 %v2365
    %v2430 = vpack.c.b16 %v2395, %v2390
    %v2431 = vpack.c.b16 %v2396, %v2391
    %v2432 = vpack.c.b16 %v2397, %v2392
    %v2433 = vpack.c.b16 %v2398, %v2393
    %v2434 = vpack.c.b16 %v2399, %v2394
    %v2435 = vpack.c.b16 %v2405, %v2400
    %v2436 = vpack.c.b16 %v2406, %v2401
    %v2437 = vpack.c.b16 %v2407, %v2402
    %v2438 = vpack.c.b16 %v2408, %v2403
    %v2439 = vpack.c.b16 %v2409, %v2404
    %v2440 = vpack.c.b16 %v2415, %v2410
    %v2441 = vpack.c.b16 %v2416, %v2411
    %v2442 = vpack.c.b16 %v2417, %v2412
    %v2443 = vpack.c.b16 %v2418, %v2413
    %v2444 = vpack.c.b16 %v2419, %v2414
    %v2445 = vpack.c.b16 %v2425, %v2420
    %v2446 = vpack.c.b16 %v2426, %v2421
    %v2447 = vpack.c.b16 %v2427, %v2422
    %v2448 = vpack.c.b16 %v2428, %v2423
    %v2449 = vpack.c.b16 %v2429, %v2424
    %v2471 = vsel %vm1451, %v2340, 0
    %2473 = vmatprep.subr.bf16.mxu0 0
    %2474 = vmatpush1.bf16.msra.mxu0 0
    %2475 = vmatprep.subr.bf16.mxu0 0
    %2476 = vmatpush1.bf16.msra.mxu0 0
    %2477 = vmatprep.subr.bf16.mxu0 0
    %2478 = vmatpush1.bf16.msra.mxu0 0
    %2479 = vmatprep.subr.bf16.mxu0 0
    %2480 = vmatpush1.bf16.msra.mxu0 0
    %2481 = vmatprep.subr.bf16.mxu0 %v2446
    %2482 = vmatpush1.bf16.msra.mxu0 %v2445
    %2483 = vmatprep.subr.bf16.mxu0 %v2441
    %2484 = vmatpush1.bf16.msra.mxu0 %v2440
    %2485 = vmatprep.subr.bf16.mxu0 %v2436
    %2486 = vmatpush1.bf16.msra.mxu0 %v2435
    %2487 = vmatprep.subr.bf16.mxu0 %v2431
    %2488 = vmatpush1.bf16.msra.mxu0 %v2430
    %2489 = vmatprep.subr.bf16.mxu0 0
    %2490 = vmatpush2.bf16.msra.mxu0 0
    %2491 = vmatprep.subr.bf16.mxu0 0
    %2492 = vmatpush2.bf16.msra.mxu0 0
    %2493 = vmatprep.subr.bf16.mxu0 0
    %2494 = vmatpush2.bf16.msra.mxu0 0
    %2495 = vmatprep.subr.bf16.mxu0 0
    %2496 = vmatpush2.bf16.msra.mxu0 0
    %2497 = vmatprep.subr.bf16.mxu0 0
    %2498 = vmatpush2.bf16.msra.mxu0 0
    %2499 = vmatprep.subr.bf16.mxu0 0
    %2500 = vmatpush2.bf16.msra.mxu0 0
    %2501 = vmatprep.subr.bf16.mxu0 0
    %2502 = vmatpush2.bf16.msra.mxu0 0
    %2503 = vmatprep.subr.bf16.mxu0 0
    %2504 = vmatpush2.bf16.msra.mxu0 0
    %2505 = vmatprep.mubr.bf16.mxu0 0
    %2506 = vmatmul.mubr.bf16.gmra.mxu0 %v2471
    %v2507 = vpop.f32.mrf.mxu0
    %v2508 = vadd.f32 0.0, %v2507
    %v2509 = vpop.f32.mrf.mxu0
    %v2510 = vadd.f32 0.0, %v2509
    %v2511 = vpop.f32.mrf.mxu0
    %v2512 = vpop.f32.mrf.mxu0
    %2513 = vdwg.mxu0
    %2514 = vmatprep.subr.bf16.mxu0 0
    %2515 = vmatpush1.bf16.msra.mxu0 0
    %2516 = vmatprep.subr.bf16.mxu0 0
    %2517 = vmatpush1.bf16.msra.mxu0 0
    %2518 = vmatprep.subr.bf16.mxu0 0
    %2519 = vmatpush1.bf16.msra.mxu0 0
    %2520 = vmatprep.subr.bf16.mxu0 0
    %2521 = vmatpush1.bf16.msra.mxu0 0
    %2522 = vmatprep.subr.bf16.mxu0 %v2448
    %2523 = vmatpush1.bf16.msra.mxu0 %v2447
    %2524 = vmatprep.subr.bf16.mxu0 %v2443
    %2525 = vmatpush1.bf16.msra.mxu0 %v2442
    %2526 = vmatprep.subr.bf16.mxu0 %v2438
    %2527 = vmatpush1.bf16.msra.mxu0 %v2437
    %2528 = vmatprep.subr.bf16.mxu0 %v2433
    %2529 = vmatpush1.bf16.msra.mxu0 %v2432
    %2530 = vmatprep.subr.bf16.mxu0 0
    %2531 = vmatpush2.bf16.msra.mxu0 0
    %2532 = vmatprep.subr.bf16.mxu0 0
    %2533 = vmatpush2.bf16.msra.mxu0 0
    %2534 = vmatprep.subr.bf16.mxu0 0
    %2535 = vmatpush2.bf16.msra.mxu0 0
    %2536 = vmatprep.subr.bf16.mxu0 0
    %2537 = vmatpush2.bf16.msra.mxu0 0
    %2538 = vmatprep.subr.bf16.mxu0 0
    %2539 = vmatpush2.bf16.msra.mxu0 0
    %2540 = vmatprep.subr.bf16.mxu0 0
    %2541 = vmatpush2.bf16.msra.mxu0 0
    %2542 = vmatprep.subr.bf16.mxu0 0
    %2543 = vmatpush2.bf16.msra.mxu0 0
    %2544 = vmatprep.subr.bf16.mxu0 0
    %2545 = vmatpush2.bf16.msra.mxu0 0
    %2546 = vmatprep.mubr.bf16.mxu0 0
    %2547 = vmatmul.mubr.bf16.gmra.mxu0 %v2471
    %v2548 = vpop.f32.mrf.mxu0
    %v2549 = vadd.f32 0.0, %v2548
    %v2550 = vpop.f32.mrf.mxu0
    %v2551 = vadd.f32 0.0, %v2550
    %v2552 = vpop.f32.mrf.mxu0
    %v2553 = vpop.f32.mrf.mxu0
    %2554 = vdwg.mxu0
    %2555 = vmatprep.subr.bf16.mxu0 0
    %2556 = vmatpush1.bf16.msra.mxu0 0
    %2557 = vmatprep.subr.bf16.mxu0 0
    %2558 = vmatpush1.bf16.msra.mxu0 0
    %2559 = vmatprep.subr.bf16.mxu0 0
    %2560 = vmatpush1.bf16.msra.mxu0 0
    %2561 = vmatprep.subr.bf16.mxu0 0
    %2562 = vmatpush1.bf16.msra.mxu0 0
    %2563 = vmatprep.subr.bf16.mxu0 0
    %2564 = vmatpush1.bf16.msra.mxu0 %v2449
    %2565 = vmatprep.subr.bf16.mxu0 0
    %2566 = vmatpush1.bf16.msra.mxu0 %v2444
    %2567 = vmatprep.subr.bf16.mxu0 0
    %2568 = vmatpush1.bf16.msra.mxu0 %v2439
    %2569 = vmatprep.subr.bf16.mxu0 0
    %2570 = vmatpush1.bf16.msra.mxu0 %v2434
    %2571 = vmatprep.subr.bf16.mxu0 0
    %2572 = vmatpush2.bf16.msra.mxu0 0
    %2573 = vmatprep.subr.bf16.mxu0 0
    %2574 = vmatpush2.bf16.msra.mxu0 0
    %2575 = vmatprep.subr.bf16.mxu0 0
    %2576 = vmatpush2.bf16.msra.mxu0 0
    %2577 = vmatprep.subr.bf16.mxu0 0
    %2578 = vmatpush2.bf16.msra.mxu0 0
    %2579 = vmatprep.subr.bf16.mxu0 0
    %2580 = vmatpush2.bf16.msra.mxu0 0
    %2581 = vmatprep.subr.bf16.mxu0 0
    %2582 = vmatpush2.bf16.msra.mxu0 0
    %2583 = vmatprep.subr.bf16.mxu0 0
    %2584 = vmatpush2.bf16.msra.mxu0 0
    %2585 = vmatprep.subr.bf16.mxu0 0
    %2586 = vmatpush2.bf16.msra.mxu0 0
    %2587 = vmatprep.mubr.bf16.mxu0 0
    %2588 = vmatmul.mubr.bf16.gmra.mxu0 %v2471
    %v2589 = vpop.f32.mrf.mxu0
    %v2590 = vadd.f32 0.0, %v2589
    %v2591 = vpop.f32.mrf.mxu0
    %v2592 = vpop.f32.mrf.mxu0
    %v2593 = vpop.f32.mrf.mxu0
    %2594 = vdwg.mxu0
    %v2595 = vadd.f32 %v2331, %v2508
    %v2596 = vadd.f32 %v2332, %v2510
    %v2597 = vadd.f32 %v2333, %v2549
    %v2598 = vadd.f32 %v2334, %v2551
    %v2599 = vadd.f32 %v2335, %v2590
    %v2600 = vrot.slane %v1318, 2
    %v2602 = vrot.slane %v1283, 2
    %v2604 = vsel %vm1291, %v2600, %v2602
    %s2605 = scalar_lea.vmem %s3, 800
    %v2606 = vld [vmem:[%s2605] sm:$0xff]
    %v2607 = vld [vmem:[%s2605 + $0x8] sm:$0xff]
    %v2608 = vld [vmem:[%s2605 + $0x10] sm:$0xf]
    %v2609 = vld [vmem:[%s2605 + $0x14] sm:$0xff]
    %v2610 = vld [vmem:[%s2605 + $0x1c] sm:$0xff]
    %v2611 = vld [vmem:[%s2605 + $0x24] sm:$0xf]
    %v2612 = vld [vmem:[%s2605 + $0x28] sm:$0xff]
    %v2613 = vld [vmem:[%s2605 + $0x30] sm:$0xff]
    %v2614 = vld [vmem:[%s2605 + $0x38] sm:$0xf]
    %v2615 = vld [vmem:[%s2605 + $0x3c] sm:$0xff]
    %v2616 = vld [vmem:[%s2605 + $0x44] sm:$0xff]
    %v2617 = vld [vmem:[%s2605 + $0x4c] sm:$0xf]
    %v2618 = vld [vmem:[%s2605 + $0x50] sm:$0xff]
    %v2619 = vld [vmem:[%s2605 + $0x58] sm:$0xff]
    %v2620 = vld [vmem:[%s2605 + $0x60] sm:$0xf]
    %v2621 = vld [vmem:[%s2605 + $0x64] sm:$0xff]
    %v2622 = vld [vmem:[%s2605 + $0x6c] sm:$0xff]
    %v2623 = vld [vmem:[%s2605 + $0x74] sm:$0xf]
    %v2624 = vld [vmem:[%s2605 + $0x78] sm:$0xff]
    %v2625 = vld [vmem:[%s2605 + $0x80] sm:$0xff]
    %v2626 = vld [vmem:[%s2605 + $0x88] sm:$0xf]
    %v2627 = vld [vmem:[%s2605 + $0x8c] sm:$0xff]
    %v2628 = vld [vmem:[%s2605 + $0x94] sm:$0xff]
    %v2629 = vld [vmem:[%s2605 + $0x9c] sm:$0xf]
    %v2654 = vunpack.c.l.b16 %v2606
    %v2655 = vunpack.c.h.b16 %v2606
    %v2656 = vunpack.c.l.b16 %v2607
    %v2657 = vunpack.c.h.b16 %v2607
    %v2658 = vunpack.c.l.b16 %v2608
    %v2659 = vunpack.c.l.b16 %v2609
    %v2660 = vunpack.c.h.b16 %v2609
    %v2661 = vunpack.c.l.b16 %v2610
    %v2662 = vunpack.c.h.b16 %v2610
    %v2663 = vunpack.c.l.b16 %v2611
    %v2664 = vunpack.c.l.b16 %v2612
    %v2665 = vunpack.c.h.b16 %v2612
    %v2666 = vunpack.c.l.b16 %v2613
    %v2667 = vunpack.c.h.b16 %v2613
    %v2668 = vunpack.c.l.b16 %v2614
    %v2669 = vunpack.c.l.b16 %v2615
    %v2670 = vunpack.c.h.b16 %v2615
    %v2671 = vunpack.c.l.b16 %v2616
    %v2672 = vunpack.c.h.b16 %v2616
    %v2673 = vunpack.c.l.b16 %v2617
    %v2674 = vunpack.c.l.b16 %v2618
    %v2675 = vunpack.c.h.b16 %v2618
    %v2676 = vunpack.c.l.b16 %v2619
    %v2677 = vunpack.c.h.b16 %v2619
    %v2678 = vunpack.c.l.b16 %v2620
    %v2679 = vunpack.c.l.b16 %v2621
    %v2680 = vunpack.c.h.b16 %v2621
    %v2681 = vunpack.c.l.b16 %v2622
    %v2682 = vunpack.c.h.b16 %v2622
    %v2683 = vunpack.c.l.b16 %v2623
    %v2684 = vunpack.c.l.b16 %v2624
    %v2685 = vunpack.c.h.b16 %v2624
    %v2686 = vunpack.c.l.b16 %v2625
    %v2687 = vunpack.c.h.b16 %v2625
    %v2688 = vunpack.c.l.b16 %v2626
    %v2689 = vunpack.c.l.b16 %v2627
    %v2690 = vunpack.c.h.b16 %v2627
    %v2691 = vunpack.c.l.b16 %v2628
    %v2692 = vunpack.c.h.b16 %v2628
    %v2693 = vunpack.c.l.b16 %v2629
    %v2694 = vpack.c.b16 %v2659, %v2654
    %v2695 = vpack.c.b16 %v2660, %v2655
    %v2696 = vpack.c.b16 %v2661, %v2656
    %v2697 = vpack.c.b16 %v2662, %v2657
    %v2698 = vpack.c.b16 %v2663, %v2658
    %v2699 = vpack.c.b16 %v2669, %v2664
    %v2700 = vpack.c.b16 %v2670, %v2665
    %v2701 = vpack.c.b16 %v2671, %v2666
    %v2702 = vpack.c.b16 %v2672, %v2667
    %v2703 = vpack.c.b16 %v2673, %v2668
    %v2704 = vpack.c.b16 %v2679, %v2674
    %v2705 = vpack.c.b16 %v2680, %v2675
    %v2706 = vpack.c.b16 %v2681, %v2676
    %v2707 = vpack.c.b16 %v2682, %v2677
    %v2708 = vpack.c.b16 %v2683, %v2678
    %v2709 = vpack.c.b16 %v2689, %v2684
    %v2710 = vpack.c.b16 %v2690, %v2685
    %v2711 = vpack.c.b16 %v2691, %v2686
    %v2712 = vpack.c.b16 %v2692, %v2687
    %v2713 = vpack.c.b16 %v2693, %v2688
    %v2735 = vsel %vm1451, %v2604, 0
    %2737 = vmatprep.subr.bf16.mxu0 0
    %2738 = vmatpush1.bf16.msra.mxu0 0
    %2739 = vmatprep.subr.bf16.mxu0 0
    %2740 = vmatpush1.bf16.msra.mxu0 0
    %2741 = vmatprep.subr.bf16.mxu0 0
    %2742 = vmatpush1.bf16.msra.mxu0 0
    %2743 = vmatprep.subr.bf16.mxu0 0
    %2744 = vmatpush1.bf16.msra.mxu0 0
    %2745 = vmatprep.subr.bf16.mxu0 %v2710
    %2746 = vmatpush1.bf16.msra.mxu0 %v2709
    %2747 = vmatprep.subr.bf16.mxu0 %v2705
    %2748 = vmatpush1.bf16.msra.mxu0 %v2704
    %2749 = vmatprep.subr.bf16.mxu0 %v2700
    %2750 = vmatpush1.bf16.msra.mxu0 %v2699
    %2751 = vmatprep.subr.bf16.mxu0 %v2695
    %2752 = vmatpush1.bf16.msra.mxu0 %v2694
    %2753 = vmatprep.subr.bf16.mxu0 0
    %2754 = vmatpush2.bf16.msra.mxu0 0
    %2755 = vmatprep.subr.bf16.mxu0 0
    %2756 = vmatpush2.bf16.msra.mxu0 0
    %2757 = vmatprep.subr.bf16.mxu0 0
    %2758 = vmatpush2.bf16.msra.mxu0 0
    %2759 = vmatprep.subr.bf16.mxu0 0
    %2760 = vmatpush2.bf16.msra.mxu0 0
    %2761 = vmatprep.subr.bf16.mxu0 0
    %2762 = vmatpush2.bf16.msra.mxu0 0
    %2763 = vmatprep.subr.bf16.mxu0 0
    %2764 = vmatpush2.bf16.msra.mxu0 0
    %2765 = vmatprep.subr.bf16.mxu0 0
    %2766 = vmatpush2.bf16.msra.mxu0 0
    %2767 = vmatprep.subr.bf16.mxu0 0
    %2768 = vmatpush2.bf16.msra.mxu0 0
    %2769 = vmatprep.mubr.bf16.mxu0 0
    %2770 = vmatmul.mubr.bf16.gmra.mxu0 %v2735
    %v2771 = vpop.f32.mrf.mxu0
    %v2772 = vadd.f32 0.0, %v2771
    %v2773 = vpop.f32.mrf.mxu0
    %v2774 = vadd.f32 0.0, %v2773
    %v2775 = vpop.f32.mrf.mxu0
    %v2776 = vpop.f32.mrf.mxu0
    %2777 = vdwg.mxu0
    %2778 = vmatprep.subr.bf16.mxu0 0
    %2779 = vmatpush1.bf16.msra.mxu0 0
    %2780 = vmatprep.subr.bf16.mxu0 0
    %2781 = vmatpush1.bf16.msra.mxu0 0
    %2782 = vmatprep.subr.bf16.mxu0 0
    %2783 = vmatpush1.bf16.msra.mxu0 0
    %2784 = vmatprep.subr.bf16.mxu0 0
    %2785 = vmatpush1.bf16.msra.mxu0 0
    %2786 = vmatprep.subr.bf16.mxu0 %v2712
    %2787 = vmatpush1.bf16.msra.mxu0 %v2711
    %2788 = vmatprep.subr.bf16.mxu0 %v2707
    %2789 = vmatpush1.bf16.msra.mxu0 %v2706
    %2790 = vmatprep.subr.bf16.mxu0 %v2702
    %2791 = vmatpush1.bf16.msra.mxu0 %v2701
    %2792 = vmatprep.subr.bf16.mxu0 %v2697
    %2793 = vmatpush1.bf16.msra.mxu0 %v2696
    %2794 = vmatprep.subr.bf16.mxu0 0
    %2795 = vmatpush2.bf16.msra.mxu0 0
    %2796 = vmatprep.subr.bf16.mxu0 0
    %2797 = vmatpush2.bf16.msra.mxu0 0
    %2798 = vmatprep.subr.bf16.mxu0 0
    %2799 = vmatpush2.bf16.msra.mxu0 0
    %2800 = vmatprep.subr.bf16.mxu0 0
    %2801 = vmatpush2.bf16.msra.mxu0 0
    %2802 = vmatprep.subr.bf16.mxu0 0
    %2803 = vmatpush2.bf16.msra.mxu0 0
    %2804 = vmatprep.subr.bf16.mxu0 0
    %2805 = vmatpush2.bf16.msra.mxu0 0
    %2806 = vmatprep.subr.bf16.mxu0 0
    %2807 = vmatpush2.bf16.msra.mxu0 0
    %2808 = vmatprep.subr.bf16.mxu0 0
    %2809 = vmatpush2.bf16.msra.mxu0 0
    %2810 = vmatprep.mubr.bf16.mxu0 0
    %2811 = vmatmul.mubr.bf16.gmra.mxu0 %v2735
    %v2812 = vpop.f32.mrf.mxu0
    %v2813 = vadd.f32 0.0, %v2812
    %v2814 = vpop.f32.mrf.mxu0
    %v2815 = vadd.f32 0.0, %v2814
    %v2816 = vpop.f32.mrf.mxu0
    %v2817 = vpop.f32.mrf.mxu0
    %2818 = vdwg.mxu0
    %2819 = vmatprep.subr.bf16.mxu0 0
    %2820 = vmatpush1.bf16.msra.mxu0 0
    %2821 = vmatprep.subr.bf16.mxu0 0
    %2822 = vmatpush1.bf16.msra.mxu0 0
    %2823 = vmatprep.subr.bf16.mxu0 0
    %2824 = vmatpush1.bf16.msra.mxu0 0
    %2825 = vmatprep.subr.bf16.mxu0 0
    %2826 = vmatpush1.bf16.msra.mxu0 0
    %2827 = vmatprep.subr.bf16.mxu0 0
    %2828 = vmatpush1.bf16.msra.mxu0 %v2713
    %2829 = vmatprep.subr.bf16.mxu0 0
    %2830 = vmatpush1.bf16.msra.mxu0 %v2708
    %2831 = vmatprep.subr.bf16.mxu0 0
    %2832 = vmatpush1.bf16.msra.mxu0 %v2703
    %2833 = vmatprep.subr.bf16.mxu0 0
    %2834 = vmatpush1.bf16.msra.mxu0 %v2698
    %2835 = vmatprep.subr.bf16.mxu0 0
    %2836 = vmatpush2.bf16.msra.mxu0 0
    %2837 = vmatprep.subr.bf16.mxu0 0
    %2838 = vmatpush2.bf16.msra.mxu0 0
    %2839 = vmatprep.subr.bf16.mxu0 0
    %2840 = vmatpush2.bf16.msra.mxu0 0
    %2841 = vmatprep.subr.bf16.mxu0 0
    %2842 = vmatpush2.bf16.msra.mxu0 0
    %2843 = vmatprep.subr.bf16.mxu0 0
    %2844 = vmatpush2.bf16.msra.mxu0 0
    %2845 = vmatprep.subr.bf16.mxu0 0
    %2846 = vmatpush2.bf16.msra.mxu0 0
    %2847 = vmatprep.subr.bf16.mxu0 0
    %2848 = vmatpush2.bf16.msra.mxu0 0
    %2849 = vmatprep.subr.bf16.mxu0 0
    %2850 = vmatpush2.bf16.msra.mxu0 0
    %2851 = vmatprep.mubr.bf16.mxu0 0
    %2852 = vmatmul.mubr.bf16.gmra.mxu0 %v2735
    %v2853 = vpop.f32.mrf.mxu0
    %v2854 = vadd.f32 0.0, %v2853
    %v2855 = vpop.f32.mrf.mxu0
    %v2856 = vpop.f32.mrf.mxu0
    %v2857 = vpop.f32.mrf.mxu0
    %2858 = vdwg.mxu0
    %v2859 = vadd.f32 %v2595, %v2772
    %v2860 = vadd.f32 %v2596, %v2774
    %v2861 = vadd.f32 %v2597, %v2813
    %v2862 = vadd.f32 %v2598, %v2815
    %v2863 = vadd.f32 %v2599, %v2854
    %v2864 = vrot.slane %v730, 3
    %v2866 = vrot.slane %v1286, 3
    %v2868 = vsel %vm1291, %v2864, %v2866
    %s2869 = scalar_lea.vmem %s3, 960
    %v2870 = vld [vmem:[%s2869] sm:$0xff]
    %v2871 = vld [vmem:[%s2869 + $0x8] sm:$0xff]
    %v2872 = vld [vmem:[%s2869 + $0x10] sm:$0xf]
    %v2873 = vld [vmem:[%s2869 + $0x14] sm:$0xff]
    %v2874 = vld [vmem:[%s2869 + $0x1c] sm:$0xff]
    %v2875 = vld [vmem:[%s2869 + $0x24] sm:$0xf]
    %v2876 = vld [vmem:[%s2869 + $0x28] sm:$0xff]
    %v2877 = vld [vmem:[%s2869 + $0x30] sm:$0xff]
    %v2878 = vld [vmem:[%s2869 + $0x38] sm:$0xf]
    %v2879 = vld [vmem:[%s2869 + $0x3c] sm:$0xff]
    %v2880 = vld [vmem:[%s2869 + $0x44] sm:$0xff]
    %v2881 = vld [vmem:[%s2869 + $0x4c] sm:$0xf]
    %v2882 = vld [vmem:[%s2869 + $0x50] sm:$0xff]
    %v2883 = vld [vmem:[%s2869 + $0x58] sm:$0xff]
    %v2884 = vld [vmem:[%s2869 + $0x60] sm:$0xf]
    %v2885 = vld [vmem:[%s2869 + $0x64] sm:$0xff]
    %v2886 = vld [vmem:[%s2869 + $0x6c] sm:$0xff]
    %v2887 = vld [vmem:[%s2869 + $0x74] sm:$0xf]
    %v2888 = vld [vmem:[%s2869 + $0x78] sm:$0xff]
    %v2889 = vld [vmem:[%s2869 + $0x80] sm:$0xff]
    %v2890 = vld [vmem:[%s2869 + $0x88] sm:$0xf]
    %v2891 = vld [vmem:[%s2869 + $0x8c] sm:$0xff]
    %v2892 = vld [vmem:[%s2869 + $0x94] sm:$0xff]
    %v2893 = vld [vmem:[%s2869 + $0x9c] sm:$0xf]
    %v2918 = vunpack.c.l.b16 %v2870
    %v2919 = vunpack.c.h.b16 %v2870
    %v2920 = vunpack.c.l.b16 %v2871
    %v2921 = vunpack.c.h.b16 %v2871
    %v2922 = vunpack.c.l.b16 %v2872
    %v2923 = vunpack.c.l.b16 %v2873
    %v2924 = vunpack.c.h.b16 %v2873
    %v2925 = vunpack.c.l.b16 %v2874
    %v2926 = vunpack.c.h.b16 %v2874
    %v2927 = vunpack.c.l.b16 %v2875
    %v2928 = vunpack.c.l.b16 %v2876
    %v2929 = vunpack.c.h.b16 %v2876
    %v2930 = vunpack.c.l.b16 %v2877
    %v2931 = vunpack.c.h.b16 %v2877
    %v2932 = vunpack.c.l.b16 %v2878
    %v2933 = vunpack.c.l.b16 %v2879
    %v2934 = vunpack.c.h.b16 %v2879
    %v2935 = vunpack.c.l.b16 %v2880
    %v2936 = vunpack.c.h.b16 %v2880
    %v2937 = vunpack.c.l.b16 %v2881
    %v2938 = vunpack.c.l.b16 %v2882
    %v2939 = vunpack.c.h.b16 %v2882
    %v2940 = vunpack.c.l.b16 %v2883
    %v2941 = vunpack.c.h.b16 %v2883
    %v2942 = vunpack.c.l.b16 %v2884
    %v2943 = vunpack.c.l.b16 %v2885
    %v2944 = vunpack.c.h.b16 %v2885
    %v2945 = vunpack.c.l.b16 %v2886
    %v2946 = vunpack.c.h.b16 %v2886
    %v2947 = vunpack.c.l.b16 %v2887
    %v2948 = vunpack.c.l.b16 %v2888
    %v2949 = vunpack.c.h.b16 %v2888
    %v2950 = vunpack.c.l.b16 %v2889
    %v2951 = vunpack.c.h.b16 %v2889
    %v2952 = vunpack.c.l.b16 %v2890
    %v2953 = vunpack.c.l.b16 %v2891
    %v2954 = vunpack.c.h.b16 %v2891
    %v2955 = vunpack.c.l.b16 %v2892
    %v2956 = vunpack.c.h.b16 %v2892
    %v2957 = vunpack.c.l.b16 %v2893
    %v2958 = vpack.c.b16 %v2923, %v2918
    %v2959 = vpack.c.b16 %v2924, %v2919
    %v2960 = vpack.c.b16 %v2925, %v2920
    %v2961 = vpack.c.b16 %v2926, %v2921
    %v2962 = vpack.c.b16 %v2927, %v2922
    %v2963 = vpack.c.b16 %v2933, %v2928
    %v2964 = vpack.c.b16 %v2934, %v2929
    %v2965 = vpack.c.b16 %v2935, %v2930
    %v2966 = vpack.c.b16 %v2936, %v2931
    %v2967 = vpack.c.b16 %v2937, %v2932
    %v2968 = vpack.c.b16 %v2943, %v2938
    %v2969 = vpack.c.b16 %v2944, %v2939
    %v2970 = vpack.c.b16 %v2945, %v2940
    %v2971 = vpack.c.b16 %v2946, %v2941
    %v2972 = vpack.c.b16 %v2947, %v2942
    %v2973 = vpack.c.b16 %v2953, %v2948
    %v2974 = vpack.c.b16 %v2954, %v2949
    %v2975 = vpack.c.b16 %v2955, %v2950
    %v2976 = vpack.c.b16 %v2956, %v2951
    %v2977 = vpack.c.b16 %v2957, %v2952
    %v2999 = vsel %vm1451, %v2868, 0
    %3001 = vmatprep.subr.bf16.mxu0 0
    %3002 = vmatpush1.bf16.msra.mxu0 0
    %3003 = vmatprep.subr.bf16.mxu0 0
    %3004 = vmatpush1.bf16.msra.mxu0 0
    %3005 = vmatprep.subr.bf16.mxu0 0
    %3006 = vmatpush1.bf16.msra.mxu0 0
    %3007 = vmatprep.subr.bf16.mxu0 0
    %3008 = vmatpush1.bf16.msra.mxu0 0
    %3009 = vmatprep.subr.bf16.mxu0 %v2974
    %3010 = vmatpush1.bf16.msra.mxu0 %v2973
    %3011 = vmatprep.subr.bf16.mxu0 %v2969
    %3012 = vmatpush1.bf16.msra.mxu0 %v2968
    %3013 = vmatprep.subr.bf16.mxu0 %v2964
    %3014 = vmatpush1.bf16.msra.mxu0 %v2963
    %3015 = vmatprep.subr.bf16.mxu0 %v2959
    %3016 = vmatpush1.bf16.msra.mxu0 %v2958
    %3017 = vmatprep.subr.bf16.mxu0 0
    %3018 = vmatpush2.bf16.msra.mxu0 0
    %3019 = vmatprep.subr.bf16.mxu0 0
    %3020 = vmatpush2.bf16.msra.mxu0 0
    %3021 = vmatprep.subr.bf16.mxu0 0
    %3022 = vmatpush2.bf16.msra.mxu0 0
    %3023 = vmatprep.subr.bf16.mxu0 0
    %3024 = vmatpush2.bf16.msra.mxu0 0
    %3025 = vmatprep.subr.bf16.mxu0 0
    %3026 = vmatpush2.bf16.msra.mxu0 0
    %3027 = vmatprep.subr.bf16.mxu0 0
    %3028 = vmatpush2.bf16.msra.mxu0 0
    %3029 = vmatprep.subr.bf16.mxu0 0
    %3030 = vmatpush2.bf16.msra.mxu0 0
    %3031 = vmatprep.subr.bf16.mxu0 0
    %3032 = vmatpush2.bf16.msra.mxu0 0
    %3033 = vmatprep.mubr.bf16.mxu0 0
    %3034 = vmatmul.mubr.bf16.gmra.mxu0 %v2999
    %v3035 = vpop.f32.mrf.mxu0
    %v3036 = vadd.f32 0.0, %v3035
    %v3037 = vpop.f32.mrf.mxu0
    %v3038 = vadd.f32 0.0, %v3037
    %v3039 = vpop.f32.mrf.mxu0
    %v3040 = vpop.f32.mrf.mxu0
    %3041 = vdwg.mxu0
    %3042 = vmatprep.subr.bf16.mxu0 0
    %3043 = vmatpush1.bf16.msra.mxu0 0
    %3044 = vmatprep.subr.bf16.mxu0 0
    %3045 = vmatpush1.bf16.msra.mxu0 0
    %3046 = vmatprep.subr.bf16.mxu0 0
    %3047 = vmatpush1.bf16.msra.mxu0 0
    %3048 = vmatprep.subr.bf16.mxu0 0
    %3049 = vmatpush1.bf16.msra.mxu0 0
    %3050 = vmatprep.subr.bf16.mxu0 %v2976
    %3051 = vmatpush1.bf16.msra.mxu0 %v2975
    %3052 = vmatprep.subr.bf16.mxu0 %v2971
    %3053 = vmatpush1.bf16.msra.mxu0 %v2970
    %3054 = vmatprep.subr.bf16.mxu0 %v2966
    %3055 = vmatpush1.bf16.msra.mxu0 %v2965
    %3056 = vmatprep.subr.bf16.mxu0 %v2961
    %3057 = vmatpush1.bf16.msra.mxu0 %v2960
    %3058 = vmatprep.subr.bf16.mxu0 0
    %3059 = vmatpush2.bf16.msra.mxu0 0
    %3060 = vmatprep.subr.bf16.mxu0 0
    %3061 = vmatpush2.bf16.msra.mxu0 0
    %3062 = vmatprep.subr.bf16.mxu0 0
    %3063 = vmatpush2.bf16.msra.mxu0 0
    %3064 = vmatprep.subr.bf16.mxu0 0
    %3065 = vmatpush2.bf16.msra.mxu0 0
    %3066 = vmatprep.subr.bf16.mxu0 0
    %3067 = vmatpush2.bf16.msra.mxu0 0
    %3068 = vmatprep.subr.bf16.mxu0 0
    %3069 = vmatpush2.bf16.msra.mxu0 0
    %3070 = vmatprep.subr.bf16.mxu0 0
    %3071 = vmatpush2.bf16.msra.mxu0 0
    %3072 = vmatprep.subr.bf16.mxu0 0
    %3073 = vmatpush2.bf16.msra.mxu0 0
    %3074 = vmatprep.mubr.bf16.mxu0 0
    %3075 = vmatmul.mubr.bf16.gmra.mxu0 %v2999
    %v3076 = vpop.f32.mrf.mxu0
    %v3077 = vadd.f32 0.0, %v3076
    %v3078 = vpop.f32.mrf.mxu0
    %v3079 = vadd.f32 0.0, %v3078
    %v3080 = vpop.f32.mrf.mxu0
    %v3081 = vpop.f32.mrf.mxu0
    %3082 = vdwg.mxu0
    %3083 = vmatprep.subr.bf16.mxu0 0
    %3084 = vmatpush1.bf16.msra.mxu0 0
    %3085 = vmatprep.subr.bf16.mxu0 0
    %3086 = vmatpush1.bf16.msra.mxu0 0
    %3087 = vmatprep.subr.bf16.mxu0 0
    %3088 = vmatpush1.bf16.msra.mxu0 0
    %3089 = vmatprep.subr.bf16.mxu0 0
    %3090 = vmatpush1.bf16.msra.mxu0 0
    %3091 = vmatprep.subr.bf16.mxu0 0
    %3092 = vmatpush1.bf16.msra.mxu0 %v2977
    %3093 = vmatprep.subr.bf16.mxu0 0
    %3094 = vmatpush1.bf16.msra.mxu0 %v2972
    %3095 = vmatprep.subr.bf16.mxu0 0
    %3096 = vmatpush1.bf16.msra.mxu0 %v2967
    %3097 = vmatprep.subr.bf16.mxu0 0
    %3098 = vmatpush1.bf16.msra.mxu0 %v2962
    %3099 = vmatprep.subr.bf16.mxu0 0
    %3100 = vmatpush2.bf16.msra.mxu0 0
    %3101 = vmatprep.subr.bf16.mxu0 0
    %3102 = vmatpush2.bf16.msra.mxu0 0
    %3103 = vmatprep.subr.bf16.mxu0 0
    %3104 = vmatpush2.bf16.msra.mxu0 0
    %3105 = vmatprep.subr.bf16.mxu0 0
    %3106 = vmatpush2.bf16.msra.mxu0 0
    %3107 = vmatprep.subr.bf16.mxu0 0
    %3108 = vmatpush2.bf16.msra.mxu0 0
    %3109 = vmatprep.subr.bf16.mxu0 0
    %3110 = vmatpush2.bf16.msra.mxu0 0
    %3111 = vmatprep.subr.bf16.mxu0 0
    %3112 = vmatpush2.bf16.msra.mxu0 0
    %3113 = vmatprep.subr.bf16.mxu0 0
    %3114 = vmatpush2.bf16.msra.mxu0 0
    %3115 = vmatprep.mubr.bf16.mxu0 0
    %3116 = vmatmul.mubr.bf16.gmra.mxu0 %v2999
    %v3117 = vpop.f32.mrf.mxu0
    %v3118 = vadd.f32 0.0, %v3117
    %v3119 = vpop.f32.mrf.mxu0
    %v3120 = vpop.f32.mrf.mxu0
    %v3121 = vpop.f32.mrf.mxu0
    %3122 = vdwg.mxu0
    %v3123 = vadd.f32 %v2859, %v3036
    %v3124 = vadd.f32 %v2860, %v3038
    %v3125 = vadd.f32 %v2861, %v3077
    %v3126 = vadd.f32 %v2862, %v3079
    %v3127 = vadd.f32 %v2863, %v3118
    %v3128 = vrot.slane %v1318, 3
    %v3130 = vrot.slane %v1283, 3
    %v3132 = vsel %vm1291, %v3128, %v3130
    %s3133 = scalar_lea.vmem %s3, 1120
    %v3134 = vld [vmem:[%s3133] sm:$0xff]
    %v3135 = vld [vmem:[%s3133 + $0x8] sm:$0xff]
    %v3136 = vld [vmem:[%s3133 + $0x10] sm:$0xf]
    %v3137 = vld [vmem:[%s3133 + $0x14] sm:$0xff]
    %v3138 = vld [vmem:[%s3133 + $0x1c] sm:$0xff]
    %v3139 = vld [vmem:[%s3133 + $0x24] sm:$0xf]
    %v3140 = vld [vmem:[%s3133 + $0x28] sm:$0xff]
    %v3141 = vld [vmem:[%s3133 + $0x30] sm:$0xff]
    %v3142 = vld [vmem:[%s3133 + $0x38] sm:$0xf]
    %v3143 = vld [vmem:[%s3133 + $0x3c] sm:$0xff]
    %v3144 = vld [vmem:[%s3133 + $0x44] sm:$0xff]
    %v3145 = vld [vmem:[%s3133 + $0x4c] sm:$0xf]
    %v3146 = vld [vmem:[%s3133 + $0x50] sm:$0xff]
    %v3147 = vld [vmem:[%s3133 + $0x58] sm:$0xff]
    %v3148 = vld [vmem:[%s3133 + $0x60] sm:$0xf]
    %v3149 = vld [vmem:[%s3133 + $0x64] sm:$0xff]
    %v3150 = vld [vmem:[%s3133 + $0x6c] sm:$0xff]
    %v3151 = vld [vmem:[%s3133 + $0x74] sm:$0xf]
    %v3152 = vld [vmem:[%s3133 + $0x78] sm:$0xff]
    %v3153 = vld [vmem:[%s3133 + $0x80] sm:$0xff]
    %v3154 = vld [vmem:[%s3133 + $0x88] sm:$0xf]
    %v3155 = vld [vmem:[%s3133 + $0x8c] sm:$0xff]
    %v3156 = vld [vmem:[%s3133 + $0x94] sm:$0xff]
    %v3157 = vld [vmem:[%s3133 + $0x9c] sm:$0xf]
    %v3182 = vunpack.c.l.b16 %v3134
    %v3183 = vunpack.c.h.b16 %v3134
    %v3184 = vunpack.c.l.b16 %v3135
    %v3185 = vunpack.c.h.b16 %v3135
    %v3186 = vunpack.c.l.b16 %v3136
    %v3187 = vunpack.c.l.b16 %v3137
    %v3188 = vunpack.c.h.b16 %v3137
    %v3189 = vunpack.c.l.b16 %v3138
    %v3190 = vunpack.c.h.b16 %v3138
    %v3191 = vunpack.c.l.b16 %v3139
    %v3192 = vunpack.c.l.b16 %v3140
    %v3193 = vunpack.c.h.b16 %v3140
    %v3194 = vunpack.c.l.b16 %v3141
    %v3195 = vunpack.c.h.b16 %v3141
    %v3196 = vunpack.c.l.b16 %v3142
    %v3197 = vunpack.c.l.b16 %v3143
    %v3198 = vunpack.c.h.b16 %v3143
    %v3199 = vunpack.c.l.b16 %v3144
    %v3200 = vunpack.c.h.b16 %v3144
    %v3201 = vunpack.c.l.b16 %v3145
    %v3202 = vunpack.c.l.b16 %v3146
    %v3203 = vunpack.c.h.b16 %v3146
    %v3204 = vunpack.c.l.b16 %v3147
    %v3205 = vunpack.c.h.b16 %v3147
    %v3206 = vunpack.c.l.b16 %v3148
    %v3207 = vunpack.c.l.b16 %v3149
    %v3208 = vunpack.c.h.b16 %v3149
    %v3209 = vunpack.c.l.b16 %v3150
    %v3210 = vunpack.c.h.b16 %v3150
    %v3211 = vunpack.c.l.b16 %v3151
    %v3212 = vunpack.c.l.b16 %v3152
    %v3213 = vunpack.c.h.b16 %v3152
    %v3214 = vunpack.c.l.b16 %v3153
    %v3215 = vunpack.c.h.b16 %v3153
    %v3216 = vunpack.c.l.b16 %v3154
    %v3217 = vunpack.c.l.b16 %v3155
    %v3218 = vunpack.c.h.b16 %v3155
    %v3219 = vunpack.c.l.b16 %v3156
    %v3220 = vunpack.c.h.b16 %v3156
    %v3221 = vunpack.c.l.b16 %v3157
    %v3222 = vpack.c.b16 %v3187, %v3182
    %v3223 = vpack.c.b16 %v3188, %v3183
    %v3224 = vpack.c.b16 %v3189, %v3184
    %v3225 = vpack.c.b16 %v3190, %v3185
    %v3226 = vpack.c.b16 %v3191, %v3186
    %v3227 = vpack.c.b16 %v3197, %v3192
    %v3228 = vpack.c.b16 %v3198, %v3193
    %v3229 = vpack.c.b16 %v3199, %v3194
    %v3230 = vpack.c.b16 %v3200, %v3195
    %v3231 = vpack.c.b16 %v3201, %v3196
    %v3232 = vpack.c.b16 %v3207, %v3202
    %v3233 = vpack.c.b16 %v3208, %v3203
    %v3234 = vpack.c.b16 %v3209, %v3204
    %v3235 = vpack.c.b16 %v3210, %v3205
    %v3236 = vpack.c.b16 %v3211, %v3206
    %v3237 = vpack.c.b16 %v3217, %v3212
    %v3238 = vpack.c.b16 %v3218, %v3213
    %v3239 = vpack.c.b16 %v3219, %v3214
    %v3240 = vpack.c.b16 %v3220, %v3215
    %v3241 = vpack.c.b16 %v3221, %v3216
    %v3263 = vsel %vm1451, %v3132, 0
    %3265 = vmatprep.subr.bf16.mxu0 0
    %3266 = vmatpush1.bf16.msra.mxu0 0
    %3267 = vmatprep.subr.bf16.mxu0 0
    %3268 = vmatpush1.bf16.msra.mxu0 0
    %3269 = vmatprep.subr.bf16.mxu0 0
    %3270 = vmatpush1.bf16.msra.mxu0 0
    %3271 = vmatprep.subr.bf16.mxu0 0
    %3272 = vmatpush1.bf16.msra.mxu0 0
    %3273 = vmatprep.subr.bf16.mxu0 %v3238
    %3274 = vmatpush1.bf16.msra.mxu0 %v3237
    %3275 = vmatprep.subr.bf16.mxu0 %v3233
    %3276 = vmatpush1.bf16.msra.mxu0 %v3232
    %3277 = vmatprep.subr.bf16.mxu0 %v3228
    %3278 = vmatpush1.bf16.msra.mxu0 %v3227
    %3279 = vmatprep.subr.bf16.mxu0 %v3223
    %3280 = vmatpush1.bf16.msra.mxu0 %v3222
    %3281 = vmatprep.subr.bf16.mxu0 0
    %3282 = vmatpush2.bf16.msra.mxu0 0
    %3283 = vmatprep.subr.bf16.mxu0 0
    %3284 = vmatpush2.bf16.msra.mxu0 0
    %3285 = vmatprep.subr.bf16.mxu0 0
    %3286 = vmatpush2.bf16.msra.mxu0 0
    %3287 = vmatprep.subr.bf16.mxu0 0
    %3288 = vmatpush2.bf16.msra.mxu0 0
    %3289 = vmatprep.subr.bf16.mxu0 0
    %3290 = vmatpush2.bf16.msra.mxu0 0
    %3291 = vmatprep.subr.bf16.mxu0 0
    %3292 = vmatpush2.bf16.msra.mxu0 0
    %3293 = vmatprep.subr.bf16.mxu0 0
    %3294 = vmatpush2.bf16.msra.mxu0 0
    %3295 = vmatprep.subr.bf16.mxu0 0
    %3296 = vmatpush2.bf16.msra.mxu0 0
    %3297 = vmatprep.mubr.bf16.mxu0 0
    %3298 = vmatmul.mubr.bf16.gmra.mxu0 %v3263
    %v3299 = vpop.f32.mrf.mxu0
    %v3300 = vadd.f32 0.0, %v3299
    %v3301 = vpop.f32.mrf.mxu0
    %v3302 = vadd.f32 0.0, %v3301
    %v3303 = vpop.f32.mrf.mxu0
    %v3304 = vpop.f32.mrf.mxu0
    %3305 = vdwg.mxu0
    %3306 = vmatprep.subr.bf16.mxu0 0
    %3307 = vmatpush1.bf16.msra.mxu0 0
    %3308 = vmatprep.subr.bf16.mxu0 0
    %3309 = vmatpush1.bf16.msra.mxu0 0
    %3310 = vmatprep.subr.bf16.mxu0 0
    %3311 = vmatpush1.bf16.msra.mxu0 0
    %3312 = vmatprep.subr.bf16.mxu0 0
    %3313 = vmatpush1.bf16.msra.mxu0 0
    %3314 = vmatprep.subr.bf16.mxu0 %v3240
    %3315 = vmatpush1.bf16.msra.mxu0 %v3239
    %3316 = vmatprep.subr.bf16.mxu0 %v3235
    %3317 = vmatpush1.bf16.msra.mxu0 %v3234
    %3318 = vmatprep.subr.bf16.mxu0 %v3230
    %3319 = vmatpush1.bf16.msra.mxu0 %v3229
    %3320 = vmatprep.subr.bf16.mxu0 %v3225
    %3321 = vmatpush1.bf16.msra.mxu0 %v3224
    %3322 = vmatprep.subr.bf16.mxu0 0
    %3323 = vmatpush2.bf16.msra.mxu0 0
    %3324 = vmatprep.subr.bf16.mxu0 0
    %3325 = vmatpush2.bf16.msra.mxu0 0
    %3326 = vmatprep.subr.bf16.mxu0 0
    %3327 = vmatpush2.bf16.msra.mxu0 0
    %3328 = vmatprep.subr.bf16.mxu0 0
    %3329 = vmatpush2.bf16.msra.mxu0 0
    %3330 = vmatprep.subr.bf16.mxu0 0
    %3331 = vmatpush2.bf16.msra.mxu0 0
    %3332 = vmatprep.subr.bf16.mxu0 0
    %3333 = vmatpush2.bf16.msra.mxu0 0
    %3334 = vmatprep.subr.bf16.mxu0 0
    %3335 = vmatpush2.bf16.msra.mxu0 0
    %3336 = vmatprep.subr.bf16.mxu0 0
    %3337 = vmatpush2.bf16.msra.mxu0 0
    %3338 = vmatprep.mubr.bf16.mxu0 0
    %3339 = vmatmul.mubr.bf16.gmra.mxu0 %v3263
    %v3340 = vpop.f32.mrf.mxu0
    %v3341 = vadd.f32 0.0, %v3340
    %v3342 = vpop.f32.mrf.mxu0
    %v3343 = vadd.f32 0.0, %v3342
    %v3344 = vpop.f32.mrf.mxu0
    %v3345 = vpop.f32.mrf.mxu0
    %3346 = vdwg.mxu0
    %3347 = vmatprep.subr.bf16.mxu0 0
    %3348 = vmatpush1.bf16.msra.mxu0 0
    %3349 = vmatprep.subr.bf16.mxu0 0
    %3350 = vmatpush1.bf16.msra.mxu0 0
    %3351 = vmatprep.subr.bf16.mxu0 0
    %3352 = vmatpush1.bf16.msra.mxu0 0
    %3353 = vmatprep.subr.bf16.mxu0 0
    %3354 = vmatpush1.bf16.msra.mxu0 0
    %3355 = vmatprep.subr.bf16.mxu0 0
    %3356 = vmatpush1.bf16.msra.mxu0 %v3241
    %3357 = vmatprep.subr.bf16.mxu0 0
    %3358 = vmatpush1.bf16.msra.mxu0 %v3236
    %3359 = vmatprep.subr.bf16.mxu0 0
    %3360 = vmatpush1.bf16.msra.mxu0 %v3231
    %3361 = vmatprep.subr.bf16.mxu0 0
    %3362 = vmatpush1.bf16.msra.mxu0 %v3226
    %3363 = vmatprep.subr.bf16.mxu0 0
    %3364 = vmatpush2.bf16.msra.mxu0 0
    %3365 = vmatprep.subr.bf16.mxu0 0
    %3366 = vmatpush2.bf16.msra.mxu0 0
    %3367 = vmatprep.subr.bf16.mxu0 0
    %3368 = vmatpush2.bf16.msra.mxu0 0
    %3369 = vmatprep.subr.bf16.mxu0 0
    %3370 = vmatpush2.bf16.msra.mxu0 0
    %3371 = vmatprep.subr.bf16.mxu0 0
    %3372 = vmatpush2.bf16.msra.mxu0 0
    %3373 = vmatprep.subr.bf16.mxu0 0
    %3374 = vmatpush2.bf16.msra.mxu0 0
    %3375 = vmatprep.subr.bf16.mxu0 0
    %3376 = vmatpush2.bf16.msra.mxu0 0
    %3377 = vmatprep.subr.bf16.mxu0 0
    %3378 = vmatpush2.bf16.msra.mxu0 0
    %3379 = vmatprep.mubr.bf16.mxu0 0
    %3380 = vmatmul.mubr.bf16.gmra.mxu0 %v3263
    %v3381 = vpop.f32.mrf.mxu0
    %v3382 = vadd.f32 0.0, %v3381
    %v3383 = vpop.f32.mrf.mxu0
    %v3384 = vpop.f32.mrf.mxu0
    %v3385 = vpop.f32.mrf.mxu0
    %3386 = vdwg.mxu0
    %v3387 = vadd.f32 %v3123, %v3300
    %v3388 = vadd.f32 %v3124, %v3302
    %v3389 = vadd.f32 %v3125, %v3341
    %v3390 = vadd.f32 %v3126, %v3343
    %v3391 = vadd.f32 %v3127, %v3382
    %v3392 = vrot.slane %v730, 4
    %v3394 = vrot.slane %v1286, 4
    %v3396 = vsel %vm1291, %v3392, %v3394
    %s3397 = scalar_lea.vmem %s3, 1280
    %v3398 = vld [vmem:[%s3397] sm:$0xff]
    %v3399 = vld [vmem:[%s3397 + $0x8] sm:$0xff]
    %v3400 = vld [vmem:[%s3397 + $0x10] sm:$0xf]
    %v3401 = vld [vmem:[%s3397 + $0x14] sm:$0xff]
    %v3402 = vld [vmem:[%s3397 + $0x1c] sm:$0xff]
    %v3403 = vld [vmem:[%s3397 + $0x24] sm:$0xf]
    %v3404 = vld [vmem:[%s3397 + $0x28] sm:$0xff]
    %v3405 = vld [vmem:[%s3397 + $0x30] sm:$0xff]
    %v3406 = vld [vmem:[%s3397 + $0x38] sm:$0xf]
    %v3407 = vld [vmem:[%s3397 + $0x3c] sm:$0xff]
    %v3408 = vld [vmem:[%s3397 + $0x44] sm:$0xff]
    %v3409 = vld [vmem:[%s3397 + $0x4c] sm:$0xf]
    %v3410 = vld [vmem:[%s3397 + $0x50] sm:$0xff]
    %v3411 = vld [vmem:[%s3397 + $0x58] sm:$0xff]
    %v3412 = vld [vmem:[%s3397 + $0x60] sm:$0xf]
    %v3413 = vld [vmem:[%s3397 + $0x64] sm:$0xff]
    %v3414 = vld [vmem:[%s3397 + $0x6c] sm:$0xff]
    %v3415 = vld [vmem:[%s3397 + $0x74] sm:$0xf]
    %v3416 = vld [vmem:[%s3397 + $0x78] sm:$0xff]
    %v3417 = vld [vmem:[%s3397 + $0x80] sm:$0xff]
    %v3418 = vld [vmem:[%s3397 + $0x88] sm:$0xf]
    %v3419 = vld [vmem:[%s3397 + $0x8c] sm:$0xff]
    %v3420 = vld [vmem:[%s3397 + $0x94] sm:$0xff]
    %v3421 = vld [vmem:[%s3397 + $0x9c] sm:$0xf]
    %v3446 = vunpack.c.l.b16 %v3398
    %v3447 = vunpack.c.h.b16 %v3398
    %v3448 = vunpack.c.l.b16 %v3399
    %v3449 = vunpack.c.h.b16 %v3399
    %v3450 = vunpack.c.l.b16 %v3400
    %v3451 = vunpack.c.l.b16 %v3401
    %v3452 = vunpack.c.h.b16 %v3401
    %v3453 = vunpack.c.l.b16 %v3402
    %v3454 = vunpack.c.h.b16 %v3402
    %v3455 = vunpack.c.l.b16 %v3403
    %v3456 = vunpack.c.l.b16 %v3404
    %v3457 = vunpack.c.h.b16 %v3404
    %v3458 = vunpack.c.l.b16 %v3405
    %v3459 = vunpack.c.h.b16 %v3405
    %v3460 = vunpack.c.l.b16 %v3406
    %v3461 = vunpack.c.l.b16 %v3407
    %v3462 = vunpack.c.h.b16 %v3407
    %v3463 = vunpack.c.l.b16 %v3408
    %v3464 = vunpack.c.h.b16 %v3408
    %v3465 = vunpack.c.l.b16 %v3409
    %v3466 = vunpack.c.l.b16 %v3410
    %v3467 = vunpack.c.h.b16 %v3410
    %v3468 = vunpack.c.l.b16 %v3411
    %v3469 = vunpack.c.h.b16 %v3411
    %v3470 = vunpack.c.l.b16 %v3412
    %v3471 = vunpack.c.l.b16 %v3413
    %v3472 = vunpack.c.h.b16 %v3413
    %v3473 = vunpack.c.l.b16 %v3414
    %v3474 = vunpack.c.h.b16 %v3414
    %v3475 = vunpack.c.l.b16 %v3415
    %v3476 = vunpack.c.l.b16 %v3416
    %v3477 = vunpack.c.h.b16 %v3416
    %v3478 = vunpack.c.l.b16 %v3417
    %v3479 = vunpack.c.h.b16 %v3417
    %v3480 = vunpack.c.l.b16 %v3418
    %v3481 = vunpack.c.l.b16 %v3419
    %v3482 = vunpack.c.h.b16 %v3419
    %v3483 = vunpack.c.l.b16 %v3420
    %v3484 = vunpack.c.h.b16 %v3420
    %v3485 = vunpack.c.l.b16 %v3421
    %v3486 = vpack.c.b16 %v3451, %v3446
    %v3487 = vpack.c.b16 %v3452, %v3447
    %v3488 = vpack.c.b16 %v3453, %v3448
    %v3489 = vpack.c.b16 %v3454, %v3449
    %v3490 = vpack.c.b16 %v3455, %v3450
    %v3491 = vpack.c.b16 %v3461, %v3456
    %v3492 = vpack.c.b16 %v3462, %v3457
    %v3493 = vpack.c.b16 %v3463, %v3458
    %v3494 = vpack.c.b16 %v3464, %v3459
    %v3495 = vpack.c.b16 %v3465, %v3460
    %v3496 = vpack.c.b16 %v3471, %v3466
    %v3497 = vpack.c.b16 %v3472, %v3467
    %v3498 = vpack.c.b16 %v3473, %v3468
    %v3499 = vpack.c.b16 %v3474, %v3469
    %v3500 = vpack.c.b16 %v3475, %v3470
    %v3501 = vpack.c.b16 %v3481, %v3476
    %v3502 = vpack.c.b16 %v3482, %v3477
    %v3503 = vpack.c.b16 %v3483, %v3478
    %v3504 = vpack.c.b16 %v3484, %v3479
    %v3505 = vpack.c.b16 %v3485, %v3480
    %v3527 = vsel %vm1451, %v3396, 0
    %3529 = vmatprep.subr.bf16.mxu0 0
    %3530 = vmatpush1.bf16.msra.mxu0 0
    %3531 = vmatprep.subr.bf16.mxu0 0
    %3532 = vmatpush1.bf16.msra.mxu0 0
    %3533 = vmatprep.subr.bf16.mxu0 0
    %3534 = vmatpush1.bf16.msra.mxu0 0
    %3535 = vmatprep.subr.bf16.mxu0 0
    %3536 = vmatpush1.bf16.msra.mxu0 0
    %3537 = vmatprep.subr.bf16.mxu0 %v3502
    %3538 = vmatpush1.bf16.msra.mxu0 %v3501
    %3539 = vmatprep.subr.bf16.mxu0 %v3497
    %3540 = vmatpush1.bf16.msra.mxu0 %v3496
    %3541 = vmatprep.subr.bf16.mxu0 %v3492
    %3542 = vmatpush1.bf16.msra.mxu0 %v3491
    %3543 = vmatprep.subr.bf16.mxu0 %v3487
    %3544 = vmatpush1.bf16.msra.mxu0 %v3486
    %3545 = vmatprep.subr.bf16.mxu0 0
    %3546 = vmatpush2.bf16.msra.mxu0 0
    %3547 = vmatprep.subr.bf16.mxu0 0
    %3548 = vmatpush2.bf16.msra.mxu0 0
    %3549 = vmatprep.subr.bf16.mxu0 0
    %3550 = vmatpush2.bf16.msra.mxu0 0
    %3551 = vmatprep.subr.bf16.mxu0 0
    %3552 = vmatpush2.bf16.msra.mxu0 0
    %3553 = vmatprep.subr.bf16.mxu0 0
    %3554 = vmatpush2.bf16.msra.mxu0 0
    %3555 = vmatprep.subr.bf16.mxu0 0
    %3556 = vmatpush2.bf16.msra.mxu0 0
    %3557 = vmatprep.subr.bf16.mxu0 0
    %3558 = vmatpush2.bf16.msra.mxu0 0
    %3559 = vmatprep.subr.bf16.mxu0 0
    %3560 = vmatpush2.bf16.msra.mxu0 0
    %3561 = vmatprep.mubr.bf16.mxu0 0
    %3562 = vmatmul.mubr.bf16.gmra.mxu0 %v3527
    %v3563 = vpop.f32.mrf.mxu0
    %v3564 = vadd.f32 0.0, %v3563
    %v3565 = vpop.f32.mrf.mxu0
    %v3566 = vadd.f32 0.0, %v3565
    %v3567 = vpop.f32.mrf.mxu0
    %v3568 = vpop.f32.mrf.mxu0
    %3569 = vdwg.mxu0
    %3570 = vmatprep.subr.bf16.mxu0 0
    %3571 = vmatpush1.bf16.msra.mxu0 0
    %3572 = vmatprep.subr.bf16.mxu0 0
    %3573 = vmatpush1.bf16.msra.mxu0 0
    %3574 = vmatprep.subr.bf16.mxu0 0
    %3575 = vmatpush1.bf16.msra.mxu0 0
    %3576 = vmatprep.subr.bf16.mxu0 0
    %3577 = vmatpush1.bf16.msra.mxu0 0
    %3578 = vmatprep.subr.bf16.mxu0 %v3504
    %3579 = vmatpush1.bf16.msra.mxu0 %v3503
    %3580 = vmatprep.subr.bf16.mxu0 %v3499
    %3581 = vmatpush1.bf16.msra.mxu0 %v3498
    %3582 = vmatprep.subr.bf16.mxu0 %v3494
    %3583 = vmatpush1.bf16.msra.mxu0 %v3493
    %3584 = vmatprep.subr.bf16.mxu0 %v3489
    %3585 = vmatpush1.bf16.msra.mxu0 %v3488
    %3586 = vmatprep.subr.bf16.mxu0 0
    %3587 = vmatpush2.bf16.msra.mxu0 0
    %3588 = vmatprep.subr.bf16.mxu0 0
    %3589 = vmatpush2.bf16.msra.mxu0 0
    %3590 = vmatprep.subr.bf16.mxu0 0
    %3591 = vmatpush2.bf16.msra.mxu0 0
    %3592 = vmatprep.subr.bf16.mxu0 0
    %3593 = vmatpush2.bf16.msra.mxu0 0
    %3594 = vmatprep.subr.bf16.mxu0 0
    %3595 = vmatpush2.bf16.msra.mxu0 0
    %3596 = vmatprep.subr.bf16.mxu0 0
    %3597 = vmatpush2.bf16.msra.mxu0 0
    %3598 = vmatprep.subr.bf16.mxu0 0
    %3599 = vmatpush2.bf16.msra.mxu0 0
    %3600 = vmatprep.subr.bf16.mxu0 0
    %3601 = vmatpush2.bf16.msra.mxu0 0
    %3602 = vmatprep.mubr.bf16.mxu0 0
    %3603 = vmatmul.mubr.bf16.gmra.mxu0 %v3527
    %v3604 = vpop.f32.mrf.mxu0
    %v3605 = vadd.f32 0.0, %v3604
    %v3606 = vpop.f32.mrf.mxu0
    %v3607 = vadd.f32 0.0, %v3606
    %v3608 = vpop.f32.mrf.mxu0
    %v3609 = vpop.f32.mrf.mxu0
    %3610 = vdwg.mxu0
    %3611 = vmatprep.subr.bf16.mxu0 0
    %3612 = vmatpush1.bf16.msra.mxu0 0
    %3613 = vmatprep.subr.bf16.mxu0 0
    %3614 = vmatpush1.bf16.msra.mxu0 0
    %3615 = vmatprep.subr.bf16.mxu0 0
    %3616 = vmatpush1.bf16.msra.mxu0 0
    %3617 = vmatprep.subr.bf16.mxu0 0
    %3618 = vmatpush1.bf16.msra.mxu0 0
    %3619 = vmatprep.subr.bf16.mxu0 0
    %3620 = vmatpush1.bf16.msra.mxu0 %v3505
    %3621 = vmatprep.subr.bf16.mxu0 0
    %3622 = vmatpush1.bf16.msra.mxu0 %v3500
    %3623 = vmatprep.subr.bf16.mxu0 0
    %3624 = vmatpush1.bf16.msra.mxu0 %v3495
    %3625 = vmatprep.subr.bf16.mxu0 0
    %3626 = vmatpush1.bf16.msra.mxu0 %v3490
    %3627 = vmatprep.subr.bf16.mxu0 0
    %3628 = vmatpush2.bf16.msra.mxu0 0
    %3629 = vmatprep.subr.bf16.mxu0 0
    %3630 = vmatpush2.bf16.msra.mxu0 0
    %3631 = vmatprep.subr.bf16.mxu0 0
    %3632 = vmatpush2.bf16.msra.mxu0 0
    %3633 = vmatprep.subr.bf16.mxu0 0
    %3634 = vmatpush2.bf16.msra.mxu0 0
    %3635 = vmatprep.subr.bf16.mxu0 0
    %3636 = vmatpush2.bf16.msra.mxu0 0
    %3637 = vmatprep.subr.bf16.mxu0 0
    %3638 = vmatpush2.bf16.msra.mxu0 0
    %3639 = vmatprep.subr.bf16.mxu0 0
    %3640 = vmatpush2.bf16.msra.mxu0 0
    %3641 = vmatprep.subr.bf16.mxu0 0
    %3642 = vmatpush2.bf16.msra.mxu0 0
    %3643 = vmatprep.mubr.bf16.mxu0 0
    %3644 = vmatmul.mubr.bf16.gmra.mxu0 %v3527
    %v3645 = vpop.f32.mrf.mxu0
    %v3646 = vadd.f32 0.0, %v3645
    %v3647 = vpop.f32.mrf.mxu0
    %v3648 = vpop.f32.mrf.mxu0
    %v3649 = vpop.f32.mrf.mxu0
    %3650 = vdwg.mxu0
    %v3651 = vadd.f32 %v3387, %v3564
    %v3652 = vadd.f32 %v3388, %v3566
    %v3653 = vadd.f32 %v3389, %v3605
    %v3654 = vadd.f32 %v3390, %v3607
    %v3655 = vadd.f32 %v3391, %v3646
    %v3656 = vrot.slane %v1318, 4
    %v3658 = vrot.slane %v1283, 4
    %v3660 = vsel %vm1291, %v3656, %v3658
    %s3661 = scalar_lea.vmem %s3, 1440
    %v3662 = vld [vmem:[%s3661] sm:$0xff]
    %v3663 = vld [vmem:[%s3661 + $0x8] sm:$0xff]
    %v3664 = vld [vmem:[%s3661 + $0x10] sm:$0xf]
    %v3665 = vld [vmem:[%s3661 + $0x14] sm:$0xff]
    %v3666 = vld [vmem:[%s3661 + $0x1c] sm:$0xff]
    %v3667 = vld [vmem:[%s3661 + $0x24] sm:$0xf]
    %v3668 = vld [vmem:[%s3661 + $0x28] sm:$0xff]
    %v3669 = vld [vmem:[%s3661 + $0x30] sm:$0xff]
    %v3670 = vld [vmem:[%s3661 + $0x38] sm:$0xf]
    %v3671 = vld [vmem:[%s3661 + $0x3c] sm:$0xff]
    %v3672 = vld [vmem:[%s3661 + $0x44] sm:$0xff]
    %v3673 = vld [vmem:[%s3661 + $0x4c] sm:$0xf]
    %v3674 = vld [vmem:[%s3661 + $0x50] sm:$0xff]
    %v3675 = vld [vmem:[%s3661 + $0x58] sm:$0xff]
    %v3676 = vld [vmem:[%s3661 + $0x60] sm:$0xf]
    %v3677 = vld [vmem:[%s3661 + $0x64] sm:$0xff]
    %v3678 = vld [vmem:[%s3661 + $0x6c] sm:$0xff]
    %v3679 = vld [vmem:[%s3661 + $0x74] sm:$0xf]
    %v3680 = vld [vmem:[%s3661 + $0x78] sm:$0xff]
    %v3681 = vld [vmem:[%s3661 + $0x80] sm:$0xff]
    %v3682 = vld [vmem:[%s3661 + $0x88] sm:$0xf]
    %v3683 = vld [vmem:[%s3661 + $0x8c] sm:$0xff]
    %v3684 = vld [vmem:[%s3661 + $0x94] sm:$0xff]
    %v3685 = vld [vmem:[%s3661 + $0x9c] sm:$0xf]
    %v3710 = vunpack.c.l.b16 %v3662
    %v3711 = vunpack.c.h.b16 %v3662
    %v3712 = vunpack.c.l.b16 %v3663
    %v3713 = vunpack.c.h.b16 %v3663
    %v3714 = vunpack.c.l.b16 %v3664
    %v3715 = vunpack.c.l.b16 %v3665
    %v3716 = vunpack.c.h.b16 %v3665
    %v3717 = vunpack.c.l.b16 %v3666
    %v3718 = vunpack.c.h.b16 %v3666
    %v3719 = vunpack.c.l.b16 %v3667
    %v3720 = vunpack.c.l.b16 %v3668
    %v3721 = vunpack.c.h.b16 %v3668
    %v3722 = vunpack.c.l.b16 %v3669
    %v3723 = vunpack.c.h.b16 %v3669
    %v3724 = vunpack.c.l.b16 %v3670
    %v3725 = vunpack.c.l.b16 %v3671
    %v3726 = vunpack.c.h.b16 %v3671
    %v3727 = vunpack.c.l.b16 %v3672
    %v3728 = vunpack.c.h.b16 %v3672
    %v3729 = vunpack.c.l.b16 %v3673
    %v3730 = vunpack.c.l.b16 %v3674
    %v3731 = vunpack.c.h.b16 %v3674
    %v3732 = vunpack.c.l.b16 %v3675
    %v3733 = vunpack.c.h.b16 %v3675
    %v3734 = vunpack.c.l.b16 %v3676
    %v3735 = vunpack.c.l.b16 %v3677
    %v3736 = vunpack.c.h.b16 %v3677
    %v3737 = vunpack.c.l.b16 %v3678
    %v3738 = vunpack.c.h.b16 %v3678
    %v3739 = vunpack.c.l.b16 %v3679
    %v3740 = vunpack.c.l.b16 %v3680
    %v3741 = vunpack.c.h.b16 %v3680
    %v3742 = vunpack.c.l.b16 %v3681
    %v3743 = vunpack.c.h.b16 %v3681
    %v3744 = vunpack.c.l.b16 %v3682
    %v3745 = vunpack.c.l.b16 %v3683
    %v3746 = vunpack.c.h.b16 %v3683
    %v3747 = vunpack.c.l.b16 %v3684
    %v3748 = vunpack.c.h.b16 %v3684
    %v3749 = vunpack.c.l.b16 %v3685
    %v3750 = vpack.c.b16 %v3715, %v3710
    %v3751 = vpack.c.b16 %v3716, %v3711
    %v3752 = vpack.c.b16 %v3717, %v3712
    %v3753 = vpack.c.b16 %v3718, %v3713
    %v3754 = vpack.c.b16 %v3719, %v3714
    %v3755 = vpack.c.b16 %v3725, %v3720
    %v3756 = vpack.c.b16 %v3726, %v3721
    %v3757 = vpack.c.b16 %v3727, %v3722
    %v3758 = vpack.c.b16 %v3728, %v3723
    %v3759 = vpack.c.b16 %v3729, %v3724
    %v3760 = vpack.c.b16 %v3735, %v3730
    %v3761 = vpack.c.b16 %v3736, %v3731
    %v3762 = vpack.c.b16 %v3737, %v3732
    %v3763 = vpack.c.b16 %v3738, %v3733
    %v3764 = vpack.c.b16 %v3739, %v3734
    %v3765 = vpack.c.b16 %v3745, %v3740
    %v3766 = vpack.c.b16 %v3746, %v3741
    %v3767 = vpack.c.b16 %v3747, %v3742
    %v3768 = vpack.c.b16 %v3748, %v3743
    %v3769 = vpack.c.b16 %v3749, %v3744
    %v3791 = vsel %vm1451, %v3660, 0
    %3793 = vmatprep.subr.bf16.mxu0 0
    %3794 = vmatpush1.bf16.msra.mxu0 0
    %3795 = vmatprep.subr.bf16.mxu0 0
    %3796 = vmatpush1.bf16.msra.mxu0 0
    %3797 = vmatprep.subr.bf16.mxu0 0
    %3798 = vmatpush1.bf16.msra.mxu0 0
    %3799 = vmatprep.subr.bf16.mxu0 0
    %3800 = vmatpush1.bf16.msra.mxu0 0
    %3801 = vmatprep.subr.bf16.mxu0 %v3766
    %3802 = vmatpush1.bf16.msra.mxu0 %v3765
    %3803 = vmatprep.subr.bf16.mxu0 %v3761
    %3804 = vmatpush1.bf16.msra.mxu0 %v3760
    %3805 = vmatprep.subr.bf16.mxu0 %v3756
    %3806 = vmatpush1.bf16.msra.mxu0 %v3755
    %3807 = vmatprep.subr.bf16.mxu0 %v3751
    %3808 = vmatpush1.bf16.msra.mxu0 %v3750
    %3809 = vmatprep.subr.bf16.mxu0 0
    %3810 = vmatpush2.bf16.msra.mxu0 0
    %3811 = vmatprep.subr.bf16.mxu0 0
    %3812 = vmatpush2.bf16.msra.mxu0 0
    %3813 = vmatprep.subr.bf16.mxu0 0
    %3814 = vmatpush2.bf16.msra.mxu0 0
    %3815 = vmatprep.subr.bf16.mxu0 0
    %3816 = vmatpush2.bf16.msra.mxu0 0
    %3817 = vmatprep.subr.bf16.mxu0 0
    %3818 = vmatpush2.bf16.msra.mxu0 0
    %3819 = vmatprep.subr.bf16.mxu0 0
    %3820 = vmatpush2.bf16.msra.mxu0 0
    %3821 = vmatprep.subr.bf16.mxu0 0
    %3822 = vmatpush2.bf16.msra.mxu0 0
    %3823 = vmatprep.subr.bf16.mxu0 0
    %3824 = vmatpush2.bf16.msra.mxu0 0
    %3825 = vmatprep.mubr.bf16.mxu0 0
    %3826 = vmatmul.mubr.bf16.gmra.mxu0 %v3791
    %v3827 = vpop.f32.mrf.mxu0
    %v3828 = vadd.f32 0.0, %v3827
    %v3829 = vpop.f32.mrf.mxu0
    %v3830 = vadd.f32 0.0, %v3829
    %v3831 = vpop.f32.mrf.mxu0
    %v3832 = vpop.f32.mrf.mxu0
    %3833 = vdwg.mxu0
    %3834 = vmatprep.subr.bf16.mxu0 0
    %3835 = vmatpush1.bf16.msra.mxu0 0
    %3836 = vmatprep.subr.bf16.mxu0 0
    %3837 = vmatpush1.bf16.msra.mxu0 0
    %3838 = vmatprep.subr.bf16.mxu0 0
    %3839 = vmatpush1.bf16.msra.mxu0 0
    %3840 = vmatprep.subr.bf16.mxu0 0
    %3841 = vmatpush1.bf16.msra.mxu0 0
    %3842 = vmatprep.subr.bf16.mxu0 %v3768
    %3843 = vmatpush1.bf16.msra.mxu0 %v3767
    %3844 = vmatprep.subr.bf16.mxu0 %v3763
    %3845 = vmatpush1.bf16.msra.mxu0 %v3762
    %3846 = vmatprep.subr.bf16.mxu0 %v3758
    %3847 = vmatpush1.bf16.msra.mxu0 %v3757
    %3848 = vmatprep.subr.bf16.mxu0 %v3753
    %3849 = vmatpush1.bf16.msra.mxu0 %v3752
    %3850 = vmatprep.subr.bf16.mxu0 0
    %3851 = vmatpush2.bf16.msra.mxu0 0
    %3852 = vmatprep.subr.bf16.mxu0 0
    %3853 = vmatpush2.bf16.msra.mxu0 0
    %3854 = vmatprep.subr.bf16.mxu0 0
    %3855 = vmatpush2.bf16.msra.mxu0 0
    %3856 = vmatprep.subr.bf16.mxu0 0
    %3857 = vmatpush2.bf16.msra.mxu0 0
    %3858 = vmatprep.subr.bf16.mxu0 0
    %3859 = vmatpush2.bf16.msra.mxu0 0
    %3860 = vmatprep.subr.bf16.mxu0 0
    %3861 = vmatpush2.bf16.msra.mxu0 0
    %3862 = vmatprep.subr.bf16.mxu0 0
    %3863 = vmatpush2.bf16.msra.mxu0 0
    %3864 = vmatprep.subr.bf16.mxu0 0
    %3865 = vmatpush2.bf16.msra.mxu0 0
    %3866 = vmatprep.mubr.bf16.mxu0 0
    %3867 = vmatmul.mubr.bf16.gmra.mxu0 %v3791
    %v3868 = vpop.f32.mrf.mxu0
    %v3869 = vadd.f32 0.0, %v3868
    %v3870 = vpop.f32.mrf.mxu0
    %v3871 = vadd.f32 0.0, %v3870
    %v3872 = vpop.f32.mrf.mxu0
    %v3873 = vpop.f32.mrf.mxu0
    %3874 = vdwg.mxu0
    %3875 = vmatprep.subr.bf16.mxu0 0
    %3876 = vmatpush1.bf16.msra.mxu0 0
    %3877 = vmatprep.subr.bf16.mxu0 0
    %3878 = vmatpush1.bf16.msra.mxu0 0
    %3879 = vmatprep.subr.bf16.mxu0 0
    %3880 = vmatpush1.bf16.msra.mxu0 0
    %3881 = vmatprep.subr.bf16.mxu0 0
    %3882 = vmatpush1.bf16.msra.mxu0 0
    %3883 = vmatprep.subr.bf16.mxu0 0
    %3884 = vmatpush1.bf16.msra.mxu0 %v3769
    %3885 = vmatprep.subr.bf16.mxu0 0
    %3886 = vmatpush1.bf16.msra.mxu0 %v3764
    %3887 = vmatprep.subr.bf16.mxu0 0
    %3888 = vmatpush1.bf16.msra.mxu0 %v3759
    %3889 = vmatprep.subr.bf16.mxu0 0
    %3890 = vmatpush1.bf16.msra.mxu0 %v3754
    %3891 = vmatprep.subr.bf16.mxu0 0
    %3892 = vmatpush2.bf16.msra.mxu0 0
    %3893 = vmatprep.subr.bf16.mxu0 0
    %3894 = vmatpush2.bf16.msra.mxu0 0
    %3895 = vmatprep.subr.bf16.mxu0 0
    %3896 = vmatpush2.bf16.msra.mxu0 0
    %3897 = vmatprep.subr.bf16.mxu0 0
    %3898 = vmatpush2.bf16.msra.mxu0 0
    %3899 = vmatprep.subr.bf16.mxu0 0
    %3900 = vmatpush2.bf16.msra.mxu0 0
    %3901 = vmatprep.subr.bf16.mxu0 0
    %3902 = vmatpush2.bf16.msra.mxu0 0
    %3903 = vmatprep.subr.bf16.mxu0 0
    %3904 = vmatpush2.bf16.msra.mxu0 0
    %3905 = vmatprep.subr.bf16.mxu0 0
    %3906 = vmatpush2.bf16.msra.mxu0 0
    %3907 = vmatprep.mubr.bf16.mxu0 0
    %3908 = vmatmul.mubr.bf16.gmra.mxu0 %v3791
    %v3909 = vpop.f32.mrf.mxu0
    %v3910 = vadd.f32 0.0, %v3909
    %v3911 = vpop.f32.mrf.mxu0
    %v3912 = vpop.f32.mrf.mxu0
    %v3913 = vpop.f32.mrf.mxu0
    %3914 = vdwg.mxu0
    %v3915 = vadd.f32 %v3651, %v3828
    %v3916 = vadd.f32 %v3652, %v3830
    %v3917 = vadd.f32 %v3653, %v3869
    %v3918 = vadd.f32 %v3654, %v3871
    %v3919 = vadd.f32 %v3655, %v3910
    %v3920 = vrot.slane %v730, 5
    %v3922 = vrot.slane %v1286, 5
    %v3924 = vsel %vm1291, %v3920, %v3922
    %s3925 = scalar_lea.vmem %s3, 1600
    %v3926 = vld [vmem:[%s3925] sm:$0xff]
    %v3927 = vld [vmem:[%s3925 + $0x8] sm:$0xff]
    %v3928 = vld [vmem:[%s3925 + $0x10] sm:$0xf]
    %v3929 = vld [vmem:[%s3925 + $0x14] sm:$0xff]
    %v3930 = vld [vmem:[%s3925 + $0x1c] sm:$0xff]
    %v3931 = vld [vmem:[%s3925 + $0x24] sm:$0xf]
    %v3932 = vld [vmem:[%s3925 + $0x28] sm:$0xff]
    %v3933 = vld [vmem:[%s3925 + $0x30] sm:$0xff]
    %v3934 = vld [vmem:[%s3925 + $0x38] sm:$0xf]
    %v3935 = vld [vmem:[%s3925 + $0x3c] sm:$0xff]
    %v3936 = vld [vmem:[%s3925 + $0x44] sm:$0xff]
    %v3937 = vld [vmem:[%s3925 + $0x4c] sm:$0xf]
    %v3938 = vld [vmem:[%s3925 + $0x50] sm:$0xff]
    %v3939 = vld [vmem:[%s3925 + $0x58] sm:$0xff]
    %v3940 = vld [vmem:[%s3925 + $0x60] sm:$0xf]
    %v3941 = vld [vmem:[%s3925 + $0x64] sm:$0xff]
    %v3942 = vld [vmem:[%s3925 + $0x6c] sm:$0xff]
    %v3943 = vld [vmem:[%s3925 + $0x74] sm:$0xf]
    %v3944 = vld [vmem:[%s3925 + $0x78] sm:$0xff]
    %v3945 = vld [vmem:[%s3925 + $0x80] sm:$0xff]
    %v3946 = vld [vmem:[%s3925 + $0x88] sm:$0xf]
    %v3947 = vld [vmem:[%s3925 + $0x8c] sm:$0xff]
    %v3948 = vld [vmem:[%s3925 + $0x94] sm:$0xff]
    %v3949 = vld [vmem:[%s3925 + $0x9c] sm:$0xf]
    %v3974 = vunpack.c.l.b16 %v3926
    %v3975 = vunpack.c.h.b16 %v3926
    %v3976 = vunpack.c.l.b16 %v3927
    %v3977 = vunpack.c.h.b16 %v3927
    %v3978 = vunpack.c.l.b16 %v3928
    %v3979 = vunpack.c.l.b16 %v3929
    %v3980 = vunpack.c.h.b16 %v3929
    %v3981 = vunpack.c.l.b16 %v3930
    %v3982 = vunpack.c.h.b16 %v3930
    %v3983 = vunpack.c.l.b16 %v3931
    %v3984 = vunpack.c.l.b16 %v3932
    %v3985 = vunpack.c.h.b16 %v3932
    %v3986 = vunpack.c.l.b16 %v3933
    %v3987 = vunpack.c.h.b16 %v3933
    %v3988 = vunpack.c.l.b16 %v3934
    %v3989 = vunpack.c.l.b16 %v3935
    %v3990 = vunpack.c.h.b16 %v3935
    %v3991 = vunpack.c.l.b16 %v3936
    %v3992 = vunpack.c.h.b16 %v3936
    %v3993 = vunpack.c.l.b16 %v3937
    %v3994 = vunpack.c.l.b16 %v3938
    %v3995 = vunpack.c.h.b16 %v3938
    %v3996 = vunpack.c.l.b16 %v3939
    %v3997 = vunpack.c.h.b16 %v3939
    %v3998 = vunpack.c.l.b16 %v3940
    %v3999 = vunpack.c.l.b16 %v3941
    %v4000 = vunpack.c.h.b16 %v3941
    %v4001 = vunpack.c.l.b16 %v3942
    %v4002 = vunpack.c.h.b16 %v3942
    %v4003 = vunpack.c.l.b16 %v3943
    %v4004 = vunpack.c.l.b16 %v3944
    %v4005 = vunpack.c.h.b16 %v3944
    %v4006 = vunpack.c.l.b16 %v3945
    %v4007 = vunpack.c.h.b16 %v3945
    %v4008 = vunpack.c.l.b16 %v3946
    %v4009 = vunpack.c.l.b16 %v3947
    %v4010 = vunpack.c.h.b16 %v3947
    %v4011 = vunpack.c.l.b16 %v3948
    %v4012 = vunpack.c.h.b16 %v3948
    %v4013 = vunpack.c.l.b16 %v3949
    %v4014 = vpack.c.b16 %v3979, %v3974
    %v4015 = vpack.c.b16 %v3980, %v3975
    %v4016 = vpack.c.b16 %v3981, %v3976
    %v4017 = vpack.c.b16 %v3982, %v3977
    %v4018 = vpack.c.b16 %v3983, %v3978
    %v4019 = vpack.c.b16 %v3989, %v3984
    %v4020 = vpack.c.b16 %v3990, %v3985
    %v4021 = vpack.c.b16 %v3991, %v3986
    %v4022 = vpack.c.b16 %v3992, %v3987
    %v4023 = vpack.c.b16 %v3993, %v3988
    %v4024 = vpack.c.b16 %v3999, %v3994
    %v4025 = vpack.c.b16 %v4000, %v3995
    %v4026 = vpack.c.b16 %v4001, %v3996
    %v4027 = vpack.c.b16 %v4002, %v3997
    %v4028 = vpack.c.b16 %v4003, %v3998
    %v4029 = vpack.c.b16 %v4009, %v4004
    %v4030 = vpack.c.b16 %v4010, %v4005
    %v4031 = vpack.c.b16 %v4011, %v4006
    %v4032 = vpack.c.b16 %v4012, %v4007
    %v4033 = vpack.c.b16 %v4013, %v4008
    %v4055 = vsel %vm1451, %v3924, 0
    %4057 = vmatprep.subr.bf16.mxu0 0
    %4058 = vmatpush1.bf16.msra.mxu0 0
    %4059 = vmatprep.subr.bf16.mxu0 0
    %4060 = vmatpush1.bf16.msra.mxu0 0
    %4061 = vmatprep.subr.bf16.mxu0 0
    %4062 = vmatpush1.bf16.msra.mxu0 0
    %4063 = vmatprep.subr.bf16.mxu0 0
    %4064 = vmatpush1.bf16.msra.mxu0 0
    %4065 = vmatprep.subr.bf16.mxu0 %v4030
    %4066 = vmatpush1.bf16.msra.mxu0 %v4029
    %4067 = vmatprep.subr.bf16.mxu0 %v4025
    %4068 = vmatpush1.bf16.msra.mxu0 %v4024
    %4069 = vmatprep.subr.bf16.mxu0 %v4020
    %4070 = vmatpush1.bf16.msra.mxu0 %v4019
    %4071 = vmatprep.subr.bf16.mxu0 %v4015
    %4072 = vmatpush1.bf16.msra.mxu0 %v4014
    %4073 = vmatprep.subr.bf16.mxu0 0
    %4074 = vmatpush2.bf16.msra.mxu0 0
    %4075 = vmatprep.subr.bf16.mxu0 0
    %4076 = vmatpush2.bf16.msra.mxu0 0
    %4077 = vmatprep.subr.bf16.mxu0 0
    %4078 = vmatpush2.bf16.msra.mxu0 0
    %4079 = vmatprep.subr.bf16.mxu0 0
    %4080 = vmatpush2.bf16.msra.mxu0 0
    %4081 = vmatprep.subr.bf16.mxu0 0
    %4082 = vmatpush2.bf16.msra.mxu0 0
    %4083 = vmatprep.subr.bf16.mxu0 0
    %4084 = vmatpush2.bf16.msra.mxu0 0
    %4085 = vmatprep.subr.bf16.mxu0 0
    %4086 = vmatpush2.bf16.msra.mxu0 0
    %4087 = vmatprep.subr.bf16.mxu0 0
    %4088 = vmatpush2.bf16.msra.mxu0 0
    %4089 = vmatprep.mubr.bf16.mxu0 0
    %4090 = vmatmul.mubr.bf16.gmra.mxu0 %v4055
    %v4091 = vpop.f32.mrf.mxu0
    %v4092 = vadd.f32 0.0, %v4091
    %v4093 = vpop.f32.mrf.mxu0
    %v4094 = vadd.f32 0.0, %v4093
    %v4095 = vpop.f32.mrf.mxu0
    %v4096 = vpop.f32.mrf.mxu0
    %4097 = vdwg.mxu0
    %4098 = vmatprep.subr.bf16.mxu0 0
    %4099 = vmatpush1.bf16.msra.mxu0 0
    %4100 = vmatprep.subr.bf16.mxu0 0
    %4101 = vmatpush1.bf16.msra.mxu0 0
    %4102 = vmatprep.subr.bf16.mxu0 0
    %4103 = vmatpush1.bf16.msra.mxu0 0
    %4104 = vmatprep.subr.bf16.mxu0 0
    %4105 = vmatpush1.bf16.msra.mxu0 0
    %4106 = vmatprep.subr.bf16.mxu0 %v4032
    %4107 = vmatpush1.bf16.msra.mxu0 %v4031
    %4108 = vmatprep.subr.bf16.mxu0 %v4027
    %4109 = vmatpush1.bf16.msra.mxu0 %v4026
    %4110 = vmatprep.subr.bf16.mxu0 %v4022
    %4111 = vmatpush1.bf16.msra.mxu0 %v4021
    %4112 = vmatprep.subr.bf16.mxu0 %v4017
    %4113 = vmatpush1.bf16.msra.mxu0 %v4016
    %4114 = vmatprep.subr.bf16.mxu0 0
    %4115 = vmatpush2.bf16.msra.mxu0 0
    %4116 = vmatprep.subr.bf16.mxu0 0
    %4117 = vmatpush2.bf16.msra.mxu0 0
    %4118 = vmatprep.subr.bf16.mxu0 0
    %4119 = vmatpush2.bf16.msra.mxu0 0
    %4120 = vmatprep.subr.bf16.mxu0 0
    %4121 = vmatpush2.bf16.msra.mxu0 0
    %4122 = vmatprep.subr.bf16.mxu0 0
    %4123 = vmatpush2.bf16.msra.mxu0 0
    %4124 = vmatprep.subr.bf16.mxu0 0
    %4125 = vmatpush2.bf16.msra.mxu0 0
    %4126 = vmatprep.subr.bf16.mxu0 0
    %4127 = vmatpush2.bf16.msra.mxu0 0
    %4128 = vmatprep.subr.bf16.mxu0 0
    %4129 = vmatpush2.bf16.msra.mxu0 0
    %4130 = vmatprep.mubr.bf16.mxu0 0
    %4131 = vmatmul.mubr.bf16.gmra.mxu0 %v4055
    %v4132 = vpop.f32.mrf.mxu0
    %v4133 = vadd.f32 0.0, %v4132
    %v4134 = vpop.f32.mrf.mxu0
    %v4135 = vadd.f32 0.0, %v4134
    %v4136 = vpop.f32.mrf.mxu0
    %v4137 = vpop.f32.mrf.mxu0
    %4138 = vdwg.mxu0
    %4139 = vmatprep.subr.bf16.mxu0 0
    %4140 = vmatpush1.bf16.msra.mxu0 0
    %4141 = vmatprep.subr.bf16.mxu0 0
    %4142 = vmatpush1.bf16.msra.mxu0 0
    %4143 = vmatprep.subr.bf16.mxu0 0
    %4144 = vmatpush1.bf16.msra.mxu0 0
    %4145 = vmatprep.subr.bf16.mxu0 0
    %4146 = vmatpush1.bf16.msra.mxu0 0
    %4147 = vmatprep.subr.bf16.mxu0 0
    %4148 = vmatpush1.bf16.msra.mxu0 %v4033
    %4149 = vmatprep.subr.bf16.mxu0 0
    %4150 = vmatpush1.bf16.msra.mxu0 %v4028
    %4151 = vmatprep.subr.bf16.mxu0 0
    %4152 = vmatpush1.bf16.msra.mxu0 %v4023
    %4153 = vmatprep.subr.bf16.mxu0 0
    %4154 = vmatpush1.bf16.msra.mxu0 %v4018
    %4155 = vmatprep.subr.bf16.mxu0 0
    %4156 = vmatpush2.bf16.msra.mxu0 0
    %4157 = vmatprep.subr.bf16.mxu0 0
    %4158 = vmatpush2.bf16.msra.mxu0 0
    %4159 = vmatprep.subr.bf16.mxu0 0
    %4160 = vmatpush2.bf16.msra.mxu0 0
    %4161 = vmatprep.subr.bf16.mxu0 0
    %4162 = vmatpush2.bf16.msra.mxu0 0
    %4163 = vmatprep.subr.bf16.mxu0 0
    %4164 = vmatpush2.bf16.msra.mxu0 0
    %4165 = vmatprep.subr.bf16.mxu0 0
    %4166 = vmatpush2.bf16.msra.mxu0 0
    %4167 = vmatprep.subr.bf16.mxu0 0
    %4168 = vmatpush2.bf16.msra.mxu0 0
    %4169 = vmatprep.subr.bf16.mxu0 0
    %4170 = vmatpush2.bf16.msra.mxu0 0
    %4171 = vmatprep.mubr.bf16.mxu0 0
    %4172 = vmatmul.mubr.bf16.gmra.mxu0 %v4055
    %v4173 = vpop.f32.mrf.mxu0
    %v4174 = vadd.f32 0.0, %v4173
    %v4175 = vpop.f32.mrf.mxu0
    %v4176 = vpop.f32.mrf.mxu0
    %v4177 = vpop.f32.mrf.mxu0
    %4178 = vdwg.mxu0
    %v4179 = vadd.f32 %v3915, %v4092
    %v4180 = vadd.f32 %v3916, %v4094
    %v4181 = vadd.f32 %v3917, %v4133
    %v4182 = vadd.f32 %v3918, %v4135
    %v4183 = vadd.f32 %v3919, %v4174
    %v4184 = vrot.slane %v1318, 5
    %v4186 = vrot.slane %v1283, 5
    %v4188 = vsel %vm1291, %v4184, %v4186
    %s4189 = scalar_lea.vmem %s3, 1760
    %v4190 = vld [vmem:[%s4189] sm:$0xff]
    %v4191 = vld [vmem:[%s4189 + $0x8] sm:$0xff]
    %v4192 = vld [vmem:[%s4189 + $0x10] sm:$0xf]
    %v4193 = vld [vmem:[%s4189 + $0x14] sm:$0xff]
    %v4194 = vld [vmem:[%s4189 + $0x1c] sm:$0xff]
    %v4195 = vld [vmem:[%s4189 + $0x24] sm:$0xf]
    %v4196 = vld [vmem:[%s4189 + $0x28] sm:$0xff]
    %v4197 = vld [vmem:[%s4189 + $0x30] sm:$0xff]
    %v4198 = vld [vmem:[%s4189 + $0x38] sm:$0xf]
    %v4199 = vld [vmem:[%s4189 + $0x3c] sm:$0xff]
    %v4200 = vld [vmem:[%s4189 + $0x44] sm:$0xff]
    %v4201 = vld [vmem:[%s4189 + $0x4c] sm:$0xf]
    %v4202 = vld [vmem:[%s4189 + $0x50] sm:$0xff]
    %v4203 = vld [vmem:[%s4189 + $0x58] sm:$0xff]
    %v4204 = vld [vmem:[%s4189 + $0x60] sm:$0xf]
    %v4205 = vld [vmem:[%s4189 + $0x64] sm:$0xff]
    %v4206 = vld [vmem:[%s4189 + $0x6c] sm:$0xff]
    %v4207 = vld [vmem:[%s4189 + $0x74] sm:$0xf]
    %v4208 = vld [vmem:[%s4189 + $0x78] sm:$0xff]
    %v4209 = vld [vmem:[%s4189 + $0x80] sm:$0xff]
    %v4210 = vld [vmem:[%s4189 + $0x88] sm:$0xf]
    %v4211 = vld [vmem:[%s4189 + $0x8c] sm:$0xff]
    %v4212 = vld [vmem:[%s4189 + $0x94] sm:$0xff]
    %v4213 = vld [vmem:[%s4189 + $0x9c] sm:$0xf]
    %v4238 = vunpack.c.l.b16 %v4190
    %v4239 = vunpack.c.h.b16 %v4190
    %v4240 = vunpack.c.l.b16 %v4191
    %v4241 = vunpack.c.h.b16 %v4191
    %v4242 = vunpack.c.l.b16 %v4192
    %v4243 = vunpack.c.l.b16 %v4193
    %v4244 = vunpack.c.h.b16 %v4193
    %v4245 = vunpack.c.l.b16 %v4194
    %v4246 = vunpack.c.h.b16 %v4194
    %v4247 = vunpack.c.l.b16 %v4195
    %v4248 = vunpack.c.l.b16 %v4196
    %v4249 = vunpack.c.h.b16 %v4196
    %v4250 = vunpack.c.l.b16 %v4197
    %v4251 = vunpack.c.h.b16 %v4197
    %v4252 = vunpack.c.l.b16 %v4198
    %v4253 = vunpack.c.l.b16 %v4199
    %v4254 = vunpack.c.h.b16 %v4199
    %v4255 = vunpack.c.l.b16 %v4200
    %v4256 = vunpack.c.h.b16 %v4200
    %v4257 = vunpack.c.l.b16 %v4201
    %v4258 = vunpack.c.l.b16 %v4202
    %v4259 = vunpack.c.h.b16 %v4202
    %v4260 = vunpack.c.l.b16 %v4203
    %v4261 = vunpack.c.h.b16 %v4203
    %v4262 = vunpack.c.l.b16 %v4204
    %v4263 = vunpack.c.l.b16 %v4205
    %v4264 = vunpack.c.h.b16 %v4205
    %v4265 = vunpack.c.l.b16 %v4206
    %v4266 = vunpack.c.h.b16 %v4206
    %v4267 = vunpack.c.l.b16 %v4207
    %v4268 = vunpack.c.l.b16 %v4208
    %v4269 = vunpack.c.h.b16 %v4208
    %v4270 = vunpack.c.l.b16 %v4209
    %v4271 = vunpack.c.h.b16 %v4209
    %v4272 = vunpack.c.l.b16 %v4210
    %v4273 = vunpack.c.l.b16 %v4211
    %v4274 = vunpack.c.h.b16 %v4211
    %v4275 = vunpack.c.l.b16 %v4212
    %v4276 = vunpack.c.h.b16 %v4212
    %v4277 = vunpack.c.l.b16 %v4213
    %v4278 = vpack.c.b16 %v4243, %v4238
    %v4279 = vpack.c.b16 %v4244, %v4239
    %v4280 = vpack.c.b16 %v4245, %v4240
    %v4281 = vpack.c.b16 %v4246, %v4241
    %v4282 = vpack.c.b16 %v4247, %v4242
    %v4283 = vpack.c.b16 %v4253, %v4248
    %v4284 = vpack.c.b16 %v4254, %v4249
    %v4285 = vpack.c.b16 %v4255, %v4250
    %v4286 = vpack.c.b16 %v4256, %v4251
    %v4287 = vpack.c.b16 %v4257, %v4252
    %v4288 = vpack.c.b16 %v4263, %v4258
    %v4289 = vpack.c.b16 %v4264, %v4259
    %v4290 = vpack.c.b16 %v4265, %v4260
    %v4291 = vpack.c.b16 %v4266, %v4261
    %v4292 = vpack.c.b16 %v4267, %v4262
    %v4293 = vpack.c.b16 %v4273, %v4268
    %v4294 = vpack.c.b16 %v4274, %v4269
    %v4295 = vpack.c.b16 %v4275, %v4270
    %v4296 = vpack.c.b16 %v4276, %v4271
    %v4297 = vpack.c.b16 %v4277, %v4272
    %v4319 = vsel %vm1451, %v4188, 0
    %4321 = vmatprep.subr.bf16.mxu0 0
    %4322 = vmatpush1.bf16.msra.mxu0 0
    %4323 = vmatprep.subr.bf16.mxu0 0
    %4324 = vmatpush1.bf16.msra.mxu0 0
    %4325 = vmatprep.subr.bf16.mxu0 0
    %4326 = vmatpush1.bf16.msra.mxu0 0
    %4327 = vmatprep.subr.bf16.mxu0 0
    %4328 = vmatpush1.bf16.msra.mxu0 0
    %4329 = vmatprep.subr.bf16.mxu0 %v4294
    %4330 = vmatpush1.bf16.msra.mxu0 %v4293
    %4331 = vmatprep.subr.bf16.mxu0 %v4289
    %4332 = vmatpush1.bf16.msra.mxu0 %v4288
    %4333 = vmatprep.subr.bf16.mxu0 %v4284
    %4334 = vmatpush1.bf16.msra.mxu0 %v4283
    %4335 = vmatprep.subr.bf16.mxu0 %v4279
    %4336 = vmatpush1.bf16.msra.mxu0 %v4278
    %4337 = vmatprep.subr.bf16.mxu0 0
    %4338 = vmatpush2.bf16.msra.mxu0 0
    %4339 = vmatprep.subr.bf16.mxu0 0
    %4340 = vmatpush2.bf16.msra.mxu0 0
    %4341 = vmatprep.subr.bf16.mxu0 0
    %4342 = vmatpush2.bf16.msra.mxu0 0
    %4343 = vmatprep.subr.bf16.mxu0 0
    %4344 = vmatpush2.bf16.msra.mxu0 0
    %4345 = vmatprep.subr.bf16.mxu0 0
    %4346 = vmatpush2.bf16.msra.mxu0 0
    %4347 = vmatprep.subr.bf16.mxu0 0
    %4348 = vmatpush2.bf16.msra.mxu0 0
    %4349 = vmatprep.subr.bf16.mxu0 0
    %4350 = vmatpush2.bf16.msra.mxu0 0
    %4351 = vmatprep.subr.bf16.mxu0 0
    %4352 = vmatpush2.bf16.msra.mxu0 0
    %4353 = vmatprep.mubr.bf16.mxu0 0
    %4354 = vmatmul.mubr.bf16.gmra.mxu0 %v4319
    %v4355 = vpop.f32.mrf.mxu0
    %v4356 = vadd.f32 0.0, %v4355
    %v4357 = vpop.f32.mrf.mxu0
    %v4358 = vadd.f32 0.0, %v4357
    %v4359 = vpop.f32.mrf.mxu0
    %v4360 = vpop.f32.mrf.mxu0
    %4361 = vdwg.mxu0
    %4362 = vmatprep.subr.bf16.mxu0 0
    %4363 = vmatpush1.bf16.msra.mxu0 0
    %4364 = vmatprep.subr.bf16.mxu0 0
    %4365 = vmatpush1.bf16.msra.mxu0 0
    %4366 = vmatprep.subr.bf16.mxu0 0
    %4367 = vmatpush1.bf16.msra.mxu0 0
    %4368 = vmatprep.subr.bf16.mxu0 0
    %4369 = vmatpush1.bf16.msra.mxu0 0
    %4370 = vmatprep.subr.bf16.mxu0 %v4296
    %4371 = vmatpush1.bf16.msra.mxu0 %v4295
    %4372 = vmatprep.subr.bf16.mxu0 %v4291
    %4373 = vmatpush1.bf16.msra.mxu0 %v4290
    %4374 = vmatprep.subr.bf16.mxu0 %v4286
    %4375 = vmatpush1.bf16.msra.mxu0 %v4285
    %4376 = vmatprep.subr.bf16.mxu0 %v4281
    %4377 = vmatpush1.bf16.msra.mxu0 %v4280
    %4378 = vmatprep.subr.bf16.mxu0 0
    %4379 = vmatpush2.bf16.msra.mxu0 0
    %4380 = vmatprep.subr.bf16.mxu0 0
    %4381 = vmatpush2.bf16.msra.mxu0 0
    %4382 = vmatprep.subr.bf16.mxu0 0
    %4383 = vmatpush2.bf16.msra.mxu0 0
    %4384 = vmatprep.subr.bf16.mxu0 0
    %4385 = vmatpush2.bf16.msra.mxu0 0
    %4386 = vmatprep.subr.bf16.mxu0 0
    %4387 = vmatpush2.bf16.msra.mxu0 0
    %4388 = vmatprep.subr.bf16.mxu0 0
    %4389 = vmatpush2.bf16.msra.mxu0 0
    %4390 = vmatprep.subr.bf16.mxu0 0
    %4391 = vmatpush2.bf16.msra.mxu0 0
    %4392 = vmatprep.subr.bf16.mxu0 0
    %4393 = vmatpush2.bf16.msra.mxu0 0
    %4394 = vmatprep.mubr.bf16.mxu0 0
    %4395 = vmatmul.mubr.bf16.gmra.mxu0 %v4319
    %v4396 = vpop.f32.mrf.mxu0
    %v4397 = vadd.f32 0.0, %v4396
    %v4398 = vpop.f32.mrf.mxu0
    %v4399 = vadd.f32 0.0, %v4398
    %v4400 = vpop.f32.mrf.mxu0
    %v4401 = vpop.f32.mrf.mxu0
    %4402 = vdwg.mxu0
    %4403 = vmatprep.subr.bf16.mxu0 0
    %4404 = vmatpush1.bf16.msra.mxu0 0
    %4405 = vmatprep.subr.bf16.mxu0 0
    %4406 = vmatpush1.bf16.msra.mxu0 0
    %4407 = vmatprep.subr.bf16.mxu0 0
    %4408 = vmatpush1.bf16.msra.mxu0 0
    %4409 = vmatprep.subr.bf16.mxu0 0
    %4410 = vmatpush1.bf16.msra.mxu0 0
    %4411 = vmatprep.subr.bf16.mxu0 0
    %4412 = vmatpush1.bf16.msra.mxu0 %v4297
    %4413 = vmatprep.subr.bf16.mxu0 0
    %4414 = vmatpush1.bf16.msra.mxu0 %v4292
    %4415 = vmatprep.subr.bf16.mxu0 0
    %4416 = vmatpush1.bf16.msra.mxu0 %v4287
    %4417 = vmatprep.subr.bf16.mxu0 0
    %4418 = vmatpush1.bf16.msra.mxu0 %v4282
    %4419 = vmatprep.subr.bf16.mxu0 0
    %4420 = vmatpush2.bf16.msra.mxu0 0
    %4421 = vmatprep.subr.bf16.mxu0 0
    %4422 = vmatpush2.bf16.msra.mxu0 0
    %4423 = vmatprep.subr.bf16.mxu0 0
    %4424 = vmatpush2.bf16.msra.mxu0 0
    %4425 = vmatprep.subr.bf16.mxu0 0
    %4426 = vmatpush2.bf16.msra.mxu0 0
    %4427 = vmatprep.subr.bf16.mxu0 0
    %4428 = vmatpush2.bf16.msra.mxu0 0
    %4429 = vmatprep.subr.bf16.mxu0 0
    %4430 = vmatpush2.bf16.msra.mxu0 0
    %4431 = vmatprep.subr.bf16.mxu0 0
    %4432 = vmatpush2.bf16.msra.mxu0 0
    %4433 = vmatprep.subr.bf16.mxu0 0
    %4434 = vmatpush2.bf16.msra.mxu0 0
    %4435 = vmatprep.mubr.bf16.mxu0 0
    %4436 = vmatmul.mubr.bf16.gmra.mxu0 %v4319
    %v4437 = vpop.f32.mrf.mxu0
    %v4438 = vadd.f32 0.0, %v4437
    %v4439 = vpop.f32.mrf.mxu0
    %v4440 = vpop.f32.mrf.mxu0
    %v4441 = vpop.f32.mrf.mxu0
    %4442 = vdwg.mxu0
    %v4443 = vadd.f32 %v4179, %v4356
    %v4444 = vadd.f32 %v4180, %v4358
    %v4445 = vadd.f32 %v4181, %v4397
    %v4446 = vadd.f32 %v4182, %v4399
    %v4447 = vadd.f32 %v4183, %v4438
    %v4448 = vrot.slane %v730, 6
    %v4450 = vrot.slane %v1286, 6
    %v4452 = vsel %vm1291, %v4448, %v4450
    %s4453 = scalar_lea.vmem %s3, 1920
    %v4454 = vld [vmem:[%s4453] sm:$0xff]
    %v4455 = vld [vmem:[%s4453 + $0x8] sm:$0xff]
    %v4456 = vld [vmem:[%s4453 + $0x10] sm:$0xf]
    %v4457 = vld [vmem:[%s4453 + $0x14] sm:$0xff]
    %v4458 = vld [vmem:[%s4453 + $0x1c] sm:$0xff]
    %v4459 = vld [vmem:[%s4453 + $0x24] sm:$0xf]
    %v4460 = vld [vmem:[%s4453 + $0x28] sm:$0xff]
    %v4461 = vld [vmem:[%s4453 + $0x30] sm:$0xff]
    %v4462 = vld [vmem:[%s4453 + $0x38] sm:$0xf]
    %v4463 = vld [vmem:[%s4453 + $0x3c] sm:$0xff]
    %v4464 = vld [vmem:[%s4453 + $0x44] sm:$0xff]
    %v4465 = vld [vmem:[%s4453 + $0x4c] sm:$0xf]
    %v4466 = vld [vmem:[%s4453 + $0x50] sm:$0xff]
    %v4467 = vld [vmem:[%s4453 + $0x58] sm:$0xff]
    %v4468 = vld [vmem:[%s4453 + $0x60] sm:$0xf]
    %v4469 = vld [vmem:[%s4453 + $0x64] sm:$0xff]
    %v4470 = vld [vmem:[%s4453 + $0x6c] sm:$0xff]
    %v4471 = vld [vmem:[%s4453 + $0x74] sm:$0xf]
    %v4472 = vld [vmem:[%s4453 + $0x78] sm:$0xff]
    %v4473 = vld [vmem:[%s4453 + $0x80] sm:$0xff]
    %v4474 = vld [vmem:[%s4453 + $0x88] sm:$0xf]
    %v4475 = vld [vmem:[%s4453 + $0x8c] sm:$0xff]
    %v4476 = vld [vmem:[%s4453 + $0x94] sm:$0xff]
    %v4477 = vld [vmem:[%s4453 + $0x9c] sm:$0xf]
    %v4502 = vunpack.c.l.b16 %v4454
    %v4503 = vunpack.c.h.b16 %v4454
    %v4504 = vunpack.c.l.b16 %v4455
    %v4505 = vunpack.c.h.b16 %v4455
    %v4506 = vunpack.c.l.b16 %v4456
    %v4507 = vunpack.c.l.b16 %v4457
    %v4508 = vunpack.c.h.b16 %v4457
    %v4509 = vunpack.c.l.b16 %v4458
    %v4510 = vunpack.c.h.b16 %v4458
    %v4511 = vunpack.c.l.b16 %v4459
    %v4512 = vunpack.c.l.b16 %v4460
    %v4513 = vunpack.c.h.b16 %v4460
    %v4514 = vunpack.c.l.b16 %v4461
    %v4515 = vunpack.c.h.b16 %v4461
    %v4516 = vunpack.c.l.b16 %v4462
    %v4517 = vunpack.c.l.b16 %v4463
    %v4518 = vunpack.c.h.b16 %v4463
    %v4519 = vunpack.c.l.b16 %v4464
    %v4520 = vunpack.c.h.b16 %v4464
    %v4521 = vunpack.c.l.b16 %v4465
    %v4522 = vunpack.c.l.b16 %v4466
    %v4523 = vunpack.c.h.b16 %v4466
    %v4524 = vunpack.c.l.b16 %v4467
    %v4525 = vunpack.c.h.b16 %v4467
    %v4526 = vunpack.c.l.b16 %v4468
    %v4527 = vunpack.c.l.b16 %v4469
    %v4528 = vunpack.c.h.b16 %v4469
    %v4529 = vunpack.c.l.b16 %v4470
    %v4530 = vunpack.c.h.b16 %v4470
    %v4531 = vunpack.c.l.b16 %v4471
    %v4532 = vunpack.c.l.b16 %v4472
    %v4533 = vunpack.c.h.b16 %v4472
    %v4534 = vunpack.c.l.b16 %v4473
    %v4535 = vunpack.c.h.b16 %v4473
    %v4536 = vunpack.c.l.b16 %v4474
    %v4537 = vunpack.c.l.b16 %v4475
    %v4538 = vunpack.c.h.b16 %v4475
    %v4539 = vunpack.c.l.b16 %v4476
    %v4540 = vunpack.c.h.b16 %v4476
    %v4541 = vunpack.c.l.b16 %v4477
    %v4542 = vpack.c.b16 %v4507, %v4502
    %v4543 = vpack.c.b16 %v4508, %v4503
    %v4544 = vpack.c.b16 %v4509, %v4504
    %v4545 = vpack.c.b16 %v4510, %v4505
    %v4546 = vpack.c.b16 %v4511, %v4506
    %v4547 = vpack.c.b16 %v4517, %v4512
    %v4548 = vpack.c.b16 %v4518, %v4513
    %v4549 = vpack.c.b16 %v4519, %v4514
    %v4550 = vpack.c.b16 %v4520, %v4515
    %v4551 = vpack.c.b16 %v4521, %v4516
    %v4552 = vpack.c.b16 %v4527, %v4522
    %v4553 = vpack.c.b16 %v4528, %v4523
    %v4554 = vpack.c.b16 %v4529, %v4524
    %v4555 = vpack.c.b16 %v4530, %v4525
    %v4556 = vpack.c.b16 %v4531, %v4526
    %v4557 = vpack.c.b16 %v4537, %v4532
    %v4558 = vpack.c.b16 %v4538, %v4533
    %v4559 = vpack.c.b16 %v4539, %v4534
    %v4560 = vpack.c.b16 %v4540, %v4535
    %v4561 = vpack.c.b16 %v4541, %v4536
    %v4583 = vsel %vm1451, %v4452, 0
    %4585 = vmatprep.subr.bf16.mxu0 0
    %4586 = vmatpush1.bf16.msra.mxu0 0
    %4587 = vmatprep.subr.bf16.mxu0 0
    %4588 = vmatpush1.bf16.msra.mxu0 0
    %4589 = vmatprep.subr.bf16.mxu0 0
    %4590 = vmatpush1.bf16.msra.mxu0 0
    %4591 = vmatprep.subr.bf16.mxu0 0
    %4592 = vmatpush1.bf16.msra.mxu0 0
    %4593 = vmatprep.subr.bf16.mxu0 %v4558
    %4594 = vmatpush1.bf16.msra.mxu0 %v4557
    %4595 = vmatprep.subr.bf16.mxu0 %v4553
    %4596 = vmatpush1.bf16.msra.mxu0 %v4552
    %4597 = vmatprep.subr.bf16.mxu0 %v4548
    %4598 = vmatpush1.bf16.msra.mxu0 %v4547
    %4599 = vmatprep.subr.bf16.mxu0 %v4543
    %4600 = vmatpush1.bf16.msra.mxu0 %v4542
    %4601 = vmatprep.subr.bf16.mxu0 0
    %4602 = vmatpush2.bf16.msra.mxu0 0
    %4603 = vmatprep.subr.bf16.mxu0 0
    %4604 = vmatpush2.bf16.msra.mxu0 0
    %4605 = vmatprep.subr.bf16.mxu0 0
    %4606 = vmatpush2.bf16.msra.mxu0 0
    %4607 = vmatprep.subr.bf16.mxu0 0
    %4608 = vmatpush2.bf16.msra.mxu0 0
    %4609 = vmatprep.subr.bf16.mxu0 0
    %4610 = vmatpush2.bf16.msra.mxu0 0
    %4611 = vmatprep.subr.bf16.mxu0 0
    %4612 = vmatpush2.bf16.msra.mxu0 0
    %4613 = vmatprep.subr.bf16.mxu0 0
    %4614 = vmatpush2.bf16.msra.mxu0 0
    %4615 = vmatprep.subr.bf16.mxu0 0
    %4616 = vmatpush2.bf16.msra.mxu0 0
    %4617 = vmatprep.mubr.bf16.mxu0 0
    %4618 = vmatmul.mubr.bf16.gmra.mxu0 %v4583
    %v4619 = vpop.f32.mrf.mxu0
    %v4620 = vadd.f32 0.0, %v4619
    %v4621 = vpop.f32.mrf.mxu0
    %v4622 = vadd.f32 0.0, %v4621
    %v4623 = vpop.f32.mrf.mxu0
    %v4624 = vpop.f32.mrf.mxu0
    %4625 = vdwg.mxu0
    %4626 = vmatprep.subr.bf16.mxu0 0
    %4627 = vmatpush1.bf16.msra.mxu0 0
    %4628 = vmatprep.subr.bf16.mxu0 0
    %4629 = vmatpush1.bf16.msra.mxu0 0
    %4630 = vmatprep.subr.bf16.mxu0 0
    %4631 = vmatpush1.bf16.msra.mxu0 0
    %4632 = vmatprep.subr.bf16.mxu0 0
    %4633 = vmatpush1.bf16.msra.mxu0 0
    %4634 = vmatprep.subr.bf16.mxu0 %v4560
    %4635 = vmatpush1.bf16.msra.mxu0 %v4559
    %4636 = vmatprep.subr.bf16.mxu0 %v4555
    %4637 = vmatpush1.bf16.msra.mxu0 %v4554
    %4638 = vmatprep.subr.bf16.mxu0 %v4550
    %4639 = vmatpush1.bf16.msra.mxu0 %v4549
    %4640 = vmatprep.subr.bf16.mxu0 %v4545
    %4641 = vmatpush1.bf16.msra.mxu0 %v4544
    %4642 = vmatprep.subr.bf16.mxu0 0
    %4643 = vmatpush2.bf16.msra.mxu0 0
    %4644 = vmatprep.subr.bf16.mxu0 0
    %4645 = vmatpush2.bf16.msra.mxu0 0
    %4646 = vmatprep.subr.bf16.mxu0 0
    %4647 = vmatpush2.bf16.msra.mxu0 0
    %4648 = vmatprep.subr.bf16.mxu0 0
    %4649 = vmatpush2.bf16.msra.mxu0 0
    %4650 = vmatprep.subr.bf16.mxu0 0
    %4651 = vmatpush2.bf16.msra.mxu0 0
    %4652 = vmatprep.subr.bf16.mxu0 0
    %4653 = vmatpush2.bf16.msra.mxu0 0
    %4654 = vmatprep.subr.bf16.mxu0 0
    %4655 = vmatpush2.bf16.msra.mxu0 0
    %4656 = vmatprep.subr.bf16.mxu0 0
    %4657 = vmatpush2.bf16.msra.mxu0 0
    %4658 = vmatprep.mubr.bf16.mxu0 0
    %4659 = vmatmul.mubr.bf16.gmra.mxu0 %v4583
    %v4660 = vpop.f32.mrf.mxu0
    %v4661 = vadd.f32 0.0, %v4660
    %v4662 = vpop.f32.mrf.mxu0
    %v4663 = vadd.f32 0.0, %v4662
    %v4664 = vpop.f32.mrf.mxu0
    %v4665 = vpop.f32.mrf.mxu0
    %4666 = vdwg.mxu0
    %4667 = vmatprep.subr.bf16.mxu0 0
    %4668 = vmatpush1.bf16.msra.mxu0 0
    %4669 = vmatprep.subr.bf16.mxu0 0
    %4670 = vmatpush1.bf16.msra.mxu0 0
    %4671 = vmatprep.subr.bf16.mxu0 0
    %4672 = vmatpush1.bf16.msra.mxu0 0
    %4673 = vmatprep.subr.bf16.mxu0 0
    %4674 = vmatpush1.bf16.msra.mxu0 0
    %4675 = vmatprep.subr.bf16.mxu0 0
    %4676 = vmatpush1.bf16.msra.mxu0 %v4561
    %4677 = vmatprep.subr.bf16.mxu0 0
    %4678 = vmatpush1.bf16.msra.mxu0 %v4556
    %4679 = vmatprep.subr.bf16.mxu0 0
    %4680 = vmatpush1.bf16.msra.mxu0 %v4551
    %4681 = vmatprep.subr.bf16.mxu0 0
    %4682 = vmatpush1.bf16.msra.mxu0 %v4546
    %4683 = vmatprep.subr.bf16.mxu0 0
    %4684 = vmatpush2.bf16.msra.mxu0 0
    %4685 = vmatprep.subr.bf16.mxu0 0
    %4686 = vmatpush2.bf16.msra.mxu0 0
    %4687 = vmatprep.subr.bf16.mxu0 0
    %4688 = vmatpush2.bf16.msra.mxu0 0
    %4689 = vmatprep.subr.bf16.mxu0 0
    %4690 = vmatpush2.bf16.msra.mxu0 0
    %4691 = vmatprep.subr.bf16.mxu0 0
    %4692 = vmatpush2.bf16.msra.mxu0 0
    %4693 = vmatprep.subr.bf16.mxu0 0
    %4694 = vmatpush2.bf16.msra.mxu0 0
    %4695 = vmatprep.subr.bf16.mxu0 0
    %4696 = vmatpush2.bf16.msra.mxu0 0
    %4697 = vmatprep.subr.bf16.mxu0 0
    %4698 = vmatpush2.bf16.msra.mxu0 0
    %4699 = vmatprep.mubr.bf16.mxu0 0
    %4700 = vmatmul.mubr.bf16.gmra.mxu0 %v4583
    %v4701 = vpop.f32.mrf.mxu0
    %v4702 = vadd.f32 0.0, %v4701
    %v4703 = vpop.f32.mrf.mxu0
    %v4704 = vpop.f32.mrf.mxu0
    %v4705 = vpop.f32.mrf.mxu0
    %4706 = vdwg.mxu0
    %v4707 = vadd.f32 %v4443, %v4620
    %v4708 = vadd.f32 %v4444, %v4622
    %v4709 = vadd.f32 %v4445, %v4661
    %v4710 = vadd.f32 %v4446, %v4663
    %v4711 = vadd.f32 %v4447, %v4702
    %v4712 = vrot.slane %v1318, 6
    %v4714 = vrot.slane %v1283, 6
    %v4716 = vsel %vm1291, %v4712, %v4714
    %s4717 = scalar_lea.vmem %s3, 2080
    %v4718 = vld [vmem:[%s4717] sm:$0xff]
    %v4719 = vld [vmem:[%s4717 + $0x8] sm:$0xff]
    %v4720 = vld [vmem:[%s4717 + $0x10] sm:$0xf]
    %v4721 = vld [vmem:[%s4717 + $0x14] sm:$0xff]
    %v4722 = vld [vmem:[%s4717 + $0x1c] sm:$0xff]
    %v4723 = vld [vmem:[%s4717 + $0x24] sm:$0xf]
    %v4724 = vld [vmem:[%s4717 + $0x28] sm:$0xff]
    %v4725 = vld [vmem:[%s4717 + $0x30] sm:$0xff]
    %v4726 = vld [vmem:[%s4717 + $0x38] sm:$0xf]
    %v4727 = vld [vmem:[%s4717 + $0x3c] sm:$0xff]
    %v4728 = vld [vmem:[%s4717 + $0x44] sm:$0xff]
    %v4729 = vld [vmem:[%s4717 + $0x4c] sm:$0xf]
    %v4730 = vld [vmem:[%s4717 + $0x50] sm:$0xff]
    %v4731 = vld [vmem:[%s4717 + $0x58] sm:$0xff]
    %v4732 = vld [vmem:[%s4717 + $0x60] sm:$0xf]
    %v4733 = vld [vmem:[%s4717 + $0x64] sm:$0xff]
    %v4734 = vld [vmem:[%s4717 + $0x6c] sm:$0xff]
    %v4735 = vld [vmem:[%s4717 + $0x74] sm:$0xf]
    %v4736 = vld [vmem:[%s4717 + $0x78] sm:$0xff]
    %v4737 = vld [vmem:[%s4717 + $0x80] sm:$0xff]
    %v4738 = vld [vmem:[%s4717 + $0x88] sm:$0xf]
    %v4739 = vld [vmem:[%s4717 + $0x8c] sm:$0xff]
    %v4740 = vld [vmem:[%s4717 + $0x94] sm:$0xff]
    %v4741 = vld [vmem:[%s4717 + $0x9c] sm:$0xf]
    %v4766 = vunpack.c.l.b16 %v4718
    %v4767 = vunpack.c.h.b16 %v4718
    %v4768 = vunpack.c.l.b16 %v4719
    %v4769 = vunpack.c.h.b16 %v4719
    %v4770 = vunpack.c.l.b16 %v4720
    %v4771 = vunpack.c.l.b16 %v4721
    %v4772 = vunpack.c.h.b16 %v4721
    %v4773 = vunpack.c.l.b16 %v4722
    %v4774 = vunpack.c.h.b16 %v4722
    %v4775 = vunpack.c.l.b16 %v4723
    %v4776 = vunpack.c.l.b16 %v4724
    %v4777 = vunpack.c.h.b16 %v4724
    %v4778 = vunpack.c.l.b16 %v4725
    %v4779 = vunpack.c.h.b16 %v4725
    %v4780 = vunpack.c.l.b16 %v4726
    %v4781 = vunpack.c.l.b16 %v4727
    %v4782 = vunpack.c.h.b16 %v4727
    %v4783 = vunpack.c.l.b16 %v4728
    %v4784 = vunpack.c.h.b16 %v4728
    %v4785 = vunpack.c.l.b16 %v4729
    %v4786 = vunpack.c.l.b16 %v4730
    %v4787 = vunpack.c.h.b16 %v4730
    %v4788 = vunpack.c.l.b16 %v4731
    %v4789 = vunpack.c.h.b16 %v4731
    %v4790 = vunpack.c.l.b16 %v4732
    %v4791 = vunpack.c.l.b16 %v4733
    %v4792 = vunpack.c.h.b16 %v4733
    %v4793 = vunpack.c.l.b16 %v4734
    %v4794 = vunpack.c.h.b16 %v4734
    %v4795 = vunpack.c.l.b16 %v4735
    %v4796 = vunpack.c.l.b16 %v4736
    %v4797 = vunpack.c.h.b16 %v4736
    %v4798 = vunpack.c.l.b16 %v4737
    %v4799 = vunpack.c.h.b16 %v4737
    %v4800 = vunpack.c.l.b16 %v4738
    %v4801 = vunpack.c.l.b16 %v4739
    %v4802 = vunpack.c.h.b16 %v4739
    %v4803 = vunpack.c.l.b16 %v4740
    %v4804 = vunpack.c.h.b16 %v4740
    %v4805 = vunpack.c.l.b16 %v4741
    %v4806 = vpack.c.b16 %v4771, %v4766
    %v4807 = vpack.c.b16 %v4772, %v4767
    %v4808 = vpack.c.b16 %v4773, %v4768
    %v4809 = vpack.c.b16 %v4774, %v4769
    %v4810 = vpack.c.b16 %v4775, %v4770
    %v4811 = vpack.c.b16 %v4781, %v4776
    %v4812 = vpack.c.b16 %v4782, %v4777
    %v4813 = vpack.c.b16 %v4783, %v4778
    %v4814 = vpack.c.b16 %v4784, %v4779
    %v4815 = vpack.c.b16 %v4785, %v4780
    %v4816 = vpack.c.b16 %v4791, %v4786
    %v4817 = vpack.c.b16 %v4792, %v4787
    %v4818 = vpack.c.b16 %v4793, %v4788
    %v4819 = vpack.c.b16 %v4794, %v4789
    %v4820 = vpack.c.b16 %v4795, %v4790
    %v4821 = vpack.c.b16 %v4801, %v4796
    %v4822 = vpack.c.b16 %v4802, %v4797
    %v4823 = vpack.c.b16 %v4803, %v4798
    %v4824 = vpack.c.b16 %v4804, %v4799
    %v4825 = vpack.c.b16 %v4805, %v4800
    %v4847 = vsel %vm1451, %v4716, 0
    %4849 = vmatprep.subr.bf16.mxu0 0
    %4850 = vmatpush1.bf16.msra.mxu0 0
    %4851 = vmatprep.subr.bf16.mxu0 0
    %4852 = vmatpush1.bf16.msra.mxu0 0
    %4853 = vmatprep.subr.bf16.mxu0 0
    %4854 = vmatpush1.bf16.msra.mxu0 0
    %4855 = vmatprep.subr.bf16.mxu0 0
    %4856 = vmatpush1.bf16.msra.mxu0 0
    %4857 = vmatprep.subr.bf16.mxu0 %v4822
    %4858 = vmatpush1.bf16.msra.mxu0 %v4821
    %4859 = vmatprep.subr.bf16.mxu0 %v4817
    %4860 = vmatpush1.bf16.msra.mxu0 %v4816
    %4861 = vmatprep.subr.bf16.mxu0 %v4812
    %4862 = vmatpush1.bf16.msra.mxu0 %v4811
    %4863 = vmatprep.subr.bf16.mxu0 %v4807
    %4864 = vmatpush1.bf16.msra.mxu0 %v4806
    %4865 = vmatprep.subr.bf16.mxu0 0
    %4866 = vmatpush2.bf16.msra.mxu0 0
    %4867 = vmatprep.subr.bf16.mxu0 0
    %4868 = vmatpush2.bf16.msra.mxu0 0
    %4869 = vmatprep.subr.bf16.mxu0 0
    %4870 = vmatpush2.bf16.msra.mxu0 0
    %4871 = vmatprep.subr.bf16.mxu0 0
    %4872 = vmatpush2.bf16.msra.mxu0 0
    %4873 = vmatprep.subr.bf16.mxu0 0
    %4874 = vmatpush2.bf16.msra.mxu0 0
    %4875 = vmatprep.subr.bf16.mxu0 0
    %4876 = vmatpush2.bf16.msra.mxu0 0
    %4877 = vmatprep.subr.bf16.mxu0 0
    %4878 = vmatpush2.bf16.msra.mxu0 0
    %4879 = vmatprep.subr.bf16.mxu0 0
    %4880 = vmatpush2.bf16.msra.mxu0 0
    %4881 = vmatprep.mubr.bf16.mxu0 0
    %4882 = vmatmul.mubr.bf16.gmra.mxu0 %v4847
    %v4883 = vpop.f32.mrf.mxu0
    %v4884 = vadd.f32 0.0, %v4883
    %v4885 = vpop.f32.mrf.mxu0
    %v4886 = vadd.f32 0.0, %v4885
    %v4887 = vpop.f32.mrf.mxu0
    %v4888 = vpop.f32.mrf.mxu0
    %4889 = vdwg.mxu0
    %4890 = vmatprep.subr.bf16.mxu0 0
    %4891 = vmatpush1.bf16.msra.mxu0 0
    %4892 = vmatprep.subr.bf16.mxu0 0
    %4893 = vmatpush1.bf16.msra.mxu0 0
    %4894 = vmatprep.subr.bf16.mxu0 0
    %4895 = vmatpush1.bf16.msra.mxu0 0
    %4896 = vmatprep.subr.bf16.mxu0 0
    %4897 = vmatpush1.bf16.msra.mxu0 0
    %4898 = vmatprep.subr.bf16.mxu0 %v4824
    %4899 = vmatpush1.bf16.msra.mxu0 %v4823
    %4900 = vmatprep.subr.bf16.mxu0 %v4819
    %4901 = vmatpush1.bf16.msra.mxu0 %v4818
    %4902 = vmatprep.subr.bf16.mxu0 %v4814
    %4903 = vmatpush1.bf16.msra.mxu0 %v4813
    %4904 = vmatprep.subr.bf16.mxu0 %v4809
    %4905 = vmatpush1.bf16.msra.mxu0 %v4808
    %4906 = vmatprep.subr.bf16.mxu0 0
    %4907 = vmatpush2.bf16.msra.mxu0 0
    %4908 = vmatprep.subr.bf16.mxu0 0
    %4909 = vmatpush2.bf16.msra.mxu0 0
    %4910 = vmatprep.subr.bf16.mxu0 0
    %4911 = vmatpush2.bf16.msra.mxu0 0
    %4912 = vmatprep.subr.bf16.mxu0 0
    %4913 = vmatpush2.bf16.msra.mxu0 0
    %4914 = vmatprep.subr.bf16.mxu0 0
    %4915 = vmatpush2.bf16.msra.mxu0 0
    %4916 = vmatprep.subr.bf16.mxu0 0
    %4917 = vmatpush2.bf16.msra.mxu0 0
    %4918 = vmatprep.subr.bf16.mxu0 0
    %4919 = vmatpush2.bf16.msra.mxu0 0
    %4920 = vmatprep.subr.bf16.mxu0 0
    %4921 = vmatpush2.bf16.msra.mxu0 0
    %4922 = vmatprep.mubr.bf16.mxu0 0
    %4923 = vmatmul.mubr.bf16.gmra.mxu0 %v4847
    %v4924 = vpop.f32.mrf.mxu0
    %v4925 = vadd.f32 0.0, %v4924
    %v4926 = vpop.f32.mrf.mxu0
    %v4927 = vadd.f32 0.0, %v4926
    %v4928 = vpop.f32.mrf.mxu0
    %v4929 = vpop.f32.mrf.mxu0
    %4930 = vdwg.mxu0
    %4931 = vmatprep.subr.bf16.mxu0 0
    %4932 = vmatpush1.bf16.msra.mxu0 0
    %4933 = vmatprep.subr.bf16.mxu0 0
    %4934 = vmatpush1.bf16.msra.mxu0 0
    %4935 = vmatprep.subr.bf16.mxu0 0
    %4936 = vmatpush1.bf16.msra.mxu0 0
    %4937 = vmatprep.subr.bf16.mxu0 0
    %4938 = vmatpush1.bf16.msra.mxu0 0
    %4939 = vmatprep.subr.bf16.mxu0 0
    %4940 = vmatpush1.bf16.msra.mxu0 %v4825
    %4941 = vmatprep.subr.bf16.mxu0 0
    %4942 = vmatpush1.bf16.msra.mxu0 %v4820
    %4943 = vmatprep.subr.bf16.mxu0 0
    %4944 = vmatpush1.bf16.msra.mxu0 %v4815
    %4945 = vmatprep.subr.bf16.mxu0 0
    %4946 = vmatpush1.bf16.msra.mxu0 %v4810
    %4947 = vmatprep.subr.bf16.mxu0 0
    %4948 = vmatpush2.bf16.msra.mxu0 0
    %4949 = vmatprep.subr.bf16.mxu0 0
    %4950 = vmatpush2.bf16.msra.mxu0 0
    %4951 = vmatprep.subr.bf16.mxu0 0
    %4952 = vmatpush2.bf16.msra.mxu0 0
    %4953 = vmatprep.subr.bf16.mxu0 0
    %4954 = vmatpush2.bf16.msra.mxu0 0
    %4955 = vmatprep.subr.bf16.mxu0 0
    %4956 = vmatpush2.bf16.msra.mxu0 0
    %4957 = vmatprep.subr.bf16.mxu0 0
    %4958 = vmatpush2.bf16.msra.mxu0 0
    %4959 = vmatprep.subr.bf16.mxu0 0
    %4960 = vmatpush2.bf16.msra.mxu0 0
    %4961 = vmatprep.subr.bf16.mxu0 0
    %4962 = vmatpush2.bf16.msra.mxu0 0
    %4963 = vmatprep.mubr.bf16.mxu0 0
    %4964 = vmatmul.mubr.bf16.gmra.mxu0 %v4847
    %v4965 = vpop.f32.mrf.mxu0
    %v4966 = vadd.f32 0.0, %v4965
    %v4967 = vpop.f32.mrf.mxu0
    %v4968 = vpop.f32.mrf.mxu0
    %v4969 = vpop.f32.mrf.mxu0
    %4970 = vdwg.mxu0
    %v4971 = vadd.f32 %v4707, %v4884
    %v4972 = vadd.f32 %v4708, %v4886
    %v4973 = vadd.f32 %v4709, %v4925
    %v4974 = vadd.f32 %v4710, %v4927
    %v4975 = vadd.f32 %v4711, %v4966
    %v4976 = vrot.slane %v730, 7
    %v4978 = vrot.slane %v1286, 7
    %v4980 = vsel %vm1291, %v4976, %v4978
    %s4981 = scalar_lea.vmem %s3, 2240
    %v4982 = vld [vmem:[%s4981] sm:$0xff]
    %v4983 = vld [vmem:[%s4981 + $0x8] sm:$0xff]
    %v4984 = vld [vmem:[%s4981 + $0x10] sm:$0xf]
    %v4985 = vld [vmem:[%s4981 + $0x14] sm:$0xff]
    %v4986 = vld [vmem:[%s4981 + $0x1c] sm:$0xff]
    %v4987 = vld [vmem:[%s4981 + $0x24] sm:$0xf]
    %v4988 = vld [vmem:[%s4981 + $0x28] sm:$0xff]
    %v4989 = vld [vmem:[%s4981 + $0x30] sm:$0xff]
    %v4990 = vld [vmem:[%s4981 + $0x38] sm:$0xf]
    %v4991 = vld [vmem:[%s4981 + $0x3c] sm:$0xff]
    %v4992 = vld [vmem:[%s4981 + $0x44] sm:$0xff]
    %v4993 = vld [vmem:[%s4981 + $0x4c] sm:$0xf]
    %v4994 = vld [vmem:[%s4981 + $0x50] sm:$0xff]
    %v4995 = vld [vmem:[%s4981 + $0x58] sm:$0xff]
    %v4996 = vld [vmem:[%s4981 + $0x60] sm:$0xf]
    %v4997 = vld [vmem:[%s4981 + $0x64] sm:$0xff]
    %v4998 = vld [vmem:[%s4981 + $0x6c] sm:$0xff]
    %v4999 = vld [vmem:[%s4981 + $0x74] sm:$0xf]
    %v5000 = vld [vmem:[%s4981 + $0x78] sm:$0xff]
    %v5001 = vld [vmem:[%s4981 + $0x80] sm:$0xff]
    %v5002 = vld [vmem:[%s4981 + $0x88] sm:$0xf]
    %v5003 = vld [vmem:[%s4981 + $0x8c] sm:$0xff]
    %v5004 = vld [vmem:[%s4981 + $0x94] sm:$0xff]
    %v5005 = vld [vmem:[%s4981 + $0x9c] sm:$0xf]
    %v5030 = vunpack.c.l.b16 %v4982
    %v5031 = vunpack.c.h.b16 %v4982
    %v5032 = vunpack.c.l.b16 %v4983
    %v5033 = vunpack.c.h.b16 %v4983
    %v5034 = vunpack.c.l.b16 %v4984
    %v5035 = vunpack.c.l.b16 %v4985
    %v5036 = vunpack.c.h.b16 %v4985
    %v5037 = vunpack.c.l.b16 %v4986
    %v5038 = vunpack.c.h.b16 %v4986
    %v5039 = vunpack.c.l.b16 %v4987
    %v5040 = vunpack.c.l.b16 %v4988
    %v5041 = vunpack.c.h.b16 %v4988
    %v5042 = vunpack.c.l.b16 %v4989
    %v5043 = vunpack.c.h.b16 %v4989
    %v5044 = vunpack.c.l.b16 %v4990
    %v5045 = vunpack.c.l.b16 %v4991
    %v5046 = vunpack.c.h.b16 %v4991
    %v5047 = vunpack.c.l.b16 %v4992
    %v5048 = vunpack.c.h.b16 %v4992
    %v5049 = vunpack.c.l.b16 %v4993
    %v5050 = vunpack.c.l.b16 %v4994
    %v5051 = vunpack.c.h.b16 %v4994
    %v5052 = vunpack.c.l.b16 %v4995
    %v5053 = vunpack.c.h.b16 %v4995
    %v5054 = vunpack.c.l.b16 %v4996
    %v5055 = vunpack.c.l.b16 %v4997
    %v5056 = vunpack.c.h.b16 %v4997
    %v5057 = vunpack.c.l.b16 %v4998
    %v5058 = vunpack.c.h.b16 %v4998
    %v5059 = vunpack.c.l.b16 %v4999
    %v5060 = vunpack.c.l.b16 %v5000
    %v5061 = vunpack.c.h.b16 %v5000
    %v5062 = vunpack.c.l.b16 %v5001
    %v5063 = vunpack.c.h.b16 %v5001
    %v5064 = vunpack.c.l.b16 %v5002
    %v5065 = vunpack.c.l.b16 %v5003
    %v5066 = vunpack.c.h.b16 %v5003
    %v5067 = vunpack.c.l.b16 %v5004
    %v5068 = vunpack.c.h.b16 %v5004
    %v5069 = vunpack.c.l.b16 %v5005
    %v5070 = vpack.c.b16 %v5035, %v5030
    %v5071 = vpack.c.b16 %v5036, %v5031
    %v5072 = vpack.c.b16 %v5037, %v5032
    %v5073 = vpack.c.b16 %v5038, %v5033
    %v5074 = vpack.c.b16 %v5039, %v5034
    %v5075 = vpack.c.b16 %v5045, %v5040
    %v5076 = vpack.c.b16 %v5046, %v5041
    %v5077 = vpack.c.b16 %v5047, %v5042
    %v5078 = vpack.c.b16 %v5048, %v5043
    %v5079 = vpack.c.b16 %v5049, %v5044
    %v5080 = vpack.c.b16 %v5055, %v5050
    %v5081 = vpack.c.b16 %v5056, %v5051
    %v5082 = vpack.c.b16 %v5057, %v5052
    %v5083 = vpack.c.b16 %v5058, %v5053
    %v5084 = vpack.c.b16 %v5059, %v5054
    %v5085 = vpack.c.b16 %v5065, %v5060
    %v5086 = vpack.c.b16 %v5066, %v5061
    %v5087 = vpack.c.b16 %v5067, %v5062
    %v5088 = vpack.c.b16 %v5068, %v5063
    %v5089 = vpack.c.b16 %v5069, %v5064
    %v5111 = vsel %vm1451, %v4980, 0
    %5113 = vmatprep.subr.bf16.mxu0 0
    %5114 = vmatpush1.bf16.msra.mxu0 0
    %5115 = vmatprep.subr.bf16.mxu0 0
    %5116 = vmatpush1.bf16.msra.mxu0 0
    %5117 = vmatprep.subr.bf16.mxu0 0
    %5118 = vmatpush1.bf16.msra.mxu0 0
    %5119 = vmatprep.subr.bf16.mxu0 0
    %5120 = vmatpush1.bf16.msra.mxu0 0
    %5121 = vmatprep.subr.bf16.mxu0 %v5086
    %5122 = vmatpush1.bf16.msra.mxu0 %v5085
    %5123 = vmatprep.subr.bf16.mxu0 %v5081
    %5124 = vmatpush1.bf16.msra.mxu0 %v5080
    %5125 = vmatprep.subr.bf16.mxu0 %v5076
    %5126 = vmatpush1.bf16.msra.mxu0 %v5075
    %5127 = vmatprep.subr.bf16.mxu0 %v5071
    %5128 = vmatpush1.bf16.msra.mxu0 %v5070
    %5129 = vmatprep.subr.bf16.mxu0 0
    %5130 = vmatpush2.bf16.msra.mxu0 0
    %5131 = vmatprep.subr.bf16.mxu0 0
    %5132 = vmatpush2.bf16.msra.mxu0 0
    %5133 = vmatprep.subr.bf16.mxu0 0
    %5134 = vmatpush2.bf16.msra.mxu0 0
    %5135 = vmatprep.subr.bf16.mxu0 0
    %5136 = vmatpush2.bf16.msra.mxu0 0
    %5137 = vmatprep.subr.bf16.mxu0 0
    %5138 = vmatpush2.bf16.msra.mxu0 0
    %5139 = vmatprep.subr.bf16.mxu0 0
    %5140 = vmatpush2.bf16.msra.mxu0 0
    %5141 = vmatprep.subr.bf16.mxu0 0
    %5142 = vmatpush2.bf16.msra.mxu0 0
    %5143 = vmatprep.subr.bf16.mxu0 0
    %5144 = vmatpush2.bf16.msra.mxu0 0
    %5145 = vmatprep.mubr.bf16.mxu0 0
    %5146 = vmatmul.mubr.bf16.gmra.mxu0 %v5111
    %v5147 = vpop.f32.mrf.mxu0
    %v5148 = vadd.f32 0.0, %v5147
    %v5149 = vpop.f32.mrf.mxu0
    %v5150 = vadd.f32 0.0, %v5149
    %v5151 = vpop.f32.mrf.mxu0
    %v5152 = vpop.f32.mrf.mxu0
    %5153 = vdwg.mxu0
    %5154 = vmatprep.subr.bf16.mxu0 0
    %5155 = vmatpush1.bf16.msra.mxu0 0
    %5156 = vmatprep.subr.bf16.mxu0 0
    %5157 = vmatpush1.bf16.msra.mxu0 0
    %5158 = vmatprep.subr.bf16.mxu0 0
    %5159 = vmatpush1.bf16.msra.mxu0 0
    %5160 = vmatprep.subr.bf16.mxu0 0
    %5161 = vmatpush1.bf16.msra.mxu0 0
    %5162 = vmatprep.subr.bf16.mxu0 %v5088
    %5163 = vmatpush1.bf16.msra.mxu0 %v5087
    %5164 = vmatprep.subr.bf16.mxu0 %v5083
    %5165 = vmatpush1.bf16.msra.mxu0 %v5082
    %5166 = vmatprep.subr.bf16.mxu0 %v5078
    %5167 = vmatpush1.bf16.msra.mxu0 %v5077
    %5168 = vmatprep.subr.bf16.mxu0 %v5073
    %5169 = vmatpush1.bf16.msra.mxu0 %v5072
    %5170 = vmatprep.subr.bf16.mxu0 0
    %5171 = vmatpush2.bf16.msra.mxu0 0
    %5172 = vmatprep.subr.bf16.mxu0 0
    %5173 = vmatpush2.bf16.msra.mxu0 0
    %5174 = vmatprep.subr.bf16.mxu0 0
    %5175 = vmatpush2.bf16.msra.mxu0 0
    %5176 = vmatprep.subr.bf16.mxu0 0
    %5177 = vmatpush2.bf16.msra.mxu0 0
    %5178 = vmatprep.subr.bf16.mxu0 0
    %5179 = vmatpush2.bf16.msra.mxu0 0
    %5180 = vmatprep.subr.bf16.mxu0 0
    %5181 = vmatpush2.bf16.msra.mxu0 0
    %5182 = vmatprep.subr.bf16.mxu0 0
    %5183 = vmatpush2.bf16.msra.mxu0 0
    %5184 = vmatprep.subr.bf16.mxu0 0
    %5185 = vmatpush2.bf16.msra.mxu0 0
    %5186 = vmatprep.mubr.bf16.mxu0 0
    %5187 = vmatmul.mubr.bf16.gmra.mxu0 %v5111
    %v5188 = vpop.f32.mrf.mxu0
    %v5189 = vadd.f32 0.0, %v5188
    %v5190 = vpop.f32.mrf.mxu0
    %v5191 = vadd.f32 0.0, %v5190
    %v5192 = vpop.f32.mrf.mxu0
    %v5193 = vpop.f32.mrf.mxu0
    %5194 = vdwg.mxu0
    %5195 = vmatprep.subr.bf16.mxu0 0
    %5196 = vmatpush1.bf16.msra.mxu0 0
    %5197 = vmatprep.subr.bf16.mxu0 0
    %5198 = vmatpush1.bf16.msra.mxu0 0
    %5199 = vmatprep.subr.bf16.mxu0 0
    %5200 = vmatpush1.bf16.msra.mxu0 0
    %5201 = vmatprep.subr.bf16.mxu0 0
    %5202 = vmatpush1.bf16.msra.mxu0 0
    %5203 = vmatprep.subr.bf16.mxu0 0
    %5204 = vmatpush1.bf16.msra.mxu0 %v5089
    %5205 = vmatprep.subr.bf16.mxu0 0
    %5206 = vmatpush1.bf16.msra.mxu0 %v5084
    %5207 = vmatprep.subr.bf16.mxu0 0
    %5208 = vmatpush1.bf16.msra.mxu0 %v5079
    %5209 = vmatprep.subr.bf16.mxu0 0
    %5210 = vmatpush1.bf16.msra.mxu0 %v5074
    %5211 = vmatprep.subr.bf16.mxu0 0
    %5212 = vmatpush2.bf16.msra.mxu0 0
    %5213 = vmatprep.subr.bf16.mxu0 0
    %5214 = vmatpush2.bf16.msra.mxu0 0
    %5215 = vmatprep.subr.bf16.mxu0 0
    %5216 = vmatpush2.bf16.msra.mxu0 0
    %5217 = vmatprep.subr.bf16.mxu0 0
    %5218 = vmatpush2.bf16.msra.mxu0 0
    %5219 = vmatprep.subr.bf16.mxu0 0
    %5220 = vmatpush2.bf16.msra.mxu0 0
    %5221 = vmatprep.subr.bf16.mxu0 0
    %5222 = vmatpush2.bf16.msra.mxu0 0
    %5223 = vmatprep.subr.bf16.mxu0 0
    %5224 = vmatpush2.bf16.msra.mxu0 0
    %5225 = vmatprep.subr.bf16.mxu0 0
    %5226 = vmatpush2.bf16.msra.mxu0 0
    %5227 = vmatprep.mubr.bf16.mxu0 0
    %5228 = vmatmul.mubr.bf16.gmra.mxu0 %v5111
    %v5229 = vpop.f32.mrf.mxu0
    %v5230 = vadd.f32 0.0, %v5229
    %v5231 = vpop.f32.mrf.mxu0
    %v5232 = vpop.f32.mrf.mxu0
    %v5233 = vpop.f32.mrf.mxu0
    %5234 = vdwg.mxu0
    %v5235 = vadd.f32 %v4971, %v5148
    %v5236 = vadd.f32 %v4972, %v5150
    %v5237 = vadd.f32 %v4973, %v5189
    %v5238 = vadd.f32 %v4974, %v5191
    %v5239 = vadd.f32 %v4975, %v5230
    %v5240 = vrot.slane %v1318, 7
    %v5242 = vrot.slane %v1283, 7
    %v5244 = vsel %vm1291, %v5240, %v5242
    %s5245 = scalar_lea.vmem %s3, 2400
    %v5246 = vld [vmem:[%s5245] sm:$0xff]
    %v5247 = vld [vmem:[%s5245 + $0x8] sm:$0xff]
    %v5248 = vld [vmem:[%s5245 + $0x10] sm:$0xf]
    %v5249 = vld [vmem:[%s5245 + $0x14] sm:$0xff]
    %v5250 = vld [vmem:[%s5245 + $0x1c] sm:$0xff]
    %v5251 = vld [vmem:[%s5245 + $0x24] sm:$0xf]
    %v5252 = vld [vmem:[%s5245 + $0x28] sm:$0xff]
    %v5253 = vld [vmem:[%s5245 + $0x30] sm:$0xff]
    %v5254 = vld [vmem:[%s5245 + $0x38] sm:$0xf]
    %v5255 = vld [vmem:[%s5245 + $0x3c] sm:$0xff]
    %v5256 = vld [vmem:[%s5245 + $0x44] sm:$0xff]
    %v5257 = vld [vmem:[%s5245 + $0x4c] sm:$0xf]
    %v5258 = vld [vmem:[%s5245 + $0x50] sm:$0xff]
    %v5259 = vld [vmem:[%s5245 + $0x58] sm:$0xff]
    %v5260 = vld [vmem:[%s5245 + $0x60] sm:$0xf]
    %v5261 = vld [vmem:[%s5245 + $0x64] sm:$0xff]
    %v5262 = vld [vmem:[%s5245 + $0x6c] sm:$0xff]
    %v5263 = vld [vmem:[%s5245 + $0x74] sm:$0xf]
    %v5264 = vld [vmem:[%s5245 + $0x78] sm:$0xff]
    %v5265 = vld [vmem:[%s5245 + $0x80] sm:$0xff]
    %v5266 = vld [vmem:[%s5245 + $0x88] sm:$0xf]
    %v5267 = vld [vmem:[%s5245 + $0x8c] sm:$0xff]
    %v5268 = vld [vmem:[%s5245 + $0x94] sm:$0xff]
    %v5269 = vld [vmem:[%s5245 + $0x9c] sm:$0xf]
    %v5294 = vunpack.c.l.b16 %v5246
    %v5295 = vunpack.c.h.b16 %v5246
    %v5296 = vunpack.c.l.b16 %v5247
    %v5297 = vunpack.c.h.b16 %v5247
    %v5298 = vunpack.c.l.b16 %v5248
    %v5299 = vunpack.c.l.b16 %v5249
    %v5300 = vunpack.c.h.b16 %v5249
    %v5301 = vunpack.c.l.b16 %v5250
    %v5302 = vunpack.c.h.b16 %v5250
    %v5303 = vunpack.c.l.b16 %v5251
    %v5304 = vunpack.c.l.b16 %v5252
    %v5305 = vunpack.c.h.b16 %v5252
    %v5306 = vunpack.c.l.b16 %v5253
    %v5307 = vunpack.c.h.b16 %v5253
    %v5308 = vunpack.c.l.b16 %v5254
    %v5309 = vunpack.c.l.b16 %v5255
    %v5310 = vunpack.c.h.b16 %v5255
    %v5311 = vunpack.c.l.b16 %v5256
    %v5312 = vunpack.c.h.b16 %v5256
    %v5313 = vunpack.c.l.b16 %v5257
    %v5314 = vunpack.c.l.b16 %v5258
    %v5315 = vunpack.c.h.b16 %v5258
    %v5316 = vunpack.c.l.b16 %v5259
    %v5317 = vunpack.c.h.b16 %v5259
    %v5318 = vunpack.c.l.b16 %v5260
    %v5319 = vunpack.c.l.b16 %v5261
    %v5320 = vunpack.c.h.b16 %v5261
    %v5321 = vunpack.c.l.b16 %v5262
    %v5322 = vunpack.c.h.b16 %v5262
    %v5323 = vunpack.c.l.b16 %v5263
    %v5324 = vunpack.c.l.b16 %v5264
    %v5325 = vunpack.c.h.b16 %v5264
    %v5326 = vunpack.c.l.b16 %v5265
    %v5327 = vunpack.c.h.b16 %v5265
    %v5328 = vunpack.c.l.b16 %v5266
    %v5329 = vunpack.c.l.b16 %v5267
    %v5330 = vunpack.c.h.b16 %v5267
    %v5331 = vunpack.c.l.b16 %v5268
    %v5332 = vunpack.c.h.b16 %v5268
    %v5333 = vunpack.c.l.b16 %v5269
    %v5334 = vpack.c.b16 %v5299, %v5294
    %v5335 = vpack.c.b16 %v5300, %v5295
    %v5336 = vpack.c.b16 %v5301, %v5296
    %v5337 = vpack.c.b16 %v5302, %v5297
    %v5338 = vpack.c.b16 %v5303, %v5298
    %v5339 = vpack.c.b16 %v5309, %v5304
    %v5340 = vpack.c.b16 %v5310, %v5305
    %v5341 = vpack.c.b16 %v5311, %v5306
    %v5342 = vpack.c.b16 %v5312, %v5307
    %v5343 = vpack.c.b16 %v5313, %v5308
    %v5344 = vpack.c.b16 %v5319, %v5314
    %v5345 = vpack.c.b16 %v5320, %v5315
    %v5346 = vpack.c.b16 %v5321, %v5316
    %v5347 = vpack.c.b16 %v5322, %v5317
    %v5348 = vpack.c.b16 %v5323, %v5318
    %v5349 = vpack.c.b16 %v5329, %v5324
    %v5350 = vpack.c.b16 %v5330, %v5325
    %v5351 = vpack.c.b16 %v5331, %v5326
    %v5352 = vpack.c.b16 %v5332, %v5327
    %v5353 = vpack.c.b16 %v5333, %v5328
    %v5375 = vsel %vm1451, %v5244, 0
    %5377 = vmatprep.subr.bf16.mxu0 0
    %5378 = vmatpush1.bf16.msra.mxu0 0
    %5379 = vmatprep.subr.bf16.mxu0 0
    %5380 = vmatpush1.bf16.msra.mxu0 0
    %5381 = vmatprep.subr.bf16.mxu0 0
    %5382 = vmatpush1.bf16.msra.mxu0 0
    %5383 = vmatprep.subr.bf16.mxu0 0
    %5384 = vmatpush1.bf16.msra.mxu0 0
    %5385 = vmatprep.subr.bf16.mxu0 %v5350
    %5386 = vmatpush1.bf16.msra.mxu0 %v5349
    %5387 = vmatprep.subr.bf16.mxu0 %v5345
    %5388 = vmatpush1.bf16.msra.mxu0 %v5344
    %5389 = vmatprep.subr.bf16.mxu0 %v5340
    %5390 = vmatpush1.bf16.msra.mxu0 %v5339
    %5391 = vmatprep.subr.bf16.mxu0 %v5335
    %5392 = vmatpush1.bf16.msra.mxu0 %v5334
    %5393 = vmatprep.subr.bf16.mxu0 0
    %5394 = vmatpush2.bf16.msra.mxu0 0
    %5395 = vmatprep.subr.bf16.mxu0 0
    %5396 = vmatpush2.bf16.msra.mxu0 0
    %5397 = vmatprep.subr.bf16.mxu0 0
    %5398 = vmatpush2.bf16.msra.mxu0 0
    %5399 = vmatprep.subr.bf16.mxu0 0
    %5400 = vmatpush2.bf16.msra.mxu0 0
    %5401 = vmatprep.subr.bf16.mxu0 0
    %5402 = vmatpush2.bf16.msra.mxu0 0
    %5403 = vmatprep.subr.bf16.mxu0 0
    %5404 = vmatpush2.bf16.msra.mxu0 0
    %5405 = vmatprep.subr.bf16.mxu0 0
    %5406 = vmatpush2.bf16.msra.mxu0 0
    %5407 = vmatprep.subr.bf16.mxu0 0
    %5408 = vmatpush2.bf16.msra.mxu0 0
    %5409 = vmatprep.mubr.bf16.mxu0 0
    %5410 = vmatmul.mubr.bf16.gmra.mxu0 %v5375
    %v5411 = vpop.f32.mrf.mxu0
    %v5412 = vadd.f32 0.0, %v5411
    %v5413 = vpop.f32.mrf.mxu0
    %v5414 = vadd.f32 0.0, %v5413
    %v5415 = vpop.f32.mrf.mxu0
    %v5416 = vpop.f32.mrf.mxu0
    %5417 = vdwg.mxu0
    %5418 = vmatprep.subr.bf16.mxu0 0
    %5419 = vmatpush1.bf16.msra.mxu0 0
    %5420 = vmatprep.subr.bf16.mxu0 0
    %5421 = vmatpush1.bf16.msra.mxu0 0
    %5422 = vmatprep.subr.bf16.mxu0 0
    %5423 = vmatpush1.bf16.msra.mxu0 0
    %5424 = vmatprep.subr.bf16.mxu0 0
    %5425 = vmatpush1.bf16.msra.mxu0 0
    %5426 = vmatprep.subr.bf16.mxu0 %v5352
    %5427 = vmatpush1.bf16.msra.mxu0 %v5351
    %5428 = vmatprep.subr.bf16.mxu0 %v5347
    %5429 = vmatpush1.bf16.msra.mxu0 %v5346
    %5430 = vmatprep.subr.bf16.mxu0 %v5342
    %5431 = vmatpush1.bf16.msra.mxu0 %v5341
    %5432 = vmatprep.subr.bf16.mxu0 %v5337
    %5433 = vmatpush1.bf16.msra.mxu0 %v5336
    %5434 = vmatprep.subr.bf16.mxu0 0
    %5435 = vmatpush2.bf16.msra.mxu0 0
    %5436 = vmatprep.subr.bf16.mxu0 0
    %5437 = vmatpush2.bf16.msra.mxu0 0
    %5438 = vmatprep.subr.bf16.mxu0 0
    %5439 = vmatpush2.bf16.msra.mxu0 0
    %5440 = vmatprep.subr.bf16.mxu0 0
    %5441 = vmatpush2.bf16.msra.mxu0 0
    %5442 = vmatprep.subr.bf16.mxu0 0
    %5443 = vmatpush2.bf16.msra.mxu0 0
    %5444 = vmatprep.subr.bf16.mxu0 0
    %5445 = vmatpush2.bf16.msra.mxu0 0
    %5446 = vmatprep.subr.bf16.mxu0 0
    %5447 = vmatpush2.bf16.msra.mxu0 0
    %5448 = vmatprep.subr.bf16.mxu0 0
    %5449 = vmatpush2.bf16.msra.mxu0 0
    %5450 = vmatprep.mubr.bf16.mxu0 0
    %5451 = vmatmul.mubr.bf16.gmra.mxu0 %v5375
    %v5452 = vpop.f32.mrf.mxu0
    %v5453 = vadd.f32 0.0, %v5452
    %v5454 = vpop.f32.mrf.mxu0
    %v5455 = vadd.f32 0.0, %v5454
    %v5456 = vpop.f32.mrf.mxu0
    %v5457 = vpop.f32.mrf.mxu0
    %5458 = vdwg.mxu0
    %5459 = vmatprep.subr.bf16.mxu0 0
    %5460 = vmatpush1.bf16.msra.mxu0 0
    %5461 = vmatprep.subr.bf16.mxu0 0
    %5462 = vmatpush1.bf16.msra.mxu0 0
    %5463 = vmatprep.subr.bf16.mxu0 0
    %5464 = vmatpush1.bf16.msra.mxu0 0
    %5465 = vmatprep.subr.bf16.mxu0 0
    %5466 = vmatpush1.bf16.msra.mxu0 0
    %5467 = vmatprep.subr.bf16.mxu0 0
    %5468 = vmatpush1.bf16.msra.mxu0 %v5353
    %5469 = vmatprep.subr.bf16.mxu0 0
    %5470 = vmatpush1.bf16.msra.mxu0 %v5348
    %5471 = vmatprep.subr.bf16.mxu0 0
    %5472 = vmatpush1.bf16.msra.mxu0 %v5343
    %5473 = vmatprep.subr.bf16.mxu0 0
    %5474 = vmatpush1.bf16.msra.mxu0 %v5338
    %5475 = vmatprep.subr.bf16.mxu0 0
    %5476 = vmatpush2.bf16.msra.mxu0 0
    %5477 = vmatprep.subr.bf16.mxu0 0
    %5478 = vmatpush2.bf16.msra.mxu0 0
    %5479 = vmatprep.subr.bf16.mxu0 0
    %5480 = vmatpush2.bf16.msra.mxu0 0
    %5481 = vmatprep.subr.bf16.mxu0 0
    %5482 = vmatpush2.bf16.msra.mxu0 0
    %5483 = vmatprep.subr.bf16.mxu0 0
    %5484 = vmatpush2.bf16.msra.mxu0 0
    %5485 = vmatprep.subr.bf16.mxu0 0
    %5486 = vmatpush2.bf16.msra.mxu0 0
    %5487 = vmatprep.subr.bf16.mxu0 0
    %5488 = vmatpush2.bf16.msra.mxu0 0
    %5489 = vmatprep.subr.bf16.mxu0 0
    %5490 = vmatpush2.bf16.msra.mxu0 0
    %5491 = vmatprep.mubr.bf16.mxu0 0
    %5492 = vmatmul.mubr.bf16.gmra.mxu0 %v5375
    %v5493 = vpop.f32.mrf.mxu0
    %v5494 = vadd.f32 0.0, %v5493
    %v5495 = vpop.f32.mrf.mxu0
    %v5496 = vpop.f32.mrf.mxu0
    %v5497 = vpop.f32.mrf.mxu0
    %5498 = vdwg.mxu0
    %v5499 = vadd.f32 %v5235, %v5412
    %v5500 = vadd.f32 %v5236, %v5414
    %v5501 = vadd.f32 %v5237, %v5453
    %v5502 = vadd.f32 %v5238, %v5455
    %v5503 = vadd.f32 %v5239, %v5494
    %v5505 = vshll.u32 %v1284, 16
    %v5508 = vsel %vm1291, %v731, %v5505
    %s5509 = scalar_lea.vmem %s3, 2560
    %v5510 = vld [vmem:[%s5509] sm:$0xff]
    %v5511 = vld [vmem:[%s5509 + $0x8] sm:$0xff]
    %v5512 = vld [vmem:[%s5509 + $0x10] sm:$0xf]
    %v5513 = vld [vmem:[%s5509 + $0x14] sm:$0xff]
    %v5514 = vld [vmem:[%s5509 + $0x1c] sm:$0xff]
    %v5515 = vld [vmem:[%s5509 + $0x24] sm:$0xf]
    %v5516 = vld [vmem:[%s5509 + $0x28] sm:$0xff]
    %v5517 = vld [vmem:[%s5509 + $0x30] sm:$0xff]
    %v5518 = vld [vmem:[%s5509 + $0x38] sm:$0xf]
    %v5519 = vld [vmem:[%s5509 + $0x3c] sm:$0xff]
    %v5520 = vld [vmem:[%s5509 + $0x44] sm:$0xff]
    %v5521 = vld [vmem:[%s5509 + $0x4c] sm:$0xf]
    %v5522 = vld [vmem:[%s5509 + $0x50] sm:$0xff]
    %v5523 = vld [vmem:[%s5509 + $0x58] sm:$0xff]
    %v5524 = vld [vmem:[%s5509 + $0x60] sm:$0xf]
    %v5525 = vld [vmem:[%s5509 + $0x64] sm:$0xff]
    %v5526 = vld [vmem:[%s5509 + $0x6c] sm:$0xff]
    %v5527 = vld [vmem:[%s5509 + $0x74] sm:$0xf]
    %v5528 = vld [vmem:[%s5509 + $0x78] sm:$0xff]
    %v5529 = vld [vmem:[%s5509 + $0x80] sm:$0xff]
    %v5530 = vld [vmem:[%s5509 + $0x88] sm:$0xf]
    %v5531 = vld [vmem:[%s5509 + $0x8c] sm:$0xff]
    %v5532 = vld [vmem:[%s5509 + $0x94] sm:$0xff]
    %v5533 = vld [vmem:[%s5509 + $0x9c] sm:$0xf]
    %v5558 = vunpack.c.l.b16 %v5510
    %v5559 = vunpack.c.h.b16 %v5510
    %v5560 = vunpack.c.l.b16 %v5511
    %v5561 = vunpack.c.h.b16 %v5511
    %v5562 = vunpack.c.l.b16 %v5512
    %v5563 = vunpack.c.l.b16 %v5513
    %v5564 = vunpack.c.h.b16 %v5513
    %v5565 = vunpack.c.l.b16 %v5514
    %v5566 = vunpack.c.h.b16 %v5514
    %v5567 = vunpack.c.l.b16 %v5515
    %v5568 = vunpack.c.l.b16 %v5516
    %v5569 = vunpack.c.h.b16 %v5516
    %v5570 = vunpack.c.l.b16 %v5517
    %v5571 = vunpack.c.h.b16 %v5517
    %v5572 = vunpack.c.l.b16 %v5518
    %v5573 = vunpack.c.l.b16 %v5519
    %v5574 = vunpack.c.h.b16 %v5519
    %v5575 = vunpack.c.l.b16 %v5520
    %v5576 = vunpack.c.h.b16 %v5520
    %v5577 = vunpack.c.l.b16 %v5521
    %v5578 = vunpack.c.l.b16 %v5522
    %v5579 = vunpack.c.h.b16 %v5522
    %v5580 = vunpack.c.l.b16 %v5523
    %v5581 = vunpack.c.h.b16 %v5523
    %v5582 = vunpack.c.l.b16 %v5524
    %v5583 = vunpack.c.l.b16 %v5525
    %v5584 = vunpack.c.h.b16 %v5525
    %v5585 = vunpack.c.l.b16 %v5526
    %v5586 = vunpack.c.h.b16 %v5526
    %v5587 = vunpack.c.l.b16 %v5527
    %v5588 = vunpack.c.l.b16 %v5528
    %v5589 = vunpack.c.h.b16 %v5528
    %v5590 = vunpack.c.l.b16 %v5529
    %v5591 = vunpack.c.h.b16 %v5529
    %v5592 = vunpack.c.l.b16 %v5530
    %v5593 = vunpack.c.l.b16 %v5531
    %v5594 = vunpack.c.h.b16 %v5531
    %v5595 = vunpack.c.l.b16 %v5532
    %v5596 = vunpack.c.h.b16 %v5532
    %v5597 = vunpack.c.l.b16 %v5533
    %v5598 = vpack.c.b16 %v5563, %v5558
    %v5599 = vpack.c.b16 %v5564, %v5559
    %v5600 = vpack.c.b16 %v5565, %v5560
    %v5601 = vpack.c.b16 %v5566, %v5561
    %v5602 = vpack.c.b16 %v5567, %v5562
    %v5603 = vpack.c.b16 %v5573, %v5568
    %v5604 = vpack.c.b16 %v5574, %v5569
    %v5605 = vpack.c.b16 %v5575, %v5570
    %v5606 = vpack.c.b16 %v5576, %v5571
    %v5607 = vpack.c.b16 %v5577, %v5572
    %v5608 = vpack.c.b16 %v5583, %v5578
    %v5609 = vpack.c.b16 %v5584, %v5579
    %v5610 = vpack.c.b16 %v5585, %v5580
    %v5611 = vpack.c.b16 %v5586, %v5581
    %v5612 = vpack.c.b16 %v5587, %v5582
    %v5613 = vpack.c.b16 %v5593, %v5588
    %v5614 = vpack.c.b16 %v5594, %v5589
    %v5615 = vpack.c.b16 %v5595, %v5590
    %v5616 = vpack.c.b16 %v5596, %v5591
    %v5617 = vpack.c.b16 %v5597, %v5592
    %v5639 = vsel %vm1451, %v5508, 0
    %5641 = vmatprep.subr.bf16.mxu0 0
    %5642 = vmatpush1.bf16.msra.mxu0 0
    %5643 = vmatprep.subr.bf16.mxu0 0
    %5644 = vmatpush1.bf16.msra.mxu0 0
    %5645 = vmatprep.subr.bf16.mxu0 0
    %5646 = vmatpush1.bf16.msra.mxu0 0
    %5647 = vmatprep.subr.bf16.mxu0 0
    %5648 = vmatpush1.bf16.msra.mxu0 0
    %5649 = vmatprep.subr.bf16.mxu0 %v5614
    %5650 = vmatpush1.bf16.msra.mxu0 %v5613
    %5651 = vmatprep.subr.bf16.mxu0 %v5609
    %5652 = vmatpush1.bf16.msra.mxu0 %v5608
    %5653 = vmatprep.subr.bf16.mxu0 %v5604
    %5654 = vmatpush1.bf16.msra.mxu0 %v5603
    %5655 = vmatprep.subr.bf16.mxu0 %v5599
    %5656 = vmatpush1.bf16.msra.mxu0 %v5598
    %5657 = vmatprep.subr.bf16.mxu0 0
    %5658 = vmatpush2.bf16.msra.mxu0 0
    %5659 = vmatprep.subr.bf16.mxu0 0
    %5660 = vmatpush2.bf16.msra.mxu0 0
    %5661 = vmatprep.subr.bf16.mxu0 0
    %5662 = vmatpush2.bf16.msra.mxu0 0
    %5663 = vmatprep.subr.bf16.mxu0 0
    %5664 = vmatpush2.bf16.msra.mxu0 0
    %5665 = vmatprep.subr.bf16.mxu0 0
    %5666 = vmatpush2.bf16.msra.mxu0 0
    %5667 = vmatprep.subr.bf16.mxu0 0
    %5668 = vmatpush2.bf16.msra.mxu0 0
    %5669 = vmatprep.subr.bf16.mxu0 0
    %5670 = vmatpush2.bf16.msra.mxu0 0
    %5671 = vmatprep.subr.bf16.mxu0 0
    %5672 = vmatpush2.bf16.msra.mxu0 0
    %5673 = vmatprep.mubr.bf16.mxu0 0
    %5674 = vmatmul.mubr.bf16.gmra.mxu0 %v5639
    %v5675 = vpop.f32.mrf.mxu0
    %v5676 = vadd.f32 0.0, %v5675
    %v5677 = vpop.f32.mrf.mxu0
    %v5678 = vadd.f32 0.0, %v5677
    %v5679 = vpop.f32.mrf.mxu0
    %v5680 = vpop.f32.mrf.mxu0
    %5681 = vdwg.mxu0
    %5682 = vmatprep.subr.bf16.mxu0 0
    %5683 = vmatpush1.bf16.msra.mxu0 0
    %5684 = vmatprep.subr.bf16.mxu0 0
    %5685 = vmatpush1.bf16.msra.mxu0 0
    %5686 = vmatprep.subr.bf16.mxu0 0
    %5687 = vmatpush1.bf16.msra.mxu0 0
    %5688 = vmatprep.subr.bf16.mxu0 0
    %5689 = vmatpush1.bf16.msra.mxu0 0
    %5690 = vmatprep.subr.bf16.mxu0 %v5616
    %5691 = vmatpush1.bf16.msra.mxu0 %v5615
    %5692 = vmatprep.subr.bf16.mxu0 %v5611
    %5693 = vmatpush1.bf16.msra.mxu0 %v5610
    %5694 = vmatprep.subr.bf16.mxu0 %v5606
    %5695 = vmatpush1.bf16.msra.mxu0 %v5605
    %5696 = vmatprep.subr.bf16.mxu0 %v5601
    %5697 = vmatpush1.bf16.msra.mxu0 %v5600
    %5698 = vmatprep.subr.bf16.mxu0 0
    %5699 = vmatpush2.bf16.msra.mxu0 0
    %5700 = vmatprep.subr.bf16.mxu0 0
    %5701 = vmatpush2.bf16.msra.mxu0 0
    %5702 = vmatprep.subr.bf16.mxu0 0
    %5703 = vmatpush2.bf16.msra.mxu0 0
    %5704 = vmatprep.subr.bf16.mxu0 0
    %5705 = vmatpush2.bf16.msra.mxu0 0
    %5706 = vmatprep.subr.bf16.mxu0 0
    %5707 = vmatpush2.bf16.msra.mxu0 0
    %5708 = vmatprep.subr.bf16.mxu0 0
    %5709 = vmatpush2.bf16.msra.mxu0 0
    %5710 = vmatprep.subr.bf16.mxu0 0
    %5711 = vmatpush2.bf16.msra.mxu0 0
    %5712 = vmatprep.subr.bf16.mxu0 0
    %5713 = vmatpush2.bf16.msra.mxu0 0
    %5714 = vmatprep.mubr.bf16.mxu0 0
    %5715 = vmatmul.mubr.bf16.gmra.mxu0 %v5639
    %v5716 = vpop.f32.mrf.mxu0
    %v5717 = vadd.f32 0.0, %v5716
    %v5718 = vpop.f32.mrf.mxu0
    %v5719 = vadd.f32 0.0, %v5718
    %v5720 = vpop.f32.mrf.mxu0
    %v5721 = vpop.f32.mrf.mxu0
    %5722 = vdwg.mxu0
    %5723 = vmatprep.subr.bf16.mxu0 0
    %5724 = vmatpush1.bf16.msra.mxu0 0
    %5725 = vmatprep.subr.bf16.mxu0 0
    %5726 = vmatpush1.bf16.msra.mxu0 0
    %5727 = vmatprep.subr.bf16.mxu0 0
    %5728 = vmatpush1.bf16.msra.mxu0 0
    %5729 = vmatprep.subr.bf16.mxu0 0
    %5730 = vmatpush1.bf16.msra.mxu0 0
    %5731 = vmatprep.subr.bf16.mxu0 0
    %5732 = vmatpush1.bf16.msra.mxu0 %v5617
    %5733 = vmatprep.subr.bf16.mxu0 0
    %5734 = vmatpush1.bf16.msra.mxu0 %v5612
    %5735 = vmatprep.subr.bf16.mxu0 0
    %5736 = vmatpush1.bf16.msra.mxu0 %v5607
    %5737 = vmatprep.subr.bf16.mxu0 0
    %5738 = vmatpush1.bf16.msra.mxu0 %v5602
    %5739 = vmatprep.subr.bf16.mxu0 0
    %5740 = vmatpush2.bf16.msra.mxu0 0
    %5741 = vmatprep.subr.bf16.mxu0 0
    %5742 = vmatpush2.bf16.msra.mxu0 0
    %5743 = vmatprep.subr.bf16.mxu0 0
    %5744 = vmatpush2.bf16.msra.mxu0 0
    %5745 = vmatprep.subr.bf16.mxu0 0
    %5746 = vmatpush2.bf16.msra.mxu0 0
    %5747 = vmatprep.subr.bf16.mxu0 0
    %5748 = vmatpush2.bf16.msra.mxu0 0
    %5749 = vmatprep.subr.bf16.mxu0 0
    %5750 = vmatpush2.bf16.msra.mxu0 0
    %5751 = vmatprep.subr.bf16.mxu0 0
    %5752 = vmatpush2.bf16.msra.mxu0 0
    %5753 = vmatprep.subr.bf16.mxu0 0
    %5754 = vmatpush2.bf16.msra.mxu0 0
    %5755 = vmatprep.mubr.bf16.mxu0 0
    %5756 = vmatmul.mubr.bf16.gmra.mxu0 %v5639
    %v5757 = vpop.f32.mrf.mxu0
    %v5758 = vadd.f32 0.0, %v5757
    %v5759 = vpop.f32.mrf.mxu0
    %v5760 = vpop.f32.mrf.mxu0
    %v5761 = vpop.f32.mrf.mxu0
    %5762 = vdwg.mxu0
    %v5763 = vadd.f32 %v5499, %v5676
    %v5764 = vadd.f32 %v5500, %v5678
    %v5765 = vadd.f32 %v5501, %v5717
    %v5766 = vadd.f32 %v5502, %v5719
    %v5767 = vadd.f32 %v5503, %v5758
    %v5769 = vshrl.u32 %v731, 16
    %v5772 = vsel %vm1291, %v5769, %v1284
    %s5773 = scalar_lea.vmem %s3, 2720
    %v5774 = vld [vmem:[%s5773] sm:$0xff]
    %v5775 = vld [vmem:[%s5773 + $0x8] sm:$0xff]
    %v5776 = vld [vmem:[%s5773 + $0x10] sm:$0xf]
    %v5777 = vld [vmem:[%s5773 + $0x14] sm:$0xff]
    %v5778 = vld [vmem:[%s5773 + $0x1c] sm:$0xff]
    %v5779 = vld [vmem:[%s5773 + $0x24] sm:$0xf]
    %v5780 = vld [vmem:[%s5773 + $0x28] sm:$0xff]
    %v5781 = vld [vmem:[%s5773 + $0x30] sm:$0xff]
    %v5782 = vld [vmem:[%s5773 + $0x38] sm:$0xf]
    %v5783 = vld [vmem:[%s5773 + $0x3c] sm:$0xff]
    %v5784 = vld [vmem:[%s5773 + $0x44] sm:$0xff]
    %v5785 = vld [vmem:[%s5773 + $0x4c] sm:$0xf]
    %v5786 = vld [vmem:[%s5773 + $0x50] sm:$0xff]
    %v5787 = vld [vmem:[%s5773 + $0x58] sm:$0xff]
    %v5788 = vld [vmem:[%s5773 + $0x60] sm:$0xf]
    %v5789 = vld [vmem:[%s5773 + $0x64] sm:$0xff]
    %v5790 = vld [vmem:[%s5773 + $0x6c] sm:$0xff]
    %v5791 = vld [vmem:[%s5773 + $0x74] sm:$0xf]
    %v5792 = vld [vmem:[%s5773 + $0x78] sm:$0xff]
    %v5793 = vld [vmem:[%s5773 + $0x80] sm:$0xff]
    %v5794 = vld [vmem:[%s5773 + $0x88] sm:$0xf]
    %v5795 = vld [vmem:[%s5773 + $0x8c] sm:$0xff]
    %v5796 = vld [vmem:[%s5773 + $0x94] sm:$0xff]
    %v5797 = vld [vmem:[%s5773 + $0x9c] sm:$0xf]
    %v5822 = vunpack.c.l.b16 %v5774
    %v5823 = vunpack.c.h.b16 %v5774
    %v5824 = vunpack.c.l.b16 %v5775
    %v5825 = vunpack.c.h.b16 %v5775
    %v5826 = vunpack.c.l.b16 %v5776
    %v5827 = vunpack.c.l.b16 %v5777
    %v5828 = vunpack.c.h.b16 %v5777
    %v5829 = vunpack.c.l.b16 %v5778
    %v5830 = vunpack.c.h.b16 %v5778
    %v5831 = vunpack.c.l.b16 %v5779
    %v5832 = vunpack.c.l.b16 %v5780
    %v5833 = vunpack.c.h.b16 %v5780
    %v5834 = vunpack.c.l.b16 %v5781
    %v5835 = vunpack.c.h.b16 %v5781
    %v5836 = vunpack.c.l.b16 %v5782
    %v5837 = vunpack.c.l.b16 %v5783
    %v5838 = vunpack.c.h.b16 %v5783
    %v5839 = vunpack.c.l.b16 %v5784
    %v5840 = vunpack.c.h.b16 %v5784
    %v5841 = vunpack.c.l.b16 %v5785
    %v5842 = vunpack.c.l.b16 %v5786
    %v5843 = vunpack.c.h.b16 %v5786
    %v5844 = vunpack.c.l.b16 %v5787
    %v5845 = vunpack.c.h.b16 %v5787
    %v5846 = vunpack.c.l.b16 %v5788
    %v5847 = vunpack.c.l.b16 %v5789
    %v5848 = vunpack.c.h.b16 %v5789
    %v5849 = vunpack.c.l.b16 %v5790
    %v5850 = vunpack.c.h.b16 %v5790
    %v5851 = vunpack.c.l.b16 %v5791
    %v5852 = vunpack.c.l.b16 %v5792
    %v5853 = vunpack.c.h.b16 %v5792
    %v5854 = vunpack.c.l.b16 %v5793
    %v5855 = vunpack.c.h.b16 %v5793
    %v5856 = vunpack.c.l.b16 %v5794
    %v5857 = vunpack.c.l.b16 %v5795
    %v5858 = vunpack.c.h.b16 %v5795
    %v5859 = vunpack.c.l.b16 %v5796
    %v5860 = vunpack.c.h.b16 %v5796
    %v5861 = vunpack.c.l.b16 %v5797
    %v5862 = vpack.c.b16 %v5827, %v5822
    %v5863 = vpack.c.b16 %v5828, %v5823
    %v5864 = vpack.c.b16 %v5829, %v5824
    %v5865 = vpack.c.b16 %v5830, %v5825
    %v5866 = vpack.c.b16 %v5831, %v5826
    %v5867 = vpack.c.b16 %v5837, %v5832
    %v5868 = vpack.c.b16 %v5838, %v5833
    %v5869 = vpack.c.b16 %v5839, %v5834
    %v5870 = vpack.c.b16 %v5840, %v5835
    %v5871 = vpack.c.b16 %v5841, %v5836
    %v5872 = vpack.c.b16 %v5847, %v5842
    %v5873 = vpack.c.b16 %v5848, %v5843
    %v5874 = vpack.c.b16 %v5849, %v5844
    %v5875 = vpack.c.b16 %v5850, %v5845
    %v5876 = vpack.c.b16 %v5851, %v5846
    %v5877 = vpack.c.b16 %v5857, %v5852
    %v5878 = vpack.c.b16 %v5858, %v5853
    %v5879 = vpack.c.b16 %v5859, %v5854
    %v5880 = vpack.c.b16 %v5860, %v5855
    %v5881 = vpack.c.b16 %v5861, %v5856
    %v5903 = vsel %vm1451, %v5772, 0
    %5905 = vmatprep.subr.bf16.mxu0 0
    %5906 = vmatpush1.bf16.msra.mxu0 0
    %5907 = vmatprep.subr.bf16.mxu0 0
    %5908 = vmatpush1.bf16.msra.mxu0 0
    %5909 = vmatprep.subr.bf16.mxu0 0
    %5910 = vmatpush1.bf16.msra.mxu0 0
    %5911 = vmatprep.subr.bf16.mxu0 0
    %5912 = vmatpush1.bf16.msra.mxu0 0
    %5913 = vmatprep.subr.bf16.mxu0 %v5878
    %5914 = vmatpush1.bf16.msra.mxu0 %v5877
    %5915 = vmatprep.subr.bf16.mxu0 %v5873
    %5916 = vmatpush1.bf16.msra.mxu0 %v5872
    %5917 = vmatprep.subr.bf16.mxu0 %v5868
    %5918 = vmatpush1.bf16.msra.mxu0 %v5867
    %5919 = vmatprep.subr.bf16.mxu0 %v5863
    %5920 = vmatpush1.bf16.msra.mxu0 %v5862
    %5921 = vmatprep.subr.bf16.mxu0 0
    %5922 = vmatpush2.bf16.msra.mxu0 0
    %5923 = vmatprep.subr.bf16.mxu0 0
    %5924 = vmatpush2.bf16.msra.mxu0 0
    %5925 = vmatprep.subr.bf16.mxu0 0
    %5926 = vmatpush2.bf16.msra.mxu0 0
    %5927 = vmatprep.subr.bf16.mxu0 0
    %5928 = vmatpush2.bf16.msra.mxu0 0
    %5929 = vmatprep.subr.bf16.mxu0 0
    %5930 = vmatpush2.bf16.msra.mxu0 0
    %5931 = vmatprep.subr.bf16.mxu0 0
    %5932 = vmatpush2.bf16.msra.mxu0 0
    %5933 = vmatprep.subr.bf16.mxu0 0
    %5934 = vmatpush2.bf16.msra.mxu0 0
    %5935 = vmatprep.subr.bf16.mxu0 0
    %5936 = vmatpush2.bf16.msra.mxu0 0
    %5937 = vmatprep.mubr.bf16.mxu0 0
    %5938 = vmatmul.mubr.bf16.gmra.mxu0 %v5903
    %v5939 = vpop.f32.mrf.mxu0
    %v5940 = vadd.f32 0.0, %v5939
    %v5941 = vpop.f32.mrf.mxu0
    %v5942 = vadd.f32 0.0, %v5941
    %v5943 = vpop.f32.mrf.mxu0
    %v5944 = vpop.f32.mrf.mxu0
    %5945 = vdwg.mxu0
    %5946 = vmatprep.subr.bf16.mxu0 0
    %5947 = vmatpush1.bf16.msra.mxu0 0
    %5948 = vmatprep.subr.bf16.mxu0 0
    %5949 = vmatpush1.bf16.msra.mxu0 0
    %5950 = vmatprep.subr.bf16.mxu0 0
    %5951 = vmatpush1.bf16.msra.mxu0 0
    %5952 = vmatprep.subr.bf16.mxu0 0
    %5953 = vmatpush1.bf16.msra.mxu0 0
    %5954 = vmatprep.subr.bf16.mxu0 %v5880
    %5955 = vmatpush1.bf16.msra.mxu0 %v5879
    %5956 = vmatprep.subr.bf16.mxu0 %v5875
    %5957 = vmatpush1.bf16.msra.mxu0 %v5874
    %5958 = vmatprep.subr.bf16.mxu0 %v5870
    %5959 = vmatpush1.bf16.msra.mxu0 %v5869
    %5960 = vmatprep.subr.bf16.mxu0 %v5865
    %5961 = vmatpush1.bf16.msra.mxu0 %v5864
    %5962 = vmatprep.subr.bf16.mxu0 0
    %5963 = vmatpush2.bf16.msra.mxu0 0
    %5964 = vmatprep.subr.bf16.mxu0 0
    %5965 = vmatpush2.bf16.msra.mxu0 0
    %5966 = vmatprep.subr.bf16.mxu0 0
    %5967 = vmatpush2.bf16.msra.mxu0 0
    %5968 = vmatprep.subr.bf16.mxu0 0
    %5969 = vmatpush2.bf16.msra.mxu0 0
    %5970 = vmatprep.subr.bf16.mxu0 0
    %5971 = vmatpush2.bf16.msra.mxu0 0
    %5972 = vmatprep.subr.bf16.mxu0 0
    %5973 = vmatpush2.bf16.msra.mxu0 0
    %5974 = vmatprep.subr.bf16.mxu0 0
    %5975 = vmatpush2.bf16.msra.mxu0 0
    %5976 = vmatprep.subr.bf16.mxu0 0
    %5977 = vmatpush2.bf16.msra.mxu0 0
    %5978 = vmatprep.mubr.bf16.mxu0 0
    %5979 = vmatmul.mubr.bf16.gmra.mxu0 %v5903
    %v5980 = vpop.f32.mrf.mxu0
    %v5981 = vadd.f32 0.0, %v5980
    %v5982 = vpop.f32.mrf.mxu0
    %v5983 = vadd.f32 0.0, %v5982
    %v5984 = vpop.f32.mrf.mxu0
    %v5985 = vpop.f32.mrf.mxu0
    %5986 = vdwg.mxu0
    %5987 = vmatprep.subr.bf16.mxu0 0
    %5988 = vmatpush1.bf16.msra.mxu0 0
    %5989 = vmatprep.subr.bf16.mxu0 0
    %5990 = vmatpush1.bf16.msra.mxu0 0
    %5991 = vmatprep.subr.bf16.mxu0 0
    %5992 = vmatpush1.bf16.msra.mxu0 0
    %5993 = vmatprep.subr.bf16.mxu0 0
    %5994 = vmatpush1.bf16.msra.mxu0 0
    %5995 = vmatprep.subr.bf16.mxu0 0
    %5996 = vmatpush1.bf16.msra.mxu0 %v5881
    %5997 = vmatprep.subr.bf16.mxu0 0
    %5998 = vmatpush1.bf16.msra.mxu0 %v5876
    %5999 = vmatprep.subr.bf16.mxu0 0
    %6000 = vmatpush1.bf16.msra.mxu0 %v5871
    %6001 = vmatprep.subr.bf16.mxu0 0
    %6002 = vmatpush1.bf16.msra.mxu0 %v5866
    %6003 = vmatprep.subr.bf16.mxu0 0
    %6004 = vmatpush2.bf16.msra.mxu0 0
    %6005 = vmatprep.subr.bf16.mxu0 0
    %6006 = vmatpush2.bf16.msra.mxu0 0
    %6007 = vmatprep.subr.bf16.mxu0 0
    %6008 = vmatpush2.bf16.msra.mxu0 0
    %6009 = vmatprep.subr.bf16.mxu0 0
    %6010 = vmatpush2.bf16.msra.mxu0 0
    %6011 = vmatprep.subr.bf16.mxu0 0
    %6012 = vmatpush2.bf16.msra.mxu0 0
    %6013 = vmatprep.subr.bf16.mxu0 0
    %6014 = vmatpush2.bf16.msra.mxu0 0
    %6015 = vmatprep.subr.bf16.mxu0 0
    %6016 = vmatpush2.bf16.msra.mxu0 0
    %6017 = vmatprep.subr.bf16.mxu0 0
    %6018 = vmatpush2.bf16.msra.mxu0 0
    %6019 = vmatprep.mubr.bf16.mxu0 0
    %6020 = vmatmul.mubr.bf16.gmra.mxu0 %v5903
    %v6021 = vpop.f32.mrf.mxu0
    %v6022 = vadd.f32 0.0, %v6021
    %v6023 = vpop.f32.mrf.mxu0
    %v6024 = vpop.f32.mrf.mxu0
    %v6025 = vpop.f32.mrf.mxu0
    %6026 = vdwg.mxu0
    %v6027 = vadd.f32 %v5763, %v5940
    %v6028 = vadd.f32 %v5764, %v5942
    %v6029 = vadd.f32 %v5765, %v5981
    %v6030 = vadd.f32 %v5766, %v5983
    %v6031 = vadd.f32 %v5767, %v6022
    %v6033 = vrot.slane %v731, 1
    %v6035 = vrot.slane %v5505, 1
    %v6037 = vsel %vm1291, %v6033, %v6035
    %s6038 = scalar_lea.vmem %s3, 2880
    %v6039 = vld [vmem:[%s6038] sm:$0xff]
    %v6040 = vld [vmem:[%s6038 + $0x8] sm:$0xff]
    %v6041 = vld [vmem:[%s6038 + $0x10] sm:$0xf]
    %v6042 = vld [vmem:[%s6038 + $0x14] sm:$0xff]
    %v6043 = vld [vmem:[%s6038 + $0x1c] sm:$0xff]
    %v6044 = vld [vmem:[%s6038 + $0x24] sm:$0xf]
    %v6045 = vld [vmem:[%s6038 + $0x28] sm:$0xff]
    %v6046 = vld [vmem:[%s6038 + $0x30] sm:$0xff]
    %v6047 = vld [vmem:[%s6038 + $0x38] sm:$0xf]
    %v6048 = vld [vmem:[%s6038 + $0x3c] sm:$0xff]
    %v6049 = vld [vmem:[%s6038 + $0x44] sm:$0xff]
    %v6050 = vld [vmem:[%s6038 + $0x4c] sm:$0xf]
    %v6051 = vld [vmem:[%s6038 + $0x50] sm:$0xff]
    %v6052 = vld [vmem:[%s6038 + $0x58] sm:$0xff]
    %v6053 = vld [vmem:[%s6038 + $0x60] sm:$0xf]
    %v6054 = vld [vmem:[%s6038 + $0x64] sm:$0xff]
    %v6055 = vld [vmem:[%s6038 + $0x6c] sm:$0xff]
    %v6056 = vld [vmem:[%s6038 + $0x74] sm:$0xf]
    %v6057 = vld [vmem:[%s6038 + $0x78] sm:$0xff]
    %v6058 = vld [vmem:[%s6038 + $0x80] sm:$0xff]
    %v6059 = vld [vmem:[%s6038 + $0x88] sm:$0xf]
    %v6060 = vld [vmem:[%s6038 + $0x8c] sm:$0xff]
    %v6061 = vld [vmem:[%s6038 + $0x94] sm:$0xff]
    %v6062 = vld [vmem:[%s6038 + $0x9c] sm:$0xf]
    %v6087 = vunpack.c.l.b16 %v6039
    %v6088 = vunpack.c.h.b16 %v6039
    %v6089 = vunpack.c.l.b16 %v6040
    %v6090 = vunpack.c.h.b16 %v6040
    %v6091 = vunpack.c.l.b16 %v6041
    %v6092 = vunpack.c.l.b16 %v6042
    %v6093 = vunpack.c.h.b16 %v6042
    %v6094 = vunpack.c.l.b16 %v6043
    %v6095 = vunpack.c.h.b16 %v6043
    %v6096 = vunpack.c.l.b16 %v6044
    %v6097 = vunpack.c.l.b16 %v6045
    %v6098 = vunpack.c.h.b16 %v6045
    %v6099 = vunpack.c.l.b16 %v6046
    %v6100 = vunpack.c.h.b16 %v6046
    %v6101 = vunpack.c.l.b16 %v6047
    %v6102 = vunpack.c.l.b16 %v6048
    %v6103 = vunpack.c.h.b16 %v6048
    %v6104 = vunpack.c.l.b16 %v6049
    %v6105 = vunpack.c.h.b16 %v6049
    %v6106 = vunpack.c.l.b16 %v6050
    %v6107 = vunpack.c.l.b16 %v6051
    %v6108 = vunpack.c.h.b16 %v6051
    %v6109 = vunpack.c.l.b16 %v6052
    %v6110 = vunpack.c.h.b16 %v6052
    %v6111 = vunpack.c.l.b16 %v6053
    %v6112 = vunpack.c.l.b16 %v6054
    %v6113 = vunpack.c.h.b16 %v6054
    %v6114 = vunpack.c.l.b16 %v6055
    %v6115 = vunpack.c.h.b16 %v6055
    %v6116 = vunpack.c.l.b16 %v6056
    %v6117 = vunpack.c.l.b16 %v6057
    %v6118 = vunpack.c.h.b16 %v6057
    %v6119 = vunpack.c.l.b16 %v6058
    %v6120 = vunpack.c.h.b16 %v6058
    %v6121 = vunpack.c.l.b16 %v6059
    %v6122 = vunpack.c.l.b16 %v6060
    %v6123 = vunpack.c.h.b16 %v6060
    %v6124 = vunpack.c.l.b16 %v6061
    %v6125 = vunpack.c.h.b16 %v6061
    %v6126 = vunpack.c.l.b16 %v6062
    %v6127 = vpack.c.b16 %v6092, %v6087
    %v6128 = vpack.c.b16 %v6093, %v6088
    %v6129 = vpack.c.b16 %v6094, %v6089
    %v6130 = vpack.c.b16 %v6095, %v6090
    %v6131 = vpack.c.b16 %v6096, %v6091
    %v6132 = vpack.c.b16 %v6102, %v6097
    %v6133 = vpack.c.b16 %v6103, %v6098
    %v6134 = vpack.c.b16 %v6104, %v6099
    %v6135 = vpack.c.b16 %v6105, %v6100
    %v6136 = vpack.c.b16 %v6106, %v6101
    %v6137 = vpack.c.b16 %v6112, %v6107
    %v6138 = vpack.c.b16 %v6113, %v6108
    %v6139 = vpack.c.b16 %v6114, %v6109
    %v6140 = vpack.c.b16 %v6115, %v6110
    %v6141 = vpack.c.b16 %v6116, %v6111
    %v6142 = vpack.c.b16 %v6122, %v6117
    %v6143 = vpack.c.b16 %v6123, %v6118
    %v6144 = vpack.c.b16 %v6124, %v6119
    %v6145 = vpack.c.b16 %v6125, %v6120
    %v6146 = vpack.c.b16 %v6126, %v6121
    %v6168 = vsel %vm1451, %v6037, 0
    %6170 = vmatprep.subr.bf16.mxu0 0
    %6171 = vmatpush1.bf16.msra.mxu0 0
    %6172 = vmatprep.subr.bf16.mxu0 0
    %6173 = vmatpush1.bf16.msra.mxu0 0
    %6174 = vmatprep.subr.bf16.mxu0 0
    %6175 = vmatpush1.bf16.msra.mxu0 0
    %6176 = vmatprep.subr.bf16.mxu0 0
    %6177 = vmatpush1.bf16.msra.mxu0 0
    %6178 = vmatprep.subr.bf16.mxu0 %v6143
    %6179 = vmatpush1.bf16.msra.mxu0 %v6142
    %6180 = vmatprep.subr.bf16.mxu0 %v6138
    %6181 = vmatpush1.bf16.msra.mxu0 %v6137
    %6182 = vmatprep.subr.bf16.mxu0 %v6133
    %6183 = vmatpush1.bf16.msra.mxu0 %v6132
    %6184 = vmatprep.subr.bf16.mxu0 %v6128
    %6185 = vmatpush1.bf16.msra.mxu0 %v6127
    %6186 = vmatprep.subr.bf16.mxu0 0
    %6187 = vmatpush2.bf16.msra.mxu0 0
    %6188 = vmatprep.subr.bf16.mxu0 0
    %6189 = vmatpush2.bf16.msra.mxu0 0
    %6190 = vmatprep.subr.bf16.mxu0 0
    %6191 = vmatpush2.bf16.msra.mxu0 0
    %6192 = vmatprep.subr.bf16.mxu0 0
    %6193 = vmatpush2.bf16.msra.mxu0 0
    %6194 = vmatprep.subr.bf16.mxu0 0
    %6195 = vmatpush2.bf16.msra.mxu0 0
    %6196 = vmatprep.subr.bf16.mxu0 0
    %6197 = vmatpush2.bf16.msra.mxu0 0
    %6198 = vmatprep.subr.bf16.mxu0 0
    %6199 = vmatpush2.bf16.msra.mxu0 0
    %6200 = vmatprep.subr.bf16.mxu0 0
    %6201 = vmatpush2.bf16.msra.mxu0 0
    %6202 = vmatprep.mubr.bf16.mxu0 0
    %6203 = vmatmul.mubr.bf16.gmra.mxu0 %v6168
    %v6204 = vpop.f32.mrf.mxu0
    %v6205 = vadd.f32 0.0, %v6204
    %v6206 = vpop.f32.mrf.mxu0
    %v6207 = vadd.f32 0.0, %v6206
    %v6208 = vpop.f32.mrf.mxu0
    %v6209 = vpop.f32.mrf.mxu0
    %6210 = vdwg.mxu0
    %6211 = vmatprep.subr.bf16.mxu0 0
    %6212 = vmatpush1.bf16.msra.mxu0 0
    %6213 = vmatprep.subr.bf16.mxu0 0
    %6214 = vmatpush1.bf16.msra.mxu0 0
    %6215 = vmatprep.subr.bf16.mxu0 0
    %6216 = vmatpush1.bf16.msra.mxu0 0
    %6217 = vmatprep.subr.bf16.mxu0 0
    %6218 = vmatpush1.bf16.msra.mxu0 0
    %6219 = vmatprep.subr.bf16.mxu0 %v6145
    %6220 = vmatpush1.bf16.msra.mxu0 %v6144
    %6221 = vmatprep.subr.bf16.mxu0 %v6140
    %6222 = vmatpush1.bf16.msra.mxu0 %v6139
    %6223 = vmatprep.subr.bf16.mxu0 %v6135
    %6224 = vmatpush1.bf16.msra.mxu0 %v6134
    %6225 = vmatprep.subr.bf16.mxu0 %v6130
    %6226 = vmatpush1.bf16.msra.mxu0 %v6129
    %6227 = vmatprep.subr.bf16.mxu0 0
    %6228 = vmatpush2.bf16.msra.mxu0 0
    %6229 = vmatprep.subr.bf16.mxu0 0
    %6230 = vmatpush2.bf16.msra.mxu0 0
    %6231 = vmatprep.subr.bf16.mxu0 0
    %6232 = vmatpush2.bf16.msra.mxu0 0
    %6233 = vmatprep.subr.bf16.mxu0 0
    %6234 = vmatpush2.bf16.msra.mxu0 0
    %6235 = vmatprep.subr.bf16.mxu0 0
    %6236 = vmatpush2.bf16.msra.mxu0 0
    %6237 = vmatprep.subr.bf16.mxu0 0
    %6238 = vmatpush2.bf16.msra.mxu0 0
    %6239 = vmatprep.subr.bf16.mxu0 0
    %6240 = vmatpush2.bf16.msra.mxu0 0
    %6241 = vmatprep.subr.bf16.mxu0 0
    %6242 = vmatpush2.bf16.msra.mxu0 0
    %6243 = vmatprep.mubr.bf16.mxu0 0
    %6244 = vmatmul.mubr.bf16.gmra.mxu0 %v6168
    %v6245 = vpop.f32.mrf.mxu0
    %v6246 = vadd.f32 0.0, %v6245
    %v6247 = vpop.f32.mrf.mxu0
    %v6248 = vadd.f32 0.0, %v6247
    %v6249 = vpop.f32.mrf.mxu0
    %v6250 = vpop.f32.mrf.mxu0
    %6251 = vdwg.mxu0
    %6252 = vmatprep.subr.bf16.mxu0 0
    %6253 = vmatpush1.bf16.msra.mxu0 0
    %6254 = vmatprep.subr.bf16.mxu0 0
    %6255 = vmatpush1.bf16.msra.mxu0 0
    %6256 = vmatprep.subr.bf16.mxu0 0
    %6257 = vmatpush1.bf16.msra.mxu0 0
    %6258 = vmatprep.subr.bf16.mxu0 0
    %6259 = vmatpush1.bf16.msra.mxu0 0
    %6260 = vmatprep.subr.bf16.mxu0 0
    %6261 = vmatpush1.bf16.msra.mxu0 %v6146
    %6262 = vmatprep.subr.bf16.mxu0 0
    %6263 = vmatpush1.bf16.msra.mxu0 %v6141
    %6264 = vmatprep.subr.bf16.mxu0 0
    %6265 = vmatpush1.bf16.msra.mxu0 %v6136
    %6266 = vmatprep.subr.bf16.mxu0 0
    %6267 = vmatpush1.bf16.msra.mxu0 %v6131
    %6268 = vmatprep.subr.bf16.mxu0 0
    %6269 = vmatpush2.bf16.msra.mxu0 0
    %6270 = vmatprep.subr.bf16.mxu0 0
    %6271 = vmatpush2.bf16.msra.mxu0 0
    %6272 = vmatprep.subr.bf16.mxu0 0
    %6273 = vmatpush2.bf16.msra.mxu0 0
    %6274 = vmatprep.subr.bf16.mxu0 0
    %6275 = vmatpush2.bf16.msra.mxu0 0
    %6276 = vmatprep.subr.bf16.mxu0 0
    %6277 = vmatpush2.bf16.msra.mxu0 0
    %6278 = vmatprep.subr.bf16.mxu0 0
    %6279 = vmatpush2.bf16.msra.mxu0 0
    %6280 = vmatprep.subr.bf16.mxu0 0
    %6281 = vmatpush2.bf16.msra.mxu0 0
    %6282 = vmatprep.subr.bf16.mxu0 0
    %6283 = vmatpush2.bf16.msra.mxu0 0
    %6284 = vmatprep.mubr.bf16.mxu0 0
    %6285 = vmatmul.mubr.bf16.gmra.mxu0 %v6168
    %v6286 = vpop.f32.mrf.mxu0
    %v6287 = vadd.f32 0.0, %v6286
    %v6288 = vpop.f32.mrf.mxu0
    %v6289 = vpop.f32.mrf.mxu0
    %v6290 = vpop.f32.mrf.mxu0
    %6291 = vdwg.mxu0
    %v6292 = vadd.f32 %v6027, %v6205
    %v6293 = vadd.f32 %v6028, %v6207
    %v6294 = vadd.f32 %v6029, %v6246
    %v6295 = vadd.f32 %v6030, %v6248
    %v6296 = vadd.f32 %v6031, %v6287
    %v6297 = vrot.slane %v5769, 1
    %v6300 = vrot.slane %v1284, 1
    %v6302 = vsel %vm1291, %v6297, %v6300
    %s6303 = scalar_lea.vmem %s3, 3040
    %v6304 = vld [vmem:[%s6303] sm:$0xff]
    %v6305 = vld [vmem:[%s6303 + $0x8] sm:$0xff]
    %v6306 = vld [vmem:[%s6303 + $0x10] sm:$0xf]
    %v6307 = vld [vmem:[%s6303 + $0x14] sm:$0xff]
    %v6308 = vld [vmem:[%s6303 + $0x1c] sm:$0xff]
    %v6309 = vld [vmem:[%s6303 + $0x24] sm:$0xf]
    %v6310 = vld [vmem:[%s6303 + $0x28] sm:$0xff]
    %v6311 = vld [vmem:[%s6303 + $0x30] sm:$0xff]
    %v6312 = vld [vmem:[%s6303 + $0x38] sm:$0xf]
    %v6313 = vld [vmem:[%s6303 + $0x3c] sm:$0xff]
    %v6314 = vld [vmem:[%s6303 + $0x44] sm:$0xff]
    %v6315 = vld [vmem:[%s6303 + $0x4c] sm:$0xf]
    %v6316 = vld [vmem:[%s6303 + $0x50] sm:$0xff]
    %v6317 = vld [vmem:[%s6303 + $0x58] sm:$0xff]
    %v6318 = vld [vmem:[%s6303 + $0x60] sm:$0xf]
    %v6319 = vld [vmem:[%s6303 + $0x64] sm:$0xff]
    %v6320 = vld [vmem:[%s6303 + $0x6c] sm:$0xff]
    %v6321 = vld [vmem:[%s6303 + $0x74] sm:$0xf]
    %v6322 = vld [vmem:[%s6303 + $0x78] sm:$0xff]
    %v6323 = vld [vmem:[%s6303 + $0x80] sm:$0xff]
    %v6324 = vld [vmem:[%s6303 + $0x88] sm:$0xf]
    %v6325 = vld [vmem:[%s6303 + $0x8c] sm:$0xff]
    %v6326 = vld [vmem:[%s6303 + $0x94] sm:$0xff]
    %v6327 = vld [vmem:[%s6303 + $0x9c] sm:$0xf]
    %v6352 = vunpack.c.l.b16 %v6304
    %v6353 = vunpack.c.h.b16 %v6304
    %v6354 = vunpack.c.l.b16 %v6305
    %v6355 = vunpack.c.h.b16 %v6305
    %v6356 = vunpack.c.l.b16 %v6306
    %v6357 = vunpack.c.l.b16 %v6307
    %v6358 = vunpack.c.h.b16 %v6307
    %v6359 = vunpack.c.l.b16 %v6308
    %v6360 = vunpack.c.h.b16 %v6308
    %v6361 = vunpack.c.l.b16 %v6309
    %v6362 = vunpack.c.l.b16 %v6310
    %v6363 = vunpack.c.h.b16 %v6310
    %v6364 = vunpack.c.l.b16 %v6311
    %v6365 = vunpack.c.h.b16 %v6311
    %v6366 = vunpack.c.l.b16 %v6312
    %v6367 = vunpack.c.l.b16 %v6313
    %v6368 = vunpack.c.h.b16 %v6313
    %v6369 = vunpack.c.l.b16 %v6314
    %v6370 = vunpack.c.h.b16 %v6314
    %v6371 = vunpack.c.l.b16 %v6315
    %v6372 = vunpack.c.l.b16 %v6316
    %v6373 = vunpack.c.h.b16 %v6316
    %v6374 = vunpack.c.l.b16 %v6317
    %v6375 = vunpack.c.h.b16 %v6317
    %v6376 = vunpack.c.l.b16 %v6318
    %v6377 = vunpack.c.l.b16 %v6319
    %v6378 = vunpack.c.h.b16 %v6319
    %v6379 = vunpack.c.l.b16 %v6320
    %v6380 = vunpack.c.h.b16 %v6320
    %v6381 = vunpack.c.l.b16 %v6321
    %v6382 = vunpack.c.l.b16 %v6322
    %v6383 = vunpack.c.h.b16 %v6322
    %v6384 = vunpack.c.l.b16 %v6323
    %v6385 = vunpack.c.h.b16 %v6323
    %v6386 = vunpack.c.l.b16 %v6324
    %v6387 = vunpack.c.l.b16 %v6325
    %v6388 = vunpack.c.h.b16 %v6325
    %v6389 = vunpack.c.l.b16 %v6326
    %v6390 = vunpack.c.h.b16 %v6326
    %v6391 = vunpack.c.l.b16 %v6327
    %v6392 = vpack.c.b16 %v6357, %v6352
    %v6393 = vpack.c.b16 %v6358, %v6353
    %v6394 = vpack.c.b16 %v6359, %v6354
    %v6395 = vpack.c.b16 %v6360, %v6355
    %v6396 = vpack.c.b16 %v6361, %v6356
    %v6397 = vpack.c.b16 %v6367, %v6362
    %v6398 = vpack.c.b16 %v6368, %v6363
    %v6399 = vpack.c.b16 %v6369, %v6364
    %v6400 = vpack.c.b16 %v6370, %v6365
    %v6401 = vpack.c.b16 %v6371, %v6366
    %v6402 = vpack.c.b16 %v6377, %v6372
    %v6403 = vpack.c.b16 %v6378, %v6373
    %v6404 = vpack.c.b16 %v6379, %v6374
    %v6405 = vpack.c.b16 %v6380, %v6375
    %v6406 = vpack.c.b16 %v6381, %v6376
    %v6407 = vpack.c.b16 %v6387, %v6382
    %v6408 = vpack.c.b16 %v6388, %v6383
    %v6409 = vpack.c.b16 %v6389, %v6384
    %v6410 = vpack.c.b16 %v6390, %v6385
    %v6411 = vpack.c.b16 %v6391, %v6386
    %v6433 = vsel %vm1451, %v6302, 0
    %6435 = vmatprep.subr.bf16.mxu0 0
    %6436 = vmatpush1.bf16.msra.mxu0 0
    %6437 = vmatprep.subr.bf16.mxu0 0
    %6438 = vmatpush1.bf16.msra.mxu0 0
    %6439 = vmatprep.subr.bf16.mxu0 0
    %6440 = vmatpush1.bf16.msra.mxu0 0
    %6441 = vmatprep.subr.bf16.mxu0 0
    %6442 = vmatpush1.bf16.msra.mxu0 0
    %6443 = vmatprep.subr.bf16.mxu0 %v6408
    %6444 = vmatpush1.bf16.msra.mxu0 %v6407
    %6445 = vmatprep.subr.bf16.mxu0 %v6403
    %6446 = vmatpush1.bf16.msra.mxu0 %v6402
    %6447 = vmatprep.subr.bf16.mxu0 %v6398
    %6448 = vmatpush1.bf16.msra.mxu0 %v6397
    %6449 = vmatprep.subr.bf16.mxu0 %v6393
    %6450 = vmatpush1.bf16.msra.mxu0 %v6392
    %6451 = vmatprep.subr.bf16.mxu0 0
    %6452 = vmatpush2.bf16.msra.mxu0 0
    %6453 = vmatprep.subr.bf16.mxu0 0
    %6454 = vmatpush2.bf16.msra.mxu0 0
    %6455 = vmatprep.subr.bf16.mxu0 0
    %6456 = vmatpush2.bf16.msra.mxu0 0
    %6457 = vmatprep.subr.bf16.mxu0 0
    %6458 = vmatpush2.bf16.msra.mxu0 0
    %6459 = vmatprep.subr.bf16.mxu0 0
    %6460 = vmatpush2.bf16.msra.mxu0 0
    %6461 = vmatprep.subr.bf16.mxu0 0
    %6462 = vmatpush2.bf16.msra.mxu0 0
    %6463 = vmatprep.subr.bf16.mxu0 0
    %6464 = vmatpush2.bf16.msra.mxu0 0
    %6465 = vmatprep.subr.bf16.mxu0 0
    %6466 = vmatpush2.bf16.msra.mxu0 0
    %6467 = vmatprep.mubr.bf16.mxu0 0
    %6468 = vmatmul.mubr.bf16.gmra.mxu0 %v6433
    %v6469 = vpop.f32.mrf.mxu0
    %v6470 = vadd.f32 0.0, %v6469
    %v6471 = vpop.f32.mrf.mxu0
    %v6472 = vadd.f32 0.0, %v6471
    %v6473 = vpop.f32.mrf.mxu0
    %v6474 = vpop.f32.mrf.mxu0
    %6475 = vdwg.mxu0
    %6476 = vmatprep.subr.bf16.mxu0 0
    %6477 = vmatpush1.bf16.msra.mxu0 0
    %6478 = vmatprep.subr.bf16.mxu0 0
    %6479 = vmatpush1.bf16.msra.mxu0 0
    %6480 = vmatprep.subr.bf16.mxu0 0
    %6481 = vmatpush1.bf16.msra.mxu0 0
    %6482 = vmatprep.subr.bf16.mxu0 0
    %6483 = vmatpush1.bf16.msra.mxu0 0
    %6484 = vmatprep.subr.bf16.mxu0 %v6410
    %6485 = vmatpush1.bf16.msra.mxu0 %v6409
    %6486 = vmatprep.subr.bf16.mxu0 %v6405
    %6487 = vmatpush1.bf16.msra.mxu0 %v6404
    %6488 = vmatprep.subr.bf16.mxu0 %v6400
    %6489 = vmatpush1.bf16.msra.mxu0 %v6399
    %6490 = vmatprep.subr.bf16.mxu0 %v6395
    %6491 = vmatpush1.bf16.msra.mxu0 %v6394
    %6492 = vmatprep.subr.bf16.mxu0 0
    %6493 = vmatpush2.bf16.msra.mxu0 0
    %6494 = vmatprep.subr.bf16.mxu0 0
    %6495 = vmatpush2.bf16.msra.mxu0 0
    %6496 = vmatprep.subr.bf16.mxu0 0
    %6497 = vmatpush2.bf16.msra.mxu0 0
    %6498 = vmatprep.subr.bf16.mxu0 0
    %6499 = vmatpush2.bf16.msra.mxu0 0
    %6500 = vmatprep.subr.bf16.mxu0 0
    %6501 = vmatpush2.bf16.msra.mxu0 0
    %6502 = vmatprep.subr.bf16.mxu0 0
    %6503 = vmatpush2.bf16.msra.mxu0 0
    %6504 = vmatprep.subr.bf16.mxu0 0
    %6505 = vmatpush2.bf16.msra.mxu0 0
    %6506 = vmatprep.subr.bf16.mxu0 0
    %6507 = vmatpush2.bf16.msra.mxu0 0
    %6508 = vmatprep.mubr.bf16.mxu0 0
    %6509 = vmatmul.mubr.bf16.gmra.mxu0 %v6433
    %v6510 = vpop.f32.mrf.mxu0
    %v6511 = vadd.f32 0.0, %v6510
    %v6512 = vpop.f32.mrf.mxu0
    %v6513 = vadd.f32 0.0, %v6512
    %v6514 = vpop.f32.mrf.mxu0
    %v6515 = vpop.f32.mrf.mxu0
    %6516 = vdwg.mxu0
    %6517 = vmatprep.subr.bf16.mxu0 0
    %6518 = vmatpush1.bf16.msra.mxu0 0
    %6519 = vmatprep.subr.bf16.mxu0 0
    %6520 = vmatpush1.bf16.msra.mxu0 0
    %6521 = vmatprep.subr.bf16.mxu0 0
    %6522 = vmatpush1.bf16.msra.mxu0 0
    %6523 = vmatprep.subr.bf16.mxu0 0
    %6524 = vmatpush1.bf16.msra.mxu0 0
    %6525 = vmatprep.subr.bf16.mxu0 0
    %6526 = vmatpush1.bf16.msra.mxu0 %v6411
    %6527 = vmatprep.subr.bf16.mxu0 0
    %6528 = vmatpush1.bf16.msra.mxu0 %v6406
    %6529 = vmatprep.subr.bf16.mxu0 0
    %6530 = vmatpush1.bf16.msra.mxu0 %v6401
    %6531 = vmatprep.subr.bf16.mxu0 0
    %6532 = vmatpush1.bf16.msra.mxu0 %v6396
    %6533 = vmatprep.subr.bf16.mxu0 0
    %6534 = vmatpush2.bf16.msra.mxu0 0
    %6535 = vmatprep.subr.bf16.mxu0 0
    %6536 = vmatpush2.bf16.msra.mxu0 0
    %6537 = vmatprep.subr.bf16.mxu0 0
    %6538 = vmatpush2.bf16.msra.mxu0 0
    %6539 = vmatprep.subr.bf16.mxu0 0
    %6540 = vmatpush2.bf16.msra.mxu0 0
    %6541 = vmatprep.subr.bf16.mxu0 0
    %6542 = vmatpush2.bf16.msra.mxu0 0
    %6543 = vmatprep.subr.bf16.mxu0 0
    %6544 = vmatpush2.bf16.msra.mxu0 0
    %6545 = vmatprep.subr.bf16.mxu0 0
    %6546 = vmatpush2.bf16.msra.mxu0 0
    %6547 = vmatprep.subr.bf16.mxu0 0
    %6548 = vmatpush2.bf16.msra.mxu0 0
    %6549 = vmatprep.mubr.bf16.mxu0 0
    %6550 = vmatmul.mubr.bf16.gmra.mxu0 %v6433
    %v6551 = vpop.f32.mrf.mxu0
    %v6552 = vadd.f32 0.0, %v6551
    %v6553 = vpop.f32.mrf.mxu0
    %v6554 = vpop.f32.mrf.mxu0
    %v6555 = vpop.f32.mrf.mxu0
    %6556 = vdwg.mxu0
    %v6557 = vadd.f32 %v6292, %v6470
    %v6558 = vadd.f32 %v6293, %v6472
    %v6559 = vadd.f32 %v6294, %v6511
    %v6560 = vadd.f32 %v6295, %v6513
    %v6561 = vadd.f32 %v6296, %v6552
    %v6562 = vld [vmem:[%s4] sm:$0x1f]
    %v6564 = vlaneseq
    %v6565 = vshrl.u32 %v6564, 7
    %v6566 = vsub.s32 0, %v6565
    %v6567 = vrot.slane %v6562, %v6566
    %v6568 = vlaneseq
    %v6569 = vshrl.u32 %v6568, 7
    %v6570 = vsub.s32 1, %v6569
    %v6571 = vrot.slane %v6562, %v6570
    %v6572 = vlaneseq
    %v6573 = vshrl.u32 %v6572, 7
    %v6574 = vsub.s32 2, %v6573
    %v6575 = vrot.slane %v6562, %v6574
    %v6576 = vlaneseq
    %v6577 = vshrl.u32 %v6576, 7
    %v6578 = vsub.s32 3, %v6577
    %v6579 = vrot.slane %v6562, %v6578
    %v6580 = vlaneseq
    %v6581 = vshrl.u32 %v6580, 7
    %v6582 = vsub.s32 4, %v6581
    %v6583 = vrot.slane %v6562, %v6582
    %v6589 = vadd.f32 %v6557, %v6567
    %v6590 = vadd.f32 %v6558, %v6571
    %v6591 = vadd.f32 %v6559, %v6575
    %v6592 = vadd.f32 %v6560, %v6579
    %v6593 = vadd.f32 %v6561, %v6583
    %v6594 = vpack.c.bf16 %v6589, %v6589
    %v6595 = vpack.c.bf16 %v6590, %v6590
    %v6596 = vpack.c.bf16 %v6591, %v6591
    %v6597 = vpack.c.bf16 %v6592, %v6592
    %v6598 = vpack.c.bf16 %v6593, %v6593
    %v6599 = vld [vmem:[%s5] sm:$0xff]
    %v6600 = vld [vmem:[%s5 + $0x8] sm:$0xff]
    %v6601 = vld [vmem:[%s5 + $0x10] sm:$0xff]
    %v6602 = vld [vmem:[%s5 + $0x18] sm:$0xff]
    %v6603 = vld [vmem:[%s5 + $0x20] sm:$0xff]
    %v6604 = vld [vmem:[%s5 + $0x28] sm:$0xff]
    %v6605 = vld [vmem:[%s5 + $0x30] sm:$0xff]
    %v6606 = vld [vmem:[%s5 + $0x38] sm:$0xff]
    %v6607 = vld [vmem:[%s5 + $0x40] sm:$0xff]
    %v6608 = vld [vmem:[%s5 + $0x48] sm:$0xff]
    %v6609 = vld [vmem:[%s5 + $0x50] sm:$0xff]
    %v6610 = vld [vmem:[%s5 + $0x58] sm:$0xff]
    %v6611 = vld [vmem:[%s5 + $0x60] sm:$0xff]
    %v6612 = vld [vmem:[%s5 + $0x68] sm:$0xff]
    %v6613 = vld [vmem:[%s5 + $0x70] sm:$0xff]
    %v6614 = vld [vmem:[%s5 + $0x78] sm:$0xff]
    %v6615 = vld [vmem:[%s5 + $0x80] sm:$0xff]
    %v6616 = vld [vmem:[%s5 + $0x88] sm:$0xff]
    %v6617 = vld [vmem:[%s5 + $0x90] sm:$0xff]
    %v6618 = vld [vmem:[%s5 + $0x98] sm:$0xff]
    %v6619 = vld [vmem:[%s5 + $0xa0] sm:$0xff]
    %v6620 = vld [vmem:[%s5 + $0xa8] sm:$0xff]
    %v6621 = vld [vmem:[%s5 + $0xb0] sm:$0xff]
    %v6622 = vld [vmem:[%s5 + $0xb8] sm:$0xff]
    %v6623 = vld [vmem:[%s5 + $0xc0] sm:$0xff]
    %v6624 = vld [vmem:[%s5 + $0xc8] sm:$0xff]
    %v6625 = vld [vmem:[%s5 + $0xd0] sm:$0xff]
    %v6626 = vld [vmem:[%s5 + $0xd8] sm:$0xff]
    %v6627 = vld [vmem:[%s5 + $0xe0] sm:$0xff]
    %v6628 = vld [vmem:[%s5 + $0xe8] sm:$0xff]
    %v6629 = vld [vmem:[%s5 + $0xf0] sm:$0xff]
    %v6630 = vld [vmem:[%s5 + $0xf8] sm:$0xff]
    %v6631 = vld [vmem:[%s5 + $0x100] sm:$0xff]
    %v6632 = vld [vmem:[%s5 + $0x108] sm:$0xff]
    %v6633 = vld [vmem:[%s5 + $0x110] sm:$0xff]
    %v6634 = vld [vmem:[%s5 + $0x118] sm:$0xff]
    %v6635 = vld [vmem:[%s5 + $0x120] sm:$0xff]
    %v6636 = vld [vmem:[%s5 + $0x128] sm:$0xff]
    %v6637 = vld [vmem:[%s5 + $0x130] sm:$0xff]
    %v6638 = vld [vmem:[%s5 + $0x138] sm:$0xff]
    %v6639 = vld [vmem:[%s5 + $0x140] sm:$0xff]
    %v6640 = vld [vmem:[%s5 + $0x148] sm:$0xff]
    %v6641 = vld [vmem:[%s5 + $0x150] sm:$0xff]
    %v6642 = vld [vmem:[%s5 + $0x158] sm:$0xff]
    %v6643 = vld [vmem:[%s5 + $0x160] sm:$0xff]
    %v6644 = vld [vmem:[%s5 + $0x168] sm:$0xff]
    %v6645 = vld [vmem:[%s5 + $0x170] sm:$0xff]
    %v6646 = vld [vmem:[%s5 + $0x178] sm:$0xff]
    %v6647 = vld [vmem:[%s5 + $0x180] sm:$0xff]
    %v6648 = vld [vmem:[%s5 + $0x188] sm:$0xff]
    %v6649 = vld [vmem:[%s5 + $0x190] sm:$0xff]
    %v6650 = vld [vmem:[%s5 + $0x198] sm:$0xff]
    %v6651 = vld [vmem:[%s5 + $0x1a0] sm:$0xff]
    %v6652 = vld [vmem:[%s5 + $0x1a8] sm:$0xff]
    %v6653 = vld [vmem:[%s5 + $0x1b0] sm:$0xff]
    %v6654 = vld [vmem:[%s5 + $0x1b8] sm:$0xff]
    %v6655 = vld [vmem:[%s5 + $0x1c0] sm:$0xff]
    %v6656 = vld [vmem:[%s5 + $0x1c8] sm:$0xff]
    %v6657 = vld [vmem:[%s5 + $0x1d0] sm:$0xff]
    %v6658 = vld [vmem:[%s5 + $0x1d8] sm:$0xff]
    %v6659 = vld [vmem:[%s5 + $0x1e0] sm:$0xff]
    %v6660 = vld [vmem:[%s5 + $0x1e8] sm:$0xff]
    %v6661 = vld [vmem:[%s5 + $0x1f0] sm:$0xff]
    %v6662 = vld [vmem:[%s5 + $0x1f8] sm:$0xff]
    %v6663 = vld [vmem:[%s5 + $0x200] sm:$0xff]
    %v6664 = vld [vmem:[%s5 + $0x208] sm:$0xff]
    %v6665 = vld [vmem:[%s5 + $0x210] sm:$0xff]
    %v6666 = vld [vmem:[%s5 + $0x218] sm:$0xff]
    %v6667 = vld [vmem:[%s5 + $0x220] sm:$0xff]
    %v6668 = vld [vmem:[%s5 + $0x228] sm:$0xff]
    %v6669 = vld [vmem:[%s5 + $0x230] sm:$0xff]
    %v6670 = vld [vmem:[%s5 + $0x238] sm:$0xff]
    %v6671 = vld [vmem:[%s5 + $0x240] sm:$0xff]
    %v6672 = vld [vmem:[%s5 + $0x248] sm:$0xff]
    %v6673 = vld [vmem:[%s5 + $0x250] sm:$0xff]
    %v6674 = vld [vmem:[%s5 + $0x258] sm:$0xff]
    %v6675 = vld [vmem:[%s5 + $0x260] sm:$0xff]
    %v6676 = vld [vmem:[%s5 + $0x268] sm:$0xff]
    %v6677 = vld [vmem:[%s5 + $0x270] sm:$0xff]
    %v6678 = vld [vmem:[%s5 + $0x278] sm:$0xff]
    %v6679 = vld [vmem:[%s6] sm:$0x3]
    %v6681 = vlaneseq
    %v6682 = vshrl.u32 %v6681, 7
    %v6683 = vsub.s32 0, %v6682
    %v6684 = vrot.slane %v6679, %v6683
    %v6685 = vlaneseq
    %v6686 = vshrl.u32 %v6685, 7
    %v6687 = vsub.s32 1, %v6686
    %v6688 = vrot.slane %v6679, %v6687
    %v6771 = vunpack.c.l.b16 %v6599
    %v6772 = vunpack.c.h.b16 %v6599
    %v6773 = vunpack.c.l.b16 %v6600
    %v6774 = vunpack.c.h.b16 %v6600
    %v6775 = vunpack.c.l.b16 %v6601
    %v6776 = vunpack.c.h.b16 %v6601
    %v6777 = vunpack.c.l.b16 %v6602
    %v6778 = vunpack.c.h.b16 %v6602
    %v6779 = vunpack.c.l.b16 %v6603
    %v6780 = vunpack.c.h.b16 %v6603
    %v6781 = vunpack.c.l.b16 %v6604
    %v6782 = vunpack.c.h.b16 %v6604
    %v6783 = vunpack.c.l.b16 %v6605
    %v6784 = vunpack.c.h.b16 %v6605
    %v6785 = vunpack.c.l.b16 %v6606
    %v6786 = vunpack.c.h.b16 %v6606
    %v6787 = vunpack.c.l.b16 %v6607
    %v6788 = vunpack.c.h.b16 %v6607
    %v6789 = vunpack.c.l.b16 %v6608
    %v6790 = vunpack.c.h.b16 %v6608
    %v6791 = vunpack.c.l.b16 %v6609
    %v6792 = vunpack.c.h.b16 %v6609
    %v6793 = vunpack.c.l.b16 %v6610
    %v6794 = vunpack.c.h.b16 %v6610
    %v6795 = vunpack.c.l.b16 %v6611
    %v6796 = vunpack.c.h.b16 %v6611
    %v6797 = vunpack.c.l.b16 %v6612
    %v6798 = vunpack.c.h.b16 %v6612
    %v6799 = vunpack.c.l.b16 %v6613
    %v6800 = vunpack.c.h.b16 %v6613
    %v6801 = vunpack.c.l.b16 %v6614
    %v6802 = vunpack.c.h.b16 %v6614
    %v6803 = vunpack.c.l.b16 %v6615
    %v6804 = vunpack.c.h.b16 %v6615
    %v6805 = vunpack.c.l.b16 %v6616
    %v6806 = vunpack.c.h.b16 %v6616
    %v6807 = vunpack.c.l.b16 %v6617
    %v6808 = vunpack.c.h.b16 %v6617
    %v6809 = vunpack.c.l.b16 %v6618
    %v6810 = vunpack.c.h.b16 %v6618
    %v6811 = vunpack.c.l.b16 %v6619
    %v6812 = vunpack.c.h.b16 %v6619
    %v6813 = vunpack.c.l.b16 %v6620
    %v6814 = vunpack.c.h.b16 %v6620
    %v6815 = vunpack.c.l.b16 %v6621
    %v6816 = vunpack.c.h.b16 %v6621
    %v6817 = vunpack.c.l.b16 %v6622
    %v6818 = vunpack.c.h.b16 %v6622
    %v6819 = vunpack.c.l.b16 %v6623
    %v6820 = vunpack.c.h.b16 %v6623
    %v6821 = vunpack.c.l.b16 %v6624
    %v6822 = vunpack.c.h.b16 %v6624
    %v6823 = vunpack.c.l.b16 %v6625
    %v6824 = vunpack.c.h.b16 %v6625
    %v6825 = vunpack.c.l.b16 %v6626
    %v6826 = vunpack.c.h.b16 %v6626
    %v6827 = vunpack.c.l.b16 %v6627
    %v6828 = vunpack.c.h.b16 %v6627
    %v6829 = vunpack.c.l.b16 %v6628
    %v6830 = vunpack.c.h.b16 %v6628
    %v6831 = vunpack.c.l.b16 %v6629
    %v6832 = vunpack.c.h.b16 %v6629
    %v6833 = vunpack.c.l.b16 %v6630
    %v6834 = vunpack.c.h.b16 %v6630
    %v6835 = vunpack.c.l.b16 %v6631
    %v6836 = vunpack.c.h.b16 %v6631
    %v6837 = vunpack.c.l.b16 %v6632
    %v6838 = vunpack.c.h.b16 %v6632
    %v6839 = vunpack.c.l.b16 %v6633
    %v6840 = vunpack.c.h.b16 %v6633
    %v6841 = vunpack.c.l.b16 %v6634
    %v6842 = vunpack.c.h.b16 %v6634
    %v6843 = vunpack.c.l.b16 %v6635
    %v6844 = vunpack.c.h.b16 %v6635
    %v6845 = vunpack.c.l.b16 %v6636
    %v6846 = vunpack.c.h.b16 %v6636
    %v6847 = vunpack.c.l.b16 %v6637
    %v6848 = vunpack.c.h.b16 %v6637
    %v6849 = vunpack.c.l.b16 %v6638
    %v6850 = vunpack.c.h.b16 %v6638
    %v6851 = vunpack.c.l.b16 %v6639
    %v6852 = vunpack.c.h.b16 %v6639
    %v6853 = vunpack.c.l.b16 %v6640
    %v6854 = vunpack.c.h.b16 %v6640
    %v6855 = vunpack.c.l.b16 %v6641
    %v6856 = vunpack.c.h.b16 %v6641
    %v6857 = vunpack.c.l.b16 %v6642
    %v6858 = vunpack.c.h.b16 %v6642
    %v6859 = vunpack.c.l.b16 %v6643
    %v6860 = vunpack.c.h.b16 %v6643
    %v6861 = vunpack.c.l.b16 %v6644
    %v6862 = vunpack.c.h.b16 %v6644
    %v6863 = vunpack.c.l.b16 %v6645
    %v6864 = vunpack.c.h.b16 %v6645
    %v6865 = vunpack.c.l.b16 %v6646
    %v6866 = vunpack.c.h.b16 %v6646
    %v6867 = vunpack.c.l.b16 %v6647
    %v6868 = vunpack.c.h.b16 %v6647
    %v6869 = vunpack.c.l.b16 %v6648
    %v6870 = vunpack.c.h.b16 %v6648
    %v6871 = vunpack.c.l.b16 %v6649
    %v6872 = vunpack.c.h.b16 %v6649
    %v6873 = vunpack.c.l.b16 %v6650
    %v6874 = vunpack.c.h.b16 %v6650
    %v6875 = vunpack.c.l.b16 %v6651
    %v6876 = vunpack.c.h.b16 %v6651
    %v6877 = vunpack.c.l.b16 %v6652
    %v6878 = vunpack.c.h.b16 %v6652
    %v6879 = vunpack.c.l.b16 %v6653
    %v6880 = vunpack.c.h.b16 %v6653
    %v6881 = vunpack.c.l.b16 %v6654
    %v6882 = vunpack.c.h.b16 %v6654
    %v6883 = vunpack.c.l.b16 %v6655
    %v6884 = vunpack.c.h.b16 %v6655
    %v6885 = vunpack.c.l.b16 %v6656
    %v6886 = vunpack.c.h.b16 %v6656
    %v6887 = vunpack.c.l.b16 %v6657
    %v6888 = vunpack.c.h.b16 %v6657
    %v6889 = vunpack.c.l.b16 %v6658
    %v6890 = vunpack.c.h.b16 %v6658
    %v6891 = vunpack.c.l.b16 %v6659
    %v6892 = vunpack.c.h.b16 %v6659
    %v6893 = vunpack.c.l.b16 %v6660
    %v6894 = vunpack.c.h.b16 %v6660
    %v6895 = vunpack.c.l.b16 %v6661
    %v6896 = vunpack.c.h.b16 %v6661
    %v6897 = vunpack.c.l.b16 %v6662
    %v6898 = vunpack.c.h.b16 %v6662
    %v6899 = vunpack.c.l.b16 %v6663
    %v6900 = vunpack.c.h.b16 %v6663
    %v6901 = vunpack.c.l.b16 %v6664
    %v6902 = vunpack.c.h.b16 %v6664
    %v6903 = vunpack.c.l.b16 %v6665
    %v6904 = vunpack.c.h.b16 %v6665
    %v6905 = vunpack.c.l.b16 %v6666
    %v6906 = vunpack.c.h.b16 %v6666
    %v6907 = vunpack.c.l.b16 %v6667
    %v6908 = vunpack.c.h.b16 %v6667
    %v6909 = vunpack.c.l.b16 %v6668
    %v6910 = vunpack.c.h.b16 %v6668
    %v6911 = vunpack.c.l.b16 %v6669
    %v6912 = vunpack.c.h.b16 %v6669
    %v6913 = vunpack.c.l.b16 %v6670
    %v6914 = vunpack.c.h.b16 %v6670
    %v6915 = vunpack.c.l.b16 %v6671
    %v6916 = vunpack.c.h.b16 %v6671
    %v6917 = vunpack.c.l.b16 %v6672
    %v6918 = vunpack.c.h.b16 %v6672
    %v6919 = vunpack.c.l.b16 %v6673
    %v6920 = vunpack.c.h.b16 %v6673
    %v6921 = vunpack.c.l.b16 %v6674
    %v6922 = vunpack.c.h.b16 %v6674
    %v6923 = vunpack.c.l.b16 %v6675
    %v6924 = vunpack.c.h.b16 %v6675
    %v6925 = vunpack.c.l.b16 %v6676
    %v6926 = vunpack.c.h.b16 %v6676
    %v6927 = vunpack.c.l.b16 %v6677
    %v6928 = vunpack.c.h.b16 %v6677
    %v6929 = vunpack.c.l.b16 %v6678
    %v6930 = vunpack.c.h.b16 %v6678
    %v6931 = vpack.c.b16 %v6773, %v6771
    %v6932 = vpack.c.b16 %v6774, %v6772
    %v6933 = vpack.c.b16 %v6777, %v6775
    %v6934 = vpack.c.b16 %v6778, %v6776
    %v6935 = vpack.c.b16 %v6781, %v6779
    %v6936 = vpack.c.b16 %v6782, %v6780
    %v6937 = vpack.c.b16 %v6785, %v6783
    %v6938 = vpack.c.b16 %v6786, %v6784
    %v6939 = vpack.c.b16 %v6789, %v6787
    %v6940 = vpack.c.b16 %v6790, %v6788
    %v6941 = vpack.c.b16 %v6793, %v6791
    %v6942 = vpack.c.b16 %v6794, %v6792
    %v6943 = vpack.c.b16 %v6797, %v6795
    %v6944 = vpack.c.b16 %v6798, %v6796
    %v6945 = vpack.c.b16 %v6801, %v6799
    %v6946 = vpack.c.b16 %v6802, %v6800
    %v6947 = vpack.c.b16 %v6805, %v6803
    %v6948 = vpack.c.b16 %v6806, %v6804
    %v6949 = vpack.c.b16 %v6809, %v6807
    %v6950 = vpack.c.b16 %v6810, %v6808
    %v6951 = vpack.c.b16 %v6813, %v6811
    %v6952 = vpack.c.b16 %v6814, %v6812
    %v6953 = vpack.c.b16 %v6817, %v6815
    %v6954 = vpack.c.b16 %v6818, %v6816
    %v6955 = vpack.c.b16 %v6821, %v6819
    %v6956 = vpack.c.b16 %v6822, %v6820
    %v6957 = vpack.c.b16 %v6825, %v6823
    %v6958 = vpack.c.b16 %v6826, %v6824
    %v6959 = vpack.c.b16 %v6829, %v6827
    %v6960 = vpack.c.b16 %v6830, %v6828
    %v6961 = vpack.c.b16 %v6833, %v6831
    %v6962 = vpack.c.b16 %v6834, %v6832
    %v6963 = vpack.c.b16 %v6837, %v6835
    %v6964 = vpack.c.b16 %v6838, %v6836
    %v6965 = vpack.c.b16 %v6841, %v6839
    %v6966 = vpack.c.b16 %v6842, %v6840
    %v6967 = vpack.c.b16 %v6845, %v6843
    %v6968 = vpack.c.b16 %v6846, %v6844
    %v6969 = vpack.c.b16 %v6849, %v6847
    %v6970 = vpack.c.b16 %v6850, %v6848
    %v6971 = vpack.c.b16 %v6853, %v6851
    %v6972 = vpack.c.b16 %v6854, %v6852
    %v6973 = vpack.c.b16 %v6857, %v6855
    %v6974 = vpack.c.b16 %v6858, %v6856
    %v6975 = vpack.c.b16 %v6861, %v6859
    %v6976 = vpack.c.b16 %v6862, %v6860
    %v6977 = vpack.c.b16 %v6865, %v6863
    %v6978 = vpack.c.b16 %v6866, %v6864
    %v6979 = vpack.c.b16 %v6869, %v6867
    %v6980 = vpack.c.b16 %v6870, %v6868
    %v6981 = vpack.c.b16 %v6873, %v6871
    %v6982 = vpack.c.b16 %v6874, %v6872
    %v6983 = vpack.c.b16 %v6877, %v6875
    %v6984 = vpack.c.b16 %v6878, %v6876
    %v6985 = vpack.c.b16 %v6881, %v6879
    %v6986 = vpack.c.b16 %v6882, %v6880
    %v6987 = vpack.c.b16 %v6885, %v6883
    %v6988 = vpack.c.b16 %v6886, %v6884
    %v6989 = vpack.c.b16 %v6889, %v6887
    %v6990 = vpack.c.b16 %v6890, %v6888
    %v6991 = vpack.c.b16 %v6893, %v6891
    %v6992 = vpack.c.b16 %v6894, %v6892
    %v6993 = vpack.c.b16 %v6897, %v6895
    %v6994 = vpack.c.b16 %v6898, %v6896
    %v6995 = vpack.c.b16 %v6901, %v6899
    %v6996 = vpack.c.b16 %v6902, %v6900
    %v6997 = vpack.c.b16 %v6905, %v6903
    %v6998 = vpack.c.b16 %v6906, %v6904
    %v6999 = vpack.c.b16 %v6909, %v6907
    %v7000 = vpack.c.b16 %v6910, %v6908
    %v7001 = vpack.c.b16 %v6913, %v6911
    %v7002 = vpack.c.b16 %v6914, %v6912
    %v7003 = vpack.c.b16 %v6917, %v6915
    %v7004 = vpack.c.b16 %v6918, %v6916
    %v7005 = vpack.c.b16 %v6921, %v6919
    %v7006 = vpack.c.b16 %v6922, %v6920
    %v7007 = vpack.c.b16 %v6925, %v6923
    %v7008 = vpack.c.b16 %v6926, %v6924
    %v7009 = vpack.c.b16 %v6929, %v6927
    %v7010 = vpack.c.b16 %v6930, %v6928
    %7091 = vmatprep.subr.bf16.mxu0 %v6946
    %7092 = vmatpush1.bf16.msra.mxu0 %v6945
    %7093 = vmatprep.subr.bf16.mxu0 %v6944
    %7094 = vmatpush1.bf16.msra.mxu0 %v6943
    %7095 = vmatprep.subr.bf16.mxu0 %v6942
    %7096 = vmatpush1.bf16.msra.mxu0 %v6941
    %7097 = vmatprep.subr.bf16.mxu0 %v6940
    %7098 = vmatpush1.bf16.msra.mxu0 %v6939
    %7099 = vmatprep.subr.bf16.mxu0 %v6938
    %7100 = vmatpush1.bf16.msra.mxu0 %v6937
    %7101 = vmatprep.subr.bf16.mxu0 %v6936
    %7102 = vmatpush1.bf16.msra.mxu0 %v6935
    %7103 = vmatprep.subr.bf16.mxu0 %v6934
    %7104 = vmatpush1.bf16.msra.mxu0 %v6933
    %7105 = vmatprep.subr.bf16.mxu0 %v6932
    %7106 = vmatpush1.bf16.msra.mxu0 %v6931
    %7107 = vmatprep.subr.bf16.mxu0 %v6962
    %7108 = vmatpush2.bf16.msra.mxu0 %v6961
    %7109 = vmatprep.subr.bf16.mxu0 %v6960
    %7110 = vmatpush2.bf16.msra.mxu0 %v6959
    %7111 = vmatprep.subr.bf16.mxu0 %v6958
    %7112 = vmatpush2.bf16.msra.mxu0 %v6957
    %7113 = vmatprep.subr.bf16.mxu0 %v6956
    %7114 = vmatpush2.bf16.msra.mxu0 %v6955
    %7115 = vmatprep.subr.bf16.mxu0 %v6954
    %7116 = vmatpush2.bf16.msra.mxu0 %v6953
    %7117 = vmatprep.subr.bf16.mxu0 %v6952
    %7118 = vmatpush2.bf16.msra.mxu0 %v6951
    %7119 = vmatprep.subr.bf16.mxu0 %v6950
    %7120 = vmatpush2.bf16.msra.mxu0 %v6949
    %7121 = vmatprep.subr.bf16.mxu0 %v6948
    %7122 = vmatpush2.bf16.msra.mxu0 %v6947
    %7123 = vmatprep.mubr.bf16.mxu0 %v6595
    %7124 = vmatmul.mubr.bf16.gmra.mxu0 %v6594
    %v7125 = vpop.f32.mrf.mxu0
    %v7126 = vadd.f32 %v6684, %v7125
    %v7127 = vpop.f32.mrf.mxu0
    %v7128 = vadd.f32 %v6688, %v7127
    %v7129 = vpop.f32.mrf.mxu0
    %v7130 = vpop.f32.mrf.mxu0
    %7131 = vdwg.mxu0
    %7132 = vmatprep.subr.bf16.mxu0 %v6978
    %7133 = vmatpush1.bf16.msra.mxu0 %v6977
    %7134 = vmatprep.subr.bf16.mxu0 %v6976
    %7135 = vmatpush1.bf16.msra.mxu0 %v6975
    %7136 = vmatprep.subr.bf16.mxu0 %v6974
    %7137 = vmatpush1.bf16.msra.mxu0 %v6973
    %7138 = vmatprep.subr.bf16.mxu0 %v6972
    %7139 = vmatpush1.bf16.msra.mxu0 %v6971
    %7140 = vmatprep.subr.bf16.mxu0 %v6970
    %7141 = vmatpush1.bf16.msra.mxu0 %v6969
    %7142 = vmatprep.subr.bf16.mxu0 %v6968
    %7143 = vmatpush1.bf16.msra.mxu0 %v6967
    %7144 = vmatprep.subr.bf16.mxu0 %v6966
    %7145 = vmatpush1.bf16.msra.mxu0 %v6965
    %7146 = vmatprep.subr.bf16.mxu0 %v6964
    %7147 = vmatpush1.bf16.msra.mxu0 %v6963
    %7148 = vmatprep.subr.bf16.mxu0 %v6994
    %7149 = vmatpush2.bf16.msra.mxu0 %v6993
    %7150 = vmatprep.subr.bf16.mxu0 %v6992
    %7151 = vmatpush2.bf16.msra.mxu0 %v6991
    %7152 = vmatprep.subr.bf16.mxu0 %v6990
    %7153 = vmatpush2.bf16.msra.mxu0 %v6989
    %7154 = vmatprep.subr.bf16.mxu0 %v6988
    %7155 = vmatpush2.bf16.msra.mxu0 %v6987
    %7156 = vmatprep.subr.bf16.mxu0 %v6986
    %7157 = vmatpush2.bf16.msra.mxu0 %v6985
    %7158 = vmatprep.subr.bf16.mxu0 %v6984
    %7159 = vmatpush2.bf16.msra.mxu0 %v6983
    %7160 = vmatprep.subr.bf16.mxu0 %v6982
    %7161 = vmatpush2.bf16.msra.mxu0 %v6981
    %7162 = vmatprep.subr.bf16.mxu0 %v6980
    %7163 = vmatpush2.bf16.msra.mxu0 %v6979
    %7164 = vmatprep.mubr.bf16.mxu0 %v6597
    %7165 = vmatmul.mubr.bf16.gmra.mxu0 %v6596
    %v7166 = vpop.f32.mrf.mxu0
    %v7167 = vadd.f32 %v7126, %v7166
    %v7168 = vpop.f32.mrf.mxu0
    %v7169 = vadd.f32 %v7128, %v7168
    %v7170 = vpop.f32.mrf.mxu0
    %v7171 = vpop.f32.mrf.mxu0
    %7172 = vdwg.mxu0
    %7173 = vmatprep.subr.bf16.mxu0 %v7010
    %7174 = vmatpush1.bf16.msra.mxu0 %v7009
    %7175 = vmatprep.subr.bf16.mxu0 %v7008
    %7176 = vmatpush1.bf16.msra.mxu0 %v7007
    %7177 = vmatprep.subr.bf16.mxu0 %v7006
    %7178 = vmatpush1.bf16.msra.mxu0 %v7005
    %7179 = vmatprep.subr.bf16.mxu0 %v7004
    %7180 = vmatpush1.bf16.msra.mxu0 %v7003
    %7181 = vmatprep.subr.bf16.mxu0 %v7002
    %7182 = vmatpush1.bf16.msra.mxu0 %v7001
    %7183 = vmatprep.subr.bf16.mxu0 %v7000
    %7184 = vmatpush1.bf16.msra.mxu0 %v6999
    %7185 = vmatprep.subr.bf16.mxu0 %v6998
    %7186 = vmatpush1.bf16.msra.mxu0 %v6997
    %7187 = vmatprep.subr.bf16.mxu0 %v6996
    %7188 = vmatpush1.bf16.msra.mxu0 %v6995
    %7189 = vmatprep.subr.bf16.mxu0 0
    %7190 = vmatpush2.bf16.msra.mxu0 0
    %7191 = vmatprep.subr.bf16.mxu0 0
    %7192 = vmatpush2.bf16.msra.mxu0 0
    %7193 = vmatprep.subr.bf16.mxu0 0
    %7194 = vmatpush2.bf16.msra.mxu0 0
    %7195 = vmatprep.subr.bf16.mxu0 0
    %7196 = vmatpush2.bf16.msra.mxu0 0
    %7197 = vmatprep.subr.bf16.mxu0 0
    %7198 = vmatpush2.bf16.msra.mxu0 0
    %7199 = vmatprep.subr.bf16.mxu0 0
    %7200 = vmatpush2.bf16.msra.mxu0 0
    %7201 = vmatprep.subr.bf16.mxu0 0
    %7202 = vmatpush2.bf16.msra.mxu0 0
    %7203 = vmatprep.subr.bf16.mxu0 0
    %7204 = vmatpush2.bf16.msra.mxu0 0
    %7205 = vmatprep.mubr.bf16.mxu0 0
    %7206 = vmatmul.mubr.bf16.gmra.mxu0 %v6598
    %v7207 = vpop.f32.mrf.mxu0
    %v7208 = vadd.f32 %v7167, %v7207
    %v7209 = vpop.f32.mrf.mxu0
    %v7210 = vadd.f32 %v7169, %v7209
    %v7211 = vpop.f32.mrf.mxu0
    %v7212 = vpop.f32.mrf.mxu0
    %7213 = vdwg.mxu0
    %v7216 = vcombine.low %v7208, %v7210
    %v7218 = vunpack.c.l.s4 1983009808
    %v7219 = vunpack.c.0.s8 %v7218
    %v7220 = vlaneseq
    %v7221 = vshrl.u32 %v7220, 7
    %v7222 = vsub.s32 %v7219, %v7221
    %v7223 = vrot.slane %v7216, %v7222
    %vm7225 = vcmask 1041408
    %vm7226 = vcmask 953346
    %vm7227 = vmor %vm7226, %vm7225
    %7228 = vst.msk [vmem:[#allocation2] sm:$0xf] %vm7227, %v7223
    // Predicated region
    $region30: #{cnn_first_forward.5} parent=1 // pred_check
      _
    $region31: #{cnn_first_forward.5} parent=1 // pred_check_branch
      %7230 = sbr.rel (0) target = $region33
    $region32: #{cnn_first_forward.5} parent=1 // pred_region
      %s7232 = ssub.s32 64, 64
      %7233 = vsyncadd [#allocation3], %s7232
      %s7235 = sshll.u32 [#allocation2], 4
      %s7236 = int_to_ptr.vmem [resolvable:$true] %s7235
      %7238 = dma.vmem_to_hbm [thread:$0]  %s7236, 64, %s7, [#allocation3]
    $region33: #{cnn_first_forward.5} parent=1 // pred_fallthru
      _
    // Predicated region
    $region34: #{cnn_first_forward.5} parent=1 // pred_check
      _
    $region35: #{cnn_first_forward.5} parent=1 // pred_check_branch
      %7240 = sbr.rel (0) target = $region37
    $region36: #{cnn_first_forward.5} parent=1 // pred_region
      %7241 = dma.done [#allocation3], 64
    $region37: #{cnn_first_forward.5} parent=1 // pred_fallthru
      _
    %7242 = vsyncpa [#allocation3], 1

</llo_original>
